<compile_context>
chip_gen: v7x
topology: tpu7x:2x2x1
jax: 0.10.0
libtpu: 0.0.40
codegen_flags: <defaults>
</compile_context>

<pallas_src>
import math

import jax
import jax.numpy as jnp
from jax.experimental import pallas as pl
from jax.experimental.pallas import tpu as pltpu

# Full-precision f32 matmuls for both kernel and reference (restores ~1e-4 agreement).
jax.config.update("jax_default_matmul_precision", "highest")

# ---- model hyper-parameters (small, consistent with the module) ----------------
D_MODEL = 32
NHEAD = 4
DIM_FF = 64
SEQ = 8
BATCH = 2
EPS = 1e-5  # nn.LayerNorm default

_VEC_W = max(2 * D_MODEL, DIM_FF)  # packed-vector row width (64 here)


def _layernorm(x, w, b):
    mu = jnp.mean(x, axis=-1, keepdims=True)
    var = jnp.mean((x - mu) ** 2, axis=-1, keepdims=True)
    return (x - mu) * jax.lax.rsqrt(var + EPS) * w + b


def encoder_layer_kernel(src_ref, pos_ref, wqk_ref, wv_ref, wo_ref,
                         w1_ref, w2_ref, vec_ref, out_ref):
    N, D = src_ref.shape                       # (B*S, D) = (16, 32)
    H = NHEAD
    dh = D // H
    S = SEQ
    B = N // S
    scale = 1.0 / math.sqrt(dh)

    src = src_ref[...]                         # (N, D)
    qk_in = src + pos_ref[...]                 # q = k = src + pos

    # --- packed bias / layernorm vectors (rows of width _VEC_W) --------------------
    vecs = vec_ref[...]                        # (8, 64)
    bqk = vecs[0:1, :2 * D]                    # [bq || bk]       (1, 64)
    b1 = vecs[1:2, :DIM_FF]                    # (1, 64)
    bv = vecs[2:3, :D]
    bo = vecs[2:3, D:2 * D]
    b2 = vecs[3:4, :D]
    ln1w = vecs[3:4, D:2 * D]
    ln1b = vecs[4:5, :D]
    ln2w = vecs[4:5, D:2 * D]
    ln2b = vecs[5:6, :D]

    # --- fused Q||K and V projections: two lane-dense 2D matmuls -------------------
    qk = jnp.dot(qk_in, wqk_ref[...],
                 preferred_element_type=jnp.float32) + bqk       # (N, 2D)
    v = jnp.dot(src, wv_ref[...],
                preferred_element_type=jnp.float32) + bv         # (N, D)
    q = qk[:, :D] * scale
    k = qk[:, D:]

    # --- attention over a combined (B*H) leading axis -------------------------------
    def to_heads(x):                           # (B*S, D) -> (B*H, S, dh)
        return jnp.transpose(x.reshape(B, S, H, dh), (0, 2, 1, 3)).reshape(B * H, S, dh)

    qh, kh, vh = to_heads(q), to_heads(k), to_heads(v)

    logits = jnp.einsum("bqd,bkd->bqk", qh, kh,
                        preferred_element_type=jnp.float32)      # (B*H, S, S)
    logits = logits - jnp.max(logits, axis=-1, keepdims=True)
    probs = jnp.exp(logits)
    probs = probs * pl.reciprocal(
        jnp.sum(probs, axis=-1, keepdims=True), approx=False)
    o = jnp.einsum("bqk,bkd->bqd", probs, vh,
                   preferred_element_type=jnp.float32)           # (B*H, S, dh)

    # back to concatenated-heads rows, then ONE output-projection matmul
    o_rows = jnp.transpose(o.reshape(B, H, S, dh), (0, 2, 1, 3)).reshape(N, D)
    attn = jnp.dot(o_rows, wo_ref[...],
                   preferred_element_type=jnp.float32) + bo      # (N, D)

    # --- residual + norm1 (dropout1 is identity in eval) ---------------------------
    x = _layernorm(src + attn, ln1w, ln1b)

    # --- feed-forward: linear1 -> relu -> linear2 (all N rows at once) -------------
    h1 = jnp.maximum(
        jnp.dot(x, w1_ref[...], preferred_element_type=jnp.float32) + b1, 0.0)
    y = jnp.dot(h1, w2_ref[...], preferred_element_type=jnp.float32) + b2

    # --- residual + norm2; single dense 2D store ------------------------------------
    out_ref[...] = _layernorm(x + y, ln2w, ln2b)


def _pack_params(p):
    """Pre-arrange weights for the kernel (pure layout work, once per param set)."""
    D, F, W = D_MODEL, DIM_FF, _VEC_W

    def row(*vs):                              # concat vectors, pad to width W
        v = jnp.concatenate(vs)
        return jnp.pad(v, (0, W - v.shape[0]))[None, :]

    wqk = jnp.concatenate([p["wq"], p["wk"]], axis=1)            # (D, 2D)
    vecs = jnp.concatenate(
        [row(p["bq"], p["bk"]),
         row(p["b1"]),
         row(p["bv"], p["bo"]),
         row(p["b2"], p["ln1w"]),
         row(p["ln1b"], p["ln2w"]),
         row(p["ln2b"]),
         jnp.zeros((2, W), jnp.float32)], axis=0)                # (8, W)
    return wqk, p["wv"], p["wo"], p["w1"], p["w2"], vecs


@jax.jit
def transformer_encoder_layer(src, pos, params):
    """src, pos: (S, B, D) float32 (seq-first, PyTorch convention). Returns (S, B, D)."""
    S, B, D = src.shape
    # layout plumbing stays outside the kernel: (S,B,D) -> (B*S, D) row slabs
    src_rows = jnp.transpose(src, (1, 0, 2)).reshape(B * S, D)
    pos_rows = jnp.transpose(pos, (1, 0, 2)).reshape(B * S, D)
    operands = (src_rows, pos_rows) + _pack_params(params)
    vmem = pltpu.MemorySpace.VMEM
    out_rows = pl.pallas_call(
        encoder_layer_kernel,
        out_shape=jax.ShapeDtypeStruct((B * S, D), jnp.float32),
        in_specs=[pl.BlockSpec(memory_space=vmem)] * len(operands),
        out_specs=pl.BlockSpec(memory_space=vmem),
    )(*operands)
    return jnp.transpose(out_rows.reshape(B, S, D), (1, 0, 2))


# ------------------------- pure-JAX reference (for checking) --------------------
def reference(src, pos, p):
    S, B, D = src.shape
    dh = D // NHEAD
    qk_in = src + pos
    q = qk_in @ p["wq"] + p["bq"]
    k = qk_in @ p["wk"] + p["bk"]
    v = src @ p["wv"] + p["bv"]

    def split(x):                              # (S, B, D) -> (B, H, S, dh)
        return jnp.transpose(x.reshape(S, B, NHEAD, dh), (1, 2, 0, 3))

    qh = split(q) * (1.0 / math.sqrt(dh))
    kh, vh = split(k), split(v)
    s = jnp.einsum("bhqd,bhkd->bhqk", qh, kh)
    a = jax.nn.softmax(s, axis=-1)
    o = jnp.einsum("bhqk,bhkd->bhqd", a, vh)                     # (B, H, S, dh)
    o = jnp.transpose(o, (2, 0, 1, 3)).reshape(S, B, D)
    attn = o @ p["wo"] + p["bo"]

    def ln(x, w, b):
        mu = x.mean(-1, keepdims=True)
        var = ((x - mu) ** 2).mean(-1, keepdims=True)
        return (x - mu) / jnp.sqrt(var + EPS) * w + b

    x = ln(src + attn, p["ln1w"], p["ln1b"])
    h = jnp.maximum(x @ p["w1"] + p["b1"], 0.0)
    y = h @ p["w2"] + p["b2"]
    return ln(x + y, p["ln2w"], p["ln2b"])


def make_params(key):
    ks = jax.random.split(key, 12)
    s = 0.1
    return {
        # projection weights stored in "x @ W" orientation (transposed vs torch)
        "wq": jax.random.normal(ks[0], (D_MODEL, D_MODEL), jnp.float32) * s,
        "wk": jax.random.normal(ks[1], (D_MODEL, D_MODEL), jnp.float32) * s,
        "wv": jax.random.normal(ks[2], (D_MODEL, D_MODEL), jnp.float32) * s,
        "bq": jax.random.normal(ks[3], (D_MODEL,), jnp.float32) * s,
        "bk": jax.random.normal(ks[4], (D_MODEL,), jnp.float32) * s,
        "bv": jax.random.normal(ks[5], (D_MODEL,), jnp.float32) * s,
        "wo": jax.random.normal(ks[6], (D_MODEL, D_MODEL), jnp.float32) * s,
        "bo": jax.random.normal(ks[7], (D_MODEL,), jnp.float32) * s,
        "w1": jax.random.normal(ks[8], (D_MODEL, DIM_FF), jnp.float32) * s,
        "b1": jax.random.normal(ks[9], (DIM_FF,), jnp.float32) * s,
        "w2": jax.random.normal(ks[10], (DIM_FF, D_MODEL), jnp.float32) * s,
        "b2": jax.random.normal(ks[11], (D_MODEL,), jnp.float32) * s,
        "ln1w": jnp.ones((D_MODEL,), jnp.float32),
        "ln1b": jnp.zeros((D_MODEL,), jnp.float32),
        "ln2w": jnp.ones((D_MODEL,), jnp.float32),
        "ln2b": jnp.zeros((D_MODEL,), jnp.float32),
    }


if __name__ == "__main__":
    key = jax.random.PRNGKey(0)
    k_src, k_pos, k_par = jax.random.split(key, 3)
    src = jax.random.normal(k_src, (SEQ, BATCH, D_MODEL), jnp.float32)
    pos = jax.random.normal(k_pos, (SEQ, BATCH, D_MODEL), jnp.float32)
    params = make_params(k_par)

    out = transformer_encoder_layer(src, pos, params)
    out = jax.block_until_ready(out)

    ref = reference(src, pos, params)
    assert out.shape == (SEQ, BATCH, D_MODEL)
    assert jnp.allclose(out, ref, atol=1e-4, rtol=1e-4), "mismatch vs reference"
    print("KERNEL_OK")
</pallas_src>

<mosaic_0001>
module attributes {stable_mosaic.version = 11 : i64} {
  func.func @encoder_layer_kernel(%arg0: memref<16x32xf32, #tpu.memory_space<vmem>>, %arg1: memref<16x32xf32, #tpu.memory_space<vmem>>, %arg2: memref<32x64xf32, #tpu.memory_space<vmem>>, %arg3: memref<32x32xf32, #tpu.memory_space<vmem>>, %arg4: memref<32x32xf32, #tpu.memory_space<vmem>>, %arg5: memref<32x64xf32, #tpu.memory_space<vmem>>, %arg6: memref<64x32xf32, #tpu.memory_space<vmem>>, %arg7: memref<8x64xf32, #tpu.memory_space<vmem>>, %arg8: memref<16x32xf32, #tpu.memory_space<vmem>>) attributes {dimension_semantics = [], scalar_prefetch = 0 : i64, scratch_operands = 0 : i64, tpu.core_type = #tpu.core_type<tc>} {
    %c0 = arith.constant 0 : index
    %c0_0 = arith.constant 0 : index
    %0 = vector.load %arg0[%c0, %c0_0] : memref<16x32xf32, #tpu.memory_space<vmem>>, vector<16x32xf32>
    %c0_1 = arith.constant 0 : index
    %c0_2 = arith.constant 0 : index
    %1 = vector.load %arg1[%c0_1, %c0_2] : memref<16x32xf32, #tpu.memory_space<vmem>>, vector<16x32xf32>
    %2 = arith.addf %0, %1 : vector<16x32xf32>
    %c0_3 = arith.constant 0 : index
    %c0_4 = arith.constant 0 : index
    %3 = vector.load %arg7[%c0_3, %c0_4] : memref<8x64xf32, #tpu.memory_space<vmem>>, vector<8x64xf32>
    %4 = vector.extract_strided_slice %3 {offsets = [0, 0], sizes = [1, 64], strides = [1, 1]} : vector<8x64xf32> to vector<1x64xf32>
    %5 = vector.extract_strided_slice %3 {offsets = [1, 0], sizes = [1, 64], strides = [1, 1]} : vector<8x64xf32> to vector<1x64xf32>
    %6 = vector.extract_strided_slice %3 {offsets = [2, 0], sizes = [1, 32], strides = [1, 1]} : vector<8x64xf32> to vector<1x32xf32>
    %7 = vector.extract_strided_slice %3 {offsets = [2, 32], sizes = [1, 32], strides = [1, 1]} : vector<8x64xf32> to vector<1x32xf32>
    %8 = vector.extract_strided_slice %3 {offsets = [3, 0], sizes = [1, 32], strides = [1, 1]} : vector<8x64xf32> to vector<1x32xf32>
    %9 = vector.extract_strided_slice %3 {offsets = [3, 32], sizes = [1, 32], strides = [1, 1]} : vector<8x64xf32> to vector<1x32xf32>
    %10 = vector.extract_strided_slice %3 {offsets = [4, 0], sizes = [1, 32], strides = [1, 1]} : vector<8x64xf32> to vector<1x32xf32>
    %11 = vector.extract_strided_slice %3 {offsets = [4, 32], sizes = [1, 32], strides = [1, 1]} : vector<8x64xf32> to vector<1x32xf32>
    %12 = vector.extract_strided_slice %3 {offsets = [5, 0], sizes = [1, 32], strides = [1, 1]} : vector<8x64xf32> to vector<1x32xf32>
    %c0_5 = arith.constant 0 : index
    %c0_6 = arith.constant 0 : index
    %13 = vector.load %arg2[%c0_5, %c0_6] : memref<32x64xf32, #tpu.memory_space<vmem>>, vector<32x64xf32>
    %cst = arith.constant dense<0.000000e+00> : vector<16x64xf32>
    %14 = tpu.matmul %2, %13, %cst {dimension_numbers = #tpu.dot_dimension_numbers<[1], [0], [0], [1], [0, 0, 1, 1], [], []>, precision = #tpu.contract_precision<fp32>} : vector<16x32xf32>, vector<32x64xf32>, vector<16x64xf32> -> vector<16x64xf32>
    %15 = vector.broadcast %4 : vector<1x64xf32> to vector<16x64xf32>
    %16 = arith.addf %14, %15 : vector<16x64xf32>
    %c0_7 = arith.constant 0 : index
    %c0_8 = arith.constant 0 : index
    %17 = vector.load %arg3[%c0_7, %c0_8] : memref<32x32xf32, #tpu.memory_space<vmem>>, vector<32x32xf32>
    %cst_9 = arith.constant dense<0.000000e+00> : vector<16x32xf32>
    %18 = tpu.matmul %0, %17, %cst_9 {dimension_numbers = #tpu.dot_dimension_numbers<[1], [0], [0], [1], [0, 0, 1, 1], [], []>, precision = #tpu.contract_precision<fp32>} : vector<16x32xf32>, vector<32x32xf32>, vector<16x32xf32> -> vector<16x32xf32>
    %19 = vector.broadcast %6 : vector<1x32xf32> to vector<16x32xf32>
    %20 = arith.addf %18, %19 : vector<16x32xf32>
    %21 = vector.extract_strided_slice %16 {offsets = [0, 0], sizes = [16, 32], strides = [1, 1]} : vector<16x64xf32> to vector<16x32xf32>
    %cst_10 = arith.constant 0.353553385 : f32
    %22 = vector.broadcast %cst_10 : f32 to vector<16x32xf32>
    %23 = arith.mulf %21, %22 : vector<16x32xf32>
    %24 = vector.extract_strided_slice %16 {offsets = [0, 32], sizes = [16, 32], strides = [1, 1]} : vector<16x64xf32> to vector<16x32xf32>
    %25 = vector.shape_cast %23 : vector<16x32xf32> to vector<2x8x4x8xf32>
    %26 = tpu.transpose %25, [0, 2, 1, 3] : vector<2x8x4x8xf32> -> vector<2x4x8x8xf32>
    %27 = vector.shape_cast %26 : vector<2x4x8x8xf32> to vector<8x8x8xf32>
    %28 = vector.shape_cast %24 : vector<16x32xf32> to vector<2x8x4x8xf32>
    %29 = tpu.transpose %28, [0, 2, 1, 3] : vector<2x8x4x8xf32> -> vector<2x4x8x8xf32>
    %30 = vector.shape_cast %29 : vector<2x4x8x8xf32> to vector<8x8x8xf32>
    %31 = vector.shape_cast %20 : vector<16x32xf32> to vector<2x8x4x8xf32>
    %32 = tpu.transpose %31, [0, 2, 1, 3] : vector<2x8x4x8xf32> -> vector<2x4x8x8xf32>
    %33 = vector.shape_cast %32 : vector<2x4x8x8xf32> to vector<8x8x8xf32>
    "tpu.trace_start"() <{level = 10 : i32, message = "bqd,bkd->bqk"}> : () -> ()
    %cst_11 = arith.constant dense<0.000000e+00> : vector<8x8x8xf32>
    %34 = tpu.matmul %27, %30, %cst_11 {dimension_numbers = #tpu.dot_dimension_numbers<[2], [2], [1], [1], [0, 0, 0, 1, 1, 1], [0], [0]>, precision = #tpu.contract_precision<fp32>} : vector<8x8x8xf32>, vector<8x8x8xf32>, vector<8x8x8xf32> -> vector<8x8x8xf32>
    "tpu.trace_stop"() : () -> ()
    %cst_12 = arith.constant dense<0xFF800000> : vector<8x8xf32>
    %35 = vector.multi_reduction <maximumf>, %34, %cst_12 [2] : vector<8x8x8xf32> to vector<8x8xf32>
    %36 = vector.shape_cast %35 : vector<8x8xf32> to vector<8x8x1xf32>
    %37 = vector.broadcast %36 : vector<8x8x1xf32> to vector<8x8x8xf32>
    %38 = arith.subf %34, %37 : vector<8x8x8xf32>
    %39 = math.exp %38 : vector<8x8x8xf32>
    %cst_13 = arith.constant dense<0.000000e+00> : vector<8x8xf32>
    %40 = vector.multi_reduction <add>, %39, %cst_13 [2] : vector<8x8x8xf32> to vector<8x8xf32>
    %41 = vector.shape_cast %40 : vector<8x8xf32> to vector<8x8x1xf32>
    %42 = tpu.reciprocal %41 : vector<8x8x1xf32> -> vector<8x8x1xf32>
    %43 = vector.broadcast %42 : vector<8x8x1xf32> to vector<8x8x8xf32>
    %44 = arith.mulf %39, %43 : vector<8x8x8xf32>
    "tpu.trace_start"() <{level = 10 : i32, message = "bqk,bkd->bqd"}> : () -> ()
    %cst_14 = arith.constant dense<0.000000e+00> : vector<8x8x8xf32>
    %45 = tpu.matmul %44, %33, %cst_14 {dimension_numbers = #tpu.dot_dimension_numbers<[2], [1], [1], [2], [0, 0, 0, 1, 1, 2], [0], [0]>, precision = #tpu.contract_precision<fp32>} : vector<8x8x8xf32>, vector<8x8x8xf32>, vector<8x8x8xf32> -> vector<8x8x8xf32>
    "tpu.trace_stop"() : () -> ()
    %46 = vector.shape_cast %45 : vector<8x8x8xf32> to vector<2x4x8x8xf32>
    %47 = tpu.transpose %46, [0, 2, 1, 3] : vector<2x4x8x8xf32> -> vector<2x8x4x8xf32>
    %48 = vector.shape_cast %47 : vector<2x8x4x8xf32> to vector<16x32xf32>
    %c0_15 = arith.constant 0 : index
    %c0_16 = arith.constant 0 : index
    %49 = vector.load %arg4[%c0_15, %c0_16] : memref<32x32xf32, #tpu.memory_space<vmem>>, vector<32x32xf32>
    %cst_17 = arith.constant dense<0.000000e+00> : vector<16x32xf32>
    %50 = tpu.matmul %48, %49, %cst_17 {dimension_numbers = #tpu.dot_dimension_numbers<[1], [0], [0], [1], [0, 0, 1, 1], [], []>, precision = #tpu.contract_precision<fp32>} : vector<16x32xf32>, vector<32x32xf32>, vector<16x32xf32> -> vector<16x32xf32>
    %51 = vector.broadcast %7 : vector<1x32xf32> to vector<16x32xf32>
    %52 = arith.addf %50, %51 : vector<16x32xf32>
    %53 = arith.addf %0, %52 : vector<16x32xf32>
    %cst_18 = arith.constant dense<0.000000e+00> : vector<16xf32>
    %54 = vector.multi_reduction <add>, %53, %cst_18 [1] : vector<16x32xf32> to vector<16xf32>
    %55 = vector.shape_cast %54 : vector<16xf32> to vector<16x1xf32>
    %cst_19 = arith.constant 3.200000e+01 : f32
    %56 = vector.broadcast %cst_19 : f32 to vector<16x1xf32>
    %57 = arith.divf %55, %56 : vector<16x1xf32>
    %58 = vector.broadcast %57 : vector<16x1xf32> to vector<16x32xf32>
    %59 = arith.subf %53, %58 : vector<16x32xf32>
    %60 = arith.mulf %59, %59 : vector<16x32xf32>
    %cst_20 = arith.constant dense<0.000000e+00> : vector<16xf32>
    %61 = vector.multi_reduction <add>, %60, %cst_20 [1] : vector<16x32xf32> to vector<16xf32>
    %62 = vector.shape_cast %61 : vector<16xf32> to vector<16x1xf32>
    %cst_21 = arith.constant 3.200000e+01 : f32
    %63 = vector.broadcast %cst_21 : f32 to vector<16x1xf32>
    %64 = arith.divf %62, %63 : vector<16x1xf32>
    %65 = vector.broadcast %57 : vector<16x1xf32> to vector<16x32xf32>
    %66 = arith.subf %53, %65 : vector<16x32xf32>
    %cst_22 = arith.constant 9.99999974E-6 : f32
    %67 = vector.broadcast %cst_22 : f32 to vector<16x1xf32>
    %68 = arith.addf %64, %67 : vector<16x1xf32>
    %69 = math.rsqrt %68 : vector<16x1xf32>
    %70 = vector.broadcast %69 : vector<16x1xf32> to vector<16x32xf32>
    %71 = arith.mulf %66, %70 : vector<16x32xf32>
    %72 = vector.broadcast %9 : vector<1x32xf32> to vector<16x32xf32>
    %73 = arith.mulf %71, %72 : vector<16x32xf32>
    %74 = vector.broadcast %10 : vector<1x32xf32> to vector<16x32xf32>
    %75 = arith.addf %73, %74 : vector<16x32xf32>
    %c0_23 = arith.constant 0 : index
    %c0_24 = arith.constant 0 : index
    %76 = vector.load %arg5[%c0_23, %c0_24] : memref<32x64xf32, #tpu.memory_space<vmem>>, vector<32x64xf32>
    %cst_25 = arith.constant dense<0.000000e+00> : vector<16x64xf32>
    %77 = tpu.matmul %75, %76, %cst_25 {dimension_numbers = #tpu.dot_dimension_numbers<[1], [0], [0], [1], [0, 0, 1, 1], [], []>, precision = #tpu.contract_precision<fp32>} : vector<16x32xf32>, vector<32x64xf32>, vector<16x64xf32> -> vector<16x64xf32>
    %78 = vector.broadcast %5 : vector<1x64xf32> to vector<16x64xf32>
    %79 = arith.addf %77, %78 : vector<16x64xf32>
    %cst_26 = arith.constant 0.000000e+00 : f32
    %80 = vector.broadcast %cst_26 : f32 to vector<16x64xf32>
    %81 = arith.maximumf %79, %80 : vector<16x64xf32>
    %c0_27 = arith.constant 0 : index
    %c0_28 = arith.constant 0 : index
    %82 = vector.load %arg6[%c0_27, %c0_28] : memref<64x32xf32, #tpu.memory_space<vmem>>, vector<64x32xf32>
    %cst_29 = arith.constant dense<0.000000e+00> : vector<16x32xf32>
    %83 = tpu.matmul %81, %82, %cst_29 {dimension_numbers = #tpu.dot_dimension_numbers<[1], [0], [0], [1], [0, 0, 1, 1], [], []>, precision = #tpu.contract_precision<fp32>} : vector<16x64xf32>, vector<64x32xf32>, vector<16x32xf32> -> vector<16x32xf32>
    %84 = vector.broadcast %8 : vector<1x32xf32> to vector<16x32xf32>
    %85 = arith.addf %83, %84 : vector<16x32xf32>
    %86 = arith.addf %75, %85 : vector<16x32xf32>
    %cst_30 = arith.constant dense<0.000000e+00> : vector<16xf32>
    %87 = vector.multi_reduction <add>, %86, %cst_30 [1] : vector<16x32xf32> to vector<16xf32>
    %88 = vector.shape_cast %87 : vector<16xf32> to vector<16x1xf32>
    %cst_31 = arith.constant 3.200000e+01 : f32
    %89 = vector.broadcast %cst_31 : f32 to vector<16x1xf32>
    %90 = arith.divf %88, %89 : vector<16x1xf32>
    %91 = vector.broadcast %90 : vector<16x1xf32> to vector<16x32xf32>
    %92 = arith.subf %86, %91 : vector<16x32xf32>
    %93 = arith.mulf %92, %92 : vector<16x32xf32>
    %cst_32 = arith.constant dense<0.000000e+00> : vector<16xf32>
    %94 = vector.multi_reduction <add>, %93, %cst_32 [1] : vector<16x32xf32> to vector<16xf32>
    %95 = vector.shape_cast %94 : vector<16xf32> to vector<16x1xf32>
    %cst_33 = arith.constant 3.200000e+01 : f32
    %96 = vector.broadcast %cst_33 : f32 to vector<16x1xf32>
    %97 = arith.divf %95, %96 : vector<16x1xf32>
    %98 = vector.broadcast %90 : vector<16x1xf32> to vector<16x32xf32>
    %99 = arith.subf %86, %98 : vector<16x32xf32>
    %cst_34 = arith.constant 9.99999974E-6 : f32
    %100 = vector.broadcast %cst_34 : f32 to vector<16x1xf32>
    %101 = arith.addf %97, %100 : vector<16x1xf32>
    %102 = math.rsqrt %101 : vector<16x1xf32>
    %103 = vector.broadcast %102 : vector<16x1xf32> to vector<16x32xf32>
    %104 = arith.mulf %99, %103 : vector<16x32xf32>
    %105 = vector.broadcast %11 : vector<1x32xf32> to vector<16x32xf32>
    %106 = arith.mulf %104, %105 : vector<16x32xf32>
    %107 = vector.broadcast %12 : vector<1x32xf32> to vector<16x32xf32>
    %108 = arith.addf %106, %107 : vector<16x32xf32>
    %c0_35 = arith.constant 0 : index
    %c0_36 = arith.constant 0 : index
    %109 = vector.load %arg8[%c0_35, %c0_36] : memref<16x32xf32, #tpu.memory_space<vmem>>, vector<16x32xf32>
    tpu.vector_store %arg8[%c0_35, %c0_36], %108 {strides = array<i32>} : memref<16x32xf32, #tpu.memory_space<vmem>>, vector<16x32xf32>,
    return
  }
}

</mosaic_0001>

<llo_original>
// kernel: transformer_encoder_layer.1
$region0: #{transformer_encoder_layer.1}
  #allocation0 [shape = 'u32[]', space=smem, size = 0x4, offset = 0x4, fixed_abs, tag = 'smem constant byte address 0x4 - core index']
  #allocation1 [shape = 'u32[144,128]{1,0:T(1,128)}', space=vmem, size = 0x12000, scoped, tag = 'internal scratch']
  %s0 = inlined_call_operand.vmem [shape: f32[16,32], index: 0, kind: input, shape index: {}]
  %s1 = inlined_call_operand.vmem [shape: f32[16,32], index: 1, kind: input, shape index: {}]
  %s2 = inlined_call_operand.vmem [shape: f32[32,64], index: 2, kind: input, shape index: {}]
  %s3 = inlined_call_operand.vmem [shape: f32[32,32], index: 3, kind: input, shape index: {}]
  %s4 = inlined_call_operand.vmem [shape: f32[32,32], index: 4, kind: input, shape index: {}]
  %s5 = inlined_call_operand.vmem [shape: f32[32,64], index: 5, kind: input, shape index: {}]
  %s6 = inlined_call_operand.vmem [shape: f32[64,32], index: 6, kind: input, shape index: {}]
  %s7 = inlined_call_operand.vmem [shape: f32[8,64], index: 7, kind: input, shape index: {}]
  %s8 = inlined_call_operand.vmem [shape: f32[16,32], index: 8, kind: output, shape index: {}]
  %s9 = sld [smem:[#allocation0]]
  $region42: #{transformer_encoder_layer.1} parent=0
    _
  %s11 = ssub.s32 1, %s9
  %s12 = scalar_select 0, %s11, %s9
  // Predicated region
  $region2: #{transformer_encoder_layer.1} parent=0 // pred_check
    _
  $region3: #{transformer_encoder_layer.1} parent=0 // pred_check_branch
    %14 = sbr.rel (0) target = $region5
  $region4: #{transformer_encoder_layer.1} parent=0 // pred_region
    _
  $region5: #{transformer_encoder_layer.1} parent=0 // pred_fallthru
    _
  // Predicated region
  $region6: #{transformer_encoder_layer.1} parent=0 // pred_check
    _
  $region7: #{transformer_encoder_layer.1} parent=0 // pred_check_branch
    %16 = sbr.rel (0) target = $region9
  $region8: #{transformer_encoder_layer.1} parent=0 // pred_region
    _
  $region9: #{transformer_encoder_layer.1} parent=0 // pred_fallthru
    _
  // Predicated region
  $region10: #{transformer_encoder_layer.1} parent=0 // pred_check
    _
  $region11: #{transformer_encoder_layer.1} parent=0 // pred_check_branch
    %18 = sbr.rel (0) target = $region13
  $region12: #{transformer_encoder_layer.1} parent=0 // pred_region
    _
  $region13: #{transformer_encoder_layer.1} parent=0 // pred_fallthru
    _
  // Predicated region
  $region14: #{transformer_encoder_layer.1} parent=0 // pred_check
    _
  $region15: #{transformer_encoder_layer.1} parent=0 // pred_check_branch
    %20 = sbr.rel (0) target = $region17
  $region16: #{transformer_encoder_layer.1} parent=0 // pred_region
    _
  $region17: #{transformer_encoder_layer.1} parent=0 // pred_fallthru
    _
  // Predicated region
  $region18: #{transformer_encoder_layer.1} parent=0 // pred_check
    _
  $region19: #{transformer_encoder_layer.1} parent=0 // pred_check_branch
    %22 = sbr.rel (0) target = $region21
  $region20: #{transformer_encoder_layer.1} parent=0 // pred_region
    _
  $region21: #{transformer_encoder_layer.1} parent=0 // pred_fallthru
    _
  // Predicated region
  $region22: #{transformer_encoder_layer.1} parent=0 // pred_check
    _
  $region23: #{transformer_encoder_layer.1} parent=0 // pred_check_branch
    %24 = sbr.rel (0) target = $region25
  $region24: #{transformer_encoder_layer.1} parent=0 // pred_region
    _
  $region25: #{transformer_encoder_layer.1} parent=0 // pred_fallthru
    _
  // Predicated region
  $region26: #{transformer_encoder_layer.1} parent=0 // pred_check
    _
  $region27: #{transformer_encoder_layer.1} parent=0 // pred_check_branch
    %26 = sbr.rel (0) target = $region29
  $region28: #{transformer_encoder_layer.1} parent=0 // pred_region
    _
  $region29: #{transformer_encoder_layer.1} parent=0 // pred_fallthru
    _
  // Predicated region
  $region30: #{transformer_encoder_layer.1} parent=0 // pred_check
    _
  $region31: #{transformer_encoder_layer.1} parent=0 // pred_check_branch
    %28 = sbr.rel (0) target = $region33
  $region32: #{transformer_encoder_layer.1} parent=0 // pred_region
    _
  $region33: #{transformer_encoder_layer.1} parent=0 // pred_fallthru
    _
  %v29 = vld [vmem:[%s0] sm:$0xff]
  %v30 = vld [vmem:[%s0 + $0x8] sm:$0xff]
  %v31 = vld [vmem:[%s1] sm:$0xff]
  %v32 = vld [vmem:[%s1 + $0x8] sm:$0xff]
  %v33 = vadd.f32 %v29, %v31
  %v34 = vadd.f32 %v30, %v32
  %v35 = vld [vmem:[%s7] sm:$0xff]
  %v36 = vld [vmem:[%s2] sm:$0xff]
  %v37 = vld [vmem:[%s2 + $0x8] sm:$0xff]
  %v38 = vld [vmem:[%s2 + $0x10] sm:$0xff]
  %v39 = vld [vmem:[%s2 + $0x18] sm:$0xff]
  %v40 = vlaneseq
  %v41 = vshrl.u32 %v40, 7
  %v42 = vsub.s32 0, %v41
  %v43 = vrot.slane %v35, %v42
  %vm44 = vcmask 261120
  %v46 = vsel %vm44, %v33, 0
  %v49 = vsel %vm44, %v34, 0
  %51 = vmatprep.subr.mxu0 0.0
  %v52 = vand.u32 %v36, 4294901760
  %53 = vmatpush1.msra.mxu0 %v52
  %54 = vmatprep.subr.mxu0 0.0
  %v55 = vand.u32 %v37, 4294901760
  %56 = vmatpush1.msra.mxu0 %v55
  %57 = vmatprep.subr.mxu0 0.0
  %v58 = vand.u32 %v38, 4294901760
  %59 = vmatpush1.msra.mxu0 %v58
  %60 = vmatprep.subr.mxu0 0.0
  %v61 = vand.u32 %v39, 4294901760
  %62 = vmatpush1.msra.mxu0 %v61
  %63 = vmatprep.subr.mxu0 0.0
  %64 = vmatpush1.msra.mxu0 0.0
  %65 = vmatprep.subr.mxu0 0.0
  %66 = vmatpush1.msra.mxu0 0.0
  %67 = vmatprep.subr.mxu0 0.0
  %68 = vmatpush1.msra.mxu0 0.0
  %69 = vmatprep.subr.mxu0 0.0
  %70 = vmatpush1.msra.mxu0 0.0
  %71 = vmatprep.subr.mxu0 0.0
  %72 = vmatpush1.msra.mxu0 0.0
  %73 = vmatprep.subr.mxu0 0.0
  %74 = vmatpush1.msra.mxu0 0.0
  %75 = vmatprep.subr.mxu0 0.0
  %76 = vmatpush1.msra.mxu0 0.0
  %77 = vmatprep.subr.mxu0 0.0
  %78 = vmatpush1.msra.mxu0 0.0
  %79 = vmatprep.subr.mxu0 0.0
  %80 = vmatpush1.msra.mxu0 0.0
  %81 = vmatprep.subr.mxu0 0.0
  %82 = vmatpush1.msra.mxu0 0.0
  %83 = vmatprep.subr.mxu0 0.0
  %84 = vmatpush1.msra.mxu0 0.0
  %85 = vmatprep.subr.mxu0 0.0
  %86 = vmatpush1.msra.mxu0 0.0
  %87 = vmatprep.subr.mxu0 0.0
  %88 = vmatpush1.msra.mxu0 0.0
  %89 = vmatprep.subr.mxu0 0.0
  %90 = vmatpush1.msra.mxu0 0.0
  %91 = vmatprep.subr.mxu0 0.0
  %92 = vmatpush1.msra.mxu0 0.0
  %93 = vmatprep.subr.mxu0 0.0
  %94 = vmatpush1.msra.mxu0 0.0
  %95 = vmatprep.subr.mxu0 0.0
  %96 = vmatpush1.msra.mxu0 0.0
  %97 = vmatprep.subr.mxu0 0.0
  %98 = vmatpush1.msra.mxu0 0.0
  %99 = vmatprep.subr.mxu0 0.0
  %100 = vmatpush1.msra.mxu0 0.0
  %101 = vmatprep.subr.mxu0 0.0
  %102 = vmatpush1.msra.mxu0 0.0
  %103 = vmatprep.subr.mxu0 0.0
  %104 = vmatpush1.msra.mxu0 0.0
  %105 = vmatprep.subr.mxu0 0.0
  %106 = vmatpush1.msra.mxu0 0.0
  %107 = vmatprep.subr.mxu0 0.0
  %108 = vmatpush1.msra.mxu0 0.0
  %109 = vmatprep.subr.mxu0 0.0
  %110 = vmatpush1.msra.mxu0 0.0
  %111 = vmatprep.subr.mxu0 0.0
  %112 = vmatpush1.msra.mxu0 0.0
  %113 = vmatprep.subr.mxu0 0.0
  %114 = vmatpush1.msra.mxu0 0.0
  %115 = vmatprep.subr.mxu0 0.0
  %116 = vmatpush1.msra.mxu0 0.0
  %117 = vmatprep.subr.mxu0 0.0
  %118 = vmatpush1.msra.mxu0 0.0
  %119 = vmatprep.mubr.f32.mxu0 0.0
  %v120 = vand.u32 %v46, 4294901760
  %v121 = vsub.f32 %v46, %v120
  %v122 = vand.u32 %v121, 4294901760
  %v123 = vsub.f32 %v121, %v122
  %v124 = vand.u32 %v123, 4294901760
  %125 = vmatmul.mubr.f32.gmra.mrb[0].mxu0 %v124
  %v126 = vpop.f32.mrb[0].mxu0
  %v127 = vadd.f32 %v43, %v126
  %v128 = vpop.f32.mrb[0].mxu0
  %129 = vmatprep.mubr.f32.mxu0 0.0
  %v130 = vand.u32 %v49, 4294901760
  %v131 = vsub.f32 %v49, %v130
  %v132 = vand.u32 %v131, 4294901760
  %v133 = vsub.f32 %v131, %v132
  %v134 = vand.u32 %v133, 4294901760
  %135 = vmatmul.mubr.f32.gmra.mrb[0].mxu0 %v134
  %v136 = vpop.f32.mrb[0].mxu0
  %v137 = vadd.f32 %v43, %v136
  %v138 = vpop.f32.mrb[0].mxu0
  %139 = vdwg.mxu0
  %140 = vmatprep.subr.mxu0 0.0
  %v141 = vand.u32 %v36, 4294901760
  %v142 = vsub.f32 %v36, %v141
  %v143 = vand.u32 %v142, 4294901760
  %v144 = vsub.f32 %v142, %v143
  %v145 = vand.u32 %v144, 4294901760
  %146 = vmatpush1.msra.mxu0 %v145
  %147 = vmatprep.subr.mxu0 0.0
  %v148 = vand.u32 %v37, 4294901760
  %v149 = vsub.f32 %v37, %v148
  %v150 = vand.u32 %v149, 4294901760
  %v151 = vsub.f32 %v149, %v150
  %v152 = vand.u32 %v151, 4294901760
  %153 = vmatpush1.msra.mxu0 %v152
  %154 = vmatprep.subr.mxu0 0.0
  %v155 = vand.u32 %v38, 4294901760
  %v156 = vsub.f32 %v38, %v155
  %v157 = vand.u32 %v156, 4294901760
  %v158 = vsub.f32 %v156, %v157
  %v159 = vand.u32 %v158, 4294901760
  %160 = vmatpush1.msra.mxu0 %v159
  %161 = vmatprep.subr.mxu0 0.0
  %v162 = vand.u32 %v39, 4294901760
  %v163 = vsub.f32 %v39, %v162
  %v164 = vand.u32 %v163, 4294901760
  %v165 = vsub.f32 %v163, %v164
  %v166 = vand.u32 %v165, 4294901760
  %167 = vmatpush1.msra.mxu0 %v166
  %168 = vmatprep.subr.mxu0 0.0
  %169 = vmatpush1.msra.mxu0 0.0
  %170 = vmatprep.subr.mxu0 0.0
  %171 = vmatpush1.msra.mxu0 0.0
  %172 = vmatprep.subr.mxu0 0.0
  %173 = vmatpush1.msra.mxu0 0.0
  %174 = vmatprep.subr.mxu0 0.0
  %175 = vmatpush1.msra.mxu0 0.0
  %176 = vmatprep.subr.mxu0 0.0
  %177 = vmatpush1.msra.mxu0 0.0
  %178 = vmatprep.subr.mxu0 0.0
  %179 = vmatpush1.msra.mxu0 0.0
  %180 = vmatprep.subr.mxu0 0.0
  %181 = vmatpush1.msra.mxu0 0.0
  %182 = vmatprep.subr.mxu0 0.0
  %183 = vmatpush1.msra.mxu0 0.0
  %184 = vmatprep.subr.mxu0 0.0
  %185 = vmatpush1.msra.mxu0 0.0
  %186 = vmatprep.subr.mxu0 0.0
  %187 = vmatpush1.msra.mxu0 0.0
  %188 = vmatprep.subr.mxu0 0.0
  %189 = vmatpush1.msra.mxu0 0.0
  %190 = vmatprep.subr.mxu0 0.0
  %191 = vmatpush1.msra.mxu0 0.0
  %192 = vmatprep.subr.mxu0 0.0
  %193 = vmatpush1.msra.mxu0 0.0
  %194 = vmatprep.subr.mxu0 0.0
  %195 = vmatpush1.msra.mxu0 0.0
  %196 = vmatprep.subr.mxu0 0.0
  %197 = vmatpush1.msra.mxu0 0.0
  %198 = vmatprep.subr.mxu0 0.0
  %199 = vmatpush1.msra.mxu0 0.0
  %200 = vmatprep.subr.mxu0 0.0
  %201 = vmatpush1.msra.mxu0 0.0
  %202 = vmatprep.subr.mxu0 0.0
  %203 = vmatpush1.msra.mxu0 0.0
  %204 = vmatprep.subr.mxu0 0.0
  %205 = vmatpush1.msra.mxu0 0.0
  %206 = vmatprep.subr.mxu0 0.0
  %207 = vmatpush1.msra.mxu0 0.0
  %208 = vmatprep.subr.mxu0 0.0
  %209 = vmatpush1.msra.mxu0 0.0
  %210 = vmatprep.subr.mxu0 0.0
  %211 = vmatpush1.msra.mxu0 0.0
  %212 = vmatprep.subr.mxu0 0.0
  %213 = vmatpush1.msra.mxu0 0.0
  %214 = vmatprep.subr.mxu0 0.0
  %215 = vmatpush1.msra.mxu0 0.0
  %216 = vmatprep.subr.mxu0 0.0
  %217 = vmatpush1.msra.mxu0 0.0
  %218 = vmatprep.subr.mxu0 0.0
  %219 = vmatpush1.msra.mxu0 0.0
  %220 = vmatprep.subr.mxu0 0.0
  %221 = vmatpush1.msra.mxu0 0.0
  %222 = vmatprep.subr.mxu0 0.0
  %223 = vmatpush1.msra.mxu0 0.0
  %224 = vmatprep.mubr.f32.mxu0 0.0
  %v225 = vand.u32 %v46, 4294901760
  %226 = vmatmul.mubr.f32.gmra.mrb[0].mxu0 %v225
  %v227 = vpop.f32.mrb[0].mxu0
  %v228 = vadd.f32 %v127, %v227
  %v229 = vpop.f32.mrb[0].mxu0
  %230 = vmatprep.mubr.f32.mxu0 0.0
  %v231 = vand.u32 %v49, 4294901760
  %232 = vmatmul.mubr.f32.gmra.mrb[0].mxu0 %v231
  %v233 = vpop.f32.mrb[0].mxu0
  %v234 = vadd.f32 %v137, %v233
  %v235 = vpop.f32.mrb[0].mxu0
  %236 = vdwg.mxu0
  %237 = vmatprep.subr.mxu0 0.0
  %v238 = vand.u32 %v36, 4294901760
  %v239 = vsub.f32 %v36, %v238
  %240 = vmatpush1.msra.mxu0 %v239
  %241 = vmatprep.subr.mxu0 0.0
  %v242 = vand.u32 %v37, 4294901760
  %v243 = vsub.f32 %v37, %v242
  %244 = vmatpush1.msra.mxu0 %v243
  %245 = vmatprep.subr.mxu0 0.0
  %v246 = vand.u32 %v38, 4294901760
  %v247 = vsub.f32 %v38, %v246
  %248 = vmatpush1.msra.mxu0 %v247
  %249 = vmatprep.subr.mxu0 0.0
  %v250 = vand.u32 %v39, 4294901760
  %v251 = vsub.f32 %v39, %v250
  %252 = vmatpush1.msra.mxu0 %v251
  %253 = vmatprep.subr.mxu0 0.0
  %254 = vmatpush1.msra.mxu0 0.0
  %255 = vmatprep.subr.mxu0 0.0
  %256 = vmatpush1.msra.mxu0 0.0
  %257 = vmatprep.subr.mxu0 0.0
  %258 = vmatpush1.msra.mxu0 0.0
  %259 = vmatprep.subr.mxu0 0.0
  %260 = vmatpush1.msra.mxu0 0.0
  %261 = vmatprep.subr.mxu0 0.0
  %262 = vmatpush1.msra.mxu0 0.0
  %263 = vmatprep.subr.mxu0 0.0
  %264 = vmatpush1.msra.mxu0 0.0
  %265 = vmatprep.subr.mxu0 0.0
  %266 = vmatpush1.msra.mxu0 0.0
  %267 = vmatprep.subr.mxu0 0.0
  %268 = vmatpush1.msra.mxu0 0.0
  %269 = vmatprep.subr.mxu0 0.0
  %270 = vmatpush1.msra.mxu0 0.0
  %271 = vmatprep.subr.mxu0 0.0
  %272 = vmatpush1.msra.mxu0 0.0
  %273 = vmatprep.subr.mxu0 0.0
  %274 = vmatpush1.msra.mxu0 0.0
  %275 = vmatprep.subr.mxu0 0.0
  %276 = vmatpush1.msra.mxu0 0.0
  %277 = vmatprep.subr.mxu0 0.0
  %278 = vmatpush1.msra.mxu0 0.0
  %279 = vmatprep.subr.mxu0 0.0
  %280 = vmatpush1.msra.mxu0 0.0
  %281 = vmatprep.subr.mxu0 0.0
  %282 = vmatpush1.msra.mxu0 0.0
  %283 = vmatprep.subr.mxu0 0.0
  %284 = vmatpush1.msra.mxu0 0.0
  %285 = vmatprep.subr.mxu0 0.0
  %286 = vmatpush1.msra.mxu0 0.0
  %287 = vmatprep.subr.mxu0 0.0
  %288 = vmatpush1.msra.mxu0 0.0
  %289 = vmatprep.subr.mxu0 0.0
  %290 = vmatpush1.msra.mxu0 0.0
  %291 = vmatprep.subr.mxu0 0.0
  %292 = vmatpush1.msra.mxu0 0.0
  %293 = vmatprep.subr.mxu0 0.0
  %294 = vmatpush1.msra.mxu0 0.0
  %295 = vmatprep.subr.mxu0 0.0
  %296 = vmatpush1.msra.mxu0 0.0
  %297 = vmatprep.subr.mxu0 0.0
  %298 = vmatpush1.msra.mxu0 0.0
  %299 = vmatprep.subr.mxu0 0.0
  %300 = vmatpush1.msra.mxu0 0.0
  %301 = vmatprep.subr.mxu0 0.0
  %302 = vmatpush1.msra.mxu0 0.0
  %303 = vmatprep.subr.mxu0 0.0
  %304 = vmatpush1.msra.mxu0 0.0
  %305 = vmatprep.subr.mxu0 0.0
  %306 = vmatpush1.msra.mxu0 0.0
  %307 = vmatprep.subr.mxu0 0.0
  %308 = vmatpush1.msra.mxu0 0.0
  %309 = vmatprep.mubr.f32.mxu0 0.0
  %v310 = vand.u32 %v46, 4294901760
  %v311 = vsub.f32 %v46, %v310
  %312 = vmatmul.mubr.f32.gmra.mrb[0].mxu0 %v311
  %v313 = vpop.f32.mrb[0].mxu0
  %v314 = vadd.f32 %v228, %v313
  %v315 = vpop.f32.mrb[0].mxu0
  %316 = vmatprep.mubr.f32.mxu0 0.0
  %v317 = vand.u32 %v49, 4294901760
  %v318 = vsub.f32 %v49, %v317
  %319 = vmatmul.mubr.f32.gmra.mrb[0].mxu0 %v318
  %v320 = vpop.f32.mrb[0].mxu0
  %v321 = vadd.f32 %v234, %v320
  %v322 = vpop.f32.mrb[0].mxu0
  %323 = vdwg.mxu0
  %324 = vmatprep.subr.mxu0 0.0
  %v325 = vand.u32 %v36, 4294901760
  %326 = vmatpush1.msra.mxu0 %v325
  %327 = vmatprep.subr.mxu0 0.0
  %v328 = vand.u32 %v37, 4294901760
  %329 = vmatpush1.msra.mxu0 %v328
  %330 = vmatprep.subr.mxu0 0.0
  %v331 = vand.u32 %v38, 4294901760
  %332 = vmatpush1.msra.mxu0 %v331
  %333 = vmatprep.subr.mxu0 0.0
  %v334 = vand.u32 %v39, 4294901760
  %335 = vmatpush1.msra.mxu0 %v334
  %336 = vmatprep.subr.mxu0 0.0
  %337 = vmatpush1.msra.mxu0 0.0
  %338 = vmatprep.subr.mxu0 0.0
  %339 = vmatpush1.msra.mxu0 0.0
  %340 = vmatprep.subr.mxu0 0.0
  %341 = vmatpush1.msra.mxu0 0.0
  %342 = vmatprep.subr.mxu0 0.0
  %343 = vmatpush1.msra.mxu0 0.0
  %344 = vmatprep.subr.mxu0 0.0
  %345 = vmatpush1.msra.mxu0 0.0
  %346 = vmatprep.subr.mxu0 0.0
  %347 = vmatpush1.msra.mxu0 0.0
  %348 = vmatprep.subr.mxu0 0.0
  %349 = vmatpush1.msra.mxu0 0.0
  %350 = vmatprep.subr.mxu0 0.0
  %351 = vmatpush1.msra.mxu0 0.0
  %352 = vmatprep.subr.mxu0 0.0
  %353 = vmatpush1.msra.mxu0 0.0
  %354 = vmatprep.subr.mxu0 0.0
  %355 = vmatpush1.msra.mxu0 0.0
  %356 = vmatprep.subr.mxu0 0.0
  %357 = vmatpush1.msra.mxu0 0.0
  %358 = vmatprep.subr.mxu0 0.0
  %359 = vmatpush1.msra.mxu0 0.0
  %360 = vmatprep.subr.mxu0 0.0
  %361 = vmatpush1.msra.mxu0 0.0
  %362 = vmatprep.subr.mxu0 0.0
  %363 = vmatpush1.msra.mxu0 0.0
  %364 = vmatprep.subr.mxu0 0.0
  %365 = vmatpush1.msra.mxu0 0.0
  %366 = vmatprep.subr.mxu0 0.0
  %367 = vmatpush1.msra.mxu0 0.0
  %368 = vmatprep.subr.mxu0 0.0
  %369 = vmatpush1.msra.mxu0 0.0
  %370 = vmatprep.subr.mxu0 0.0
  %371 = vmatpush1.msra.mxu0 0.0
  %372 = vmatprep.subr.mxu0 0.0
  %373 = vmatpush1.msra.mxu0 0.0
  %374 = vmatprep.subr.mxu0 0.0
  %375 = vmatpush1.msra.mxu0 0.0
  %376 = vmatprep.subr.mxu0 0.0
  %377 = vmatpush1.msra.mxu0 0.0
  %378 = vmatprep.subr.mxu0 0.0
  %379 = vmatpush1.msra.mxu0 0.0
  %380 = vmatprep.subr.mxu0 0.0
  %381 = vmatpush1.msra.mxu0 0.0
  %382 = vmatprep.subr.mxu0 0.0
  %383 = vmatpush1.msra.mxu0 0.0
  %384 = vmatprep.subr.mxu0 0.0
  %385 = vmatpush1.msra.mxu0 0.0
  %386 = vmatprep.subr.mxu0 0.0
  %387 = vmatpush1.msra.mxu0 0.0
  %388 = vmatprep.subr.mxu0 0.0
  %389 = vmatpush1.msra.mxu0 0.0
  %390 = vmatprep.subr.mxu0 0.0
  %391 = vmatpush1.msra.mxu0 0.0
  %392 = vmatprep.mubr.f32.mxu0 0.0
  %v393 = vand.u32 %v46, 4294901760
  %v394 = vsub.f32 %v46, %v393
  %v395 = vand.u32 %v394, 4294901760
  %396 = vmatmul.mubr.f32.gmra.mrb[0].mxu0 %v395
  %v397 = vpop.f32.mrb[0].mxu0
  %v398 = vadd.f32 %v314, %v397
  %v399 = vpop.f32.mrb[0].mxu0
  %400 = vmatprep.mubr.f32.mxu0 0.0
  %v401 = vand.u32 %v49, 4294901760
  %v402 = vsub.f32 %v49, %v401
  %v403 = vand.u32 %v402, 4294901760
  %404 = vmatmul.mubr.f32.gmra.mrb[0].mxu0 %v403
  %v405 = vpop.f32.mrb[0].mxu0
  %v406 = vadd.f32 %v321, %v405
  %v407 = vpop.f32.mrb[0].mxu0
  %408 = vdwg.mxu0
  %409 = vmatprep.subr.mxu0 0.0
  %v410 = vand.u32 %v36, 4294901760
  %v411 = vsub.f32 %v36, %v410
  %v412 = vand.u32 %v411, 4294901760
  %413 = vmatpush1.msra.mxu0 %v412
  %414 = vmatprep.subr.mxu0 0.0
  %v415 = vand.u32 %v37, 4294901760
  %v416 = vsub.f32 %v37, %v415
  %v417 = vand.u32 %v416, 4294901760
  %418 = vmatpush1.msra.mxu0 %v417
  %419 = vmatprep.subr.mxu0 0.0
  %v420 = vand.u32 %v38, 4294901760
  %v421 = vsub.f32 %v38, %v420
  %v422 = vand.u32 %v421, 4294901760
  %423 = vmatpush1.msra.mxu0 %v422
  %424 = vmatprep.subr.mxu0 0.0
  %v425 = vand.u32 %v39, 4294901760
  %v426 = vsub.f32 %v39, %v425
  %v427 = vand.u32 %v426, 4294901760
  %428 = vmatpush1.msra.mxu0 %v427
  %429 = vmatprep.subr.mxu0 0.0
  %430 = vmatpush1.msra.mxu0 0.0
  %431 = vmatprep.subr.mxu0 0.0
  %432 = vmatpush1.msra.mxu0 0.0
  %433 = vmatprep.subr.mxu0 0.0
  %434 = vmatpush1.msra.mxu0 0.0
  %435 = vmatprep.subr.mxu0 0.0
  %436 = vmatpush1.msra.mxu0 0.0
  %437 = vmatprep.subr.mxu0 0.0
  %438 = vmatpush1.msra.mxu0 0.0
  %439 = vmatprep.subr.mxu0 0.0
  %440 = vmatpush1.msra.mxu0 0.0
  %441 = vmatprep.subr.mxu0 0.0
  %442 = vmatpush1.msra.mxu0 0.0
  %443 = vmatprep.subr.mxu0 0.0
  %444 = vmatpush1.msra.mxu0 0.0
  %445 = vmatprep.subr.mxu0 0.0
  %446 = vmatpush1.msra.mxu0 0.0
  %447 = vmatprep.subr.mxu0 0.0
  %448 = vmatpush1.msra.mxu0 0.0
  %449 = vmatprep.subr.mxu0 0.0
  %450 = vmatpush1.msra.mxu0 0.0
  %451 = vmatprep.subr.mxu0 0.0
  %452 = vmatpush1.msra.mxu0 0.0
  %453 = vmatprep.subr.mxu0 0.0
  %454 = vmatpush1.msra.mxu0 0.0
  %455 = vmatprep.subr.mxu0 0.0
  %456 = vmatpush1.msra.mxu0 0.0
  %457 = vmatprep.subr.mxu0 0.0
  %458 = vmatpush1.msra.mxu0 0.0
  %459 = vmatprep.subr.mxu0 0.0
  %460 = vmatpush1.msra.mxu0 0.0
  %461 = vmatprep.subr.mxu0 0.0
  %462 = vmatpush1.msra.mxu0 0.0
  %463 = vmatprep.subr.mxu0 0.0
  %464 = vmatpush1.msra.mxu0 0.0
  %465 = vmatprep.subr.mxu0 0.0
  %466 = vmatpush1.msra.mxu0 0.0
  %467 = vmatprep.subr.mxu0 0.0
  %468 = vmatpush1.msra.mxu0 0.0
  %469 = vmatprep.subr.mxu0 0.0
  %470 = vmatpush1.msra.mxu0 0.0
  %471 = vmatprep.subr.mxu0 0.0
  %472 = vmatpush1.msra.mxu0 0.0
  %473 = vmatprep.subr.mxu0 0.0
  %474 = vmatpush1.msra.mxu0 0.0
  %475 = vmatprep.subr.mxu0 0.0
  %476 = vmatpush1.msra.mxu0 0.0
  %477 = vmatprep.subr.mxu0 0.0
  %478 = vmatpush1.msra.mxu0 0.0
  %479 = vmatprep.subr.mxu0 0.0
  %480 = vmatpush1.msra.mxu0 0.0
  %481 = vmatprep.subr.mxu0 0.0
  %482 = vmatpush1.msra.mxu0 0.0
  %483 = vmatprep.subr.mxu0 0.0
  %484 = vmatpush1.msra.mxu0 0.0
  %485 = vmatprep.mubr.f32.mxu0 0.0
  %v486 = vand.u32 %v46, 4294901760
  %487 = vmatmul.mubr.f32.gmra.mrb[0].mxu0 %v486
  %v488 = vpop.f32.mrb[0].mxu0
  %v489 = vadd.f32 %v398, %v488
  %v490 = vpop.f32.mrb[0].mxu0
  %491 = vmatprep.mubr.f32.mxu0 0.0
  %v492 = vand.u32 %v49, 4294901760
  %493 = vmatmul.mubr.f32.gmra.mrb[0].mxu0 %v492
  %v494 = vpop.f32.mrb[0].mxu0
  %v495 = vadd.f32 %v406, %v494
  %v496 = vpop.f32.mrb[0].mxu0
  %497 = vdwg.mxu0
  %498 = vmatprep.subr.mxu0 0.0
  %v499 = vand.u32 %v36, 4294901760
  %500 = vmatpush1.msra.mxu0 %v499
  %501 = vmatprep.subr.mxu0 0.0
  %v502 = vand.u32 %v37, 4294901760
  %503 = vmatpush1.msra.mxu0 %v502
  %504 = vmatprep.subr.mxu0 0.0
  %v505 = vand.u32 %v38, 4294901760
  %506 = vmatpush1.msra.mxu0 %v505
  %507 = vmatprep.subr.mxu0 0.0
  %v508 = vand.u32 %v39, 4294901760
  %509 = vmatpush1.msra.mxu0 %v508
  %510 = vmatprep.subr.mxu0 0.0
  %511 = vmatpush1.msra.mxu0 0.0
  %512 = vmatprep.subr.mxu0 0.0
  %513 = vmatpush1.msra.mxu0 0.0
  %514 = vmatprep.subr.mxu0 0.0
  %515 = vmatpush1.msra.mxu0 0.0
  %516 = vmatprep.subr.mxu0 0.0
  %517 = vmatpush1.msra.mxu0 0.0
  %518 = vmatprep.subr.mxu0 0.0
  %519 = vmatpush1.msra.mxu0 0.0
  %520 = vmatprep.subr.mxu0 0.0
  %521 = vmatpush1.msra.mxu0 0.0
  %522 = vmatprep.subr.mxu0 0.0
  %523 = vmatpush1.msra.mxu0 0.0
  %524 = vmatprep.subr.mxu0 0.0
  %525 = vmatpush1.msra.mxu0 0.0
  %526 = vmatprep.subr.mxu0 0.0
  %527 = vmatpush1.msra.mxu0 0.0
  %528 = vmatprep.subr.mxu0 0.0
  %529 = vmatpush1.msra.mxu0 0.0
  %530 = vmatprep.subr.mxu0 0.0
  %531 = vmatpush1.msra.mxu0 0.0
  %532 = vmatprep.subr.mxu0 0.0
  %533 = vmatpush1.msra.mxu0 0.0
  %534 = vmatprep.subr.mxu0 0.0
  %535 = vmatpush1.msra.mxu0 0.0
  %536 = vmatprep.subr.mxu0 0.0
  %537 = vmatpush1.msra.mxu0 0.0
  %538 = vmatprep.subr.mxu0 0.0
  %539 = vmatpush1.msra.mxu0 0.0
  %540 = vmatprep.subr.mxu0 0.0
  %541 = vmatpush1.msra.mxu0 0.0
  %542 = vmatprep.subr.mxu0 0.0
  %543 = vmatpush1.msra.mxu0 0.0
  %544 = vmatprep.subr.mxu0 0.0
  %545 = vmatpush1.msra.mxu0 0.0
  %546 = vmatprep.subr.mxu0 0.0
  %547 = vmatpush1.msra.mxu0 0.0
  %548 = vmatprep.subr.mxu0 0.0
  %549 = vmatpush1.msra.mxu0 0.0
  %550 = vmatprep.subr.mxu0 0.0
  %551 = vmatpush1.msra.mxu0 0.0
  %552 = vmatprep.subr.mxu0 0.0
  %553 = vmatpush1.msra.mxu0 0.0
  %554 = vmatprep.subr.mxu0 0.0
  %555 = vmatpush1.msra.mxu0 0.0
  %556 = vmatprep.subr.mxu0 0.0
  %557 = vmatpush1.msra.mxu0 0.0
  %558 = vmatprep.subr.mxu0 0.0
  %559 = vmatpush1.msra.mxu0 0.0
  %560 = vmatprep.subr.mxu0 0.0
  %561 = vmatpush1.msra.mxu0 0.0
  %562 = vmatprep.subr.mxu0 0.0
  %563 = vmatpush1.msra.mxu0 0.0
  %564 = vmatprep.subr.mxu0 0.0
  %565 = vmatpush1.msra.mxu0 0.0
  %566 = vmatprep.mubr.f32.mxu0 0.0
  %v567 = vand.u32 %v46, 4294901760
  %568 = vmatmul.mubr.f32.gmra.mrb[0].mxu0 %v567
  %v569 = vpop.f32.mrb[0].mxu0
  %v570 = vadd.f32 %v489, %v569
  %v571 = vpop.f32.mrb[0].mxu0
  %572 = vmatprep.mubr.f32.mxu0 0.0
  %v573 = vand.u32 %v49, 4294901760
  %574 = vmatmul.mubr.f32.gmra.mrb[0].mxu0 %v573
  %v575 = vpop.f32.mrb[0].mxu0
  %v576 = vadd.f32 %v495, %v575
  %v577 = vpop.f32.mrb[0].mxu0
  %578 = vdwg.mxu0
  %v579 = vld [vmem:[%s3] sm:$0xff]
  %v580 = vld [vmem:[%s3 + $0x8] sm:$0xff]
  %v581 = vld [vmem:[%s3 + $0x10] sm:$0xff]
  %v582 = vld [vmem:[%s3 + $0x18] sm:$0xff]
  %v583 = vlaneseq
  %v584 = vshrl.u32 %v583, 7
  %v585 = vsub.s32 2, %v584
  %v586 = vrot.slane %v35, %v585
  %v588 = vsel %vm44, %v29, 0
  %v591 = vsel %vm44, %v30, 0
  %593 = vmatprep.subr.mxu0 0.0
  %v594 = vand.u32 %v579, 4294901760
  %595 = vmatpush1.msra.mxu0 %v594
  %596 = vmatprep.subr.mxu0 0.0
  %v597 = vand.u32 %v580, 4294901760
  %598 = vmatpush1.msra.mxu0 %v597
  %599 = vmatprep.subr.mxu0 0.0
  %v600 = vand.u32 %v581, 4294901760
  %601 = vmatpush1.msra.mxu0 %v600
  %602 = vmatprep.subr.mxu0 0.0
  %v603 = vand.u32 %v582, 4294901760
  %604 = vmatpush1.msra.mxu0 %v603
  %605 = vmatprep.subr.mxu0 0.0
  %606 = vmatpush1.msra.mxu0 0.0
  %607 = vmatprep.subr.mxu0 0.0
  %608 = vmatpush1.msra.mxu0 0.0
  %609 = vmatprep.subr.mxu0 0.0
  %610 = vmatpush1.msra.mxu0 0.0
  %611 = vmatprep.subr.mxu0 0.0
  %612 = vmatpush1.msra.mxu0 0.0
  %613 = vmatprep.subr.mxu0 0.0
  %614 = vmatpush1.msra.mxu0 0.0
  %615 = vmatprep.subr.mxu0 0.0
  %616 = vmatpush1.msra.mxu0 0.0
  %617 = vmatprep.subr.mxu0 0.0
  %618 = vmatpush1.msra.mxu0 0.0
  %619 = vmatprep.subr.mxu0 0.0
  %620 = vmatpush1.msra.mxu0 0.0
  %621 = vmatprep.subr.mxu0 0.0
  %622 = vmatpush1.msra.mxu0 0.0
  %623 = vmatprep.subr.mxu0 0.0
  %624 = vmatpush1.msra.mxu0 0.0
  %625 = vmatprep.subr.mxu0 0.0
  %626 = vmatpush1.msra.mxu0 0.0
  %627 = vmatprep.subr.mxu0 0.0
  %628 = vmatpush1.msra.mxu0 0.0
  %629 = vmatprep.subr.mxu0 0.0
  %630 = vmatpush1.msra.mxu0 0.0
  %631 = vmatprep.subr.mxu0 0.0
  %632 = vmatpush1.msra.mxu0 0.0
  %633 = vmatprep.subr.mxu0 0.0
  %634 = vmatpush1.msra.mxu0 0.0
  %635 = vmatprep.subr.mxu0 0.0
  %636 = vmatpush1.msra.mxu0 0.0
  %637 = vmatprep.subr.mxu0 0.0
  %638 = vmatpush1.msra.mxu0 0.0
  %639 = vmatprep.subr.mxu0 0.0
  %640 = vmatpush1.msra.mxu0 0.0
  %641 = vmatprep.subr.mxu0 0.0
  %642 = vmatpush1.msra.mxu0 0.0
  %643 = vmatprep.subr.mxu0 0.0
  %644 = vmatpush1.msra.mxu0 0.0
  %645 = vmatprep.subr.mxu0 0.0
  %646 = vmatpush1.msra.mxu0 0.0
  %647 = vmatprep.subr.mxu0 0.0
  %648 = vmatpush1.msra.mxu0 0.0
  %649 = vmatprep.subr.mxu0 0.0
  %650 = vmatpush1.msra.mxu0 0.0
  %651 = vmatprep.subr.mxu0 0.0
  %652 = vmatpush1.msra.mxu0 0.0
  %653 = vmatprep.subr.mxu0 0.0
  %654 = vmatpush1.msra.mxu0 0.0
  %655 = vmatprep.subr.mxu0 0.0
  %656 = vmatpush1.msra.mxu0 0.0
  %657 = vmatprep.subr.mxu0 0.0
  %658 = vmatpush1.msra.mxu0 0.0
  %659 = vmatprep.subr.mxu0 0.0
  %660 = vmatpush1.msra.mxu0 0.0
  %661 = vmatprep.mubr.f32.mxu0 0.0
  %v662 = vand.u32 %v588, 4294901760
  %v663 = vsub.f32 %v588, %v662
  %v664 = vand.u32 %v663, 4294901760
  %v665 = vsub.f32 %v663, %v664
  %v666 = vand.u32 %v665, 4294901760
  %667 = vmatmul.mubr.f32.gmra.mrb[0].mxu0 %v666
  %v668 = vpop.f32.mrb[0].mxu0
  %v669 = vadd.f32 %v586, %v668
  %v670 = vpop.f32.mrb[0].mxu0
  %671 = vmatprep.mubr.f32.mxu0 0.0
  %v672 = vand.u32 %v591, 4294901760
  %v673 = vsub.f32 %v591, %v672
  %v674 = vand.u32 %v673, 4294901760
  %v675 = vsub.f32 %v673, %v674
  %v676 = vand.u32 %v675, 4294901760
  %677 = vmatmul.mubr.f32.gmra.mrb[0].mxu0 %v676
  %v678 = vpop.f32.mrb[0].mxu0
  %v679 = vadd.f32 %v586, %v678
  %v680 = vpop.f32.mrb[0].mxu0
  %681 = vdwg.mxu0
  %682 = vmatprep.subr.mxu0 0.0
  %v683 = vand.u32 %v579, 4294901760
  %v684 = vsub.f32 %v579, %v683
  %v685 = vand.u32 %v684, 4294901760
  %v686 = vsub.f32 %v684, %v685
  %v687 = vand.u32 %v686, 4294901760
  %688 = vmatpush1.msra.mxu0 %v687
  %689 = vmatprep.subr.mxu0 0.0
  %v690 = vand.u32 %v580, 4294901760
  %v691 = vsub.f32 %v580, %v690
  %v692 = vand.u32 %v691, 4294901760
  %v693 = vsub.f32 %v691, %v692
  %v694 = vand.u32 %v693, 4294901760
  %695 = vmatpush1.msra.mxu0 %v694
  %696 = vmatprep.subr.mxu0 0.0
  %v697 = vand.u32 %v581, 4294901760
  %v698 = vsub.f32 %v581, %v697
  %v699 = vand.u32 %v698, 4294901760
  %v700 = vsub.f32 %v698, %v699
  %v701 = vand.u32 %v700, 4294901760
  %702 = vmatpush1.msra.mxu0 %v701
  %703 = vmatprep.subr.mxu0 0.0
  %v704 = vand.u32 %v582, 4294901760
  %v705 = vsub.f32 %v582, %v704
  %v706 = vand.u32 %v705, 4294901760
  %v707 = vsub.f32 %v705, %v706
  %v708 = vand.u32 %v707, 4294901760
  %709 = vmatpush1.msra.mxu0 %v708
  %710 = vmatprep.subr.mxu0 0.0
  %711 = vmatpush1.msra.mxu0 0.0
  %712 = vmatprep.subr.mxu0 0.0
  %713 = vmatpush1.msra.mxu0 0.0
  %714 = vmatprep.subr.mxu0 0.0
  %715 = vmatpush1.msra.mxu0 0.0
  %716 = vmatprep.subr.mxu0 0.0
  %717 = vmatpush1.msra.mxu0 0.0
  %718 = vmatprep.subr.mxu0 0.0
  %719 = vmatpush1.msra.mxu0 0.0
  %720 = vmatprep.subr.mxu0 0.0
  %721 = vmatpush1.msra.mxu0 0.0
  %722 = vmatprep.subr.mxu0 0.0
  %723 = vmatpush1.msra.mxu0 0.0
  %724 = vmatprep.subr.mxu0 0.0
  %725 = vmatpush1.msra.mxu0 0.0
  %726 = vmatprep.subr.mxu0 0.0
  %727 = vmatpush1.msra.mxu0 0.0
  %728 = vmatprep.subr.mxu0 0.0
  %729 = vmatpush1.msra.mxu0 0.0
  %730 = vmatprep.subr.mxu0 0.0
  %731 = vmatpush1.msra.mxu0 0.0
  %732 = vmatprep.subr.mxu0 0.0
  %733 = vmatpush1.msra.mxu0 0.0
  %734 = vmatprep.subr.mxu0 0.0
  %735 = vmatpush1.msra.mxu0 0.0
  %736 = vmatprep.subr.mxu0 0.0
  %737 = vmatpush1.msra.mxu0 0.0
  %738 = vmatprep.subr.mxu0 0.0
  %739 = vmatpush1.msra.mxu0 0.0
  %740 = vmatprep.subr.mxu0 0.0
  %741 = vmatpush1.msra.mxu0 0.0
  %742 = vmatprep.subr.mxu0 0.0
  %743 = vmatpush1.msra.mxu0 0.0
  %744 = vmatprep.subr.mxu0 0.0
  %745 = vmatpush1.msra.mxu0 0.0
  %746 = vmatprep.subr.mxu0 0.0
  %747 = vmatpush1.msra.mxu0 0.0
  %748 = vmatprep.subr.mxu0 0.0
  %749 = vmatpush1.msra.mxu0 0.0
  %750 = vmatprep.subr.mxu0 0.0
  %751 = vmatpush1.msra.mxu0 0.0
  %752 = vmatprep.subr.mxu0 0.0
  %753 = vmatpush1.msra.mxu0 0.0
  %754 = vmatprep.subr.mxu0 0.0
  %755 = vmatpush1.msra.mxu0 0.0
  %756 = vmatprep.subr.mxu0 0.0
  %757 = vmatpush1.msra.mxu0 0.0
  %758 = vmatprep.subr.mxu0 0.0
  %759 = vmatpush1.msra.mxu0 0.0
  %760 = vmatprep.subr.mxu0 0.0
  %761 = vmatpush1.msra.mxu0 0.0
  %762 = vmatprep.subr.mxu0 0.0
  %763 = vmatpush1.msra.mxu0 0.0
  %764 = vmatprep.subr.mxu0 0.0
  %765 = vmatpush1.msra.mxu0 0.0
  %766 = vmatprep.mubr.f32.mxu0 0.0
  %v767 = vand.u32 %v588, 4294901760
  %768 = vmatmul.mubr.f32.gmra.mrb[0].mxu0 %v767
  %v769 = vpop.f32.mrb[0].mxu0
  %v770 = vadd.f32 %v669, %v769
  %v771 = vpop.f32.mrb[0].mxu0
  %772 = vmatprep.mubr.f32.mxu0 0.0
  %v773 = vand.u32 %v591, 4294901760
  %774 = vmatmul.mubr.f32.gmra.mrb[0].mxu0 %v773
  %v775 = vpop.f32.mrb[0].mxu0
  %v776 = vadd.f32 %v679, %v775
  %v777 = vpop.f32.mrb[0].mxu0
  %778 = vdwg.mxu0
  %779 = vmatprep.subr.mxu0 0.0
  %v780 = vand.u32 %v579, 4294901760
  %v781 = vsub.f32 %v579, %v780
  %782 = vmatpush1.msra.mxu0 %v781
  %783 = vmatprep.subr.mxu0 0.0
  %v784 = vand.u32 %v580, 4294901760
  %v785 = vsub.f32 %v580, %v784
  %786 = vmatpush1.msra.mxu0 %v785
  %787 = vmatprep.subr.mxu0 0.0
  %v788 = vand.u32 %v581, 4294901760
  %v789 = vsub.f32 %v581, %v788
  %790 = vmatpush1.msra.mxu0 %v789
  %791 = vmatprep.subr.mxu0 0.0
  %v792 = vand.u32 %v582, 4294901760
  %v793 = vsub.f32 %v582, %v792
  %794 = vmatpush1.msra.mxu0 %v793
  %795 = vmatprep.subr.mxu0 0.0
  %796 = vmatpush1.msra.mxu0 0.0
  %797 = vmatprep.subr.mxu0 0.0
  %798 = vmatpush1.msra.mxu0 0.0
  %799 = vmatprep.subr.mxu0 0.0
  %800 = vmatpush1.msra.mxu0 0.0
  %801 = vmatprep.subr.mxu0 0.0
  %802 = vmatpush1.msra.mxu0 0.0
  %803 = vmatprep.subr.mxu0 0.0
  %804 = vmatpush1.msra.mxu0 0.0
  %805 = vmatprep.subr.mxu0 0.0
  %806 = vmatpush1.msra.mxu0 0.0
  %807 = vmatprep.subr.mxu0 0.0
  %808 = vmatpush1.msra.mxu0 0.0
  %809 = vmatprep.subr.mxu0 0.0
  %810 = vmatpush1.msra.mxu0 0.0
  %811 = vmatprep.subr.mxu0 0.0
  %812 = vmatpush1.msra.mxu0 0.0
  %813 = vmatprep.subr.mxu0 0.0
  %814 = vmatpush1.msra.mxu0 0.0
  %815 = vmatprep.subr.mxu0 0.0
  %816 = vmatpush1.msra.mxu0 0.0
  %817 = vmatprep.subr.mxu0 0.0
  %818 = vmatpush1.msra.mxu0 0.0
  %819 = vmatprep.subr.mxu0 0.0
  %820 = vmatpush1.msra.mxu0 0.0
  %821 = vmatprep.subr.mxu0 0.0
  %822 = vmatpush1.msra.mxu0 0.0
  %823 = vmatprep.subr.mxu0 0.0
  %824 = vmatpush1.msra.mxu0 0.0
  %825 = vmatprep.subr.mxu0 0.0
  %826 = vmatpush1.msra.mxu0 0.0
  %827 = vmatprep.subr.mxu0 0.0
  %828 = vmatpush1.msra.mxu0 0.0
  %829 = vmatprep.subr.mxu0 0.0
  %830 = vmatpush1.msra.mxu0 0.0
  %831 = vmatprep.subr.mxu0 0.0
  %832 = vmatpush1.msra.mxu0 0.0
  %833 = vmatprep.subr.mxu0 0.0
  %834 = vmatpush1.msra.mxu0 0.0
  %835 = vmatprep.subr.mxu0 0.0
  %836 = vmatpush1.msra.mxu0 0.0
  %837 = vmatprep.subr.mxu0 0.0
  %838 = vmatpush1.msra.mxu0 0.0
  %839 = vmatprep.subr.mxu0 0.0
  %840 = vmatpush1.msra.mxu0 0.0
  %841 = vmatprep.subr.mxu0 0.0
  %842 = vmatpush1.msra.mxu0 0.0
  %843 = vmatprep.subr.mxu0 0.0
  %844 = vmatpush1.msra.mxu0 0.0
  %845 = vmatprep.subr.mxu0 0.0
  %846 = vmatpush1.msra.mxu0 0.0
  %847 = vmatprep.subr.mxu0 0.0
  %848 = vmatpush1.msra.mxu0 0.0
  %849 = vmatprep.subr.mxu0 0.0
  %850 = vmatpush1.msra.mxu0 0.0
  %851 = vmatprep.mubr.f32.mxu0 0.0
  %v852 = vand.u32 %v588, 4294901760
  %v853 = vsub.f32 %v588, %v852
  %854 = vmatmul.mubr.f32.gmra.mrb[0].mxu0 %v853
  %v855 = vpop.f32.mrb[0].mxu0
  %v856 = vadd.f32 %v770, %v855
  %v857 = vpop.f32.mrb[0].mxu0
  %858 = vmatprep.mubr.f32.mxu0 0.0
  %v859 = vand.u32 %v591, 4294901760
  %v860 = vsub.f32 %v591, %v859
  %861 = vmatmul.mubr.f32.gmra.mrb[0].mxu0 %v860
  %v862 = vpop.f32.mrb[0].mxu0
  %v863 = vadd.f32 %v776, %v862
  %v864 = vpop.f32.mrb[0].mxu0
  %865 = vdwg.mxu0
  %866 = vmatprep.subr.mxu0 0.0
  %v867 = vand.u32 %v579, 4294901760
  %868 = vmatpush1.msra.mxu0 %v867
  %869 = vmatprep.subr.mxu0 0.0
  %v870 = vand.u32 %v580, 4294901760
  %871 = vmatpush1.msra.mxu0 %v870
  %872 = vmatprep.subr.mxu0 0.0
  %v873 = vand.u32 %v581, 4294901760
  %874 = vmatpush1.msra.mxu0 %v873
  %875 = vmatprep.subr.mxu0 0.0
  %v876 = vand.u32 %v582, 4294901760
  %877 = vmatpush1.msra.mxu0 %v876
  %878 = vmatprep.subr.mxu0 0.0
  %879 = vmatpush1.msra.mxu0 0.0
  %880 = vmatprep.subr.mxu0 0.0
  %881 = vmatpush1.msra.mxu0 0.0
  %882 = vmatprep.subr.mxu0 0.0
  %883 = vmatpush1.msra.mxu0 0.0
  %884 = vmatprep.subr.mxu0 0.0
  %885 = vmatpush1.msra.mxu0 0.0
  %886 = vmatprep.subr.mxu0 0.0
  %887 = vmatpush1.msra.mxu0 0.0
  %888 = vmatprep.subr.mxu0 0.0
  %889 = vmatpush1.msra.mxu0 0.0
  %890 = vmatprep.subr.mxu0 0.0
  %891 = vmatpush1.msra.mxu0 0.0
  %892 = vmatprep.subr.mxu0 0.0
  %893 = vmatpush1.msra.mxu0 0.0
  %894 = vmatprep.subr.mxu0 0.0
  %895 = vmatpush1.msra.mxu0 0.0
  %896 = vmatprep.subr.mxu0 0.0
  %897 = vmatpush1.msra.mxu0 0.0
  %898 = vmatprep.subr.mxu0 0.0
  %899 = vmatpush1.msra.mxu0 0.0
  %900 = vmatprep.subr.mxu0 0.0
  %901 = vmatpush1.msra.mxu0 0.0
  %902 = vmatprep.subr.mxu0 0.0
  %903 = vmatpush1.msra.mxu0 0.0
  %904 = vmatprep.subr.mxu0 0.0
  %905 = vmatpush1.msra.mxu0 0.0
  %906 = vmatprep.subr.mxu0 0.0
  %907 = vmatpush1.msra.mxu0 0.0
  %908 = vmatprep.subr.mxu0 0.0
  %909 = vmatpush1.msra.mxu0 0.0
  %910 = vmatprep.subr.mxu0 0.0
  %911 = vmatpush1.msra.mxu0 0.0
  %912 = vmatprep.subr.mxu0 0.0
  %913 = vmatpush1.msra.mxu0 0.0
  %914 = vmatprep.subr.mxu0 0.0
  %915 = vmatpush1.msra.mxu0 0.0
  %916 = vmatprep.subr.mxu0 0.0
  %917 = vmatpush1.msra.mxu0 0.0
  %918 = vmatprep.subr.mxu0 0.0
  %919 = vmatpush1.msra.mxu0 0.0
  %920 = vmatprep.subr.mxu0 0.0
  %921 = vmatpush1.msra.mxu0 0.0
  %922 = vmatprep.subr.mxu0 0.0
  %923 = vmatpush1.msra.mxu0 0.0
  %924 = vmatprep.subr.mxu0 0.0
  %925 = vmatpush1.msra.mxu0 0.0
  %926 = vmatprep.subr.mxu0 0.0
  %927 = vmatpush1.msra.mxu0 0.0
  %928 = vmatprep.subr.mxu0 0.0
  %929 = vmatpush1.msra.mxu0 0.0
  %930 = vmatprep.subr.mxu0 0.0
  %931 = vmatpush1.msra.mxu0 0.0
  %932 = vmatprep.subr.mxu0 0.0
  %933 = vmatpush1.msra.mxu0 0.0
  %934 = vmatprep.mubr.f32.mxu0 0.0
  %v935 = vand.u32 %v588, 4294901760
  %v936 = vsub.f32 %v588, %v935
  %v937 = vand.u32 %v936, 4294901760
  %938 = vmatmul.mubr.f32.gmra.mrb[0].mxu0 %v937
  %v939 = vpop.f32.mrb[0].mxu0
  %v940 = vadd.f32 %v856, %v939
  %v941 = vpop.f32.mrb[0].mxu0
  %942 = vmatprep.mubr.f32.mxu0 0.0
  %v943 = vand.u32 %v591, 4294901760
  %v944 = vsub.f32 %v591, %v943
  %v945 = vand.u32 %v944, 4294901760
  %946 = vmatmul.mubr.f32.gmra.mrb[0].mxu0 %v945
  %v947 = vpop.f32.mrb[0].mxu0
  %v948 = vadd.f32 %v863, %v947
  %v949 = vpop.f32.mrb[0].mxu0
  %950 = vdwg.mxu0
  %951 = vmatprep.subr.mxu0 0.0
  %v952 = vand.u32 %v579, 4294901760
  %v953 = vsub.f32 %v579, %v952
  %v954 = vand.u32 %v953, 4294901760
  %955 = vmatpush1.msra.mxu0 %v954
  %956 = vmatprep.subr.mxu0 0.0
  %v957 = vand.u32 %v580, 4294901760
  %v958 = vsub.f32 %v580, %v957
  %v959 = vand.u32 %v958, 4294901760
  %960 = vmatpush1.msra.mxu0 %v959
  %961 = vmatprep.subr.mxu0 0.0
  %v962 = vand.u32 %v581, 4294901760
  %v963 = vsub.f32 %v581, %v962
  %v964 = vand.u32 %v963, 4294901760
  %965 = vmatpush1.msra.mxu0 %v964
  %966 = vmatprep.subr.mxu0 0.0
  %v967 = vand.u32 %v582, 4294901760
  %v968 = vsub.f32 %v582, %v967
  %v969 = vand.u32 %v968, 4294901760
  %970 = vmatpush1.msra.mxu0 %v969
  %971 = vmatprep.subr.mxu0 0.0
  %972 = vmatpush1.msra.mxu0 0.0
  %973 = vmatprep.subr.mxu0 0.0
  %974 = vmatpush1.msra.mxu0 0.0
  %975 = vmatprep.subr.mxu0 0.0
  %976 = vmatpush1.msra.mxu0 0.0
  %977 = vmatprep.subr.mxu0 0.0
  %978 = vmatpush1.msra.mxu0 0.0
  %979 = vmatprep.subr.mxu0 0.0
  %980 = vmatpush1.msra.mxu0 0.0
  %981 = vmatprep.subr.mxu0 0.0
  %982 = vmatpush1.msra.mxu0 0.0
  %983 = vmatprep.subr.mxu0 0.0
  %984 = vmatpush1.msra.mxu0 0.0
  %985 = vmatprep.subr.mxu0 0.0
  %986 = vmatpush1.msra.mxu0 0.0
  %987 = vmatprep.subr.mxu0 0.0
  %988 = vmatpush1.msra.mxu0 0.0
  %989 = vmatprep.subr.mxu0 0.0
  %990 = vmatpush1.msra.mxu0 0.0
  %991 = vmatprep.subr.mxu0 0.0
  %992 = vmatpush1.msra.mxu0 0.0
  %993 = vmatprep.subr.mxu0 0.0
  %994 = vmatpush1.msra.mxu0 0.0
  %995 = vmatprep.subr.mxu0 0.0
  %996 = vmatpush1.msra.mxu0 0.0
  %997 = vmatprep.subr.mxu0 0.0
  %998 = vmatpush1.msra.mxu0 0.0
  %999 = vmatprep.subr.mxu0 0.0
  %1000 = vmatpush1.msra.mxu0 0.0
  %1001 = vmatprep.subr.mxu0 0.0
  %1002 = vmatpush1.msra.mxu0 0.0
  %1003 = vmatprep.subr.mxu0 0.0
  %1004 = vmatpush1.msra.mxu0 0.0
  %1005 = vmatprep.subr.mxu0 0.0
  %1006 = vmatpush1.msra.mxu0 0.0
  %1007 = vmatprep.subr.mxu0 0.0
  %1008 = vmatpush1.msra.mxu0 0.0
  %1009 = vmatprep.subr.mxu0 0.0
  %1010 = vmatpush1.msra.mxu0 0.0
  %1011 = vmatprep.subr.mxu0 0.0
  %1012 = vmatpush1.msra.mxu0 0.0
  %1013 = vmatprep.subr.mxu0 0.0
  %1014 = vmatpush1.msra.mxu0 0.0
  %1015 = vmatprep.subr.mxu0 0.0
  %1016 = vmatpush1.msra.mxu0 0.0
  %1017 = vmatprep.subr.mxu0 0.0
  %1018 = vmatpush1.msra.mxu0 0.0
  %1019 = vmatprep.subr.mxu0 0.0
  %1020 = vmatpush1.msra.mxu0 0.0
  %1021 = vmatprep.subr.mxu0 0.0
  %1022 = vmatpush1.msra.mxu0 0.0
  %1023 = vmatprep.subr.mxu0 0.0
  %1024 = vmatpush1.msra.mxu0 0.0
  %1025 = vmatprep.subr.mxu0 0.0
  %1026 = vmatpush1.msra.mxu0 0.0
  %1027 = vmatprep.mubr.f32.mxu0 0.0
  %v1028 = vand.u32 %v588, 4294901760
  %1029 = vmatmul.mubr.f32.gmra.mrb[0].mxu0 %v1028
  %v1030 = vpop.f32.mrb[0].mxu0
  %v1031 = vadd.f32 %v940, %v1030
  %v1032 = vpop.f32.mrb[0].mxu0
  %1033 = vmatprep.mubr.f32.mxu0 0.0
  %v1034 = vand.u32 %v591, 4294901760
  %1035 = vmatmul.mubr.f32.gmra.mrb[0].mxu0 %v1034
  %v1036 = vpop.f32.mrb[0].mxu0
  %v1037 = vadd.f32 %v948, %v1036
  %v1038 = vpop.f32.mrb[0].mxu0
  %1039 = vdwg.mxu0
  %1040 = vmatprep.subr.mxu0 0.0
  %v1041 = vand.u32 %v579, 4294901760
  %1042 = vmatpush1.msra.mxu0 %v1041
  %1043 = vmatprep.subr.mxu0 0.0
  %v1044 = vand.u32 %v580, 4294901760
  %1045 = vmatpush1.msra.mxu0 %v1044
  %1046 = vmatprep.subr.mxu0 0.0
  %v1047 = vand.u32 %v581, 4294901760
  %1048 = vmatpush1.msra.mxu0 %v1047
  %1049 = vmatprep.subr.mxu0 0.0
  %v1050 = vand.u32 %v582, 4294901760
  %1051 = vmatpush1.msra.mxu0 %v1050
  %1052 = vmatprep.subr.mxu0 0.0
  %1053 = vmatpush1.msra.mxu0 0.0
  %1054 = vmatprep.subr.mxu0 0.0
  %1055 = vmatpush1.msra.mxu0 0.0
  %1056 = vmatprep.subr.mxu0 0.0
  %1057 = vmatpush1.msra.mxu0 0.0
  %1058 = vmatprep.subr.mxu0 0.0
  %1059 = vmatpush1.msra.mxu0 0.0
  %1060 = vmatprep.subr.mxu0 0.0
  %1061 = vmatpush1.msra.mxu0 0.0
  %1062 = vmatprep.subr.mxu0 0.0
  %1063 = vmatpush1.msra.mxu0 0.0
  %1064 = vmatprep.subr.mxu0 0.0
  %1065 = vmatpush1.msra.mxu0 0.0
  %1066 = vmatprep.subr.mxu0 0.0
  %1067 = vmatpush1.msra.mxu0 0.0
  %1068 = vmatprep.subr.mxu0 0.0
  %1069 = vmatpush1.msra.mxu0 0.0
  %1070 = vmatprep.subr.mxu0 0.0
  %1071 = vmatpush1.msra.mxu0 0.0
  %1072 = vmatprep.subr.mxu0 0.0
  %1073 = vmatpush1.msra.mxu0 0.0
  %1074 = vmatprep.subr.mxu0 0.0
  %1075 = vmatpush1.msra.mxu0 0.0
  %1076 = vmatprep.subr.mxu0 0.0
  %1077 = vmatpush1.msra.mxu0 0.0
  %1078 = vmatprep.subr.mxu0 0.0
  %1079 = vmatpush1.msra.mxu0 0.0
  %1080 = vmatprep.subr.mxu0 0.0
  %1081 = vmatpush1.msra.mxu0 0.0
  %1082 = vmatprep.subr.mxu0 0.0
  %1083 = vmatpush1.msra.mxu0 0.0
  %1084 = vmatprep.subr.mxu0 0.0
  %1085 = vmatpush1.msra.mxu0 0.0
  %1086 = vmatprep.subr.mxu0 0.0
  %1087 = vmatpush1.msra.mxu0 0.0
  %1088 = vmatprep.subr.mxu0 0.0
  %1089 = vmatpush1.msra.mxu0 0.0
  %1090 = vmatprep.subr.mxu0 0.0
  %1091 = vmatpush1.msra.mxu0 0.0
  %1092 = vmatprep.subr.mxu0 0.0
  %1093 = vmatpush1.msra.mxu0 0.0
  %1094 = vmatprep.subr.mxu0 0.0
  %1095 = vmatpush1.msra.mxu0 0.0
  %1096 = vmatprep.subr.mxu0 0.0
  %1097 = vmatpush1.msra.mxu0 0.0
  %1098 = vmatprep.subr.mxu0 0.0
  %1099 = vmatpush1.msra.mxu0 0.0
  %1100 = vmatprep.subr.mxu0 0.0
  %1101 = vmatpush1.msra.mxu0 0.0
  %1102 = vmatprep.subr.mxu0 0.0
  %1103 = vmatpush1.msra.mxu0 0.0
  %1104 = vmatprep.subr.mxu0 0.0
  %1105 = vmatpush1.msra.mxu0 0.0
  %1106 = vmatprep.subr.mxu0 0.0
  %1107 = vmatpush1.msra.mxu0 0.0
  %1108 = vmatprep.mubr.f32.mxu0 0.0
  %v1109 = vand.u32 %v588, 4294901760
  %1110 = vmatmul.mubr.f32.gmra.mrb[0].mxu0 %v1109
  %v1111 = vpop.f32.mrb[0].mxu0
  %v1112 = vadd.f32 %v1031, %v1111
  %v1113 = vpop.f32.mrb[0].mxu0
  %1114 = vmatprep.mubr.f32.mxu0 0.0
  %v1115 = vand.u32 %v591, 4294901760
  %1116 = vmatmul.mubr.f32.gmra.mrb[0].mxu0 %v1115
  %v1117 = vpop.f32.mrb[0].mxu0
  %v1118 = vadd.f32 %v1037, %v1117
  %v1119 = vpop.f32.mrb[0].mxu0
  %1120 = vdwg.mxu0
  %v1121 = vmul.f32 %v570, 0.35355338
  %v1122 = vmul.f32 %v576, 0.35355338
  %1125 = vrot.lane.b32.xlu0 %v1121, 120
  %v1126 = vpop.permute.xlu0 %1125
  %1127 = vrot.lane.b32.xlu0 %v1122, 120
  %v1128 = vpop.permute.xlu0 %1127
  %1131 = vrot.lane.b32.xlu0 %v1121, 112
  %v1132 = vpop.permute.xlu0 %1131
  %1133 = vrot.lane.b32.xlu0 %v1122, 112
  %v1134 = vpop.permute.xlu0 %1133
  %1137 = vrot.lane.b32.xlu0 %v1121, 104
  %v1138 = vpop.permute.xlu0 %1137
  %1139 = vrot.lane.b32.xlu0 %v1122, 104
  %v1140 = vpop.permute.xlu0 %1139
  %v1143 = vcombine.low %v1121, %v1132
  %v1144 = vcombine.high %v1121, %v1132
  %v1146 = vunpack.c.l.s4 1983009808
  %v1147 = vunpack.c.0.s8 %v1146
  %v1148 = vlaneseq
  %v1149 = vshrl.u32 %v1148, 7
  %v1150 = vsub.s32 %v1147, %v1149
  %v1151 = vrot.slane %v1143, %v1150
  %v1153 = vunpack.c.l.s4 1983009808
  %v1154 = vunpack.c.0.s8 %v1153
  %v1155 = vlaneseq
  %v1156 = vshrl.u32 %v1155, 7
  %v1157 = vsub.s32 %v1154, %v1156
  %v1158 = vrot.slane %v1144, %v1157
  %v1159 = vcombine.low %v1126, %v1138
  %v1160 = vcombine.high %v1126, %v1138
  %v1162 = vunpack.c.l.s4 1983009808
  %v1163 = vunpack.c.0.s8 %v1162
  %v1164 = vlaneseq
  %v1165 = vshrl.u32 %v1164, 7
  %v1166 = vsub.s32 %v1163, %v1165
  %v1167 = vrot.slane %v1159, %v1166
  %v1169 = vunpack.c.l.s4 1983009808
  %v1170 = vunpack.c.0.s8 %v1169
  %v1171 = vlaneseq
  %v1172 = vshrl.u32 %v1171, 7
  %v1173 = vsub.s32 %v1170, %v1172
  %v1174 = vrot.slane %v1160, %v1173
  %v1175 = vcombine.low %v1151, %v1167
  %v1176 = vcombine.high %v1151, %v1167
  %v1178 = vunpack.c.l.s4 1934713408
  %v1179 = vunpack.c.0.s8 %v1178
  %v1180 = vlaneseq
  %v1181 = vshrl.u32 %v1180, 7
  %v1182 = vsub.s32 %v1179, %v1181
  %v1183 = vrot.slane %v1175, %v1182
  %v1185 = vunpack.c.l.s4 1934713408
  %v1186 = vunpack.c.0.s8 %v1185
  %v1187 = vlaneseq
  %v1188 = vshrl.u32 %v1187, 7
  %v1189 = vsub.s32 %v1186, %v1188
  %v1190 = vrot.slane %v1176, %v1189
  %v1191 = vcombine.low %v1158, %v1174
  %v1192 = vcombine.high %v1158, %v1174
  %v1194 = vunpack.c.l.s4 1934713408
  %v1195 = vunpack.c.0.s8 %v1194
  %v1196 = vlaneseq
  %v1197 = vshrl.u32 %v1196, 7
  %v1198 = vsub.s32 %v1195, %v1197
  %v1199 = vrot.slane %v1191, %v1198
  %v1201 = vunpack.c.l.s4 1934713408
  %v1202 = vunpack.c.0.s8 %v1201
  %v1203 = vlaneseq
  %v1204 = vshrl.u32 %v1203, 7
  %v1205 = vsub.s32 %v1202, %v1204
  %v1206 = vrot.slane %v1192, %v1205
  %v1207 = vcombine.high %v1183, 0.0
  %v1208 = vcombine.high %v1190, 0.0
  %v1209 = vcombine.high %v1199, 0.0
  %v1210 = vcombine.high %v1206, 0.0
  %v1211 = vcombine.low %v1122, %v1134
  %v1212 = vcombine.high %v1122, %v1134
  %v1214 = vunpack.c.l.s4 1983009808
  %v1215 = vunpack.c.0.s8 %v1214
  %v1216 = vlaneseq
  %v1217 = vshrl.u32 %v1216, 7
  %v1218 = vsub.s32 %v1215, %v1217
  %v1219 = vrot.slane %v1211, %v1218
  %v1221 = vunpack.c.l.s4 1983009808
  %v1222 = vunpack.c.0.s8 %v1221
  %v1223 = vlaneseq
  %v1224 = vshrl.u32 %v1223, 7
  %v1225 = vsub.s32 %v1222, %v1224
  %v1226 = vrot.slane %v1212, %v1225
  %v1227 = vcombine.low %v1128, %v1140
  %v1228 = vcombine.high %v1128, %v1140
  %v1230 = vunpack.c.l.s4 1983009808
  %v1231 = vunpack.c.0.s8 %v1230
  %v1232 = vlaneseq
  %v1233 = vshrl.u32 %v1232, 7
  %v1234 = vsub.s32 %v1231, %v1233
  %v1235 = vrot.slane %v1227, %v1234
  %v1237 = vunpack.c.l.s4 1983009808
  %v1238 = vunpack.c.0.s8 %v1237
  %v1239 = vlaneseq
  %v1240 = vshrl.u32 %v1239, 7
  %v1241 = vsub.s32 %v1238, %v1240
  %v1242 = vrot.slane %v1228, %v1241
  %v1243 = vcombine.low %v1219, %v1235
  %v1244 = vcombine.high %v1219, %v1235
  %v1246 = vunpack.c.l.s4 1934713408
  %v1247 = vunpack.c.0.s8 %v1246
  %v1248 = vlaneseq
  %v1249 = vshrl.u32 %v1248, 7
  %v1250 = vsub.s32 %v1247, %v1249
  %v1251 = vrot.slane %v1243, %v1250
  %v1253 = vunpack.c.l.s4 1934713408
  %v1254 = vunpack.c.0.s8 %v1253
  %v1255 = vlaneseq
  %v1256 = vshrl.u32 %v1255, 7
  %v1257 = vsub.s32 %v1254, %v1256
  %v1258 = vrot.slane %v1244, %v1257
  %v1259 = vcombine.low %v1226, %v1242
  %v1260 = vcombine.high %v1226, %v1242
  %v1262 = vunpack.c.l.s4 1934713408
  %v1263 = vunpack.c.0.s8 %v1262
  %v1264 = vlaneseq
  %v1265 = vshrl.u32 %v1264, 7
  %v1266 = vsub.s32 %v1263, %v1265
  %v1267 = vrot.slane %v1259, %v1266
  %v1269 = vunpack.c.l.s4 1934713408
  %v1270 = vunpack.c.0.s8 %v1269
  %v1271 = vlaneseq
  %v1272 = vshrl.u32 %v1271, 7
  %v1273 = vsub.s32 %v1270, %v1272
  %v1274 = vrot.slane %v1260, %v1273
  %v1275 = vcombine.high %v1251, 0.0
  %v1276 = vcombine.high %v1258, 0.0
  %v1277 = vcombine.high %v1267, 0.0
  %v1278 = vcombine.high %v1274, 0.0
  %v1279 = vcombine.low %v1183, %v1190
  %v1281 = vunpack.c.l.s4 1983009808
  %v1282 = vunpack.c.0.s8 %v1281
  %v1283 = vlaneseq
  %v1284 = vshrl.u32 %v1283, 7
  %v1285 = vsub.s32 %v1282, %v1284
  %v1286 = vrot.slane %v1279, %v1285
  %v1287 = vcombine.low %v1207, %v1208
  %v1289 = vunpack.c.l.s4 1983009808
  %v1290 = vunpack.c.0.s8 %v1289
  %v1291 = vlaneseq
  %v1292 = vshrl.u32 %v1291, 7
  %v1293 = vsub.s32 %v1290, %v1292
  %v1294 = vrot.slane %v1287, %v1293
  %v1295 = vcombine.low %v1199, %v1206
  %v1297 = vunpack.c.l.s4 1983009808
  %v1298 = vunpack.c.0.s8 %v1297
  %v1299 = vlaneseq
  %v1300 = vshrl.u32 %v1299, 7
  %v1301 = vsub.s32 %v1298, %v1300
  %v1302 = vrot.slane %v1295, %v1301
  %v1303 = vcombine.low %v1209, %v1210
  %v1305 = vunpack.c.l.s4 1983009808
  %v1306 = vunpack.c.0.s8 %v1305
  %v1307 = vlaneseq
  %v1308 = vshrl.u32 %v1307, 7
  %v1309 = vsub.s32 %v1306, %v1308
  %v1310 = vrot.slane %v1303, %v1309
  %v1311 = vcombine.low %v1286, %v1294
  %v1312 = vcombine.high %v1286, %v1294
  %v1314 = vunpack.c.l.s4 1934713408
  %v1315 = vunpack.c.0.s8 %v1314
  %v1316 = vlaneseq
  %v1317 = vshrl.u32 %v1316, 7
  %v1318 = vsub.s32 %v1315, %v1317
  %v1319 = vrot.slane %v1311, %v1318
  %v1321 = vunpack.c.l.s4 1934713408
  %v1322 = vunpack.c.0.s8 %v1321
  %v1323 = vlaneseq
  %v1324 = vshrl.u32 %v1323, 7
  %v1325 = vsub.s32 %v1322, %v1324
  %v1326 = vrot.slane %v1312, %v1325
  %v1327 = vcombine.low %v1302, %v1310
  %v1328 = vcombine.high %v1302, %v1310
  %v1330 = vunpack.c.l.s4 1934713408
  %v1331 = vunpack.c.0.s8 %v1330
  %v1332 = vlaneseq
  %v1333 = vshrl.u32 %v1332, 7
  %v1334 = vsub.s32 %v1331, %v1333
  %v1335 = vrot.slane %v1327, %v1334
  %v1337 = vunpack.c.l.s4 1934713408
  %v1338 = vunpack.c.0.s8 %v1337
  %v1339 = vlaneseq
  %v1340 = vshrl.u32 %v1339, 7
  %v1341 = vsub.s32 %v1338, %v1340
  %v1342 = vrot.slane %v1328, %v1341
  %v1343 = vcombine.low %v1319, %v1335
  %v1344 = vcombine.high %v1319, %v1335
  %v1345 = vcombine.low %v1326, %v1342
  %v1346 = vcombine.high %v1326, %v1342
  %v1347 = vcombine.low %v1251, %v1258
  %v1349 = vunpack.c.l.s4 1983009808
  %v1350 = vunpack.c.0.s8 %v1349
  %v1351 = vlaneseq
  %v1352 = vshrl.u32 %v1351, 7
  %v1353 = vsub.s32 %v1350, %v1352
  %v1354 = vrot.slane %v1347, %v1353
  %v1355 = vcombine.low %v1275, %v1276
  %v1357 = vunpack.c.l.s4 1983009808
  %v1358 = vunpack.c.0.s8 %v1357
  %v1359 = vlaneseq
  %v1360 = vshrl.u32 %v1359, 7
  %v1361 = vsub.s32 %v1358, %v1360
  %v1362 = vrot.slane %v1355, %v1361
  %v1363 = vcombine.low %v1267, %v1274
  %v1365 = vunpack.c.l.s4 1983009808
  %v1366 = vunpack.c.0.s8 %v1365
  %v1367 = vlaneseq
  %v1368 = vshrl.u32 %v1367, 7
  %v1369 = vsub.s32 %v1366, %v1368
  %v1370 = vrot.slane %v1363, %v1369
  %v1371 = vcombine.low %v1277, %v1278
  %v1373 = vunpack.c.l.s4 1983009808
  %v1374 = vunpack.c.0.s8 %v1373
  %v1375 = vlaneseq
  %v1376 = vshrl.u32 %v1375, 7
  %v1377 = vsub.s32 %v1374, %v1376
  %v1378 = vrot.slane %v1371, %v1377
  %v1379 = vcombine.low %v1354, %v1362
  %v1380 = vcombine.high %v1354, %v1362
  %v1382 = vunpack.c.l.s4 1934713408
  %v1383 = vunpack.c.0.s8 %v1382
  %v1384 = vlaneseq
  %v1385 = vshrl.u32 %v1384, 7
  %v1386 = vsub.s32 %v1383, %v1385
  %v1387 = vrot.slane %v1379, %v1386
  %v1389 = vunpack.c.l.s4 1934713408
  %v1390 = vunpack.c.0.s8 %v1389
  %v1391 = vlaneseq
  %v1392 = vshrl.u32 %v1391, 7
  %v1393 = vsub.s32 %v1390, %v1392
  %v1394 = vrot.slane %v1380, %v1393
  %v1395 = vcombine.low %v1370, %v1378
  %v1396 = vcombine.high %v1370, %v1378
  %v1398 = vunpack.c.l.s4 1934713408
  %v1399 = vunpack.c.0.s8 %v1398
  %v1400 = vlaneseq
  %v1401 = vshrl.u32 %v1400, 7
  %v1402 = vsub.s32 %v1399, %v1401
  %v1403 = vrot.slane %v1395, %v1402
  %v1405 = vunpack.c.l.s4 1934713408
  %v1406 = vunpack.c.0.s8 %v1405
  %v1407 = vlaneseq
  %v1408 = vshrl.u32 %v1407, 7
  %v1409 = vsub.s32 %v1406, %v1408
  %v1410 = vrot.slane %v1396, %v1409
  %v1411 = vcombine.low %v1387, %v1403
  %v1412 = vcombine.high %v1387, %v1403
  %v1413 = vcombine.low %v1394, %v1410
  %v1414 = vcombine.high %v1394, %v1410
  %1417 = vrot.lane.b32.xlu0 %v570, 120
  %v1418 = vpop.permute.xlu0 %1417
  %1419 = vrot.lane.b32.xlu0 %v576, 120
  %v1420 = vpop.permute.xlu0 %1419
  %1421 = vrot.lane.b32.xlu0 %v570, 112
  %v1422 = vpop.permute.xlu0 %1421
  %1423 = vrot.lane.b32.xlu0 %v576, 112
  %v1424 = vpop.permute.xlu0 %1423
  %1425 = vrot.lane.b32.xlu0 %v570, 104
  %v1426 = vpop.permute.xlu0 %1425
  %1427 = vrot.lane.b32.xlu0 %v576, 104
  %v1428 = vpop.permute.xlu0 %1427
  %1429 = vrot.lane.b32.xlu0 %v570, 96
  %v1430 = vpop.permute.xlu0 %1429
  %1431 = vrot.lane.b32.xlu0 %v576, 96
  %v1432 = vpop.permute.xlu0 %1431
  %1433 = vrot.lane.b32.xlu0 %v1418, 96
  %v1434 = vpop.permute.xlu0 %1433
  %1435 = vrot.lane.b32.xlu0 %v1420, 96
  %v1436 = vpop.permute.xlu0 %1435
  %1437 = vrot.lane.b32.xlu0 %v1422, 96
  %v1438 = vpop.permute.xlu0 %1437
  %1439 = vrot.lane.b32.xlu0 %v1424, 96
  %v1440 = vpop.permute.xlu0 %1439
  %1441 = vrot.lane.b32.xlu0 %v1426, 96
  %v1442 = vpop.permute.xlu0 %1441
  %1443 = vrot.lane.b32.xlu0 %v1428, 96
  %v1444 = vpop.permute.xlu0 %1443
  %v1453 = vcombine.low %v1430, %v1438
  %v1454 = vcombine.high %v1430, %v1438
  %v1456 = vunpack.c.l.s4 1983009808
  %v1457 = vunpack.c.0.s8 %v1456
  %v1458 = vlaneseq
  %v1459 = vshrl.u32 %v1458, 7
  %v1460 = vsub.s32 %v1457, %v1459
  %v1461 = vrot.slane %v1453, %v1460
  %v1463 = vunpack.c.l.s4 1983009808
  %v1464 = vunpack.c.0.s8 %v1463
  %v1465 = vlaneseq
  %v1466 = vshrl.u32 %v1465, 7
  %v1467 = vsub.s32 %v1464, %v1466
  %v1468 = vrot.slane %v1454, %v1467
  %v1469 = vcombine.low %v1434, %v1442
  %v1470 = vcombine.high %v1434, %v1442
  %v1472 = vunpack.c.l.s4 1983009808
  %v1473 = vunpack.c.0.s8 %v1472
  %v1474 = vlaneseq
  %v1475 = vshrl.u32 %v1474, 7
  %v1476 = vsub.s32 %v1473, %v1475
  %v1477 = vrot.slane %v1469, %v1476
  %v1479 = vunpack.c.l.s4 1983009808
  %v1480 = vunpack.c.0.s8 %v1479
  %v1481 = vlaneseq
  %v1482 = vshrl.u32 %v1481, 7
  %v1483 = vsub.s32 %v1480, %v1482
  %v1484 = vrot.slane %v1470, %v1483
  %v1485 = vcombine.low %v1461, %v1477
  %v1486 = vcombine.high %v1461, %v1477
  %v1488 = vunpack.c.l.s4 1934713408
  %v1489 = vunpack.c.0.s8 %v1488
  %v1490 = vlaneseq
  %v1491 = vshrl.u32 %v1490, 7
  %v1492 = vsub.s32 %v1489, %v1491
  %v1493 = vrot.slane %v1485, %v1492
  %v1495 = vunpack.c.l.s4 1934713408
  %v1496 = vunpack.c.0.s8 %v1495
  %v1497 = vlaneseq
  %v1498 = vshrl.u32 %v1497, 7
  %v1499 = vsub.s32 %v1496, %v1498
  %v1500 = vrot.slane %v1486, %v1499
  %v1501 = vcombine.low %v1468, %v1484
  %v1502 = vcombine.high %v1468, %v1484
  %v1504 = vunpack.c.l.s4 1934713408
  %v1505 = vunpack.c.0.s8 %v1504
  %v1506 = vlaneseq
  %v1507 = vshrl.u32 %v1506, 7
  %v1508 = vsub.s32 %v1505, %v1507
  %v1509 = vrot.slane %v1501, %v1508
  %v1511 = vunpack.c.l.s4 1934713408
  %v1512 = vunpack.c.0.s8 %v1511
  %v1513 = vlaneseq
  %v1514 = vshrl.u32 %v1513, 7
  %v1515 = vsub.s32 %v1512, %v1514
  %v1516 = vrot.slane %v1502, %v1515
  %v1517 = vcombine.high %v1493, 0.0
  %v1518 = vcombine.high %v1500, 0.0
  %v1519 = vcombine.high %v1509, 0.0
  %v1520 = vcombine.high %v1516, 0.0
  %v1521 = vcombine.low %v1432, %v1440
  %v1522 = vcombine.high %v1432, %v1440
  %v1524 = vunpack.c.l.s4 1983009808
  %v1525 = vunpack.c.0.s8 %v1524
  %v1526 = vlaneseq
  %v1527 = vshrl.u32 %v1526, 7
  %v1528 = vsub.s32 %v1525, %v1527
  %v1529 = vrot.slane %v1521, %v1528
  %v1531 = vunpack.c.l.s4 1983009808
  %v1532 = vunpack.c.0.s8 %v1531
  %v1533 = vlaneseq
  %v1534 = vshrl.u32 %v1533, 7
  %v1535 = vsub.s32 %v1532, %v1534
  %v1536 = vrot.slane %v1522, %v1535
  %v1537 = vcombine.low %v1436, %v1444
  %v1538 = vcombine.high %v1436, %v1444
  %v1540 = vunpack.c.l.s4 1983009808
  %v1541 = vunpack.c.0.s8 %v1540
  %v1542 = vlaneseq
  %v1543 = vshrl.u32 %v1542, 7
  %v1544 = vsub.s32 %v1541, %v1543
  %v1545 = vrot.slane %v1537, %v1544
  %v1547 = vunpack.c.l.s4 1983009808
  %v1548 = vunpack.c.0.s8 %v1547
  %v1549 = vlaneseq
  %v1550 = vshrl.u32 %v1549, 7
  %v1551 = vsub.s32 %v1548, %v1550
  %v1552 = vrot.slane %v1538, %v1551
  %v1553 = vcombine.low %v1529, %v1545
  %v1554 = vcombine.high %v1529, %v1545
  %v1556 = vunpack.c.l.s4 1934713408
  %v1557 = vunpack.c.0.s8 %v1556
  %v1558 = vlaneseq
  %v1559 = vshrl.u32 %v1558, 7
  %v1560 = vsub.s32 %v1557, %v1559
  %v1561 = vrot.slane %v1553, %v1560
  %v1563 = vunpack.c.l.s4 1934713408
  %v1564 = vunpack.c.0.s8 %v1563
  %v1565 = vlaneseq
  %v1566 = vshrl.u32 %v1565, 7
  %v1567 = vsub.s32 %v1564, %v1566
  %v1568 = vrot.slane %v1554, %v1567
  %v1569 = vcombine.low %v1536, %v1552
  %v1570 = vcombine.high %v1536, %v1552
  %v1572 = vunpack.c.l.s4 1934713408
  %v1573 = vunpack.c.0.s8 %v1572
  %v1574 = vlaneseq
  %v1575 = vshrl.u32 %v1574, 7
  %v1576 = vsub.s32 %v1573, %v1575
  %v1577 = vrot.slane %v1569, %v1576
  %v1579 = vunpack.c.l.s4 1934713408
  %v1580 = vunpack.c.0.s8 %v1579
  %v1581 = vlaneseq
  %v1582 = vshrl.u32 %v1581, 7
  %v1583 = vsub.s32 %v1580, %v1582
  %v1584 = vrot.slane %v1570, %v1583
  %v1585 = vcombine.high %v1561, 0.0
  %v1586 = vcombine.high %v1568, 0.0
  %v1587 = vcombine.high %v1577, 0.0
  %v1588 = vcombine.high %v1584, 0.0
  %v1589 = vcombine.low %v1493, %v1500
  %v1591 = vunpack.c.l.s4 1983009808
  %v1592 = vunpack.c.0.s8 %v1591
  %v1593 = vlaneseq
  %v1594 = vshrl.u32 %v1593, 7
  %v1595 = vsub.s32 %v1592, %v1594
  %v1596 = vrot.slane %v1589, %v1595
  %v1597 = vcombine.low %v1517, %v1518
  %v1599 = vunpack.c.l.s4 1983009808
  %v1600 = vunpack.c.0.s8 %v1599
  %v1601 = vlaneseq
  %v1602 = vshrl.u32 %v1601, 7
  %v1603 = vsub.s32 %v1600, %v1602
  %v1604 = vrot.slane %v1597, %v1603
  %v1605 = vcombine.low %v1509, %v1516
  %v1607 = vunpack.c.l.s4 1983009808
  %v1608 = vunpack.c.0.s8 %v1607
  %v1609 = vlaneseq
  %v1610 = vshrl.u32 %v1609, 7
  %v1611 = vsub.s32 %v1608, %v1610
  %v1612 = vrot.slane %v1605, %v1611
  %v1613 = vcombine.low %v1519, %v1520
  %v1615 = vunpack.c.l.s4 1983009808
  %v1616 = vunpack.c.0.s8 %v1615
  %v1617 = vlaneseq
  %v1618 = vshrl.u32 %v1617, 7
  %v1619 = vsub.s32 %v1616, %v1618
  %v1620 = vrot.slane %v1613, %v1619
  %v1621 = vcombine.low %v1596, %v1604
  %v1622 = vcombine.high %v1596, %v1604
  %v1624 = vunpack.c.l.s4 1934713408
  %v1625 = vunpack.c.0.s8 %v1624
  %v1626 = vlaneseq
  %v1627 = vshrl.u32 %v1626, 7
  %v1628 = vsub.s32 %v1625, %v1627
  %v1629 = vrot.slane %v1621, %v1628
  %v1631 = vunpack.c.l.s4 1934713408
  %v1632 = vunpack.c.0.s8 %v1631
  %v1633 = vlaneseq
  %v1634 = vshrl.u32 %v1633, 7
  %v1635 = vsub.s32 %v1632, %v1634
  %v1636 = vrot.slane %v1622, %v1635
  %v1637 = vcombine.low %v1612, %v1620
  %v1638 = vcombine.high %v1612, %v1620
  %v1640 = vunpack.c.l.s4 1934713408
  %v1641 = vunpack.c.0.s8 %v1640
  %v1642 = vlaneseq
  %v1643 = vshrl.u32 %v1642, 7
  %v1644 = vsub.s32 %v1641, %v1643
  %v1645 = vrot.slane %v1637, %v1644
  %v1647 = vunpack.c.l.s4 1934713408
  %v1648 = vunpack.c.0.s8 %v1647
  %v1649 = vlaneseq
  %v1650 = vshrl.u32 %v1649, 7
  %v1651 = vsub.s32 %v1648, %v1650
  %v1652 = vrot.slane %v1638, %v1651
  %v1653 = vcombine.low %v1629, %v1645
  %v1654 = vcombine.high %v1629, %v1645
  %v1655 = vcombine.low %v1636, %v1652
  %v1656 = vcombine.high %v1636, %v1652
  %v1657 = vcombine.low %v1561, %v1568
  %v1659 = vunpack.c.l.s4 1983009808
  %v1660 = vunpack.c.0.s8 %v1659
  %v1661 = vlaneseq
  %v1662 = vshrl.u32 %v1661, 7
  %v1663 = vsub.s32 %v1660, %v1662
  %v1664 = vrot.slane %v1657, %v1663
  %v1665 = vcombine.low %v1585, %v1586
  %v1667 = vunpack.c.l.s4 1983009808
  %v1668 = vunpack.c.0.s8 %v1667
  %v1669 = vlaneseq
  %v1670 = vshrl.u32 %v1669, 7
  %v1671 = vsub.s32 %v1668, %v1670
  %v1672 = vrot.slane %v1665, %v1671
  %v1673 = vcombine.low %v1577, %v1584
  %v1675 = vunpack.c.l.s4 1983009808
  %v1676 = vunpack.c.0.s8 %v1675
  %v1677 = vlaneseq
  %v1678 = vshrl.u32 %v1677, 7
  %v1679 = vsub.s32 %v1676, %v1678
  %v1680 = vrot.slane %v1673, %v1679
  %v1681 = vcombine.low %v1587, %v1588
  %v1683 = vunpack.c.l.s4 1983009808
  %v1684 = vunpack.c.0.s8 %v1683
  %v1685 = vlaneseq
  %v1686 = vshrl.u32 %v1685, 7
  %v1687 = vsub.s32 %v1684, %v1686
  %v1688 = vrot.slane %v1681, %v1687
  %v1689 = vcombine.low %v1664, %v1672
  %v1690 = vcombine.high %v1664, %v1672
  %v1692 = vunpack.c.l.s4 1934713408
  %v1693 = vunpack.c.0.s8 %v1692
  %v1694 = vlaneseq
  %v1695 = vshrl.u32 %v1694, 7
  %v1696 = vsub.s32 %v1693, %v1695
  %v1697 = vrot.slane %v1689, %v1696
  %v1699 = vunpack.c.l.s4 1934713408
  %v1700 = vunpack.c.0.s8 %v1699
  %v1701 = vlaneseq
  %v1702 = vshrl.u32 %v1701, 7
  %v1703 = vsub.s32 %v1700, %v1702
  %v1704 = vrot.slane %v1690, %v1703
  %v1705 = vcombine.low %v1680, %v1688
  %v1706 = vcombine.high %v1680, %v1688
  %v1708 = vunpack.c.l.s4 1934713408
  %v1709 = vunpack.c.0.s8 %v1708
  %v1710 = vlaneseq
  %v1711 = vshrl.u32 %v1710, 7
  %v1712 = vsub.s32 %v1709, %v1711
  %v1713 = vrot.slane %v1705, %v1712
  %v1715 = vunpack.c.l.s4 1934713408
  %v1716 = vunpack.c.0.s8 %v1715
  %v1717 = vlaneseq
  %v1718 = vshrl.u32 %v1717, 7
  %v1719 = vsub.s32 %v1716, %v1718
  %v1720 = vrot.slane %v1706, %v1719
  %v1721 = vcombine.low %v1697, %v1713
  %v1722 = vcombine.high %v1697, %v1713
  %v1723 = vcombine.low %v1704, %v1720
  %v1724 = vcombine.high %v1704, %v1720
  %1727 = vrot.lane.b32.xlu0 %v1112, 120
  %v1728 = vpop.permute.xlu0 %1727
  %1729 = vrot.lane.b32.xlu0 %v1118, 120
  %v1730 = vpop.permute.xlu0 %1729
  %1733 = vrot.lane.b32.xlu0 %v1112, 112
  %v1734 = vpop.permute.xlu0 %1733
  %1735 = vrot.lane.b32.xlu0 %v1118, 112
  %v1736 = vpop.permute.xlu0 %1735
  %1739 = vrot.lane.b32.xlu0 %v1112, 104
  %v1740 = vpop.permute.xlu0 %1739
  %1741 = vrot.lane.b32.xlu0 %v1118, 104
  %v1742 = vpop.permute.xlu0 %1741
  %v1745 = vcombine.low %v1112, %v1734
  %v1746 = vcombine.high %v1112, %v1734
  %v1748 = vunpack.c.l.s4 1983009808
  %v1749 = vunpack.c.0.s8 %v1748
  %v1750 = vlaneseq
  %v1751 = vshrl.u32 %v1750, 7
  %v1752 = vsub.s32 %v1749, %v1751
  %v1753 = vrot.slane %v1745, %v1752
  %v1755 = vunpack.c.l.s4 1983009808
  %v1756 = vunpack.c.0.s8 %v1755
  %v1757 = vlaneseq
  %v1758 = vshrl.u32 %v1757, 7
  %v1759 = vsub.s32 %v1756, %v1758
  %v1760 = vrot.slane %v1746, %v1759
  %v1761 = vcombine.low %v1728, %v1740
  %v1762 = vcombine.high %v1728, %v1740
  %v1764 = vunpack.c.l.s4 1983009808
  %v1765 = vunpack.c.0.s8 %v1764
  %v1766 = vlaneseq
  %v1767 = vshrl.u32 %v1766, 7
  %v1768 = vsub.s32 %v1765, %v1767
  %v1769 = vrot.slane %v1761, %v1768
  %v1771 = vunpack.c.l.s4 1983009808
  %v1772 = vunpack.c.0.s8 %v1771
  %v1773 = vlaneseq
  %v1774 = vshrl.u32 %v1773, 7
  %v1775 = vsub.s32 %v1772, %v1774
  %v1776 = vrot.slane %v1762, %v1775
  %v1777 = vcombine.low %v1753, %v1769
  %v1778 = vcombine.high %v1753, %v1769
  %v1780 = vunpack.c.l.s4 1934713408
  %v1781 = vunpack.c.0.s8 %v1780
  %v1782 = vlaneseq
  %v1783 = vshrl.u32 %v1782, 7
  %v1784 = vsub.s32 %v1781, %v1783
  %v1785 = vrot.slane %v1777, %v1784
  %v1787 = vunpack.c.l.s4 1934713408
  %v1788 = vunpack.c.0.s8 %v1787
  %v1789 = vlaneseq
  %v1790 = vshrl.u32 %v1789, 7
  %v1791 = vsub.s32 %v1788, %v1790
  %v1792 = vrot.slane %v1778, %v1791
  %v1793 = vcombine.low %v1760, %v1776
  %v1794 = vcombine.high %v1760, %v1776
  %v1796 = vunpack.c.l.s4 1934713408
  %v1797 = vunpack.c.0.s8 %v1796
  %v1798 = vlaneseq
  %v1799 = vshrl.u32 %v1798, 7
  %v1800 = vsub.s32 %v1797, %v1799
  %v1801 = vrot.slane %v1793, %v1800
  %v1803 = vunpack.c.l.s4 1934713408
  %v1804 = vunpack.c.0.s8 %v1803
  %v1805 = vlaneseq
  %v1806 = vshrl.u32 %v1805, 7
  %v1807 = vsub.s32 %v1804, %v1806
  %v1808 = vrot.slane %v1794, %v1807
  %v1809 = vcombine.high %v1785, 0.0
  %v1810 = vcombine.high %v1792, 0.0
  %v1811 = vcombine.high %v1801, 0.0
  %v1812 = vcombine.high %v1808, 0.0
  %v1813 = vcombine.low %v1118, %v1736
  %v1814 = vcombine.high %v1118, %v1736
  %v1816 = vunpack.c.l.s4 1983009808
  %v1817 = vunpack.c.0.s8 %v1816
  %v1818 = vlaneseq
  %v1819 = vshrl.u32 %v1818, 7
  %v1820 = vsub.s32 %v1817, %v1819
  %v1821 = vrot.slane %v1813, %v1820
  %v1823 = vunpack.c.l.s4 1983009808
  %v1824 = vunpack.c.0.s8 %v1823
  %v1825 = vlaneseq
  %v1826 = vshrl.u32 %v1825, 7
  %v1827 = vsub.s32 %v1824, %v1826
  %v1828 = vrot.slane %v1814, %v1827
  %v1829 = vcombine.low %v1730, %v1742
  %v1830 = vcombine.high %v1730, %v1742
  %v1832 = vunpack.c.l.s4 1983009808
  %v1833 = vunpack.c.0.s8 %v1832
  %v1834 = vlaneseq
  %v1835 = vshrl.u32 %v1834, 7
  %v1836 = vsub.s32 %v1833, %v1835
  %v1837 = vrot.slane %v1829, %v1836
  %v1839 = vunpack.c.l.s4 1983009808
  %v1840 = vunpack.c.0.s8 %v1839
  %v1841 = vlaneseq
  %v1842 = vshrl.u32 %v1841, 7
  %v1843 = vsub.s32 %v1840, %v1842
  %v1844 = vrot.slane %v1830, %v1843
  %v1845 = vcombine.low %v1821, %v1837
  %v1846 = vcombine.high %v1821, %v1837
  %v1848 = vunpack.c.l.s4 1934713408
  %v1849 = vunpack.c.0.s8 %v1848
  %v1850 = vlaneseq
  %v1851 = vshrl.u32 %v1850, 7
  %v1852 = vsub.s32 %v1849, %v1851
  %v1853 = vrot.slane %v1845, %v1852
  %v1855 = vunpack.c.l.s4 1934713408
  %v1856 = vunpack.c.0.s8 %v1855
  %v1857 = vlaneseq
  %v1858 = vshrl.u32 %v1857, 7
  %v1859 = vsub.s32 %v1856, %v1858
  %v1860 = vrot.slane %v1846, %v1859
  %v1861 = vcombine.low %v1828, %v1844
  %v1862 = vcombine.high %v1828, %v1844
  %v1864 = vunpack.c.l.s4 1934713408
  %v1865 = vunpack.c.0.s8 %v1864
  %v1866 = vlaneseq
  %v1867 = vshrl.u32 %v1866, 7
  %v1868 = vsub.s32 %v1865, %v1867
  %v1869 = vrot.slane %v1861, %v1868
  %v1871 = vunpack.c.l.s4 1934713408
  %v1872 = vunpack.c.0.s8 %v1871
  %v1873 = vlaneseq
  %v1874 = vshrl.u32 %v1873, 7
  %v1875 = vsub.s32 %v1872, %v1874
  %v1876 = vrot.slane %v1862, %v1875
  %v1877 = vcombine.high %v1853, 0.0
  %v1878 = vcombine.high %v1860, 0.0
  %v1879 = vcombine.high %v1869, 0.0
  %v1880 = vcombine.high %v1876, 0.0
  %v1881 = vcombine.low %v1785, %v1792
  %v1883 = vunpack.c.l.s4 1983009808
  %v1884 = vunpack.c.0.s8 %v1883
  %v1885 = vlaneseq
  %v1886 = vshrl.u32 %v1885, 7
  %v1887 = vsub.s32 %v1884, %v1886
  %v1888 = vrot.slane %v1881, %v1887
  %v1889 = vcombine.low %v1809, %v1810
  %v1891 = vunpack.c.l.s4 1983009808
  %v1892 = vunpack.c.0.s8 %v1891
  %v1893 = vlaneseq
  %v1894 = vshrl.u32 %v1893, 7
  %v1895 = vsub.s32 %v1892, %v1894
  %v1896 = vrot.slane %v1889, %v1895
  %v1897 = vcombine.low %v1801, %v1808
  %v1899 = vunpack.c.l.s4 1983009808
  %v1900 = vunpack.c.0.s8 %v1899
  %v1901 = vlaneseq
  %v1902 = vshrl.u32 %v1901, 7
  %v1903 = vsub.s32 %v1900, %v1902
  %v1904 = vrot.slane %v1897, %v1903
  %v1905 = vcombine.low %v1811, %v1812
  %v1907 = vunpack.c.l.s4 1983009808
  %v1908 = vunpack.c.0.s8 %v1907
  %v1909 = vlaneseq
  %v1910 = vshrl.u32 %v1909, 7
  %v1911 = vsub.s32 %v1908, %v1910
  %v1912 = vrot.slane %v1905, %v1911
  %v1913 = vcombine.low %v1888, %v1896
  %v1914 = vcombine.high %v1888, %v1896
  %v1916 = vunpack.c.l.s4 1934713408
  %v1917 = vunpack.c.0.s8 %v1916
  %v1918 = vlaneseq
  %v1919 = vshrl.u32 %v1918, 7
  %v1920 = vsub.s32 %v1917, %v1919
  %v1921 = vrot.slane %v1913, %v1920
  %v1923 = vunpack.c.l.s4 1934713408
  %v1924 = vunpack.c.0.s8 %v1923
  %v1925 = vlaneseq
  %v1926 = vshrl.u32 %v1925, 7
  %v1927 = vsub.s32 %v1924, %v1926
  %v1928 = vrot.slane %v1914, %v1927
  %v1929 = vcombine.low %v1904, %v1912
  %v1930 = vcombine.high %v1904, %v1912
  %v1932 = vunpack.c.l.s4 1934713408
  %v1933 = vunpack.c.0.s8 %v1932
  %v1934 = vlaneseq
  %v1935 = vshrl.u32 %v1934, 7
  %v1936 = vsub.s32 %v1933, %v1935
  %v1937 = vrot.slane %v1929, %v1936
  %v1939 = vunpack.c.l.s4 1934713408
  %v1940 = vunpack.c.0.s8 %v1939
  %v1941 = vlaneseq
  %v1942 = vshrl.u32 %v1941, 7
  %v1943 = vsub.s32 %v1940, %v1942
  %v1944 = vrot.slane %v1930, %v1943
  %v1945 = vcombine.low %v1921, %v1937
  %v1946 = vcombine.high %v1921, %v1937
  %v1947 = vcombine.low %v1928, %v1944
  %v1948 = vcombine.high %v1928, %v1944
  %v1949 = vcombine.low %v1853, %v1860
  %v1951 = vunpack.c.l.s4 1983009808
  %v1952 = vunpack.c.0.s8 %v1951
  %v1953 = vlaneseq
  %v1954 = vshrl.u32 %v1953, 7
  %v1955 = vsub.s32 %v1952, %v1954
  %v1956 = vrot.slane %v1949, %v1955
  %v1957 = vcombine.low %v1877, %v1878
  %v1959 = vunpack.c.l.s4 1983009808
  %v1960 = vunpack.c.0.s8 %v1959
  %v1961 = vlaneseq
  %v1962 = vshrl.u32 %v1961, 7
  %v1963 = vsub.s32 %v1960, %v1962
  %v1964 = vrot.slane %v1957, %v1963
  %v1965 = vcombine.low %v1869, %v1876
  %v1967 = vunpack.c.l.s4 1983009808
  %v1968 = vunpack.c.0.s8 %v1967
  %v1969 = vlaneseq
  %v1970 = vshrl.u32 %v1969, 7
  %v1971 = vsub.s32 %v1968, %v1970
  %v1972 = vrot.slane %v1965, %v1971
  %v1973 = vcombine.low %v1879, %v1880
  %v1975 = vunpack.c.l.s4 1983009808
  %v1976 = vunpack.c.0.s8 %v1975
  %v1977 = vlaneseq
  %v1978 = vshrl.u32 %v1977, 7
  %v1979 = vsub.s32 %v1976, %v1978
  %v1980 = vrot.slane %v1973, %v1979
  %v1981 = vcombine.low %v1956, %v1964
  %v1982 = vcombine.high %v1956, %v1964
  %v1984 = vunpack.c.l.s4 1934713408
  %v1985 = vunpack.c.0.s8 %v1984
  %v1986 = vlaneseq
  %v1987 = vshrl.u32 %v1986, 7
  %v1988 = vsub.s32 %v1985, %v1987
  %v1989 = vrot.slane %v1981, %v1988
  %v1991 = vunpack.c.l.s4 1934713408
  %v1992 = vunpack.c.0.s8 %v1991
  %v1993 = vlaneseq
  %v1994 = vshrl.u32 %v1993, 7
  %v1995 = vsub.s32 %v1992, %v1994
  %v1996 = vrot.slane %v1982, %v1995
  %v1997 = vcombine.low %v1972, %v1980
  %v1998 = vcombine.high %v1972, %v1980
  %v2000 = vunpack.c.l.s4 1934713408
  %v2001 = vunpack.c.0.s8 %v2000
  %v2002 = vlaneseq
  %v2003 = vshrl.u32 %v2002, 7
  %v2004 = vsub.s32 %v2001, %v2003
  %v2005 = vrot.slane %v1997, %v2004
  %v2007 = vunpack.c.l.s4 1934713408
  %v2008 = vunpack.c.0.s8 %v2007
  %v2009 = vlaneseq
  %v2010 = vshrl.u32 %v2009, 7
  %v2011 = vsub.s32 %v2008, %v2010
  %v2012 = vrot.slane %v1998, %v2011
  %v2013 = vcombine.low %v1989, %v2005
  %v2014 = vcombine.high %v1989, %v2005
  %v2015 = vcombine.low %v1996, %v2012
  %v2016 = vcombine.high %v1996, %v2012
  %vm2017 = vcmask 64512
  %v2019 = vsel %vm2017, %v1343, 0
  %v2022 = vsel %vm2017, %v1653, 0
  %2024 = vmatprep.subr.mxu0 0.0
  %v2025 = vand.u32 %v2022, 4294901760
  %2026 = vmatpush1.xpose.msra.mxu0 %v2025
  %2027 = vmatprep.subr.mxu0 0.0
  %2028 = vmatpush1.xpose.msra.mxu0 0.0
  %2029 = vmatprep.subr.mxu0 0.0
  %2030 = vmatpush1.xpose.msra.mxu0 0.0
  %2031 = vmatprep.subr.mxu0 0.0
  %2032 = vmatpush1.xpose.msra.mxu0 0.0
  %2033 = vmatprep.subr.mxu0 0.0
  %2034 = vmatpush1.xpose.msra.mxu0 0.0
  %2035 = vmatprep.subr.mxu0 0.0
  %2036 = vmatpush1.xpose.msra.mxu0 0.0
  %2037 = vmatprep.subr.mxu0 0.0
  %2038 = vmatpush1.xpose.msra.mxu0 0.0
  %2039 = vmatprep.subr.mxu0 0.0
  %2040 = vmatpush1.xpose.msra.mxu0 0.0
  %2041 = vmatprep.subr.mxu0 0.0
  %2042 = vmatpush1.xpose.msra.mxu0 0.0
  %2043 = vmatprep.subr.mxu0 0.0
  %2044 = vmatpush1.xpose.msra.mxu0 0.0
  %2045 = vmatprep.subr.mxu0 0.0
  %2046 = vmatpush1.xpose.msra.mxu0 0.0
  %2047 = vmatprep.subr.mxu0 0.0
  %2048 = vmatpush1.xpose.msra.mxu0 0.0
  %2049 = vmatprep.subr.mxu0 0.0
  %2050 = vmatpush1.xpose.msra.mxu0 0.0
  %2051 = vmatprep.subr.mxu0 0.0
  %2052 = vmatpush1.xpose.msra.mxu0 0.0
  %2053 = vmatprep.subr.mxu0 0.0
  %2054 = vmatpush1.xpose.msra.mxu0 0.0
  %2055 = vmatprep.subr.mxu0 0.0
  %2056 = vmatpush1.xpose.msra.mxu0 0.0
  %2057 = vmatprep.subr.mxu0 0.0
  %2058 = vmatpush1.xpose.msra.mxu0 0.0
  %2059 = vmatprep.subr.mxu0 0.0
  %2060 = vmatpush1.xpose.msra.mxu0 0.0
  %2061 = vmatprep.subr.mxu0 0.0
  %2062 = vmatpush1.xpose.msra.mxu0 0.0
  %2063 = vmatprep.subr.mxu0 0.0
  %2064 = vmatpush1.xpose.msra.mxu0 0.0
  %2065 = vmatprep.subr.mxu0 0.0
  %2066 = vmatpush1.xpose.msra.mxu0 0.0
  %2067 = vmatprep.subr.mxu0 0.0
  %2068 = vmatpush1.xpose.msra.mxu0 0.0
  %2069 = vmatprep.subr.mxu0 0.0
  %2070 = vmatpush1.xpose.msra.mxu0 0.0
  %2071 = vmatprep.subr.mxu0 0.0
  %2072 = vmatpush1.xpose.msra.mxu0 0.0
  %2073 = vmatprep.subr.mxu0 0.0
  %2074 = vmatpush1.xpose.msra.mxu0 0.0
  %2075 = vmatprep.subr.mxu0 0.0
  %2076 = vmatpush1.xpose.msra.mxu0 0.0
  %2077 = vmatprep.subr.mxu0 0.0
  %2078 = vmatpush1.xpose.msra.mxu0 0.0
  %2079 = vmatprep.subr.mxu0 0.0
  %2080 = vmatpush1.xpose.msra.mxu0 0.0
  %2081 = vmatprep.subr.mxu0 0.0
  %2082 = vmatpush1.xpose.msra.mxu0 0.0
  %2083 = vmatprep.subr.mxu0 0.0
  %2084 = vmatpush1.xpose.msra.mxu0 0.0
  %2085 = vmatprep.subr.mxu0 0.0
  %2086 = vmatpush1.xpose.msra.mxu0 0.0
  %2087 = vmatprep.subr.mxu0 0.0
  %2088 = vmatpush1.xpose.msra.mxu0 0.0
  %2089 = vmatprep.mubr.f32.mxu0 0.0
  %v2090 = vand.u32 %v2019, 4294901760
  %v2091 = vsub.f32 %v2019, %v2090
  %v2092 = vand.u32 %v2091, 4294901760
  %v2093 = vsub.f32 %v2091, %v2092
  %v2094 = vand.u32 %v2093, 4294901760
  %2095 = vmatmul.mubr.f32.gmra.mrb[0].mxu0 %v2094
  %v2096 = vpop.f32.mrb[0].mxu0
  %v2097 = vadd.f32 0.0, %v2096
  %v2098 = vpop.f32.mrb[0].mxu0
  %2099 = vdwg.mxu0
  %2100 = vmatprep.subr.mxu0 0.0
  %v2101 = vand.u32 %v2022, 4294901760
  %v2102 = vsub.f32 %v2022, %v2101
  %v2103 = vand.u32 %v2102, 4294901760
  %v2104 = vsub.f32 %v2102, %v2103
  %v2105 = vand.u32 %v2104, 4294901760
  %2106 = vmatpush1.xpose.msra.mxu0 %v2105
  %2107 = vmatprep.subr.mxu0 0.0
  %2108 = vmatpush1.xpose.msra.mxu0 0.0
  %2109 = vmatprep.subr.mxu0 0.0
  %2110 = vmatpush1.xpose.msra.mxu0 0.0
  %2111 = vmatprep.subr.mxu0 0.0
  %2112 = vmatpush1.xpose.msra.mxu0 0.0
  %2113 = vmatprep.subr.mxu0 0.0
  %2114 = vmatpush1.xpose.msra.mxu0 0.0
  %2115 = vmatprep.subr.mxu0 0.0
  %2116 = vmatpush1.xpose.msra.mxu0 0.0
  %2117 = vmatprep.subr.mxu0 0.0
  %2118 = vmatpush1.xpose.msra.mxu0 0.0
  %2119 = vmatprep.subr.mxu0 0.0
  %2120 = vmatpush1.xpose.msra.mxu0 0.0
  %2121 = vmatprep.subr.mxu0 0.0
  %2122 = vmatpush1.xpose.msra.mxu0 0.0
  %2123 = vmatprep.subr.mxu0 0.0
  %2124 = vmatpush1.xpose.msra.mxu0 0.0
  %2125 = vmatprep.subr.mxu0 0.0
  %2126 = vmatpush1.xpose.msra.mxu0 0.0
  %2127 = vmatprep.subr.mxu0 0.0
  %2128 = vmatpush1.xpose.msra.mxu0 0.0
  %2129 = vmatprep.subr.mxu0 0.0
  %2130 = vmatpush1.xpose.msra.mxu0 0.0
  %2131 = vmatprep.subr.mxu0 0.0
  %2132 = vmatpush1.xpose.msra.mxu0 0.0
  %2133 = vmatprep.subr.mxu0 0.0
  %2134 = vmatpush1.xpose.msra.mxu0 0.0
  %2135 = vmatprep.subr.mxu0 0.0
  %2136 = vmatpush1.xpose.msra.mxu0 0.0
  %2137 = vmatprep.subr.mxu0 0.0
  %2138 = vmatpush1.xpose.msra.mxu0 0.0
  %2139 = vmatprep.subr.mxu0 0.0
  %2140 = vmatpush1.xpose.msra.mxu0 0.0
  %2141 = vmatprep.subr.mxu0 0.0
  %2142 = vmatpush1.xpose.msra.mxu0 0.0
  %2143 = vmatprep.subr.mxu0 0.0
  %2144 = vmatpush1.xpose.msra.mxu0 0.0
  %2145 = vmatprep.subr.mxu0 0.0
  %2146 = vmatpush1.xpose.msra.mxu0 0.0
  %2147 = vmatprep.subr.mxu0 0.0
  %2148 = vmatpush1.xpose.msra.mxu0 0.0
  %2149 = vmatprep.subr.mxu0 0.0
  %2150 = vmatpush1.xpose.msra.mxu0 0.0
  %2151 = vmatprep.subr.mxu0 0.0
  %2152 = vmatpush1.xpose.msra.mxu0 0.0
  %2153 = vmatprep.subr.mxu0 0.0
  %2154 = vmatpush1.xpose.msra.mxu0 0.0
  %2155 = vmatprep.subr.mxu0 0.0
  %2156 = vmatpush1.xpose.msra.mxu0 0.0
  %2157 = vmatprep.subr.mxu0 0.0
  %2158 = vmatpush1.xpose.msra.mxu0 0.0
  %2159 = vmatprep.subr.mxu0 0.0
  %2160 = vmatpush1.xpose.msra.mxu0 0.0
  %2161 = vmatprep.subr.mxu0 0.0
  %2162 = vmatpush1.xpose.msra.mxu0 0.0
  %2163 = vmatprep.subr.mxu0 0.0
  %2164 = vmatpush1.xpose.msra.mxu0 0.0
  %2165 = vmatprep.subr.mxu0 0.0
  %2166 = vmatpush1.xpose.msra.mxu0 0.0
  %2167 = vmatprep.subr.mxu0 0.0
  %2168 = vmatpush1.xpose.msra.mxu0 0.0
  %2169 = vmatprep.mubr.f32.mxu0 0.0
  %v2170 = vand.u32 %v2019, 4294901760
  %2171 = vmatmul.mubr.f32.gmra.mrb[0].mxu0 %v2170
  %v2172 = vpop.f32.mrb[0].mxu0
  %v2173 = vadd.f32 %v2097, %v2172
  %v2174 = vpop.f32.mrb[0].mxu0
  %2175 = vdwg.mxu0
  %2176 = vmatprep.subr.mxu0 0.0
  %v2177 = vand.u32 %v2022, 4294901760
  %v2178 = vsub.f32 %v2022, %v2177
  %2179 = vmatpush1.xpose.msra.mxu0 %v2178
  %2180 = vmatprep.subr.mxu0 0.0
  %2181 = vmatpush1.xpose.msra.mxu0 0.0
  %2182 = vmatprep.subr.mxu0 0.0
  %2183 = vmatpush1.xpose.msra.mxu0 0.0
  %2184 = vmatprep.subr.mxu0 0.0
  %2185 = vmatpush1.xpose.msra.mxu0 0.0
  %2186 = vmatprep.subr.mxu0 0.0
  %2187 = vmatpush1.xpose.msra.mxu0 0.0
  %2188 = vmatprep.subr.mxu0 0.0
  %2189 = vmatpush1.xpose.msra.mxu0 0.0
  %2190 = vmatprep.subr.mxu0 0.0
  %2191 = vmatpush1.xpose.msra.mxu0 0.0
  %2192 = vmatprep.subr.mxu0 0.0
  %2193 = vmatpush1.xpose.msra.mxu0 0.0
  %2194 = vmatprep.subr.mxu0 0.0
  %2195 = vmatpush1.xpose.msra.mxu0 0.0
  %2196 = vmatprep.subr.mxu0 0.0
  %2197 = vmatpush1.xpose.msra.mxu0 0.0
  %2198 = vmatprep.subr.mxu0 0.0
  %2199 = vmatpush1.xpose.msra.mxu0 0.0
  %2200 = vmatprep.subr.mxu0 0.0
  %2201 = vmatpush1.xpose.msra.mxu0 0.0
  %2202 = vmatprep.subr.mxu0 0.0
  %2203 = vmatpush1.xpose.msra.mxu0 0.0
  %2204 = vmatprep.subr.mxu0 0.0
  %2205 = vmatpush1.xpose.msra.mxu0 0.0
  %2206 = vmatprep.subr.mxu0 0.0
  %2207 = vmatpush1.xpose.msra.mxu0 0.0
  %2208 = vmatprep.subr.mxu0 0.0
  %2209 = vmatpush1.xpose.msra.mxu0 0.0
  %2210 = vmatprep.subr.mxu0 0.0
  %2211 = vmatpush1.xpose.msra.mxu0 0.0
  %2212 = vmatprep.subr.mxu0 0.0
  %2213 = vmatpush1.xpose.msra.mxu0 0.0
  %2214 = vmatprep.subr.mxu0 0.0
  %2215 = vmatpush1.xpose.msra.mxu0 0.0
  %2216 = vmatprep.subr.mxu0 0.0
  %2217 = vmatpush1.xpose.msra.mxu0 0.0
  %2218 = vmatprep.subr.mxu0 0.0
  %2219 = vmatpush1.xpose.msra.mxu0 0.0
  %2220 = vmatprep.subr.mxu0 0.0
  %2221 = vmatpush1.xpose.msra.mxu0 0.0
  %2222 = vmatprep.subr.mxu0 0.0
  %2223 = vmatpush1.xpose.msra.mxu0 0.0
  %2224 = vmatprep.subr.mxu0 0.0
  %2225 = vmatpush1.xpose.msra.mxu0 0.0
  %2226 = vmatprep.subr.mxu0 0.0
  %2227 = vmatpush1.xpose.msra.mxu0 0.0
  %2228 = vmatprep.subr.mxu0 0.0
  %2229 = vmatpush1.xpose.msra.mxu0 0.0
  %2230 = vmatprep.subr.mxu0 0.0
  %2231 = vmatpush1.xpose.msra.mxu0 0.0
  %2232 = vmatprep.subr.mxu0 0.0
  %2233 = vmatpush1.xpose.msra.mxu0 0.0
  %2234 = vmatprep.subr.mxu0 0.0
  %2235 = vmatpush1.xpose.msra.mxu0 0.0
  %2236 = vmatprep.subr.mxu0 0.0
  %2237 = vmatpush1.xpose.msra.mxu0 0.0
  %2238 = vmatprep.subr.mxu0 0.0
  %2239 = vmatpush1.xpose.msra.mxu0 0.0
  %2240 = vmatprep.subr.mxu0 0.0
  %2241 = vmatpush1.xpose.msra.mxu0 0.0
  %2242 = vmatprep.mubr.f32.mxu0 0.0
  %v2243 = vand.u32 %v2019, 4294901760
  %v2244 = vsub.f32 %v2019, %v2243
  %2245 = vmatmul.mubr.f32.gmra.mrb[0].mxu0 %v2244
  %v2246 = vpop.f32.mrb[0].mxu0
  %v2247 = vadd.f32 %v2173, %v2246
  %v2248 = vpop.f32.mrb[0].mxu0
  %2249 = vdwg.mxu0
  %2250 = vmatprep.subr.mxu0 0.0
  %v2251 = vand.u32 %v2022, 4294901760
  %2252 = vmatpush1.xpose.msra.mxu0 %v2251
  %2253 = vmatprep.subr.mxu0 0.0
  %2254 = vmatpush1.xpose.msra.mxu0 0.0
  %2255 = vmatprep.subr.mxu0 0.0
  %2256 = vmatpush1.xpose.msra.mxu0 0.0
  %2257 = vmatprep.subr.mxu0 0.0
  %2258 = vmatpush1.xpose.msra.mxu0 0.0
  %2259 = vmatprep.subr.mxu0 0.0
  %2260 = vmatpush1.xpose.msra.mxu0 0.0
  %2261 = vmatprep.subr.mxu0 0.0
  %2262 = vmatpush1.xpose.msra.mxu0 0.0
  %2263 = vmatprep.subr.mxu0 0.0
  %2264 = vmatpush1.xpose.msra.mxu0 0.0
  %2265 = vmatprep.subr.mxu0 0.0
  %2266 = vmatpush1.xpose.msra.mxu0 0.0
  %2267 = vmatprep.subr.mxu0 0.0
  %2268 = vmatpush1.xpose.msra.mxu0 0.0
  %2269 = vmatprep.subr.mxu0 0.0
  %2270 = vmatpush1.xpose.msra.mxu0 0.0
  %2271 = vmatprep.subr.mxu0 0.0
  %2272 = vmatpush1.xpose.msra.mxu0 0.0
  %2273 = vmatprep.subr.mxu0 0.0
  %2274 = vmatpush1.xpose.msra.mxu0 0.0
  %2275 = vmatprep.subr.mxu0 0.0
  %2276 = vmatpush1.xpose.msra.mxu0 0.0
  %2277 = vmatprep.subr.mxu0 0.0
  %2278 = vmatpush1.xpose.msra.mxu0 0.0
  %2279 = vmatprep.subr.mxu0 0.0
  %2280 = vmatpush1.xpose.msra.mxu0 0.0
  %2281 = vmatprep.subr.mxu0 0.0
  %2282 = vmatpush1.xpose.msra.mxu0 0.0
  %2283 = vmatprep.subr.mxu0 0.0
  %2284 = vmatpush1.xpose.msra.mxu0 0.0
  %2285 = vmatprep.subr.mxu0 0.0
  %2286 = vmatpush1.xpose.msra.mxu0 0.0
  %2287 = vmatprep.subr.mxu0 0.0
  %2288 = vmatpush1.xpose.msra.mxu0 0.0
  %2289 = vmatprep.subr.mxu0 0.0
  %2290 = vmatpush1.xpose.msra.mxu0 0.0
  %2291 = vmatprep.subr.mxu0 0.0
  %2292 = vmatpush1.xpose.msra.mxu0 0.0
  %2293 = vmatprep.subr.mxu0 0.0
  %2294 = vmatpush1.xpose.msra.mxu0 0.0
  %2295 = vmatprep.subr.mxu0 0.0
  %2296 = vmatpush1.xpose.msra.mxu0 0.0
  %2297 = vmatprep.subr.mxu0 0.0
  %2298 = vmatpush1.xpose.msra.mxu0 0.0
  %2299 = vmatprep.subr.mxu0 0.0
  %2300 = vmatpush1.xpose.msra.mxu0 0.0
  %2301 = vmatprep.subr.mxu0 0.0
  %2302 = vmatpush1.xpose.msra.mxu0 0.0
  %2303 = vmatprep.subr.mxu0 0.0
  %2304 = vmatpush1.xpose.msra.mxu0 0.0
  %2305 = vmatprep.subr.mxu0 0.0
  %2306 = vmatpush1.xpose.msra.mxu0 0.0
  %2307 = vmatprep.subr.mxu0 0.0
  %2308 = vmatpush1.xpose.msra.mxu0 0.0
  %2309 = vmatprep.subr.mxu0 0.0
  %2310 = vmatpush1.xpose.msra.mxu0 0.0
  %2311 = vmatprep.subr.mxu0 0.0
  %2312 = vmatpush1.xpose.msra.mxu0 0.0
  %2313 = vmatprep.subr.mxu0 0.0
  %2314 = vmatpush1.xpose.msra.mxu0 0.0
  %2315 = vmatprep.mubr.f32.mxu0 0.0
  %v2316 = vand.u32 %v2019, 4294901760
  %v2317 = vsub.f32 %v2019, %v2316
  %v2318 = vand.u32 %v2317, 4294901760
  %2319 = vmatmul.mubr.f32.gmra.mrb[0].mxu0 %v2318
  %v2320 = vpop.f32.mrb[0].mxu0
  %v2321 = vadd.f32 %v2247, %v2320
  %v2322 = vpop.f32.mrb[0].mxu0
  %2323 = vdwg.mxu0
  %2324 = vmatprep.subr.mxu0 0.0
  %v2325 = vand.u32 %v2022, 4294901760
  %v2326 = vsub.f32 %v2022, %v2325
  %v2327 = vand.u32 %v2326, 4294901760
  %2328 = vmatpush1.xpose.msra.mxu0 %v2327
  %2329 = vmatprep.subr.mxu0 0.0
  %2330 = vmatpush1.xpose.msra.mxu0 0.0
  %2331 = vmatprep.subr.mxu0 0.0
  %2332 = vmatpush1.xpose.msra.mxu0 0.0
  %2333 = vmatprep.subr.mxu0 0.0
  %2334 = vmatpush1.xpose.msra.mxu0 0.0
  %2335 = vmatprep.subr.mxu0 0.0
  %2336 = vmatpush1.xpose.msra.mxu0 0.0
  %2337 = vmatprep.subr.mxu0 0.0
  %2338 = vmatpush1.xpose.msra.mxu0 0.0
  %2339 = vmatprep.subr.mxu0 0.0
  %2340 = vmatpush1.xpose.msra.mxu0 0.0
  %2341 = vmatprep.subr.mxu0 0.0
  %2342 = vmatpush1.xpose.msra.mxu0 0.0
  %2343 = vmatprep.subr.mxu0 0.0
  %2344 = vmatpush1.xpose.msra.mxu0 0.0
  %2345 = vmatprep.subr.mxu0 0.0
  %2346 = vmatpush1.xpose.msra.mxu0 0.0
  %2347 = vmatprep.subr.mxu0 0.0
  %2348 = vmatpush1.xpose.msra.mxu0 0.0
  %2349 = vmatprep.subr.mxu0 0.0
  %2350 = vmatpush1.xpose.msra.mxu0 0.0
  %2351 = vmatprep.subr.mxu0 0.0
  %2352 = vmatpush1.xpose.msra.mxu0 0.0
  %2353 = vmatprep.subr.mxu0 0.0
  %2354 = vmatpush1.xpose.msra.mxu0 0.0
  %2355 = vmatprep.subr.mxu0 0.0
  %2356 = vmatpush1.xpose.msra.mxu0 0.0
  %2357 = vmatprep.subr.mxu0 0.0
  %2358 = vmatpush1.xpose.msra.mxu0 0.0
  %2359 = vmatprep.subr.mxu0 0.0
  %2360 = vmatpush1.xpose.msra.mxu0 0.0
  %2361 = vmatprep.subr.mxu0 0.0
  %2362 = vmatpush1.xpose.msra.mxu0 0.0
  %2363 = vmatprep.subr.mxu0 0.0
  %2364 = vmatpush1.xpose.msra.mxu0 0.0
  %2365 = vmatprep.subr.mxu0 0.0
  %2366 = vmatpush1.xpose.msra.mxu0 0.0
  %2367 = vmatprep.subr.mxu0 0.0
  %2368 = vmatpush1.xpose.msra.mxu0 0.0
  %2369 = vmatprep.subr.mxu0 0.0
  %2370 = vmatpush1.xpose.msra.mxu0 0.0
  %2371 = vmatprep.subr.mxu0 0.0
  %2372 = vmatpush1.xpose.msra.mxu0 0.0
  %2373 = vmatprep.subr.mxu0 0.0
  %2374 = vmatpush1.xpose.msra.mxu0 0.0
  %2375 = vmatprep.subr.mxu0 0.0
  %2376 = vmatpush1.xpose.msra.mxu0 0.0
  %2377 = vmatprep.subr.mxu0 0.0
  %2378 = vmatpush1.xpose.msra.mxu0 0.0
  %2379 = vmatprep.subr.mxu0 0.0
  %2380 = vmatpush1.xpose.msra.mxu0 0.0
  %2381 = vmatprep.subr.mxu0 0.0
  %2382 = vmatpush1.xpose.msra.mxu0 0.0
  %2383 = vmatprep.subr.mxu0 0.0
  %2384 = vmatpush1.xpose.msra.mxu0 0.0
  %2385 = vmatprep.subr.mxu0 0.0
  %2386 = vmatpush1.xpose.msra.mxu0 0.0
  %2387 = vmatprep.subr.mxu0 0.0
  %2388 = vmatpush1.xpose.msra.mxu0 0.0
  %2389 = vmatprep.subr.mxu0 0.0
  %2390 = vmatpush1.xpose.msra.mxu0 0.0
  %2391 = vmatprep.mubr.f32.mxu0 0.0
  %v2392 = vand.u32 %v2019, 4294901760
  %2393 = vmatmul.mubr.f32.gmra.mrb[0].mxu0 %v2392
  %v2394 = vpop.f32.mrb[0].mxu0
  %v2395 = vadd.f32 %v2321, %v2394
  %v2396 = vpop.f32.mrb[0].mxu0
  %2397 = vdwg.mxu0
  %2398 = vmatprep.subr.mxu0 0.0
  %v2399 = vand.u32 %v2022, 4294901760
  %2400 = vmatpush1.xpose.msra.mxu0 %v2399
  %2401 = vmatprep.subr.mxu0 0.0
  %2402 = vmatpush1.xpose.msra.mxu0 0.0
  %2403 = vmatprep.subr.mxu0 0.0
  %2404 = vmatpush1.xpose.msra.mxu0 0.0
  %2405 = vmatprep.subr.mxu0 0.0
  %2406 = vmatpush1.xpose.msra.mxu0 0.0
  %2407 = vmatprep.subr.mxu0 0.0
  %2408 = vmatpush1.xpose.msra.mxu0 0.0
  %2409 = vmatprep.subr.mxu0 0.0
  %2410 = vmatpush1.xpose.msra.mxu0 0.0
  %2411 = vmatprep.subr.mxu0 0.0
  %2412 = vmatpush1.xpose.msra.mxu0 0.0
  %2413 = vmatprep.subr.mxu0 0.0
  %2414 = vmatpush1.xpose.msra.mxu0 0.0
  %2415 = vmatprep.subr.mxu0 0.0
  %2416 = vmatpush1.xpose.msra.mxu0 0.0
  %2417 = vmatprep.subr.mxu0 0.0
  %2418 = vmatpush1.xpose.msra.mxu0 0.0
  %2419 = vmatprep.subr.mxu0 0.0
  %2420 = vmatpush1.xpose.msra.mxu0 0.0
  %2421 = vmatprep.subr.mxu0 0.0
  %2422 = vmatpush1.xpose.msra.mxu0 0.0
  %2423 = vmatprep.subr.mxu0 0.0
  %2424 = vmatpush1.xpose.msra.mxu0 0.0
  %2425 = vmatprep.subr.mxu0 0.0
  %2426 = vmatpush1.xpose.msra.mxu0 0.0
  %2427 = vmatprep.subr.mxu0 0.0
  %2428 = vmatpush1.xpose.msra.mxu0 0.0
  %2429 = vmatprep.subr.mxu0 0.0
  %2430 = vmatpush1.xpose.msra.mxu0 0.0
  %2431 = vmatprep.subr.mxu0 0.0
  %2432 = vmatpush1.xpose.msra.mxu0 0.0
  %2433 = vmatprep.subr.mxu0 0.0
  %2434 = vmatpush1.xpose.msra.mxu0 0.0
  %2435 = vmatprep.subr.mxu0 0.0
  %2436 = vmatpush1.xpose.msra.mxu0 0.0
  %2437 = vmatprep.subr.mxu0 0.0
  %2438 = vmatpush1.xpose.msra.mxu0 0.0
  %2439 = vmatprep.subr.mxu0 0.0
  %2440 = vmatpush1.xpose.msra.mxu0 0.0
  %2441 = vmatprep.subr.mxu0 0.0
  %2442 = vmatpush1.xpose.msra.mxu0 0.0
  %2443 = vmatprep.subr.mxu0 0.0
  %2444 = vmatpush1.xpose.msra.mxu0 0.0
  %2445 = vmatprep.subr.mxu0 0.0
  %2446 = vmatpush1.xpose.msra.mxu0 0.0
  %2447 = vmatprep.subr.mxu0 0.0
  %2448 = vmatpush1.xpose.msra.mxu0 0.0
  %2449 = vmatprep.subr.mxu0 0.0
  %2450 = vmatpush1.xpose.msra.mxu0 0.0
  %2451 = vmatprep.subr.mxu0 0.0
  %2452 = vmatpush1.xpose.msra.mxu0 0.0
  %2453 = vmatprep.subr.mxu0 0.0
  %2454 = vmatpush1.xpose.msra.mxu0 0.0
  %2455 = vmatprep.subr.mxu0 0.0
  %2456 = vmatpush1.xpose.msra.mxu0 0.0
  %2457 = vmatprep.subr.mxu0 0.0
  %2458 = vmatpush1.xpose.msra.mxu0 0.0
  %2459 = vmatprep.subr.mxu0 0.0
  %2460 = vmatpush1.xpose.msra.mxu0 0.0
  %2461 = vmatprep.subr.mxu0 0.0
  %2462 = vmatpush1.xpose.msra.mxu0 0.0
  %2463 = vmatprep.mubr.f32.mxu0 0.0
  %v2464 = vand.u32 %v2019, 4294901760
  %2465 = vmatmul.mubr.f32.gmra.mrb[0].mxu0 %v2464
  %v2466 = vpop.f32.mrb[0].mxu0
  %v2467 = vadd.f32 %v2395, %v2466
  %v2468 = vpop.f32.mrb[0].mxu0
  %2469 = vdwg.mxu0
  %v2471 = vsel %vm2017, %v1344, 0
  %v2474 = vsel %vm2017, %v1654, 0
  %2476 = vmatprep.subr.mxu0 0.0
  %v2477 = vand.u32 %v2474, 4294901760
  %2478 = vmatpush1.xpose.msra.mxu0 %v2477
  %2479 = vmatprep.subr.mxu0 0.0
  %2480 = vmatpush1.xpose.msra.mxu0 0.0
  %2481 = vmatprep.subr.mxu0 0.0
  %2482 = vmatpush1.xpose.msra.mxu0 0.0
  %2483 = vmatprep.subr.mxu0 0.0
  %2484 = vmatpush1.xpose.msra.mxu0 0.0
  %2485 = vmatprep.subr.mxu0 0.0
  %2486 = vmatpush1.xpose.msra.mxu0 0.0
  %2487 = vmatprep.subr.mxu0 0.0
  %2488 = vmatpush1.xpose.msra.mxu0 0.0
  %2489 = vmatprep.subr.mxu0 0.0
  %2490 = vmatpush1.xpose.msra.mxu0 0.0
  %2491 = vmatprep.subr.mxu0 0.0
  %2492 = vmatpush1.xpose.msra.mxu0 0.0
  %2493 = vmatprep.subr.mxu0 0.0
  %2494 = vmatpush1.xpose.msra.mxu0 0.0
  %2495 = vmatprep.subr.mxu0 0.0
  %2496 = vmatpush1.xpose.msra.mxu0 0.0
  %2497 = vmatprep.subr.mxu0 0.0
  %2498 = vmatpush1.xpose.msra.mxu0 0.0
  %2499 = vmatprep.subr.mxu0 0.0
  %2500 = vmatpush1.xpose.msra.mxu0 0.0
  %2501 = vmatprep.subr.mxu0 0.0
  %2502 = vmatpush1.xpose.msra.mxu0 0.0
  %2503 = vmatprep.subr.mxu0 0.0
  %2504 = vmatpush1.xpose.msra.mxu0 0.0
  %2505 = vmatprep.subr.mxu0 0.0
  %2506 = vmatpush1.xpose.msra.mxu0 0.0
  %2507 = vmatprep.subr.mxu0 0.0
  %2508 = vmatpush1.xpose.msra.mxu0 0.0
  %2509 = vmatprep.subr.mxu0 0.0
  %2510 = vmatpush1.xpose.msra.mxu0 0.0
  %2511 = vmatprep.subr.mxu0 0.0
  %2512 = vmatpush1.xpose.msra.mxu0 0.0
  %2513 = vmatprep.subr.mxu0 0.0
  %2514 = vmatpush1.xpose.msra.mxu0 0.0
  %2515 = vmatprep.subr.mxu0 0.0
  %2516 = vmatpush1.xpose.msra.mxu0 0.0
  %2517 = vmatprep.subr.mxu0 0.0
  %2518 = vmatpush1.xpose.msra.mxu0 0.0
  %2519 = vmatprep.subr.mxu0 0.0
  %2520 = vmatpush1.xpose.msra.mxu0 0.0
  %2521 = vmatprep.subr.mxu0 0.0
  %2522 = vmatpush1.xpose.msra.mxu0 0.0
  %2523 = vmatprep.subr.mxu0 0.0
  %2524 = vmatpush1.xpose.msra.mxu0 0.0
  %2525 = vmatprep.subr.mxu0 0.0
  %2526 = vmatpush1.xpose.msra.mxu0 0.0
  %2527 = vmatprep.subr.mxu0 0.0
  %2528 = vmatpush1.xpose.msra.mxu0 0.0
  %2529 = vmatprep.subr.mxu0 0.0
  %2530 = vmatpush1.xpose.msra.mxu0 0.0
  %2531 = vmatprep.subr.mxu0 0.0
  %2532 = vmatpush1.xpose.msra.mxu0 0.0
  %2533 = vmatprep.subr.mxu0 0.0
  %2534 = vmatpush1.xpose.msra.mxu0 0.0
  %2535 = vmatprep.subr.mxu0 0.0
  %2536 = vmatpush1.xpose.msra.mxu0 0.0
  %2537 = vmatprep.subr.mxu0 0.0
  %2538 = vmatpush1.xpose.msra.mxu0 0.0
  %2539 = vmatprep.subr.mxu0 0.0
  %2540 = vmatpush1.xpose.msra.mxu0 0.0
  %2541 = vmatprep.mubr.f32.mxu0 0.0
  %v2542 = vand.u32 %v2471, 4294901760
  %v2543 = vsub.f32 %v2471, %v2542
  %v2544 = vand.u32 %v2543, 4294901760
  %v2545 = vsub.f32 %v2543, %v2544
  %v2546 = vand.u32 %v2545, 4294901760
  %2547 = vmatmul.mubr.f32.gmra.mrb[0].mxu0 %v2546
  %v2548 = vpop.f32.mrb[0].mxu0
  %v2549 = vadd.f32 0.0, %v2548
  %v2550 = vpop.f32.mrb[0].mxu0
  %2551 = vdwg.mxu0
  %2552 = vmatprep.subr.mxu0 0.0
  %v2553 = vand.u32 %v2474, 4294901760
  %v2554 = vsub.f32 %v2474, %v2553
  %v2555 = vand.u32 %v2554, 4294901760
  %v2556 = vsub.f32 %v2554, %v2555
  %v2557 = vand.u32 %v2556, 4294901760
  %2558 = vmatpush1.xpose.msra.mxu0 %v2557
  %2559 = vmatprep.subr.mxu0 0.0
  %2560 = vmatpush1.xpose.msra.mxu0 0.0
  %2561 = vmatprep.subr.mxu0 0.0
  %2562 = vmatpush1.xpose.msra.mxu0 0.0
  %2563 = vmatprep.subr.mxu0 0.0
  %2564 = vmatpush1.xpose.msra.mxu0 0.0
  %2565 = vmatprep.subr.mxu0 0.0
  %2566 = vmatpush1.xpose.msra.mxu0 0.0
  %2567 = vmatprep.subr.mxu0 0.0
  %2568 = vmatpush1.xpose.msra.mxu0 0.0
  %2569 = vmatprep.subr.mxu0 0.0
  %2570 = vmatpush1.xpose.msra.mxu0 0.0
  %2571 = vmatprep.subr.mxu0 0.0
  %2572 = vmatpush1.xpose.msra.mxu0 0.0
  %2573 = vmatprep.subr.mxu0 0.0
  %2574 = vmatpush1.xpose.msra.mxu0 0.0
  %2575 = vmatprep.subr.mxu0 0.0
  %2576 = vmatpush1.xpose.msra.mxu0 0.0
  %2577 = vmatprep.subr.mxu0 0.0
  %2578 = vmatpush1.xpose.msra.mxu0 0.0
  %2579 = vmatprep.subr.mxu0 0.0
  %2580 = vmatpush1.xpose.msra.mxu0 0.0
  %2581 = vmatprep.subr.mxu0 0.0
  %2582 = vmatpush1.xpose.msra.mxu0 0.0
  %2583 = vmatprep.subr.mxu0 0.0
  %2584 = vmatpush1.xpose.msra.mxu0 0.0
  %2585 = vmatprep.subr.mxu0 0.0
  %2586 = vmatpush1.xpose.msra.mxu0 0.0
  %2587 = vmatprep.subr.mxu0 0.0
  %2588 = vmatpush1.xpose.msra.mxu0 0.0
  %2589 = vmatprep.subr.mxu0 0.0
  %2590 = vmatpush1.xpose.msra.mxu0 0.0
  %2591 = vmatprep.subr.mxu0 0.0
  %2592 = vmatpush1.xpose.msra.mxu0 0.0
  %2593 = vmatprep.subr.mxu0 0.0
  %2594 = vmatpush1.xpose.msra.mxu0 0.0
  %2595 = vmatprep.subr.mxu0 0.0
  %2596 = vmatpush1.xpose.msra.mxu0 0.0
  %2597 = vmatprep.subr.mxu0 0.0
  %2598 = vmatpush1.xpose.msra.mxu0 0.0
  %2599 = vmatprep.subr.mxu0 0.0
  %2600 = vmatpush1.xpose.msra.mxu0 0.0
  %2601 = vmatprep.subr.mxu0 0.0
  %2602 = vmatpush1.xpose.msra.mxu0 0.0
  %2603 = vmatprep.subr.mxu0 0.0
  %2604 = vmatpush1.xpose.msra.mxu0 0.0
  %2605 = vmatprep.subr.mxu0 0.0
  %2606 = vmatpush1.xpose.msra.mxu0 0.0
  %2607 = vmatprep.subr.mxu0 0.0
  %2608 = vmatpush1.xpose.msra.mxu0 0.0
  %2609 = vmatprep.subr.mxu0 0.0
  %2610 = vmatpush1.xpose.msra.mxu0 0.0
  %2611 = vmatprep.subr.mxu0 0.0
  %2612 = vmatpush1.xpose.msra.mxu0 0.0
  %2613 = vmatprep.subr.mxu0 0.0
  %2614 = vmatpush1.xpose.msra.mxu0 0.0
  %2615 = vmatprep.subr.mxu0 0.0
  %2616 = vmatpush1.xpose.msra.mxu0 0.0
  %2617 = vmatprep.subr.mxu0 0.0
  %2618 = vmatpush1.xpose.msra.mxu0 0.0
  %2619 = vmatprep.subr.mxu0 0.0
  %2620 = vmatpush1.xpose.msra.mxu0 0.0
  %2621 = vmatprep.mubr.f32.mxu0 0.0
  %v2622 = vand.u32 %v2471, 4294901760
  %2623 = vmatmul.mubr.f32.gmra.mrb[0].mxu0 %v2622
  %v2624 = vpop.f32.mrb[0].mxu0
  %v2625 = vadd.f32 %v2549, %v2624
  %v2626 = vpop.f32.mrb[0].mxu0
  %2627 = vdwg.mxu0
  %2628 = vmatprep.subr.mxu0 0.0
  %v2629 = vand.u32 %v2474, 4294901760
  %v2630 = vsub.f32 %v2474, %v2629
  %2631 = vmatpush1.xpose.msra.mxu0 %v2630
  %2632 = vmatprep.subr.mxu0 0.0
  %2633 = vmatpush1.xpose.msra.mxu0 0.0
  %2634 = vmatprep.subr.mxu0 0.0
  %2635 = vmatpush1.xpose.msra.mxu0 0.0
  %2636 = vmatprep.subr.mxu0 0.0
  %2637 = vmatpush1.xpose.msra.mxu0 0.0
  %2638 = vmatprep.subr.mxu0 0.0
  %2639 = vmatpush1.xpose.msra.mxu0 0.0
  %2640 = vmatprep.subr.mxu0 0.0
  %2641 = vmatpush1.xpose.msra.mxu0 0.0
  %2642 = vmatprep.subr.mxu0 0.0
  %2643 = vmatpush1.xpose.msra.mxu0 0.0
  %2644 = vmatprep.subr.mxu0 0.0
  %2645 = vmatpush1.xpose.msra.mxu0 0.0
  %2646 = vmatprep.subr.mxu0 0.0
  %2647 = vmatpush1.xpose.msra.mxu0 0.0
  %2648 = vmatprep.subr.mxu0 0.0
  %2649 = vmatpush1.xpose.msra.mxu0 0.0
  %2650 = vmatprep.subr.mxu0 0.0
  %2651 = vmatpush1.xpose.msra.mxu0 0.0
  %2652 = vmatprep.subr.mxu0 0.0
  %2653 = vmatpush1.xpose.msra.mxu0 0.0
  %2654 = vmatprep.subr.mxu0 0.0
  %2655 = vmatpush1.xpose.msra.mxu0 0.0
  %2656 = vmatprep.subr.mxu0 0.0
  %2657 = vmatpush1.xpose.msra.mxu0 0.0
  %2658 = vmatprep.subr.mxu0 0.0
  %2659 = vmatpush1.xpose.msra.mxu0 0.0
  %2660 = vmatprep.subr.mxu0 0.0
  %2661 = vmatpush1.xpose.msra.mxu0 0.0
  %2662 = vmatprep.subr.mxu0 0.0
  %2663 = vmatpush1.xpose.msra.mxu0 0.0
  %2664 = vmatprep.subr.mxu0 0.0
  %2665 = vmatpush1.xpose.msra.mxu0 0.0
  %2666 = vmatprep.subr.mxu0 0.0
  %2667 = vmatpush1.xpose.msra.mxu0 0.0
  %2668 = vmatprep.subr.mxu0 0.0
  %2669 = vmatpush1.xpose.msra.mxu0 0.0
  %2670 = vmatprep.subr.mxu0 0.0
  %2671 = vmatpush1.xpose.msra.mxu0 0.0
  %2672 = vmatprep.subr.mxu0 0.0
  %2673 = vmatpush1.xpose.msra.mxu0 0.0
  %2674 = vmatprep.subr.mxu0 0.0
  %2675 = vmatpush1.xpose.msra.mxu0 0.0
  %2676 = vmatprep.subr.mxu0 0.0
  %2677 = vmatpush1.xpose.msra.mxu0 0.0
  %2678 = vmatprep.subr.mxu0 0.0
  %2679 = vmatpush1.xpose.msra.mxu0 0.0
  %2680 = vmatprep.subr.mxu0 0.0
  %2681 = vmatpush1.xpose.msra.mxu0 0.0
  %2682 = vmatprep.subr.mxu0 0.0
  %2683 = vmatpush1.xpose.msra.mxu0 0.0
  %2684 = vmatprep.subr.mxu0 0.0
  %2685 = vmatpush1.xpose.msra.mxu0 0.0
  %2686 = vmatprep.subr.mxu0 0.0
  %2687 = vmatpush1.xpose.msra.mxu0 0.0
  %2688 = vmatprep.subr.mxu0 0.0
  %2689 = vmatpush1.xpose.msra.mxu0 0.0
  %2690 = vmatprep.subr.mxu0 0.0
  %2691 = vmatpush1.xpose.msra.mxu0 0.0
  %2692 = vmatprep.subr.mxu0 0.0
  %2693 = vmatpush1.xpose.msra.mxu0 0.0
  %2694 = vmatprep.mubr.f32.mxu0 0.0
  %v2695 = vand.u32 %v2471, 4294901760
  %v2696 = vsub.f32 %v2471, %v2695
  %2697 = vmatmul.mubr.f32.gmra.mrb[0].mxu0 %v2696
  %v2698 = vpop.f32.mrb[0].mxu0
  %v2699 = vadd.f32 %v2625, %v2698
  %v2700 = vpop.f32.mrb[0].mxu0
  %2701 = vdwg.mxu0
  %2702 = vmatprep.subr.mxu0 0.0
  %v2703 = vand.u32 %v2474, 4294901760
  %2704 = vmatpush1.xpose.msra.mxu0 %v2703
  %2705 = vmatprep.subr.mxu0 0.0
  %2706 = vmatpush1.xpose.msra.mxu0 0.0
  %2707 = vmatprep.subr.mxu0 0.0
  %2708 = vmatpush1.xpose.msra.mxu0 0.0
  %2709 = vmatprep.subr.mxu0 0.0
  %2710 = vmatpush1.xpose.msra.mxu0 0.0
  %2711 = vmatprep.subr.mxu0 0.0
  %2712 = vmatpush1.xpose.msra.mxu0 0.0
  %2713 = vmatprep.subr.mxu0 0.0
  %2714 = vmatpush1.xpose.msra.mxu0 0.0
  %2715 = vmatprep.subr.mxu0 0.0
  %2716 = vmatpush1.xpose.msra.mxu0 0.0
  %2717 = vmatprep.subr.mxu0 0.0
  %2718 = vmatpush1.xpose.msra.mxu0 0.0
  %2719 = vmatprep.subr.mxu0 0.0
  %2720 = vmatpush1.xpose.msra.mxu0 0.0
  %2721 = vmatprep.subr.mxu0 0.0
  %2722 = vmatpush1.xpose.msra.mxu0 0.0
  %2723 = vmatprep.subr.mxu0 0.0
  %2724 = vmatpush1.xpose.msra.mxu0 0.0
  %2725 = vmatprep.subr.mxu0 0.0
  %2726 = vmatpush1.xpose.msra.mxu0 0.0
  %2727 = vmatprep.subr.mxu0 0.0
  %2728 = vmatpush1.xpose.msra.mxu0 0.0
  %2729 = vmatprep.subr.mxu0 0.0
  %2730 = vmatpush1.xpose.msra.mxu0 0.0
  %2731 = vmatprep.subr.mxu0 0.0
  %2732 = vmatpush1.xpose.msra.mxu0 0.0
  %2733 = vmatprep.subr.mxu0 0.0
  %2734 = vmatpush1.xpose.msra.mxu0 0.0
  %2735 = vmatprep.subr.mxu0 0.0
  %2736 = vmatpush1.xpose.msra.mxu0 0.0
  %2737 = vmatprep.subr.mxu0 0.0
  %2738 = vmatpush1.xpose.msra.mxu0 0.0
  %2739 = vmatprep.subr.mxu0 0.0
  %2740 = vmatpush1.xpose.msra.mxu0 0.0
  %2741 = vmatprep.subr.mxu0 0.0
  %2742 = vmatpush1.xpose.msra.mxu0 0.0
  %2743 = vmatprep.subr.mxu0 0.0
  %2744 = vmatpush1.xpose.msra.mxu0 0.0
  %2745 = vmatprep.subr.mxu0 0.0
  %2746 = vmatpush1.xpose.msra.mxu0 0.0
  %2747 = vmatprep.subr.mxu0 0.0
  %2748 = vmatpush1.xpose.msra.mxu0 0.0
  %2749 = vmatprep.subr.mxu0 0.0
  %2750 = vmatpush1.xpose.msra.mxu0 0.0
  %2751 = vmatprep.subr.mxu0 0.0
  %2752 = vmatpush1.xpose.msra.mxu0 0.0
  %2753 = vmatprep.subr.mxu0 0.0
  %2754 = vmatpush1.xpose.msra.mxu0 0.0
  %2755 = vmatprep.subr.mxu0 0.0
  %2756 = vmatpush1.xpose.msra.mxu0 0.0
  %2757 = vmatprep.subr.mxu0 0.0
  %2758 = vmatpush1.xpose.msra.mxu0 0.0
  %2759 = vmatprep.subr.mxu0 0.0
  %2760 = vmatpush1.xpose.msra.mxu0 0.0
  %2761 = vmatprep.subr.mxu0 0.0
  %2762 = vmatpush1.xpose.msra.mxu0 0.0
  %2763 = vmatprep.subr.mxu0 0.0
  %2764 = vmatpush1.xpose.msra.mxu0 0.0
  %2765 = vmatprep.subr.mxu0 0.0
  %2766 = vmatpush1.xpose.msra.mxu0 0.0
  %2767 = vmatprep.mubr.f32.mxu0 0.0
  %v2768 = vand.u32 %v2471, 4294901760
  %v2769 = vsub.f32 %v2471, %v2768
  %v2770 = vand.u32 %v2769, 4294901760
  %2771 = vmatmul.mubr.f32.gmra.mrb[0].mxu0 %v2770
  %v2772 = vpop.f32.mrb[0].mxu0
  %v2773 = vadd.f32 %v2699, %v2772
  %v2774 = vpop.f32.mrb[0].mxu0
  %2775 = vdwg.mxu0
  %2776 = vmatprep.subr.mxu0 0.0
  %v2777 = vand.u32 %v2474, 4294901760
  %v2778 = vsub.f32 %v2474, %v2777
  %v2779 = vand.u32 %v2778, 4294901760
  %2780 = vmatpush1.xpose.msra.mxu0 %v2779
  %2781 = vmatprep.subr.mxu0 0.0
  %2782 = vmatpush1.xpose.msra.mxu0 0.0
  %2783 = vmatprep.subr.mxu0 0.0
  %2784 = vmatpush1.xpose.msra.mxu0 0.0
  %2785 = vmatprep.subr.mxu0 0.0
  %2786 = vmatpush1.xpose.msra.mxu0 0.0
  %2787 = vmatprep.subr.mxu0 0.0
  %2788 = vmatpush1.xpose.msra.mxu0 0.0
  %2789 = vmatprep.subr.mxu0 0.0
  %2790 = vmatpush1.xpose.msra.mxu0 0.0
  %2791 = vmatprep.subr.mxu0 0.0
  %2792 = vmatpush1.xpose.msra.mxu0 0.0
  %2793 = vmatprep.subr.mxu0 0.0
  %2794 = vmatpush1.xpose.msra.mxu0 0.0
  %2795 = vmatprep.subr.mxu0 0.0
  %2796 = vmatpush1.xpose.msra.mxu0 0.0
  %2797 = vmatprep.subr.mxu0 0.0
  %2798 = vmatpush1.xpose.msra.mxu0 0.0
  %2799 = vmatprep.subr.mxu0 0.0
  %2800 = vmatpush1.xpose.msra.mxu0 0.0
  %2801 = vmatprep.subr.mxu0 0.0
  %2802 = vmatpush1.xpose.msra.mxu0 0.0
  %2803 = vmatprep.subr.mxu0 0.0
  %2804 = vmatpush1.xpose.msra.mxu0 0.0
  %2805 = vmatprep.subr.mxu0 0.0
  %2806 = vmatpush1.xpose.msra.mxu0 0.0
  %2807 = vmatprep.subr.mxu0 0.0
  %2808 = vmatpush1.xpose.msra.mxu0 0.0
  %2809 = vmatprep.subr.mxu0 0.0
  %2810 = vmatpush1.xpose.msra.mxu0 0.0
  %2811 = vmatprep.subr.mxu0 0.0
  %2812 = vmatpush1.xpose.msra.mxu0 0.0
  %2813 = vmatprep.subr.mxu0 0.0
  %2814 = vmatpush1.xpose.msra.mxu0 0.0
  %2815 = vmatprep.subr.mxu0 0.0
  %2816 = vmatpush1.xpose.msra.mxu0 0.0
  %2817 = vmatprep.subr.mxu0 0.0
  %2818 = vmatpush1.xpose.msra.mxu0 0.0
  %2819 = vmatprep.subr.mxu0 0.0
  %2820 = vmatpush1.xpose.msra.mxu0 0.0
  %2821 = vmatprep.subr.mxu0 0.0
  %2822 = vmatpush1.xpose.msra.mxu0 0.0
  %2823 = vmatprep.subr.mxu0 0.0
  %2824 = vmatpush1.xpose.msra.mxu0 0.0
  %2825 = vmatprep.subr.mxu0 0.0
  %2826 = vmatpush1.xpose.msra.mxu0 0.0
  %2827 = vmatprep.subr.mxu0 0.0
  %2828 = vmatpush1.xpose.msra.mxu0 0.0
  %2829 = vmatprep.subr.mxu0 0.0
  %2830 = vmatpush1.xpose.msra.mxu0 0.0
  %2831 = vmatprep.subr.mxu0 0.0
  %2832 = vmatpush1.xpose.msra.mxu0 0.0
  %2833 = vmatprep.subr.mxu0 0.0
  %2834 = vmatpush1.xpose.msra.mxu0 0.0
  %2835 = vmatprep.subr.mxu0 0.0
  %2836 = vmatpush1.xpose.msra.mxu0 0.0
  %2837 = vmatprep.subr.mxu0 0.0
  %2838 = vmatpush1.xpose.msra.mxu0 0.0
  %2839 = vmatprep.subr.mxu0 0.0
  %2840 = vmatpush1.xpose.msra.mxu0 0.0
  %2841 = vmatprep.subr.mxu0 0.0
  %2842 = vmatpush1.xpose.msra.mxu0 0.0
  %2843 = vmatprep.mubr.f32.mxu0 0.0
  %v2844 = vand.u32 %v2471, 4294901760
  %2845 = vmatmul.mubr.f32.gmra.mrb[0].mxu0 %v2844
  %v2846 = vpop.f32.mrb[0].mxu0
  %v2847 = vadd.f32 %v2773, %v2846
  %v2848 = vpop.f32.mrb[0].mxu0
  %2849 = vdwg.mxu0
  %2850 = vmatprep.subr.mxu0 0.0
  %v2851 = vand.u32 %v2474, 4294901760
  %2852 = vmatpush1.xpose.msra.mxu0 %v2851
  %2853 = vmatprep.subr.mxu0 0.0
  %2854 = vmatpush1.xpose.msra.mxu0 0.0
  %2855 = vmatprep.subr.mxu0 0.0
  %2856 = vmatpush1.xpose.msra.mxu0 0.0
  %2857 = vmatprep.subr.mxu0 0.0
  %2858 = vmatpush1.xpose.msra.mxu0 0.0
  %2859 = vmatprep.subr.mxu0 0.0
  %2860 = vmatpush1.xpose.msra.mxu0 0.0
  %2861 = vmatprep.subr.mxu0 0.0
  %2862 = vmatpush1.xpose.msra.mxu0 0.0
  %2863 = vmatprep.subr.mxu0 0.0
  %2864 = vmatpush1.xpose.msra.mxu0 0.0
  %2865 = vmatprep.subr.mxu0 0.0
  %2866 = vmatpush1.xpose.msra.mxu0 0.0
  %2867 = vmatprep.subr.mxu0 0.0
  %2868 = vmatpush1.xpose.msra.mxu0 0.0
  %2869 = vmatprep.subr.mxu0 0.0
  %2870 = vmatpush1.xpose.msra.mxu0 0.0
  %2871 = vmatprep.subr.mxu0 0.0
  %2872 = vmatpush1.xpose.msra.mxu0 0.0
  %2873 = vmatprep.subr.mxu0 0.0
  %2874 = vmatpush1.xpose.msra.mxu0 0.0
  %2875 = vmatprep.subr.mxu0 0.0
  %2876 = vmatpush1.xpose.msra.mxu0 0.0
  %2877 = vmatprep.subr.mxu0 0.0
  %2878 = vmatpush1.xpose.msra.mxu0 0.0
  %2879 = vmatprep.subr.mxu0 0.0
  %2880 = vmatpush1.xpose.msra.mxu0 0.0
  %2881 = vmatprep.subr.mxu0 0.0
  %2882 = vmatpush1.xpose.msra.mxu0 0.0
  %2883 = vmatprep.subr.mxu0 0.0
  %2884 = vmatpush1.xpose.msra.mxu0 0.0
  %2885 = vmatprep.subr.mxu0 0.0
  %2886 = vmatpush1.xpose.msra.mxu0 0.0
  %2887 = vmatprep.subr.mxu0 0.0
  %2888 = vmatpush1.xpose.msra.mxu0 0.0
  %2889 = vmatprep.subr.mxu0 0.0
  %2890 = vmatpush1.xpose.msra.mxu0 0.0
  %2891 = vmatprep.subr.mxu0 0.0
  %2892 = vmatpush1.xpose.msra.mxu0 0.0
  %2893 = vmatprep.subr.mxu0 0.0
  %2894 = vmatpush1.xpose.msra.mxu0 0.0
  %2895 = vmatprep.subr.mxu0 0.0
  %2896 = vmatpush1.xpose.msra.mxu0 0.0
  %2897 = vmatprep.subr.mxu0 0.0
  %2898 = vmatpush1.xpose.msra.mxu0 0.0
  %2899 = vmatprep.subr.mxu0 0.0
  %2900 = vmatpush1.xpose.msra.mxu0 0.0
  %2901 = vmatprep.subr.mxu0 0.0
  %2902 = vmatpush1.xpose.msra.mxu0 0.0
  %2903 = vmatprep.subr.mxu0 0.0
  %2904 = vmatpush1.xpose.msra.mxu0 0.0
  %2905 = vmatprep.subr.mxu0 0.0
  %2906 = vmatpush1.xpose.msra.mxu0 0.0
  %2907 = vmatprep.subr.mxu0 0.0
  %2908 = vmatpush1.xpose.msra.mxu0 0.0
  %2909 = vmatprep.subr.mxu0 0.0
  %2910 = vmatpush1.xpose.msra.mxu0 0.0
  %2911 = vmatprep.subr.mxu0 0.0
  %2912 = vmatpush1.xpose.msra.mxu0 0.0
  %2913 = vmatprep.subr.mxu0 0.0
  %2914 = vmatpush1.xpose.msra.mxu0 0.0
  %2915 = vmatprep.mubr.f32.mxu0 0.0
  %v2916 = vand.u32 %v2471, 4294901760
  %2917 = vmatmul.mubr.f32.gmra.mrb[0].mxu0 %v2916
  %v2918 = vpop.f32.mrb[0].mxu0
  %v2919 = vadd.f32 %v2847, %v2918
  %v2920 = vpop.f32.mrb[0].mxu0
  %2921 = vdwg.mxu0
  %v2923 = vsel %vm2017, %v1345, 0
  %v2926 = vsel %vm2017, %v1655, 0
  %2928 = vmatprep.subr.mxu0 0.0
  %v2929 = vand.u32 %v2926, 4294901760
  %2930 = vmatpush1.xpose.msra.mxu0 %v2929
  %2931 = vmatprep.subr.mxu0 0.0
  %2932 = vmatpush1.xpose.msra.mxu0 0.0
  %2933 = vmatprep.subr.mxu0 0.0
  %2934 = vmatpush1.xpose.msra.mxu0 0.0
  %2935 = vmatprep.subr.mxu0 0.0
  %2936 = vmatpush1.xpose.msra.mxu0 0.0
  %2937 = vmatprep.subr.mxu0 0.0
  %2938 = vmatpush1.xpose.msra.mxu0 0.0
  %2939 = vmatprep.subr.mxu0 0.0
  %2940 = vmatpush1.xpose.msra.mxu0 0.0
  %2941 = vmatprep.subr.mxu0 0.0
  %2942 = vmatpush1.xpose.msra.mxu0 0.0
  %2943 = vmatprep.subr.mxu0 0.0
  %2944 = vmatpush1.xpose.msra.mxu0 0.0
  %2945 = vmatprep.subr.mxu0 0.0
  %2946 = vmatpush1.xpose.msra.mxu0 0.0
  %2947 = vmatprep.subr.mxu0 0.0
  %2948 = vmatpush1.xpose.msra.mxu0 0.0
  %2949 = vmatprep.subr.mxu0 0.0
  %2950 = vmatpush1.xpose.msra.mxu0 0.0
  %2951 = vmatprep.subr.mxu0 0.0
  %2952 = vmatpush1.xpose.msra.mxu0 0.0
  %2953 = vmatprep.subr.mxu0 0.0
  %2954 = vmatpush1.xpose.msra.mxu0 0.0
  %2955 = vmatprep.subr.mxu0 0.0
  %2956 = vmatpush1.xpose.msra.mxu0 0.0
  %2957 = vmatprep.subr.mxu0 0.0
  %2958 = vmatpush1.xpose.msra.mxu0 0.0
  %2959 = vmatprep.subr.mxu0 0.0
  %2960 = vmatpush1.xpose.msra.mxu0 0.0
  %2961 = vmatprep.subr.mxu0 0.0
  %2962 = vmatpush1.xpose.msra.mxu0 0.0
  %2963 = vmatprep.subr.mxu0 0.0
  %2964 = vmatpush1.xpose.msra.mxu0 0.0
  %2965 = vmatprep.subr.mxu0 0.0
  %2966 = vmatpush1.xpose.msra.mxu0 0.0
  %2967 = vmatprep.subr.mxu0 0.0
  %2968 = vmatpush1.xpose.msra.mxu0 0.0
  %2969 = vmatprep.subr.mxu0 0.0
  %2970 = vmatpush1.xpose.msra.mxu0 0.0
  %2971 = vmatprep.subr.mxu0 0.0
  %2972 = vmatpush1.xpose.msra.mxu0 0.0
  %2973 = vmatprep.subr.mxu0 0.0
  %2974 = vmatpush1.xpose.msra.mxu0 0.0
  %2975 = vmatprep.subr.mxu0 0.0
  %2976 = vmatpush1.xpose.msra.mxu0 0.0
  %2977 = vmatprep.subr.mxu0 0.0
  %2978 = vmatpush1.xpose.msra.mxu0 0.0
  %2979 = vmatprep.subr.mxu0 0.0
  %2980 = vmatpush1.xpose.msra.mxu0 0.0
  %2981 = vmatprep.subr.mxu0 0.0
  %2982 = vmatpush1.xpose.msra.mxu0 0.0
  %2983 = vmatprep.subr.mxu0 0.0
  %2984 = vmatpush1.xpose.msra.mxu0 0.0
  %2985 = vmatprep.subr.mxu0 0.0
  %2986 = vmatpush1.xpose.msra.mxu0 0.0
  %2987 = vmatprep.subr.mxu0 0.0
  %2988 = vmatpush1.xpose.msra.mxu0 0.0
  %2989 = vmatprep.subr.mxu0 0.0
  %2990 = vmatpush1.xpose.msra.mxu0 0.0
  %2991 = vmatprep.subr.mxu0 0.0
  %2992 = vmatpush1.xpose.msra.mxu0 0.0
  %2993 = vmatprep.mubr.f32.mxu0 0.0
  %v2994 = vand.u32 %v2923, 4294901760
  %v2995 = vsub.f32 %v2923, %v2994
  %v2996 = vand.u32 %v2995, 4294901760
  %v2997 = vsub.f32 %v2995, %v2996
  %v2998 = vand.u32 %v2997, 4294901760
  %2999 = vmatmul.mubr.f32.gmra.mrb[0].mxu0 %v2998
  %v3000 = vpop.f32.mrb[0].mxu0
  %v3001 = vadd.f32 0.0, %v3000
  %v3002 = vpop.f32.mrb[0].mxu0
  %3003 = vdwg.mxu0
  %3004 = vmatprep.subr.mxu0 0.0
  %v3005 = vand.u32 %v2926, 4294901760
  %v3006 = vsub.f32 %v2926, %v3005
  %v3007 = vand.u32 %v3006, 4294901760
  %v3008 = vsub.f32 %v3006, %v3007
  %v3009 = vand.u32 %v3008, 4294901760
  %3010 = vmatpush1.xpose.msra.mxu0 %v3009
  %3011 = vmatprep.subr.mxu0 0.0
  %3012 = vmatpush1.xpose.msra.mxu0 0.0
  %3013 = vmatprep.subr.mxu0 0.0
  %3014 = vmatpush1.xpose.msra.mxu0 0.0
  %3015 = vmatprep.subr.mxu0 0.0
  %3016 = vmatpush1.xpose.msra.mxu0 0.0
  %3017 = vmatprep.subr.mxu0 0.0
  %3018 = vmatpush1.xpose.msra.mxu0 0.0
  %3019 = vmatprep.subr.mxu0 0.0
  %3020 = vmatpush1.xpose.msra.mxu0 0.0
  %3021 = vmatprep.subr.mxu0 0.0
  %3022 = vmatpush1.xpose.msra.mxu0 0.0
  %3023 = vmatprep.subr.mxu0 0.0
  %3024 = vmatpush1.xpose.msra.mxu0 0.0
  %3025 = vmatprep.subr.mxu0 0.0
  %3026 = vmatpush1.xpose.msra.mxu0 0.0
  %3027 = vmatprep.subr.mxu0 0.0
  %3028 = vmatpush1.xpose.msra.mxu0 0.0
  %3029 = vmatprep.subr.mxu0 0.0
  %3030 = vmatpush1.xpose.msra.mxu0 0.0
  %3031 = vmatprep.subr.mxu0 0.0
  %3032 = vmatpush1.xpose.msra.mxu0 0.0
  %3033 = vmatprep.subr.mxu0 0.0
  %3034 = vmatpush1.xpose.msra.mxu0 0.0
  %3035 = vmatprep.subr.mxu0 0.0
  %3036 = vmatpush1.xpose.msra.mxu0 0.0
  %3037 = vmatprep.subr.mxu0 0.0
  %3038 = vmatpush1.xpose.msra.mxu0 0.0
  %3039 = vmatprep.subr.mxu0 0.0
  %3040 = vmatpush1.xpose.msra.mxu0 0.0
  %3041 = vmatprep.subr.mxu0 0.0
  %3042 = vmatpush1.xpose.msra.mxu0 0.0
  %3043 = vmatprep.subr.mxu0 0.0
  %3044 = vmatpush1.xpose.msra.mxu0 0.0
  %3045 = vmatprep.subr.mxu0 0.0
  %3046 = vmatpush1.xpose.msra.mxu0 0.0
  %3047 = vmatprep.subr.mxu0 0.0
  %3048 = vmatpush1.xpose.msra.mxu0 0.0
  %3049 = vmatprep.subr.mxu0 0.0
  %3050 = vmatpush1.xpose.msra.mxu0 0.0
  %3051 = vmatprep.subr.mxu0 0.0
  %3052 = vmatpush1.xpose.msra.mxu0 0.0
  %3053 = vmatprep.subr.mxu0 0.0
  %3054 = vmatpush1.xpose.msra.mxu0 0.0
  %3055 = vmatprep.subr.mxu0 0.0
  %3056 = vmatpush1.xpose.msra.mxu0 0.0
  %3057 = vmatprep.subr.mxu0 0.0
  %3058 = vmatpush1.xpose.msra.mxu0 0.0
  %3059 = vmatprep.subr.mxu0 0.0
  %3060 = vmatpush1.xpose.msra.mxu0 0.0
  %3061 = vmatprep.subr.mxu0 0.0
  %3062 = vmatpush1.xpose.msra.mxu0 0.0
  %3063 = vmatprep.subr.mxu0 0.0
  %3064 = vmatpush1.xpose.msra.mxu0 0.0
  %3065 = vmatprep.subr.mxu0 0.0
  %3066 = vmatpush1.xpose.msra.mxu0 0.0
  %3067 = vmatprep.subr.mxu0 0.0
  %3068 = vmatpush1.xpose.msra.mxu0 0.0
  %3069 = vmatprep.subr.mxu0 0.0
  %3070 = vmatpush1.xpose.msra.mxu0 0.0
  %3071 = vmatprep.subr.mxu0 0.0
  %3072 = vmatpush1.xpose.msra.mxu0 0.0
  %3073 = vmatprep.mubr.f32.mxu0 0.0
  %v3074 = vand.u32 %v2923, 4294901760
  %3075 = vmatmul.mubr.f32.gmra.mrb[0].mxu0 %v3074
  %v3076 = vpop.f32.mrb[0].mxu0
  %v3077 = vadd.f32 %v3001, %v3076
  %v3078 = vpop.f32.mrb[0].mxu0
  %3079 = vdwg.mxu0
  %3080 = vmatprep.subr.mxu0 0.0
  %v3081 = vand.u32 %v2926, 4294901760
  %v3082 = vsub.f32 %v2926, %v3081
  %3083 = vmatpush1.xpose.msra.mxu0 %v3082
  %3084 = vmatprep.subr.mxu0 0.0
  %3085 = vmatpush1.xpose.msra.mxu0 0.0
  %3086 = vmatprep.subr.mxu0 0.0
  %3087 = vmatpush1.xpose.msra.mxu0 0.0
  %3088 = vmatprep.subr.mxu0 0.0
  %3089 = vmatpush1.xpose.msra.mxu0 0.0
  %3090 = vmatprep.subr.mxu0 0.0
  %3091 = vmatpush1.xpose.msra.mxu0 0.0
  %3092 = vmatprep.subr.mxu0 0.0
  %3093 = vmatpush1.xpose.msra.mxu0 0.0
  %3094 = vmatprep.subr.mxu0 0.0
  %3095 = vmatpush1.xpose.msra.mxu0 0.0
  %3096 = vmatprep.subr.mxu0 0.0
  %3097 = vmatpush1.xpose.msra.mxu0 0.0
  %3098 = vmatprep.subr.mxu0 0.0
  %3099 = vmatpush1.xpose.msra.mxu0 0.0
  %3100 = vmatprep.subr.mxu0 0.0
  %3101 = vmatpush1.xpose.msra.mxu0 0.0
  %3102 = vmatprep.subr.mxu0 0.0
  %3103 = vmatpush1.xpose.msra.mxu0 0.0
  %3104 = vmatprep.subr.mxu0 0.0
  %3105 = vmatpush1.xpose.msra.mxu0 0.0
  %3106 = vmatprep.subr.mxu0 0.0
  %3107 = vmatpush1.xpose.msra.mxu0 0.0
  %3108 = vmatprep.subr.mxu0 0.0
  %3109 = vmatpush1.xpose.msra.mxu0 0.0
  %3110 = vmatprep.subr.mxu0 0.0
  %3111 = vmatpush1.xpose.msra.mxu0 0.0
  %3112 = vmatprep.subr.mxu0 0.0
  %3113 = vmatpush1.xpose.msra.mxu0 0.0
  %3114 = vmatprep.subr.mxu0 0.0
  %3115 = vmatpush1.xpose.msra.mxu0 0.0
  %3116 = vmatprep.subr.mxu0 0.0
  %3117 = vmatpush1.xpose.msra.mxu0 0.0
  %3118 = vmatprep.subr.mxu0 0.0
  %3119 = vmatpush1.xpose.msra.mxu0 0.0
  %3120 = vmatprep.subr.mxu0 0.0
  %3121 = vmatpush1.xpose.msra.mxu0 0.0
  %3122 = vmatprep.subr.mxu0 0.0
  %3123 = vmatpush1.xpose.msra.mxu0 0.0
  %3124 = vmatprep.subr.mxu0 0.0
  %3125 = vmatpush1.xpose.msra.mxu0 0.0
  %3126 = vmatprep.subr.mxu0 0.0
  %3127 = vmatpush1.xpose.msra.mxu0 0.0
  %3128 = vmatprep.subr.mxu0 0.0
  %3129 = vmatpush1.xpose.msra.mxu0 0.0
  %3130 = vmatprep.subr.mxu0 0.0
  %3131 = vmatpush1.xpose.msra.mxu0 0.0
  %3132 = vmatprep.subr.mxu0 0.0
  %3133 = vmatpush1.xpose.msra.mxu0 0.0
  %3134 = vmatprep.subr.mxu0 0.0
  %3135 = vmatpush1.xpose.msra.mxu0 0.0
  %3136 = vmatprep.subr.mxu0 0.0
  %3137 = vmatpush1.xpose.msra.mxu0 0.0
  %3138 = vmatprep.subr.mxu0 0.0
  %3139 = vmatpush1.xpose.msra.mxu0 0.0
  %3140 = vmatprep.subr.mxu0 0.0
  %3141 = vmatpush1.xpose.msra.mxu0 0.0
  %3142 = vmatprep.subr.mxu0 0.0
  %3143 = vmatpush1.xpose.msra.mxu0 0.0
  %3144 = vmatprep.subr.mxu0 0.0
  %3145 = vmatpush1.xpose.msra.mxu0 0.0
  %3146 = vmatprep.mubr.f32.mxu0 0.0
  %v3147 = vand.u32 %v2923, 4294901760
  %v3148 = vsub.f32 %v2923, %v3147
  %3149 = vmatmul.mubr.f32.gmra.mrb[0].mxu0 %v3148
  %v3150 = vpop.f32.mrb[0].mxu0
  %v3151 = vadd.f32 %v3077, %v3150
  %v3152 = vpop.f32.mrb[0].mxu0
  %3153 = vdwg.mxu0
  %3154 = vmatprep.subr.mxu0 0.0
  %v3155 = vand.u32 %v2926, 4294901760
  %3156 = vmatpush1.xpose.msra.mxu0 %v3155
  %3157 = vmatprep.subr.mxu0 0.0
  %3158 = vmatpush1.xpose.msra.mxu0 0.0
  %3159 = vmatprep.subr.mxu0 0.0
  %3160 = vmatpush1.xpose.msra.mxu0 0.0
  %3161 = vmatprep.subr.mxu0 0.0
  %3162 = vmatpush1.xpose.msra.mxu0 0.0
  %3163 = vmatprep.subr.mxu0 0.0
  %3164 = vmatpush1.xpose.msra.mxu0 0.0
  %3165 = vmatprep.subr.mxu0 0.0
  %3166 = vmatpush1.xpose.msra.mxu0 0.0
  %3167 = vmatprep.subr.mxu0 0.0
  %3168 = vmatpush1.xpose.msra.mxu0 0.0
  %3169 = vmatprep.subr.mxu0 0.0
  %3170 = vmatpush1.xpose.msra.mxu0 0.0
  %3171 = vmatprep.subr.mxu0 0.0
  %3172 = vmatpush1.xpose.msra.mxu0 0.0
  %3173 = vmatprep.subr.mxu0 0.0
  %3174 = vmatpush1.xpose.msra.mxu0 0.0
  %3175 = vmatprep.subr.mxu0 0.0
  %3176 = vmatpush1.xpose.msra.mxu0 0.0
  %3177 = vmatprep.subr.mxu0 0.0
  %3178 = vmatpush1.xpose.msra.mxu0 0.0
  %3179 = vmatprep.subr.mxu0 0.0
  %3180 = vmatpush1.xpose.msra.mxu0 0.0
  %3181 = vmatprep.subr.mxu0 0.0
  %3182 = vmatpush1.xpose.msra.mxu0 0.0
  %3183 = vmatprep.subr.mxu0 0.0
  %3184 = vmatpush1.xpose.msra.mxu0 0.0
  %3185 = vmatprep.subr.mxu0 0.0
  %3186 = vmatpush1.xpose.msra.mxu0 0.0
  %3187 = vmatprep.subr.mxu0 0.0
  %3188 = vmatpush1.xpose.msra.mxu0 0.0
  %3189 = vmatprep.subr.mxu0 0.0
  %3190 = vmatpush1.xpose.msra.mxu0 0.0
  %3191 = vmatprep.subr.mxu0 0.0
  %3192 = vmatpush1.xpose.msra.mxu0 0.0
  %3193 = vmatprep.subr.mxu0 0.0
  %3194 = vmatpush1.xpose.msra.mxu0 0.0
  %3195 = vmatprep.subr.mxu0 0.0
  %3196 = vmatpush1.xpose.msra.mxu0 0.0
  %3197 = vmatprep.subr.mxu0 0.0
  %3198 = vmatpush1.xpose.msra.mxu0 0.0
  %3199 = vmatprep.subr.mxu0 0.0
  %3200 = vmatpush1.xpose.msra.mxu0 0.0
  %3201 = vmatprep.subr.mxu0 0.0
  %3202 = vmatpush1.xpose.msra.mxu0 0.0
  %3203 = vmatprep.subr.mxu0 0.0
  %3204 = vmatpush1.xpose.msra.mxu0 0.0
  %3205 = vmatprep.subr.mxu0 0.0
  %3206 = vmatpush1.xpose.msra.mxu0 0.0
  %3207 = vmatprep.subr.mxu0 0.0
  %3208 = vmatpush1.xpose.msra.mxu0 0.0
  %3209 = vmatprep.subr.mxu0 0.0
  %3210 = vmatpush1.xpose.msra.mxu0 0.0
  %3211 = vmatprep.subr.mxu0 0.0
  %3212 = vmatpush1.xpose.msra.mxu0 0.0
  %3213 = vmatprep.subr.mxu0 0.0
  %3214 = vmatpush1.xpose.msra.mxu0 0.0
  %3215 = vmatprep.subr.mxu0 0.0
  %3216 = vmatpush1.xpose.msra.mxu0 0.0
  %3217 = vmatprep.subr.mxu0 0.0
  %3218 = vmatpush1.xpose.msra.mxu0 0.0
  %3219 = vmatprep.mubr.f32.mxu0 0.0
  %v3220 = vand.u32 %v2923, 4294901760
  %v3221 = vsub.f32 %v2923, %v3220
  %v3222 = vand.u32 %v3221, 4294901760
  %3223 = vmatmul.mubr.f32.gmra.mrb[0].mxu0 %v3222
  %v3224 = vpop.f32.mrb[0].mxu0
  %v3225 = vadd.f32 %v3151, %v3224
  %v3226 = vpop.f32.mrb[0].mxu0
  %3227 = vdwg.mxu0
  %3228 = vmatprep.subr.mxu0 0.0
  %v3229 = vand.u32 %v2926, 4294901760
  %v3230 = vsub.f32 %v2926, %v3229
  %v3231 = vand.u32 %v3230, 4294901760
  %3232 = vmatpush1.xpose.msra.mxu0 %v3231
  %3233 = vmatprep.subr.mxu0 0.0
  %3234 = vmatpush1.xpose.msra.mxu0 0.0
  %3235 = vmatprep.subr.mxu0 0.0
  %3236 = vmatpush1.xpose.msra.mxu0 0.0
  %3237 = vmatprep.subr.mxu0 0.0
  %3238 = vmatpush1.xpose.msra.mxu0 0.0
  %3239 = vmatprep.subr.mxu0 0.0
  %3240 = vmatpush1.xpose.msra.mxu0 0.0
  %3241 = vmatprep.subr.mxu0 0.0
  %3242 = vmatpush1.xpose.msra.mxu0 0.0
  %3243 = vmatprep.subr.mxu0 0.0
  %3244 = vmatpush1.xpose.msra.mxu0 0.0
  %3245 = vmatprep.subr.mxu0 0.0
  %3246 = vmatpush1.xpose.msra.mxu0 0.0
  %3247 = vmatprep.subr.mxu0 0.0
  %3248 = vmatpush1.xpose.msra.mxu0 0.0
  %3249 = vmatprep.subr.mxu0 0.0
  %3250 = vmatpush1.xpose.msra.mxu0 0.0
  %3251 = vmatprep.subr.mxu0 0.0
  %3252 = vmatpush1.xpose.msra.mxu0 0.0
  %3253 = vmatprep.subr.mxu0 0.0
  %3254 = vmatpush1.xpose.msra.mxu0 0.0
  %3255 = vmatprep.subr.mxu0 0.0
  %3256 = vmatpush1.xpose.msra.mxu0 0.0
  %3257 = vmatprep.subr.mxu0 0.0
  %3258 = vmatpush1.xpose.msra.mxu0 0.0
  %3259 = vmatprep.subr.mxu0 0.0
  %3260 = vmatpush1.xpose.msra.mxu0 0.0
  %3261 = vmatprep.subr.mxu0 0.0
  %3262 = vmatpush1.xpose.msra.mxu0 0.0
  %3263 = vmatprep.subr.mxu0 0.0
  %3264 = vmatpush1.xpose.msra.mxu0 0.0
  %3265 = vmatprep.subr.mxu0 0.0
  %3266 = vmatpush1.xpose.msra.mxu0 0.0
  %3267 = vmatprep.subr.mxu0 0.0
  %3268 = vmatpush1.xpose.msra.mxu0 0.0
  %3269 = vmatprep.subr.mxu0 0.0
  %3270 = vmatpush1.xpose.msra.mxu0 0.0
  %3271 = vmatprep.subr.mxu0 0.0
  %3272 = vmatpush1.xpose.msra.mxu0 0.0
  %3273 = vmatprep.subr.mxu0 0.0
  %3274 = vmatpush1.xpose.msra.mxu0 0.0
  %3275 = vmatprep.subr.mxu0 0.0
  %3276 = vmatpush1.xpose.msra.mxu0 0.0
  %3277 = vmatprep.subr.mxu0 0.0
  %3278 = vmatpush1.xpose.msra.mxu0 0.0
  %3279 = vmatprep.subr.mxu0 0.0
  %3280 = vmatpush1.xpose.msra.mxu0 0.0
  %3281 = vmatprep.subr.mxu0 0.0
  %3282 = vmatpush1.xpose.msra.mxu0 0.0
  %3283 = vmatprep.subr.mxu0 0.0
  %3284 = vmatpush1.xpose.msra.mxu0 0.0
  %3285 = vmatprep.subr.mxu0 0.0
  %3286 = vmatpush1.xpose.msra.mxu0 0.0
  %3287 = vmatprep.subr.mxu0 0.0
  %3288 = vmatpush1.xpose.msra.mxu0 0.0
  %3289 = vmatprep.subr.mxu0 0.0
  %3290 = vmatpush1.xpose.msra.mxu0 0.0
  %3291 = vmatprep.subr.mxu0 0.0
  %3292 = vmatpush1.xpose.msra.mxu0 0.0
  %3293 = vmatprep.subr.mxu0 0.0
  %3294 = vmatpush1.xpose.msra.mxu0 0.0
  %3295 = vmatprep.mubr.f32.mxu0 0.0
  %v3296 = vand.u32 %v2923, 4294901760
  %3297 = vmatmul.mubr.f32.gmra.mrb[0].mxu0 %v3296
  %v3298 = vpop.f32.mrb[0].mxu0
  %v3299 = vadd.f32 %v3225, %v3298
  %v3300 = vpop.f32.mrb[0].mxu0
  %3301 = vdwg.mxu0
  %3302 = vmatprep.subr.mxu0 0.0
  %v3303 = vand.u32 %v2926, 4294901760
  %3304 = vmatpush1.xpose.msra.mxu0 %v3303
  %3305 = vmatprep.subr.mxu0 0.0
  %3306 = vmatpush1.xpose.msra.mxu0 0.0
  %3307 = vmatprep.subr.mxu0 0.0
  %3308 = vmatpush1.xpose.msra.mxu0 0.0
  %3309 = vmatprep.subr.mxu0 0.0
  %3310 = vmatpush1.xpose.msra.mxu0 0.0
  %3311 = vmatprep.subr.mxu0 0.0
  %3312 = vmatpush1.xpose.msra.mxu0 0.0
  %3313 = vmatprep.subr.mxu0 0.0
  %3314 = vmatpush1.xpose.msra.mxu0 0.0
  %3315 = vmatprep.subr.mxu0 0.0
  %3316 = vmatpush1.xpose.msra.mxu0 0.0
  %3317 = vmatprep.subr.mxu0 0.0
  %3318 = vmatpush1.xpose.msra.mxu0 0.0
  %3319 = vmatprep.subr.mxu0 0.0
  %3320 = vmatpush1.xpose.msra.mxu0 0.0
  %3321 = vmatprep.subr.mxu0 0.0
  %3322 = vmatpush1.xpose.msra.mxu0 0.0
  %3323 = vmatprep.subr.mxu0 0.0
  %3324 = vmatpush1.xpose.msra.mxu0 0.0
  %3325 = vmatprep.subr.mxu0 0.0
  %3326 = vmatpush1.xpose.msra.mxu0 0.0
  %3327 = vmatprep.subr.mxu0 0.0
  %3328 = vmatpush1.xpose.msra.mxu0 0.0
  %3329 = vmatprep.subr.mxu0 0.0
  %3330 = vmatpush1.xpose.msra.mxu0 0.0
  %3331 = vmatprep.subr.mxu0 0.0
  %3332 = vmatpush1.xpose.msra.mxu0 0.0
  %3333 = vmatprep.subr.mxu0 0.0
  %3334 = vmatpush1.xpose.msra.mxu0 0.0
  %3335 = vmatprep.subr.mxu0 0.0
  %3336 = vmatpush1.xpose.msra.mxu0 0.0
  %3337 = vmatprep.subr.mxu0 0.0
  %3338 = vmatpush1.xpose.msra.mxu0 0.0
  %3339 = vmatprep.subr.mxu0 0.0
  %3340 = vmatpush1.xpose.msra.mxu0 0.0
  %3341 = vmatprep.subr.mxu0 0.0
  %3342 = vmatpush1.xpose.msra.mxu0 0.0
  %3343 = vmatprep.subr.mxu0 0.0
  %3344 = vmatpush1.xpose.msra.mxu0 0.0
  %3345 = vmatprep.subr.mxu0 0.0
  %3346 = vmatpush1.xpose.msra.mxu0 0.0
  %3347 = vmatprep.subr.mxu0 0.0
  %3348 = vmatpush1.xpose.msra.mxu0 0.0
  %3349 = vmatprep.subr.mxu0 0.0
  %3350 = vmatpush1.xpose.msra.mxu0 0.0
  %3351 = vmatprep.subr.mxu0 0.0
  %3352 = vmatpush1.xpose.msra.mxu0 0.0
  %3353 = vmatprep.subr.mxu0 0.0
  %3354 = vmatpush1.xpose.msra.mxu0 0.0
  %3355 = vmatprep.subr.mxu0 0.0
  %3356 = vmatpush1.xpose.msra.mxu0 0.0
  %3357 = vmatprep.subr.mxu0 0.0
  %3358 = vmatpush1.xpose.msra.mxu0 0.0
  %3359 = vmatprep.subr.mxu0 0.0
  %3360 = vmatpush1.xpose.msra.mxu0 0.0
  %3361 = vmatprep.subr.mxu0 0.0
  %3362 = vmatpush1.xpose.msra.mxu0 0.0
  %3363 = vmatprep.subr.mxu0 0.0
  %3364 = vmatpush1.xpose.msra.mxu0 0.0
  %3365 = vmatprep.subr.mxu0 0.0
  %3366 = vmatpush1.xpose.msra.mxu0 0.0
  %3367 = vmatprep.mubr.f32.mxu0 0.0
  %v3368 = vand.u32 %v2923, 4294901760
  %3369 = vmatmul.mubr.f32.gmra.mrb[0].mxu0 %v3368
  %v3370 = vpop.f32.mrb[0].mxu0
  %v3371 = vadd.f32 %v3299, %v3370
  %v3372 = vpop.f32.mrb[0].mxu0
  %3373 = vdwg.mxu0
  %v3375 = vsel %vm2017, %v1346, 0
  %v3378 = vsel %vm2017, %v1656, 0
  %3380 = vmatprep.subr.mxu0 0.0
  %v3381 = vand.u32 %v3378, 4294901760
  %3382 = vmatpush1.xpose.msra.mxu0 %v3381
  %3383 = vmatprep.subr.mxu0 0.0
  %3384 = vmatpush1.xpose.msra.mxu0 0.0
  %3385 = vmatprep.subr.mxu0 0.0
  %3386 = vmatpush1.xpose.msra.mxu0 0.0
  %3387 = vmatprep.subr.mxu0 0.0
  %3388 = vmatpush1.xpose.msra.mxu0 0.0
  %3389 = vmatprep.subr.mxu0 0.0
  %3390 = vmatpush1.xpose.msra.mxu0 0.0
  %3391 = vmatprep.subr.mxu0 0.0
  %3392 = vmatpush1.xpose.msra.mxu0 0.0
  %3393 = vmatprep.subr.mxu0 0.0
  %3394 = vmatpush1.xpose.msra.mxu0 0.0
  %3395 = vmatprep.subr.mxu0 0.0
  %3396 = vmatpush1.xpose.msra.mxu0 0.0
  %3397 = vmatprep.subr.mxu0 0.0
  %3398 = vmatpush1.xpose.msra.mxu0 0.0
  %3399 = vmatprep.subr.mxu0 0.0
  %3400 = vmatpush1.xpose.msra.mxu0 0.0
  %3401 = vmatprep.subr.mxu0 0.0
  %3402 = vmatpush1.xpose.msra.mxu0 0.0
  %3403 = vmatprep.subr.mxu0 0.0
  %3404 = vmatpush1.xpose.msra.mxu0 0.0
  %3405 = vmatprep.subr.mxu0 0.0
  %3406 = vmatpush1.xpose.msra.mxu0 0.0
  %3407 = vmatprep.subr.mxu0 0.0
  %3408 = vmatpush1.xpose.msra.mxu0 0.0
  %3409 = vmatprep.subr.mxu0 0.0
  %3410 = vmatpush1.xpose.msra.mxu0 0.0
  %3411 = vmatprep.subr.mxu0 0.0
  %3412 = vmatpush1.xpose.msra.mxu0 0.0
  %3413 = vmatprep.subr.mxu0 0.0
  %3414 = vmatpush1.xpose.msra.mxu0 0.0
  %3415 = vmatprep.subr.mxu0 0.0
  %3416 = vmatpush1.xpose.msra.mxu0 0.0
  %3417 = vmatprep.subr.mxu0 0.0
  %3418 = vmatpush1.xpose.msra.mxu0 0.0
  %3419 = vmatprep.subr.mxu0 0.0
  %3420 = vmatpush1.xpose.msra.mxu0 0.0
  %3421 = vmatprep.subr.mxu0 0.0
  %3422 = vmatpush1.xpose.msra.mxu0 0.0
  %3423 = vmatprep.subr.mxu0 0.0
  %3424 = vmatpush1.xpose.msra.mxu0 0.0
  %3425 = vmatprep.subr.mxu0 0.0
  %3426 = vmatpush1.xpose.msra.mxu0 0.0
  %3427 = vmatprep.subr.mxu0 0.0
  %3428 = vmatpush1.xpose.msra.mxu0 0.0
  %3429 = vmatprep.subr.mxu0 0.0
  %3430 = vmatpush1.xpose.msra.mxu0 0.0
  %3431 = vmatprep.subr.mxu0 0.0
  %3432 = vmatpush1.xpose.msra.mxu0 0.0
  %3433 = vmatprep.subr.mxu0 0.0
  %3434 = vmatpush1.xpose.msra.mxu0 0.0
  %3435 = vmatprep.subr.mxu0 0.0
  %3436 = vmatpush1.xpose.msra.mxu0 0.0
  %3437 = vmatprep.subr.mxu0 0.0
  %3438 = vmatpush1.xpose.msra.mxu0 0.0
  %3439 = vmatprep.subr.mxu0 0.0
  %3440 = vmatpush1.xpose.msra.mxu0 0.0
  %3441 = vmatprep.subr.mxu0 0.0
  %3442 = vmatpush1.xpose.msra.mxu0 0.0
  %3443 = vmatprep.subr.mxu0 0.0
  %3444 = vmatpush1.xpose.msra.mxu0 0.0
  %3445 = vmatprep.mubr.f32.mxu0 0.0
  %v3446 = vand.u32 %v3375, 4294901760
  %v3447 = vsub.f32 %v3375, %v3446
  %v3448 = vand.u32 %v3447, 4294901760
  %v3449 = vsub.f32 %v3447, %v3448
  %v3450 = vand.u32 %v3449, 4294901760
  %3451 = vmatmul.mubr.f32.gmra.mrb[0].mxu0 %v3450
  %v3452 = vpop.f32.mrb[0].mxu0
  %v3453 = vadd.f32 0.0, %v3452
  %v3454 = vpop.f32.mrb[0].mxu0
  %3455 = vdwg.mxu0
  %3456 = vmatprep.subr.mxu0 0.0
  %v3457 = vand.u32 %v3378, 4294901760
  %v3458 = vsub.f32 %v3378, %v3457
  %v3459 = vand.u32 %v3458, 4294901760
  %v3460 = vsub.f32 %v3458, %v3459
  %v3461 = vand.u32 %v3460, 4294901760
  %3462 = vmatpush1.xpose.msra.mxu0 %v3461
  %3463 = vmatprep.subr.mxu0 0.0
  %3464 = vmatpush1.xpose.msra.mxu0 0.0
  %3465 = vmatprep.subr.mxu0 0.0
  %3466 = vmatpush1.xpose.msra.mxu0 0.0
  %3467 = vmatprep.subr.mxu0 0.0
  %3468 = vmatpush1.xpose.msra.mxu0 0.0
  %3469 = vmatprep.subr.mxu0 0.0
  %3470 = vmatpush1.xpose.msra.mxu0 0.0
  %3471 = vmatprep.subr.mxu0 0.0
  %3472 = vmatpush1.xpose.msra.mxu0 0.0
  %3473 = vmatprep.subr.mxu0 0.0
  %3474 = vmatpush1.xpose.msra.mxu0 0.0
  %3475 = vmatprep.subr.mxu0 0.0
  %3476 = vmatpush1.xpose.msra.mxu0 0.0
  %3477 = vmatprep.subr.mxu0 0.0
  %3478 = vmatpush1.xpose.msra.mxu0 0.0
  %3479 = vmatprep.subr.mxu0 0.0
  %3480 = vmatpush1.xpose.msra.mxu0 0.0
  %3481 = vmatprep.subr.mxu0 0.0
  %3482 = vmatpush1.xpose.msra.mxu0 0.0
  %3483 = vmatprep.subr.mxu0 0.0
  %3484 = vmatpush1.xpose.msra.mxu0 0.0
  %3485 = vmatprep.subr.mxu0 0.0
  %3486 = vmatpush1.xpose.msra.mxu0 0.0
  %3487 = vmatprep.subr.mxu0 0.0
  %3488 = vmatpush1.xpose.msra.mxu0 0.0
  %3489 = vmatprep.subr.mxu0 0.0
  %3490 = vmatpush1.xpose.msra.mxu0 0.0
  %3491 = vmatprep.subr.mxu0 0.0
  %3492 = vmatpush1.xpose.msra.mxu0 0.0
  %3493 = vmatprep.subr.mxu0 0.0
  %3494 = vmatpush1.xpose.msra.mxu0 0.0
  %3495 = vmatprep.subr.mxu0 0.0
  %3496 = vmatpush1.xpose.msra.mxu0 0.0
  %3497 = vmatprep.subr.mxu0 0.0
  %3498 = vmatpush1.xpose.msra.mxu0 0.0
  %3499 = vmatprep.subr.mxu0 0.0
  %3500 = vmatpush1.xpose.msra.mxu0 0.0
  %3501 = vmatprep.subr.mxu0 0.0
  %3502 = vmatpush1.xpose.msra.mxu0 0.0
  %3503 = vmatprep.subr.mxu0 0.0
  %3504 = vmatpush1.xpose.msra.mxu0 0.0
  %3505 = vmatprep.subr.mxu0 0.0
  %3506 = vmatpush1.xpose.msra.mxu0 0.0
  %3507 = vmatprep.subr.mxu0 0.0
  %3508 = vmatpush1.xpose.msra.mxu0 0.0
  %3509 = vmatprep.subr.mxu0 0.0
  %3510 = vmatpush1.xpose.msra.mxu0 0.0
  %3511 = vmatprep.subr.mxu0 0.0
  %3512 = vmatpush1.xpose.msra.mxu0 0.0
  %3513 = vmatprep.subr.mxu0 0.0
  %3514 = vmatpush1.xpose.msra.mxu0 0.0
  %3515 = vmatprep.subr.mxu0 0.0
  %3516 = vmatpush1.xpose.msra.mxu0 0.0
  %3517 = vmatprep.subr.mxu0 0.0
  %3518 = vmatpush1.xpose.msra.mxu0 0.0
  %3519 = vmatprep.subr.mxu0 0.0
  %3520 = vmatpush1.xpose.msra.mxu0 0.0
  %3521 = vmatprep.subr.mxu0 0.0
  %3522 = vmatpush1.xpose.msra.mxu0 0.0
  %3523 = vmatprep.subr.mxu0 0.0
  %3524 = vmatpush1.xpose.msra.mxu0 0.0
  %3525 = vmatprep.mubr.f32.mxu0 0.0
  %v3526 = vand.u32 %v3375, 4294901760
  %3527 = vmatmul.mubr.f32.gmra.mrb[0].mxu0 %v3526
  %v3528 = vpop.f32.mrb[0].mxu0
  %v3529 = vadd.f32 %v3453, %v3528
  %v3530 = vpop.f32.mrb[0].mxu0
  %3531 = vdwg.mxu0
  %3532 = vmatprep.subr.mxu0 0.0
  %v3533 = vand.u32 %v3378, 4294901760
  %v3534 = vsub.f32 %v3378, %v3533
  %3535 = vmatpush1.xpose.msra.mxu0 %v3534
  %3536 = vmatprep.subr.mxu0 0.0
  %3537 = vmatpush1.xpose.msra.mxu0 0.0
  %3538 = vmatprep.subr.mxu0 0.0
  %3539 = vmatpush1.xpose.msra.mxu0 0.0
  %3540 = vmatprep.subr.mxu0 0.0
  %3541 = vmatpush1.xpose.msra.mxu0 0.0
  %3542 = vmatprep.subr.mxu0 0.0
  %3543 = vmatpush1.xpose.msra.mxu0 0.0
  %3544 = vmatprep.subr.mxu0 0.0
  %3545 = vmatpush1.xpose.msra.mxu0 0.0
  %3546 = vmatprep.subr.mxu0 0.0
  %3547 = vmatpush1.xpose.msra.mxu0 0.0
  %3548 = vmatprep.subr.mxu0 0.0
  %3549 = vmatpush1.xpose.msra.mxu0 0.0
  %3550 = vmatprep.subr.mxu0 0.0
  %3551 = vmatpush1.xpose.msra.mxu0 0.0
  %3552 = vmatprep.subr.mxu0 0.0
  %3553 = vmatpush1.xpose.msra.mxu0 0.0
  %3554 = vmatprep.subr.mxu0 0.0
  %3555 = vmatpush1.xpose.msra.mxu0 0.0
  %3556 = vmatprep.subr.mxu0 0.0
  %3557 = vmatpush1.xpose.msra.mxu0 0.0
  %3558 = vmatprep.subr.mxu0 0.0
  %3559 = vmatpush1.xpose.msra.mxu0 0.0
  %3560 = vmatprep.subr.mxu0 0.0
  %3561 = vmatpush1.xpose.msra.mxu0 0.0
  %3562 = vmatprep.subr.mxu0 0.0
  %3563 = vmatpush1.xpose.msra.mxu0 0.0
  %3564 = vmatprep.subr.mxu0 0.0
  %3565 = vmatpush1.xpose.msra.mxu0 0.0
  %3566 = vmatprep.subr.mxu0 0.0
  %3567 = vmatpush1.xpose.msra.mxu0 0.0
  %3568 = vmatprep.subr.mxu0 0.0
  %3569 = vmatpush1.xpose.msra.mxu0 0.0
  %3570 = vmatprep.subr.mxu0 0.0
  %3571 = vmatpush1.xpose.msra.mxu0 0.0
  %3572 = vmatprep.subr.mxu0 0.0
  %3573 = vmatpush1.xpose.msra.mxu0 0.0
  %3574 = vmatprep.subr.mxu0 0.0
  %3575 = vmatpush1.xpose.msra.mxu0 0.0
  %3576 = vmatprep.subr.mxu0 0.0
  %3577 = vmatpush1.xpose.msra.mxu0 0.0
  %3578 = vmatprep.subr.mxu0 0.0
  %3579 = vmatpush1.xpose.msra.mxu0 0.0
  %3580 = vmatprep.subr.mxu0 0.0
  %3581 = vmatpush1.xpose.msra.mxu0 0.0
  %3582 = vmatprep.subr.mxu0 0.0
  %3583 = vmatpush1.xpose.msra.mxu0 0.0
  %3584 = vmatprep.subr.mxu0 0.0
  %3585 = vmatpush1.xpose.msra.mxu0 0.0
  %3586 = vmatprep.subr.mxu0 0.0
  %3587 = vmatpush1.xpose.msra.mxu0 0.0
  %3588 = vmatprep.subr.mxu0 0.0
  %3589 = vmatpush1.xpose.msra.mxu0 0.0
  %3590 = vmatprep.subr.mxu0 0.0
  %3591 = vmatpush1.xpose.msra.mxu0 0.0
  %3592 = vmatprep.subr.mxu0 0.0
  %3593 = vmatpush1.xpose.msra.mxu0 0.0
  %3594 = vmatprep.subr.mxu0 0.0
  %3595 = vmatpush1.xpose.msra.mxu0 0.0
  %3596 = vmatprep.subr.mxu0 0.0
  %3597 = vmatpush1.xpose.msra.mxu0 0.0
  %3598 = vmatprep.mubr.f32.mxu0 0.0
  %v3599 = vand.u32 %v3375, 4294901760
  %v3600 = vsub.f32 %v3375, %v3599
  %3601 = vmatmul.mubr.f32.gmra.mrb[0].mxu0 %v3600
  %v3602 = vpop.f32.mrb[0].mxu0
  %v3603 = vadd.f32 %v3529, %v3602
  %v3604 = vpop.f32.mrb[0].mxu0
  %3605 = vdwg.mxu0
  %3606 = vmatprep.subr.mxu0 0.0
  %v3607 = vand.u32 %v3378, 4294901760
  %3608 = vmatpush1.xpose.msra.mxu0 %v3607
  %3609 = vmatprep.subr.mxu0 0.0
  %3610 = vmatpush1.xpose.msra.mxu0 0.0
  %3611 = vmatprep.subr.mxu0 0.0
  %3612 = vmatpush1.xpose.msra.mxu0 0.0
  %3613 = vmatprep.subr.mxu0 0.0
  %3614 = vmatpush1.xpose.msra.mxu0 0.0
  %3615 = vmatprep.subr.mxu0 0.0
  %3616 = vmatpush1.xpose.msra.mxu0 0.0
  %3617 = vmatprep.subr.mxu0 0.0
  %3618 = vmatpush1.xpose.msra.mxu0 0.0
  %3619 = vmatprep.subr.mxu0 0.0
  %3620 = vmatpush1.xpose.msra.mxu0 0.0
  %3621 = vmatprep.subr.mxu0 0.0
  %3622 = vmatpush1.xpose.msra.mxu0 0.0
  %3623 = vmatprep.subr.mxu0 0.0
  %3624 = vmatpush1.xpose.msra.mxu0 0.0
  %3625 = vmatprep.subr.mxu0 0.0
  %3626 = vmatpush1.xpose.msra.mxu0 0.0
  %3627 = vmatprep.subr.mxu0 0.0
  %3628 = vmatpush1.xpose.msra.mxu0 0.0
  %3629 = vmatprep.subr.mxu0 0.0
  %3630 = vmatpush1.xpose.msra.mxu0 0.0
  %3631 = vmatprep.subr.mxu0 0.0
  %3632 = vmatpush1.xpose.msra.mxu0 0.0
  %3633 = vmatprep.subr.mxu0 0.0
  %3634 = vmatpush1.xpose.msra.mxu0 0.0
  %3635 = vmatprep.subr.mxu0 0.0
  %3636 = vmatpush1.xpose.msra.mxu0 0.0
  %3637 = vmatprep.subr.mxu0 0.0
  %3638 = vmatpush1.xpose.msra.mxu0 0.0
  %3639 = vmatprep.subr.mxu0 0.0
  %3640 = vmatpush1.xpose.msra.mxu0 0.0
  %3641 = vmatprep.subr.mxu0 0.0
  %3642 = vmatpush1.xpose.msra.mxu0 0.0
  %3643 = vmatprep.subr.mxu0 0.0
  %3644 = vmatpush1.xpose.msra.mxu0 0.0
  %3645 = vmatprep.subr.mxu0 0.0
  %3646 = vmatpush1.xpose.msra.mxu0 0.0
  %3647 = vmatprep.subr.mxu0 0.0
  %3648 = vmatpush1.xpose.msra.mxu0 0.0
  %3649 = vmatprep.subr.mxu0 0.0
  %3650 = vmatpush1.xpose.msra.mxu0 0.0
  %3651 = vmatprep.subr.mxu0 0.0
  %3652 = vmatpush1.xpose.msra.mxu0 0.0
  %3653 = vmatprep.subr.mxu0 0.0
  %3654 = vmatpush1.xpose.msra.mxu0 0.0
  %3655 = vmatprep.subr.mxu0 0.0
  %3656 = vmatpush1.xpose.msra.mxu0 0.0
  %3657 = vmatprep.subr.mxu0 0.0
  %3658 = vmatpush1.xpose.msra.mxu0 0.0
  %3659 = vmatprep.subr.mxu0 0.0
  %3660 = vmatpush1.xpose.msra.mxu0 0.0
  %3661 = vmatprep.subr.mxu0 0.0
  %3662 = vmatpush1.xpose.msra.mxu0 0.0
  %3663 = vmatprep.subr.mxu0 0.0
  %3664 = vmatpush1.xpose.msra.mxu0 0.0
  %3665 = vmatprep.subr.mxu0 0.0
  %3666 = vmatpush1.xpose.msra.mxu0 0.0
  %3667 = vmatprep.subr.mxu0 0.0
  %3668 = vmatpush1.xpose.msra.mxu0 0.0
  %3669 = vmatprep.subr.mxu0 0.0
  %3670 = vmatpush1.xpose.msra.mxu0 0.0
  %3671 = vmatprep.mubr.f32.mxu0 0.0
  %v3672 = vand.u32 %v3375, 4294901760
  %v3673 = vsub.f32 %v3375, %v3672
  %v3674 = vand.u32 %v3673, 4294901760
  %3675 = vmatmul.mubr.f32.gmra.mrb[0].mxu0 %v3674
  %v3676 = vpop.f32.mrb[0].mxu0
  %v3677 = vadd.f32 %v3603, %v3676
  %v3678 = vpop.f32.mrb[0].mxu0
  %3679 = vdwg.mxu0
  %3680 = vmatprep.subr.mxu0 0.0
  %v3681 = vand.u32 %v3378, 4294901760
  %v3682 = vsub.f32 %v3378, %v3681
  %v3683 = vand.u32 %v3682, 4294901760
  %3684 = vmatpush1.xpose.msra.mxu0 %v3683
  %3685 = vmatprep.subr.mxu0 0.0
  %3686 = vmatpush1.xpose.msra.mxu0 0.0
  %3687 = vmatprep.subr.mxu0 0.0
  %3688 = vmatpush1.xpose.msra.mxu0 0.0
  %3689 = vmatprep.subr.mxu0 0.0
  %3690 = vmatpush1.xpose.msra.mxu0 0.0
  %3691 = vmatprep.subr.mxu0 0.0
  %3692 = vmatpush1.xpose.msra.mxu0 0.0
  %3693 = vmatprep.subr.mxu0 0.0
  %3694 = vmatpush1.xpose.msra.mxu0 0.0
  %3695 = vmatprep.subr.mxu0 0.0
  %3696 = vmatpush1.xpose.msra.mxu0 0.0
  %3697 = vmatprep.subr.mxu0 0.0
  %3698 = vmatpush1.xpose.msra.mxu0 0.0
  %3699 = vmatprep.subr.mxu0 0.0
  %3700 = vmatpush1.xpose.msra.mxu0 0.0
  %3701 = vmatprep.subr.mxu0 0.0
  %3702 = vmatpush1.xpose.msra.mxu0 0.0
  %3703 = vmatprep.subr.mxu0 0.0
  %3704 = vmatpush1.xpose.msra.mxu0 0.0
  %3705 = vmatprep.subr.mxu0 0.0
  %3706 = vmatpush1.xpose.msra.mxu0 0.0
  %3707 = vmatprep.subr.mxu0 0.0
  %3708 = vmatpush1.xpose.msra.mxu0 0.0
  %3709 = vmatprep.subr.mxu0 0.0
  %3710 = vmatpush1.xpose.msra.mxu0 0.0
  %3711 = vmatprep.subr.mxu0 0.0
  %3712 = vmatpush1.xpose.msra.mxu0 0.0
  %3713 = vmatprep.subr.mxu0 0.0
  %3714 = vmatpush1.xpose.msra.mxu0 0.0
  %3715 = vmatprep.subr.mxu0 0.0
  %3716 = vmatpush1.xpose.msra.mxu0 0.0
  %3717 = vmatprep.subr.mxu0 0.0
  %3718 = vmatpush1.xpose.msra.mxu0 0.0
  %3719 = vmatprep.subr.mxu0 0.0
  %3720 = vmatpush1.xpose.msra.mxu0 0.0
  %3721 = vmatprep.subr.mxu0 0.0
  %3722 = vmatpush1.xpose.msra.mxu0 0.0
  %3723 = vmatprep.subr.mxu0 0.0
  %3724 = vmatpush1.xpose.msra.mxu0 0.0
  %3725 = vmatprep.subr.mxu0 0.0
  %3726 = vmatpush1.xpose.msra.mxu0 0.0
  %3727 = vmatprep.subr.mxu0 0.0
  %3728 = vmatpush1.xpose.msra.mxu0 0.0
  %3729 = vmatprep.subr.mxu0 0.0
  %3730 = vmatpush1.xpose.msra.mxu0 0.0
  %3731 = vmatprep.subr.mxu0 0.0
  %3732 = vmatpush1.xpose.msra.mxu0 0.0
  %3733 = vmatprep.subr.mxu0 0.0
  %3734 = vmatpush1.xpose.msra.mxu0 0.0
  %3735 = vmatprep.subr.mxu0 0.0
  %3736 = vmatpush1.xpose.msra.mxu0 0.0
  %3737 = vmatprep.subr.mxu0 0.0
  %3738 = vmatpush1.xpose.msra.mxu0 0.0
  %3739 = vmatprep.subr.mxu0 0.0
  %3740 = vmatpush1.xpose.msra.mxu0 0.0
  %3741 = vmatprep.subr.mxu0 0.0
  %3742 = vmatpush1.xpose.msra.mxu0 0.0
  %3743 = vmatprep.subr.mxu0 0.0
  %3744 = vmatpush1.xpose.msra.mxu0 0.0
  %3745 = vmatprep.subr.mxu0 0.0
  %3746 = vmatpush1.xpose.msra.mxu0 0.0
  %3747 = vmatprep.mubr.f32.mxu0 0.0
  %v3748 = vand.u32 %v3375, 4294901760
  %3749 = vmatmul.mubr.f32.gmra.mrb[0].mxu0 %v3748
  %v3750 = vpop.f32.mrb[0].mxu0
  %v3751 = vadd.f32 %v3677, %v3750
  %v3752 = vpop.f32.mrb[0].mxu0
  %3753 = vdwg.mxu0
  %3754 = vmatprep.subr.mxu0 0.0
  %v3755 = vand.u32 %v3378, 4294901760
  %3756 = vmatpush1.xpose.msra.mxu0 %v3755
  %3757 = vmatprep.subr.mxu0 0.0
  %3758 = vmatpush1.xpose.msra.mxu0 0.0
  %3759 = vmatprep.subr.mxu0 0.0
  %3760 = vmatpush1.xpose.msra.mxu0 0.0
  %3761 = vmatprep.subr.mxu0 0.0
  %3762 = vmatpush1.xpose.msra.mxu0 0.0
  %3763 = vmatprep.subr.mxu0 0.0
  %3764 = vmatpush1.xpose.msra.mxu0 0.0
  %3765 = vmatprep.subr.mxu0 0.0
  %3766 = vmatpush1.xpose.msra.mxu0 0.0
  %3767 = vmatprep.subr.mxu0 0.0
  %3768 = vmatpush1.xpose.msra.mxu0 0.0
  %3769 = vmatprep.subr.mxu0 0.0
  %3770 = vmatpush1.xpose.msra.mxu0 0.0
  %3771 = vmatprep.subr.mxu0 0.0
  %3772 = vmatpush1.xpose.msra.mxu0 0.0
  %3773 = vmatprep.subr.mxu0 0.0
  %3774 = vmatpush1.xpose.msra.mxu0 0.0
  %3775 = vmatprep.subr.mxu0 0.0
  %3776 = vmatpush1.xpose.msra.mxu0 0.0
  %3777 = vmatprep.subr.mxu0 0.0
  %3778 = vmatpush1.xpose.msra.mxu0 0.0
  %3779 = vmatprep.subr.mxu0 0.0
  %3780 = vmatpush1.xpose.msra.mxu0 0.0
  %3781 = vmatprep.subr.mxu0 0.0
  %3782 = vmatpush1.xpose.msra.mxu0 0.0
  %3783 = vmatprep.subr.mxu0 0.0
  %3784 = vmatpush1.xpose.msra.mxu0 0.0
  %3785 = vmatprep.subr.mxu0 0.0
  %3786 = vmatpush1.xpose.msra.mxu0 0.0
  %3787 = vmatprep.subr.mxu0 0.0
  %3788 = vmatpush1.xpose.msra.mxu0 0.0
  %3789 = vmatprep.subr.mxu0 0.0
  %3790 = vmatpush1.xpose.msra.mxu0 0.0
  %3791 = vmatprep.subr.mxu0 0.0
  %3792 = vmatpush1.xpose.msra.mxu0 0.0
  %3793 = vmatprep.subr.mxu0 0.0
  %3794 = vmatpush1.xpose.msra.mxu0 0.0
  %3795 = vmatprep.subr.mxu0 0.0
  %3796 = vmatpush1.xpose.msra.mxu0 0.0
  %3797 = vmatprep.subr.mxu0 0.0
  %3798 = vmatpush1.xpose.msra.mxu0 0.0
  %3799 = vmatprep.subr.mxu0 0.0
  %3800 = vmatpush1.xpose.msra.mxu0 0.0
  %3801 = vmatprep.subr.mxu0 0.0
  %3802 = vmatpush1.xpose.msra.mxu0 0.0
  %3803 = vmatprep.subr.mxu0 0.0
  %3804 = vmatpush1.xpose.msra.mxu0 0.0
  %3805 = vmatprep.subr.mxu0 0.0
  %3806 = vmatpush1.xpose.msra.mxu0 0.0
  %3807 = vmatprep.subr.mxu0 0.0
  %3808 = vmatpush1.xpose.msra.mxu0 0.0
  %3809 = vmatprep.subr.mxu0 0.0
  %3810 = vmatpush1.xpose.msra.mxu0 0.0
  %3811 = vmatprep.subr.mxu0 0.0
  %3812 = vmatpush1.xpose.msra.mxu0 0.0
  %3813 = vmatprep.subr.mxu0 0.0
  %3814 = vmatpush1.xpose.msra.mxu0 0.0
  %3815 = vmatprep.subr.mxu0 0.0
  %3816 = vmatpush1.xpose.msra.mxu0 0.0
  %3817 = vmatprep.subr.mxu0 0.0
  %3818 = vmatpush1.xpose.msra.mxu0 0.0
  %3819 = vmatprep.mubr.f32.mxu0 0.0
  %v3820 = vand.u32 %v3375, 4294901760
  %3821 = vmatmul.mubr.f32.gmra.mrb[0].mxu0 %v3820
  %v3822 = vpop.f32.mrb[0].mxu0
  %v3823 = vadd.f32 %v3751, %v3822
  %v3824 = vpop.f32.mrb[0].mxu0
  %3825 = vdwg.mxu0
  %v3827 = vsel %vm2017, %v1411, 0
  %v3830 = vsel %vm2017, %v1721, 0
  %3832 = vmatprep.subr.mxu0 0.0
  %v3833 = vand.u32 %v3830, 4294901760
  %3834 = vmatpush1.xpose.msra.mxu0 %v3833
  %3835 = vmatprep.subr.mxu0 0.0
  %3836 = vmatpush1.xpose.msra.mxu0 0.0
  %3837 = vmatprep.subr.mxu0 0.0
  %3838 = vmatpush1.xpose.msra.mxu0 0.0
  %3839 = vmatprep.subr.mxu0 0.0
  %3840 = vmatpush1.xpose.msra.mxu0 0.0
  %3841 = vmatprep.subr.mxu0 0.0
  %3842 = vmatpush1.xpose.msra.mxu0 0.0
  %3843 = vmatprep.subr.mxu0 0.0
  %3844 = vmatpush1.xpose.msra.mxu0 0.0
  %3845 = vmatprep.subr.mxu0 0.0
  %3846 = vmatpush1.xpose.msra.mxu0 0.0
  %3847 = vmatprep.subr.mxu0 0.0
  %3848 = vmatpush1.xpose.msra.mxu0 0.0
  %3849 = vmatprep.subr.mxu0 0.0
  %3850 = vmatpush1.xpose.msra.mxu0 0.0
  %3851 = vmatprep.subr.mxu0 0.0
  %3852 = vmatpush1.xpose.msra.mxu0 0.0
  %3853 = vmatprep.subr.mxu0 0.0
  %3854 = vmatpush1.xpose.msra.mxu0 0.0
  %3855 = vmatprep.subr.mxu0 0.0
  %3856 = vmatpush1.xpose.msra.mxu0 0.0
  %3857 = vmatprep.subr.mxu0 0.0
  %3858 = vmatpush1.xpose.msra.mxu0 0.0
  %3859 = vmatprep.subr.mxu0 0.0
  %3860 = vmatpush1.xpose.msra.mxu0 0.0
  %3861 = vmatprep.subr.mxu0 0.0
  %3862 = vmatpush1.xpose.msra.mxu0 0.0
  %3863 = vmatprep.subr.mxu0 0.0
  %3864 = vmatpush1.xpose.msra.mxu0 0.0
  %3865 = vmatprep.subr.mxu0 0.0
  %3866 = vmatpush1.xpose.msra.mxu0 0.0
  %3867 = vmatprep.subr.mxu0 0.0
  %3868 = vmatpush1.xpose.msra.mxu0 0.0
  %3869 = vmatprep.subr.mxu0 0.0
  %3870 = vmatpush1.xpose.msra.mxu0 0.0
  %3871 = vmatprep.subr.mxu0 0.0
  %3872 = vmatpush1.xpose.msra.mxu0 0.0
  %3873 = vmatprep.subr.mxu0 0.0
  %3874 = vmatpush1.xpose.msra.mxu0 0.0
  %3875 = vmatprep.subr.mxu0 0.0
  %3876 = vmatpush1.xpose.msra.mxu0 0.0
  %3877 = vmatprep.subr.mxu0 0.0
  %3878 = vmatpush1.xpose.msra.mxu0 0.0
  %3879 = vmatprep.subr.mxu0 0.0
  %3880 = vmatpush1.xpose.msra.mxu0 0.0
  %3881 = vmatprep.subr.mxu0 0.0
  %3882 = vmatpush1.xpose.msra.mxu0 0.0
  %3883 = vmatprep.subr.mxu0 0.0
  %3884 = vmatpush1.xpose.msra.mxu0 0.0
  %3885 = vmatprep.subr.mxu0 0.0
  %3886 = vmatpush1.xpose.msra.mxu0 0.0
  %3887 = vmatprep.subr.mxu0 0.0
  %3888 = vmatpush1.xpose.msra.mxu0 0.0
  %3889 = vmatprep.subr.mxu0 0.0
  %3890 = vmatpush1.xpose.msra.mxu0 0.0
  %3891 = vmatprep.subr.mxu0 0.0
  %3892 = vmatpush1.xpose.msra.mxu0 0.0
  %3893 = vmatprep.subr.mxu0 0.0
  %3894 = vmatpush1.xpose.msra.mxu0 0.0
  %3895 = vmatprep.subr.mxu0 0.0
  %3896 = vmatpush1.xpose.msra.mxu0 0.0
  %3897 = vmatprep.mubr.f32.mxu0 0.0
  %v3898 = vand.u32 %v3827, 4294901760
  %v3899 = vsub.f32 %v3827, %v3898
  %v3900 = vand.u32 %v3899, 4294901760
  %v3901 = vsub.f32 %v3899, %v3900
  %v3902 = vand.u32 %v3901, 4294901760
  %3903 = vmatmul.mubr.f32.gmra.mrb[0].mxu0 %v3902
  %v3904 = vpop.f32.mrb[0].mxu0
  %v3905 = vadd.f32 0.0, %v3904
  %v3906 = vpop.f32.mrb[0].mxu0
  %3907 = vdwg.mxu0
  %3908 = vmatprep.subr.mxu0 0.0
  %v3909 = vand.u32 %v3830, 4294901760
  %v3910 = vsub.f32 %v3830, %v3909
  %v3911 = vand.u32 %v3910, 4294901760
  %v3912 = vsub.f32 %v3910, %v3911
  %v3913 = vand.u32 %v3912, 4294901760
  %3914 = vmatpush1.xpose.msra.mxu0 %v3913
  %3915 = vmatprep.subr.mxu0 0.0
  %3916 = vmatpush1.xpose.msra.mxu0 0.0
  %3917 = vmatprep.subr.mxu0 0.0
  %3918 = vmatpush1.xpose.msra.mxu0 0.0
  %3919 = vmatprep.subr.mxu0 0.0
  %3920 = vmatpush1.xpose.msra.mxu0 0.0
  %3921 = vmatprep.subr.mxu0 0.0
  %3922 = vmatpush1.xpose.msra.mxu0 0.0
  %3923 = vmatprep.subr.mxu0 0.0
  %3924 = vmatpush1.xpose.msra.mxu0 0.0
  %3925 = vmatprep.subr.mxu0 0.0
  %3926 = vmatpush1.xpose.msra.mxu0 0.0
  %3927 = vmatprep.subr.mxu0 0.0
  %3928 = vmatpush1.xpose.msra.mxu0 0.0
  %3929 = vmatprep.subr.mxu0 0.0
  %3930 = vmatpush1.xpose.msra.mxu0 0.0
  %3931 = vmatprep.subr.mxu0 0.0
  %3932 = vmatpush1.xpose.msra.mxu0 0.0
  %3933 = vmatprep.subr.mxu0 0.0
  %3934 = vmatpush1.xpose.msra.mxu0 0.0
  %3935 = vmatprep.subr.mxu0 0.0
  %3936 = vmatpush1.xpose.msra.mxu0 0.0
  %3937 = vmatprep.subr.mxu0 0.0
  %3938 = vmatpush1.xpose.msra.mxu0 0.0
  %3939 = vmatprep.subr.mxu0 0.0
  %3940 = vmatpush1.xpose.msra.mxu0 0.0
  %3941 = vmatprep.subr.mxu0 0.0
  %3942 = vmatpush1.xpose.msra.mxu0 0.0
  %3943 = vmatprep.subr.mxu0 0.0
  %3944 = vmatpush1.xpose.msra.mxu0 0.0
  %3945 = vmatprep.subr.mxu0 0.0
  %3946 = vmatpush1.xpose.msra.mxu0 0.0
  %3947 = vmatprep.subr.mxu0 0.0
  %3948 = vmatpush1.xpose.msra.mxu0 0.0
  %3949 = vmatprep.subr.mxu0 0.0
  %3950 = vmatpush1.xpose.msra.mxu0 0.0
  %3951 = vmatprep.subr.mxu0 0.0
  %3952 = vmatpush1.xpose.msra.mxu0 0.0
  %3953 = vmatprep.subr.mxu0 0.0
  %3954 = vmatpush1.xpose.msra.mxu0 0.0
  %3955 = vmatprep.subr.mxu0 0.0
  %3956 = vmatpush1.xpose.msra.mxu0 0.0
  %3957 = vmatprep.subr.mxu0 0.0
  %3958 = vmatpush1.xpose.msra.mxu0 0.0
  %3959 = vmatprep.subr.mxu0 0.0
  %3960 = vmatpush1.xpose.msra.mxu0 0.0
  %3961 = vmatprep.subr.mxu0 0.0
  %3962 = vmatpush1.xpose.msra.mxu0 0.0
  %3963 = vmatprep.subr.mxu0 0.0
  %3964 = vmatpush1.xpose.msra.mxu0 0.0
  %3965 = vmatprep.subr.mxu0 0.0
  %3966 = vmatpush1.xpose.msra.mxu0 0.0
  %3967 = vmatprep.subr.mxu0 0.0
  %3968 = vmatpush1.xpose.msra.mxu0 0.0
  %3969 = vmatprep.subr.mxu0 0.0
  %3970 = vmatpush1.xpose.msra.mxu0 0.0
  %3971 = vmatprep.subr.mxu0 0.0
  %3972 = vmatpush1.xpose.msra.mxu0 0.0
  %3973 = vmatprep.subr.mxu0 0.0
  %3974 = vmatpush1.xpose.msra.mxu0 0.0
  %3975 = vmatprep.subr.mxu0 0.0
  %3976 = vmatpush1.xpose.msra.mxu0 0.0
  %3977 = vmatprep.mubr.f32.mxu0 0.0
  %v3978 = vand.u32 %v3827, 4294901760
  %3979 = vmatmul.mubr.f32.gmra.mrb[0].mxu0 %v3978
  %v3980 = vpop.f32.mrb[0].mxu0
  %v3981 = vadd.f32 %v3905, %v3980
  %v3982 = vpop.f32.mrb[0].mxu0
  %3983 = vdwg.mxu0
  %3984 = vmatprep.subr.mxu0 0.0
  %v3985 = vand.u32 %v3830, 4294901760
  %v3986 = vsub.f32 %v3830, %v3985
  %3987 = vmatpush1.xpose.msra.mxu0 %v3986
  %3988 = vmatprep.subr.mxu0 0.0
  %3989 = vmatpush1.xpose.msra.mxu0 0.0
  %3990 = vmatprep.subr.mxu0 0.0
  %3991 = vmatpush1.xpose.msra.mxu0 0.0
  %3992 = vmatprep.subr.mxu0 0.0
  %3993 = vmatpush1.xpose.msra.mxu0 0.0
  %3994 = vmatprep.subr.mxu0 0.0
  %3995 = vmatpush1.xpose.msra.mxu0 0.0
  %3996 = vmatprep.subr.mxu0 0.0
  %3997 = vmatpush1.xpose.msra.mxu0 0.0
  %3998 = vmatprep.subr.mxu0 0.0
  %3999 = vmatpush1.xpose.msra.mxu0 0.0
  %4000 = vmatprep.subr.mxu0 0.0
  %4001 = vmatpush1.xpose.msra.mxu0 0.0
  %4002 = vmatprep.subr.mxu0 0.0
  %4003 = vmatpush1.xpose.msra.mxu0 0.0
  %4004 = vmatprep.subr.mxu0 0.0
  %4005 = vmatpush1.xpose.msra.mxu0 0.0
  %4006 = vmatprep.subr.mxu0 0.0
  %4007 = vmatpush1.xpose.msra.mxu0 0.0
  %4008 = vmatprep.subr.mxu0 0.0
  %4009 = vmatpush1.xpose.msra.mxu0 0.0
  %4010 = vmatprep.subr.mxu0 0.0
  %4011 = vmatpush1.xpose.msra.mxu0 0.0
  %4012 = vmatprep.subr.mxu0 0.0
  %4013 = vmatpush1.xpose.msra.mxu0 0.0
  %4014 = vmatprep.subr.mxu0 0.0
  %4015 = vmatpush1.xpose.msra.mxu0 0.0
  %4016 = vmatprep.subr.mxu0 0.0
  %4017 = vmatpush1.xpose.msra.mxu0 0.0
  %4018 = vmatprep.subr.mxu0 0.0
  %4019 = vmatpush1.xpose.msra.mxu0 0.0
  %4020 = vmatprep.subr.mxu0 0.0
  %4021 = vmatpush1.xpose.msra.mxu0 0.0
  %4022 = vmatprep.subr.mxu0 0.0
  %4023 = vmatpush1.xpose.msra.mxu0 0.0
  %4024 = vmatprep.subr.mxu0 0.0
  %4025 = vmatpush1.xpose.msra.mxu0 0.0
  %4026 = vmatprep.subr.mxu0 0.0
  %4027 = vmatpush1.xpose.msra.mxu0 0.0
  %4028 = vmatprep.subr.mxu0 0.0
  %4029 = vmatpush1.xpose.msra.mxu0 0.0
  %4030 = vmatprep.subr.mxu0 0.0
  %4031 = vmatpush1.xpose.msra.mxu0 0.0
  %4032 = vmatprep.subr.mxu0 0.0
  %4033 = vmatpush1.xpose.msra.mxu0 0.0
  %4034 = vmatprep.subr.mxu0 0.0
  %4035 = vmatpush1.xpose.msra.mxu0 0.0
  %4036 = vmatprep.subr.mxu0 0.0
  %4037 = vmatpush1.xpose.msra.mxu0 0.0
  %4038 = vmatprep.subr.mxu0 0.0
  %4039 = vmatpush1.xpose.msra.mxu0 0.0
  %4040 = vmatprep.subr.mxu0 0.0
  %4041 = vmatpush1.xpose.msra.mxu0 0.0
  %4042 = vmatprep.subr.mxu0 0.0
  %4043 = vmatpush1.xpose.msra.mxu0 0.0
  %4044 = vmatprep.subr.mxu0 0.0
  %4045 = vmatpush1.xpose.msra.mxu0 0.0
  %4046 = vmatprep.subr.mxu0 0.0
  %4047 = vmatpush1.xpose.msra.mxu0 0.0
  %4048 = vmatprep.subr.mxu0 0.0
  %4049 = vmatpush1.xpose.msra.mxu0 0.0
  %4050 = vmatprep.mubr.f32.mxu0 0.0
  %v4051 = vand.u32 %v3827, 4294901760
  %v4052 = vsub.f32 %v3827, %v4051
  %4053 = vmatmul.mubr.f32.gmra.mrb[0].mxu0 %v4052
  %v4054 = vpop.f32.mrb[0].mxu0
  %v4055 = vadd.f32 %v3981, %v4054
  %v4056 = vpop.f32.mrb[0].mxu0
  %4057 = vdwg.mxu0
  %4058 = vmatprep.subr.mxu0 0.0
  %v4059 = vand.u32 %v3830, 4294901760
  %4060 = vmatpush1.xpose.msra.mxu0 %v4059
  %4061 = vmatprep.subr.mxu0 0.0
  %4062 = vmatpush1.xpose.msra.mxu0 0.0
  %4063 = vmatprep.subr.mxu0 0.0
  %4064 = vmatpush1.xpose.msra.mxu0 0.0
  %4065 = vmatprep.subr.mxu0 0.0
  %4066 = vmatpush1.xpose.msra.mxu0 0.0
  %4067 = vmatprep.subr.mxu0 0.0
  %4068 = vmatpush1.xpose.msra.mxu0 0.0
  %4069 = vmatprep.subr.mxu0 0.0
  %4070 = vmatpush1.xpose.msra.mxu0 0.0
  %4071 = vmatprep.subr.mxu0 0.0
  %4072 = vmatpush1.xpose.msra.mxu0 0.0
  %4073 = vmatprep.subr.mxu0 0.0
  %4074 = vmatpush1.xpose.msra.mxu0 0.0
  %4075 = vmatprep.subr.mxu0 0.0
  %4076 = vmatpush1.xpose.msra.mxu0 0.0
  %4077 = vmatprep.subr.mxu0 0.0
  %4078 = vmatpush1.xpose.msra.mxu0 0.0
  %4079 = vmatprep.subr.mxu0 0.0
  %4080 = vmatpush1.xpose.msra.mxu0 0.0
  %4081 = vmatprep.subr.mxu0 0.0
  %4082 = vmatpush1.xpose.msra.mxu0 0.0
  %4083 = vmatprep.subr.mxu0 0.0
  %4084 = vmatpush1.xpose.msra.mxu0 0.0
  %4085 = vmatprep.subr.mxu0 0.0
  %4086 = vmatpush1.xpose.msra.mxu0 0.0
  %4087 = vmatprep.subr.mxu0 0.0
  %4088 = vmatpush1.xpose.msra.mxu0 0.0
  %4089 = vmatprep.subr.mxu0 0.0
  %4090 = vmatpush1.xpose.msra.mxu0 0.0
  %4091 = vmatprep.subr.mxu0 0.0
  %4092 = vmatpush1.xpose.msra.mxu0 0.0
  %4093 = vmatprep.subr.mxu0 0.0
  %4094 = vmatpush1.xpose.msra.mxu0 0.0
  %4095 = vmatprep.subr.mxu0 0.0
  %4096 = vmatpush1.xpose.msra.mxu0 0.0
  %4097 = vmatprep.subr.mxu0 0.0
  %4098 = vmatpush1.xpose.msra.mxu0 0.0
  %4099 = vmatprep.subr.mxu0 0.0
  %4100 = vmatpush1.xpose.msra.mxu0 0.0
  %4101 = vmatprep.subr.mxu0 0.0
  %4102 = vmatpush1.xpose.msra.mxu0 0.0
  %4103 = vmatprep.subr.mxu0 0.0
  %4104 = vmatpush1.xpose.msra.mxu0 0.0
  %4105 = vmatprep.subr.mxu0 0.0
  %4106 = vmatpush1.xpose.msra.mxu0 0.0
  %4107 = vmatprep.subr.mxu0 0.0
  %4108 = vmatpush1.xpose.msra.mxu0 0.0
  %4109 = vmatprep.subr.mxu0 0.0
  %4110 = vmatpush1.xpose.msra.mxu0 0.0
  %4111 = vmatprep.subr.mxu0 0.0
  %4112 = vmatpush1.xpose.msra.mxu0 0.0
  %4113 = vmatprep.subr.mxu0 0.0
  %4114 = vmatpush1.xpose.msra.mxu0 0.0
  %4115 = vmatprep.subr.mxu0 0.0
  %4116 = vmatpush1.xpose.msra.mxu0 0.0
  %4117 = vmatprep.subr.mxu0 0.0
  %4118 = vmatpush1.xpose.msra.mxu0 0.0
  %4119 = vmatprep.subr.mxu0 0.0
  %4120 = vmatpush1.xpose.msra.mxu0 0.0
  %4121 = vmatprep.subr.mxu0 0.0
  %4122 = vmatpush1.xpose.msra.mxu0 0.0
  %4123 = vmatprep.mubr.f32.mxu0 0.0
  %v4124 = vand.u32 %v3827, 4294901760
  %v4125 = vsub.f32 %v3827, %v4124
  %v4126 = vand.u32 %v4125, 4294901760
  %4127 = vmatmul.mubr.f32.gmra.mrb[0].mxu0 %v4126
  %v4128 = vpop.f32.mrb[0].mxu0
  %v4129 = vadd.f32 %v4055, %v4128
  %v4130 = vpop.f32.mrb[0].mxu0
  %4131 = vdwg.mxu0
  %4132 = vmatprep.subr.mxu0 0.0
  %v4133 = vand.u32 %v3830, 4294901760
  %v4134 = vsub.f32 %v3830, %v4133
  %v4135 = vand.u32 %v4134, 4294901760
  %4136 = vmatpush1.xpose.msra.mxu0 %v4135
  %4137 = vmatprep.subr.mxu0 0.0
  %4138 = vmatpush1.xpose.msra.mxu0 0.0
  %4139 = vmatprep.subr.mxu0 0.0
  %4140 = vmatpush1.xpose.msra.mxu0 0.0
  %4141 = vmatprep.subr.mxu0 0.0
  %4142 = vmatpush1.xpose.msra.mxu0 0.0
  %4143 = vmatprep.subr.mxu0 0.0
  %4144 = vmatpush1.xpose.msra.mxu0 0.0
  %4145 = vmatprep.subr.mxu0 0.0
  %4146 = vmatpush1.xpose.msra.mxu0 0.0
  %4147 = vmatprep.subr.mxu0 0.0
  %4148 = vmatpush1.xpose.msra.mxu0 0.0
  %4149 = vmatprep.subr.mxu0 0.0
  %4150 = vmatpush1.xpose.msra.mxu0 0.0
  %4151 = vmatprep.subr.mxu0 0.0
  %4152 = vmatpush1.xpose.msra.mxu0 0.0
  %4153 = vmatprep.subr.mxu0 0.0
  %4154 = vmatpush1.xpose.msra.mxu0 0.0
  %4155 = vmatprep.subr.mxu0 0.0
  %4156 = vmatpush1.xpose.msra.mxu0 0.0
  %4157 = vmatprep.subr.mxu0 0.0
  %4158 = vmatpush1.xpose.msra.mxu0 0.0
  %4159 = vmatprep.subr.mxu0 0.0
  %4160 = vmatpush1.xpose.msra.mxu0 0.0
  %4161 = vmatprep.subr.mxu0 0.0
  %4162 = vmatpush1.xpose.msra.mxu0 0.0
  %4163 = vmatprep.subr.mxu0 0.0
  %4164 = vmatpush1.xpose.msra.mxu0 0.0
  %4165 = vmatprep.subr.mxu0 0.0
  %4166 = vmatpush1.xpose.msra.mxu0 0.0
  %4167 = vmatprep.subr.mxu0 0.0
  %4168 = vmatpush1.xpose.msra.mxu0 0.0
  %4169 = vmatprep.subr.mxu0 0.0
  %4170 = vmatpush1.xpose.msra.mxu0 0.0
  %4171 = vmatprep.subr.mxu0 0.0
  %4172 = vmatpush1.xpose.msra.mxu0 0.0
  %4173 = vmatprep.subr.mxu0 0.0
  %4174 = vmatpush1.xpose.msra.mxu0 0.0
  %4175 = vmatprep.subr.mxu0 0.0
  %4176 = vmatpush1.xpose.msra.mxu0 0.0
  %4177 = vmatprep.subr.mxu0 0.0
  %4178 = vmatpush1.xpose.msra.mxu0 0.0
  %4179 = vmatprep.subr.mxu0 0.0
  %4180 = vmatpush1.xpose.msra.mxu0 0.0
  %4181 = vmatprep.subr.mxu0 0.0
  %4182 = vmatpush1.xpose.msra.mxu0 0.0
  %4183 = vmatprep.subr.mxu0 0.0
  %4184 = vmatpush1.xpose.msra.mxu0 0.0
  %4185 = vmatprep.subr.mxu0 0.0
  %4186 = vmatpush1.xpose.msra.mxu0 0.0
  %4187 = vmatprep.subr.mxu0 0.0
  %4188 = vmatpush1.xpose.msra.mxu0 0.0
  %4189 = vmatprep.subr.mxu0 0.0
  %4190 = vmatpush1.xpose.msra.mxu0 0.0
  %4191 = vmatprep.subr.mxu0 0.0
  %4192 = vmatpush1.xpose.msra.mxu0 0.0
  %4193 = vmatprep.subr.mxu0 0.0
  %4194 = vmatpush1.xpose.msra.mxu0 0.0
  %4195 = vmatprep.subr.mxu0 0.0
  %4196 = vmatpush1.xpose.msra.mxu0 0.0
  %4197 = vmatprep.subr.mxu0 0.0
  %4198 = vmatpush1.xpose.msra.mxu0 0.0
  %4199 = vmatprep.mubr.f32.mxu0 0.0
  %v4200 = vand.u32 %v3827, 4294901760
  %4201 = vmatmul.mubr.f32.gmra.mrb[0].mxu0 %v4200
  %v4202 = vpop.f32.mrb[0].mxu0
  %v4203 = vadd.f32 %v4129, %v4202
  %v4204 = vpop.f32.mrb[0].mxu0
  %4205 = vdwg.mxu0
  %4206 = vmatprep.subr.mxu0 0.0
  %v4207 = vand.u32 %v3830, 4294901760
  %4208 = vmatpush1.xpose.msra.mxu0 %v4207
  %4209 = vmatprep.subr.mxu0 0.0
  %4210 = vmatpush1.xpose.msra.mxu0 0.0
  %4211 = vmatprep.subr.mxu0 0.0
  %4212 = vmatpush1.xpose.msra.mxu0 0.0
  %4213 = vmatprep.subr.mxu0 0.0
  %4214 = vmatpush1.xpose.msra.mxu0 0.0
  %4215 = vmatprep.subr.mxu0 0.0
  %4216 = vmatpush1.xpose.msra.mxu0 0.0
  %4217 = vmatprep.subr.mxu0 0.0
  %4218 = vmatpush1.xpose.msra.mxu0 0.0
  %4219 = vmatprep.subr.mxu0 0.0
  %4220 = vmatpush1.xpose.msra.mxu0 0.0
  %4221 = vmatprep.subr.mxu0 0.0
  %4222 = vmatpush1.xpose.msra.mxu0 0.0
  %4223 = vmatprep.subr.mxu0 0.0
  %4224 = vmatpush1.xpose.msra.mxu0 0.0
  %4225 = vmatprep.subr.mxu0 0.0
  %4226 = vmatpush1.xpose.msra.mxu0 0.0
  %4227 = vmatprep.subr.mxu0 0.0
  %4228 = vmatpush1.xpose.msra.mxu0 0.0
  %4229 = vmatprep.subr.mxu0 0.0
  %4230 = vmatpush1.xpose.msra.mxu0 0.0
  %4231 = vmatprep.subr.mxu0 0.0
  %4232 = vmatpush1.xpose.msra.mxu0 0.0
  %4233 = vmatprep.subr.mxu0 0.0
  %4234 = vmatpush1.xpose.msra.mxu0 0.0
  %4235 = vmatprep.subr.mxu0 0.0
  %4236 = vmatpush1.xpose.msra.mxu0 0.0
  %4237 = vmatprep.subr.mxu0 0.0
  %4238 = vmatpush1.xpose.msra.mxu0 0.0
  %4239 = vmatprep.subr.mxu0 0.0
  %4240 = vmatpush1.xpose.msra.mxu0 0.0
  %4241 = vmatprep.subr.mxu0 0.0
  %4242 = vmatpush1.xpose.msra.mxu0 0.0
  %4243 = vmatprep.subr.mxu0 0.0
  %4244 = vmatpush1.xpose.msra.mxu0 0.0
  %4245 = vmatprep.subr.mxu0 0.0
  %4246 = vmatpush1.xpose.msra.mxu0 0.0
  %4247 = vmatprep.subr.mxu0 0.0
  %4248 = vmatpush1.xpose.msra.mxu0 0.0
  %4249 = vmatprep.subr.mxu0 0.0
  %4250 = vmatpush1.xpose.msra.mxu0 0.0
  %4251 = vmatprep.subr.mxu0 0.0
  %4252 = vmatpush1.xpose.msra.mxu0 0.0
  %4253 = vmatprep.subr.mxu0 0.0
  %4254 = vmatpush1.xpose.msra.mxu0 0.0
  %4255 = vmatprep.subr.mxu0 0.0
  %4256 = vmatpush1.xpose.msra.mxu0 0.0
  %4257 = vmatprep.subr.mxu0 0.0
  %4258 = vmatpush1.xpose.msra.mxu0 0.0
  %4259 = vmatprep.subr.mxu0 0.0
  %4260 = vmatpush1.xpose.msra.mxu0 0.0
  %4261 = vmatprep.subr.mxu0 0.0
  %4262 = vmatpush1.xpose.msra.mxu0 0.0
  %4263 = vmatprep.subr.mxu0 0.0
  %4264 = vmatpush1.xpose.msra.mxu0 0.0
  %4265 = vmatprep.subr.mxu0 0.0
  %4266 = vmatpush1.xpose.msra.mxu0 0.0
  %4267 = vmatprep.subr.mxu0 0.0
  %4268 = vmatpush1.xpose.msra.mxu0 0.0
  %4269 = vmatprep.subr.mxu0 0.0
  %4270 = vmatpush1.xpose.msra.mxu0 0.0
  %4271 = vmatprep.mubr.f32.mxu0 0.0
  %v4272 = vand.u32 %v3827, 4294901760
  %4273 = vmatmul.mubr.f32.gmra.mrb[0].mxu0 %v4272
  %v4274 = vpop.f32.mrb[0].mxu0
  %v4275 = vadd.f32 %v4203, %v4274
  %v4276 = vpop.f32.mrb[0].mxu0
  %4277 = vdwg.mxu0
  %v4279 = vsel %vm2017, %v1412, 0
  %v4282 = vsel %vm2017, %v1722, 0
  %4284 = vmatprep.subr.mxu0 0.0
  %v4285 = vand.u32 %v4282, 4294901760
  %4286 = vmatpush1.xpose.msra.mxu0 %v4285
  %4287 = vmatprep.subr.mxu0 0.0
  %4288 = vmatpush1.xpose.msra.mxu0 0.0
  %4289 = vmatprep.subr.mxu0 0.0
  %4290 = vmatpush1.xpose.msra.mxu0 0.0
  %4291 = vmatprep.subr.mxu0 0.0
  %4292 = vmatpush1.xpose.msra.mxu0 0.0
  %4293 = vmatprep.subr.mxu0 0.0
  %4294 = vmatpush1.xpose.msra.mxu0 0.0
  %4295 = vmatprep.subr.mxu0 0.0
  %4296 = vmatpush1.xpose.msra.mxu0 0.0
  %4297 = vmatprep.subr.mxu0 0.0
  %4298 = vmatpush1.xpose.msra.mxu0 0.0
  %4299 = vmatprep.subr.mxu0 0.0
  %4300 = vmatpush1.xpose.msra.mxu0 0.0
  %4301 = vmatprep.subr.mxu0 0.0
  %4302 = vmatpush1.xpose.msra.mxu0 0.0
  %4303 = vmatprep.subr.mxu0 0.0
  %4304 = vmatpush1.xpose.msra.mxu0 0.0
  %4305 = vmatprep.subr.mxu0 0.0
  %4306 = vmatpush1.xpose.msra.mxu0 0.0
  %4307 = vmatprep.subr.mxu0 0.0
  %4308 = vmatpush1.xpose.msra.mxu0 0.0
  %4309 = vmatprep.subr.mxu0 0.0
  %4310 = vmatpush1.xpose.msra.mxu0 0.0
  %4311 = vmatprep.subr.mxu0 0.0
  %4312 = vmatpush1.xpose.msra.mxu0 0.0
  %4313 = vmatprep.subr.mxu0 0.0
  %4314 = vmatpush1.xpose.msra.mxu0 0.0
  %4315 = vmatprep.subr.mxu0 0.0
  %4316 = vmatpush1.xpose.msra.mxu0 0.0
  %4317 = vmatprep.subr.mxu0 0.0
  %4318 = vmatpush1.xpose.msra.mxu0 0.0
  %4319 = vmatprep.subr.mxu0 0.0
  %4320 = vmatpush1.xpose.msra.mxu0 0.0
  %4321 = vmatprep.subr.mxu0 0.0
  %4322 = vmatpush1.xpose.msra.mxu0 0.0
  %4323 = vmatprep.subr.mxu0 0.0
  %4324 = vmatpush1.xpose.msra.mxu0 0.0
  %4325 = vmatprep.subr.mxu0 0.0
  %4326 = vmatpush1.xpose.msra.mxu0 0.0
  %4327 = vmatprep.subr.mxu0 0.0
  %4328 = vmatpush1.xpose.msra.mxu0 0.0
  %4329 = vmatprep.subr.mxu0 0.0
  %4330 = vmatpush1.xpose.msra.mxu0 0.0
  %4331 = vmatprep.subr.mxu0 0.0
  %4332 = vmatpush1.xpose.msra.mxu0 0.0
  %4333 = vmatprep.subr.mxu0 0.0
  %4334 = vmatpush1.xpose.msra.mxu0 0.0
  %4335 = vmatprep.subr.mxu0 0.0
  %4336 = vmatpush1.xpose.msra.mxu0 0.0
  %4337 = vmatprep.subr.mxu0 0.0
  %4338 = vmatpush1.xpose.msra.mxu0 0.0
  %4339 = vmatprep.subr.mxu0 0.0
  %4340 = vmatpush1.xpose.msra.mxu0 0.0
  %4341 = vmatprep.subr.mxu0 0.0
  %4342 = vmatpush1.xpose.msra.mxu0 0.0
  %4343 = vmatprep.subr.mxu0 0.0
  %4344 = vmatpush1.xpose.msra.mxu0 0.0
  %4345 = vmatprep.subr.mxu0 0.0
  %4346 = vmatpush1.xpose.msra.mxu0 0.0
  %4347 = vmatprep.subr.mxu0 0.0
  %4348 = vmatpush1.xpose.msra.mxu0 0.0
  %4349 = vmatprep.mubr.f32.mxu0 0.0
  %v4350 = vand.u32 %v4279, 4294901760
  %v4351 = vsub.f32 %v4279, %v4350
  %v4352 = vand.u32 %v4351, 4294901760
  %v4353 = vsub.f32 %v4351, %v4352
  %v4354 = vand.u32 %v4353, 4294901760
  %4355 = vmatmul.mubr.f32.gmra.mrb[0].mxu0 %v4354
  %v4356 = vpop.f32.mrb[0].mxu0
  %v4357 = vadd.f32 0.0, %v4356
  %v4358 = vpop.f32.mrb[0].mxu0
  %4359 = vdwg.mxu0
  %4360 = vmatprep.subr.mxu0 0.0
  %v4361 = vand.u32 %v4282, 4294901760
  %v4362 = vsub.f32 %v4282, %v4361
  %v4363 = vand.u32 %v4362, 4294901760
  %v4364 = vsub.f32 %v4362, %v4363
  %v4365 = vand.u32 %v4364, 4294901760
  %4366 = vmatpush1.xpose.msra.mxu0 %v4365
  %4367 = vmatprep.subr.mxu0 0.0
  %4368 = vmatpush1.xpose.msra.mxu0 0.0
  %4369 = vmatprep.subr.mxu0 0.0
  %4370 = vmatpush1.xpose.msra.mxu0 0.0
  %4371 = vmatprep.subr.mxu0 0.0
  %4372 = vmatpush1.xpose.msra.mxu0 0.0
  %4373 = vmatprep.subr.mxu0 0.0
  %4374 = vmatpush1.xpose.msra.mxu0 0.0
  %4375 = vmatprep.subr.mxu0 0.0
  %4376 = vmatpush1.xpose.msra.mxu0 0.0
  %4377 = vmatprep.subr.mxu0 0.0
  %4378 = vmatpush1.xpose.msra.mxu0 0.0
  %4379 = vmatprep.subr.mxu0 0.0
  %4380 = vmatpush1.xpose.msra.mxu0 0.0
  %4381 = vmatprep.subr.mxu0 0.0
  %4382 = vmatpush1.xpose.msra.mxu0 0.0
  %4383 = vmatprep.subr.mxu0 0.0
  %4384 = vmatpush1.xpose.msra.mxu0 0.0
  %4385 = vmatprep.subr.mxu0 0.0
  %4386 = vmatpush1.xpose.msra.mxu0 0.0
  %4387 = vmatprep.subr.mxu0 0.0
  %4388 = vmatpush1.xpose.msra.mxu0 0.0
  %4389 = vmatprep.subr.mxu0 0.0
  %4390 = vmatpush1.xpose.msra.mxu0 0.0
  %4391 = vmatprep.subr.mxu0 0.0
  %4392 = vmatpush1.xpose.msra.mxu0 0.0
  %4393 = vmatprep.subr.mxu0 0.0
  %4394 = vmatpush1.xpose.msra.mxu0 0.0
  %4395 = vmatprep.subr.mxu0 0.0
  %4396 = vmatpush1.xpose.msra.mxu0 0.0
  %4397 = vmatprep.subr.mxu0 0.0
  %4398 = vmatpush1.xpose.msra.mxu0 0.0
  %4399 = vmatprep.subr.mxu0 0.0
  %4400 = vmatpush1.xpose.msra.mxu0 0.0
  %4401 = vmatprep.subr.mxu0 0.0
  %4402 = vmatpush1.xpose.msra.mxu0 0.0
  %4403 = vmatprep.subr.mxu0 0.0
  %4404 = vmatpush1.xpose.msra.mxu0 0.0
  %4405 = vmatprep.subr.mxu0 0.0
  %4406 = vmatpush1.xpose.msra.mxu0 0.0
  %4407 = vmatprep.subr.mxu0 0.0
  %4408 = vmatpush1.xpose.msra.mxu0 0.0
  %4409 = vmatprep.subr.mxu0 0.0
  %4410 = vmatpush1.xpose.msra.mxu0 0.0
  %4411 = vmatprep.subr.mxu0 0.0
  %4412 = vmatpush1.xpose.msra.mxu0 0.0
  %4413 = vmatprep.subr.mxu0 0.0
  %4414 = vmatpush1.xpose.msra.mxu0 0.0
  %4415 = vmatprep.subr.mxu0 0.0
  %4416 = vmatpush1.xpose.msra.mxu0 0.0
  %4417 = vmatprep.subr.mxu0 0.0
  %4418 = vmatpush1.xpose.msra.mxu0 0.0
  %4419 = vmatprep.subr.mxu0 0.0
  %4420 = vmatpush1.xpose.msra.mxu0 0.0
  %4421 = vmatprep.subr.mxu0 0.0
  %4422 = vmatpush1.xpose.msra.mxu0 0.0
  %4423 = vmatprep.subr.mxu0 0.0
  %4424 = vmatpush1.xpose.msra.mxu0 0.0
  %4425 = vmatprep.subr.mxu0 0.0
  %4426 = vmatpush1.xpose.msra.mxu0 0.0
  %4427 = vmatprep.subr.mxu0 0.0
  %4428 = vmatpush1.xpose.msra.mxu0 0.0
  %4429 = vmatprep.mubr.f32.mxu0 0.0
  %v4430 = vand.u32 %v4279, 4294901760
  %4431 = vmatmul.mubr.f32.gmra.mrb[0].mxu0 %v4430
  %v4432 = vpop.f32.mrb[0].mxu0
  %v4433 = vadd.f32 %v4357, %v4432
  %v4434 = vpop.f32.mrb[0].mxu0
  %4435 = vdwg.mxu0
  %4436 = vmatprep.subr.mxu0 0.0
  %v4437 = vand.u32 %v4282, 4294901760
  %v4438 = vsub.f32 %v4282, %v4437
  %4439 = vmatpush1.xpose.msra.mxu0 %v4438
  %4440 = vmatprep.subr.mxu0 0.0
  %4441 = vmatpush1.xpose.msra.mxu0 0.0
  %4442 = vmatprep.subr.mxu0 0.0
  %4443 = vmatpush1.xpose.msra.mxu0 0.0
  %4444 = vmatprep.subr.mxu0 0.0
  %4445 = vmatpush1.xpose.msra.mxu0 0.0
  %4446 = vmatprep.subr.mxu0 0.0
  %4447 = vmatpush1.xpose.msra.mxu0 0.0
  %4448 = vmatprep.subr.mxu0 0.0
  %4449 = vmatpush1.xpose.msra.mxu0 0.0
  %4450 = vmatprep.subr.mxu0 0.0
  %4451 = vmatpush1.xpose.msra.mxu0 0.0
  %4452 = vmatprep.subr.mxu0 0.0
  %4453 = vmatpush1.xpose.msra.mxu0 0.0
  %4454 = vmatprep.subr.mxu0 0.0
  %4455 = vmatpush1.xpose.msra.mxu0 0.0
  %4456 = vmatprep.subr.mxu0 0.0
  %4457 = vmatpush1.xpose.msra.mxu0 0.0
  %4458 = vmatprep.subr.mxu0 0.0
  %4459 = vmatpush1.xpose.msra.mxu0 0.0
  %4460 = vmatprep.subr.mxu0 0.0
  %4461 = vmatpush1.xpose.msra.mxu0 0.0
  %4462 = vmatprep.subr.mxu0 0.0
  %4463 = vmatpush1.xpose.msra.mxu0 0.0
  %4464 = vmatprep.subr.mxu0 0.0
  %4465 = vmatpush1.xpose.msra.mxu0 0.0
  %4466 = vmatprep.subr.mxu0 0.0
  %4467 = vmatpush1.xpose.msra.mxu0 0.0
  %4468 = vmatprep.subr.mxu0 0.0
  %4469 = vmatpush1.xpose.msra.mxu0 0.0
  %4470 = vmatprep.subr.mxu0 0.0
  %4471 = vmatpush1.xpose.msra.mxu0 0.0
  %4472 = vmatprep.subr.mxu0 0.0
  %4473 = vmatpush1.xpose.msra.mxu0 0.0
  %4474 = vmatprep.subr.mxu0 0.0
  %4475 = vmatpush1.xpose.msra.mxu0 0.0
  %4476 = vmatprep.subr.mxu0 0.0
  %4477 = vmatpush1.xpose.msra.mxu0 0.0
  %4478 = vmatprep.subr.mxu0 0.0
  %4479 = vmatpush1.xpose.msra.mxu0 0.0
  %4480 = vmatprep.subr.mxu0 0.0
  %4481 = vmatpush1.xpose.msra.mxu0 0.0
  %4482 = vmatprep.subr.mxu0 0.0
  %4483 = vmatpush1.xpose.msra.mxu0 0.0
  %4484 = vmatprep.subr.mxu0 0.0
  %4485 = vmatpush1.xpose.msra.mxu0 0.0
  %4486 = vmatprep.subr.mxu0 0.0
  %4487 = vmatpush1.xpose.msra.mxu0 0.0
  %4488 = vmatprep.subr.mxu0 0.0
  %4489 = vmatpush1.xpose.msra.mxu0 0.0
  %4490 = vmatprep.subr.mxu0 0.0
  %4491 = vmatpush1.xpose.msra.mxu0 0.0
  %4492 = vmatprep.subr.mxu0 0.0
  %4493 = vmatpush1.xpose.msra.mxu0 0.0
  %4494 = vmatprep.subr.mxu0 0.0
  %4495 = vmatpush1.xpose.msra.mxu0 0.0
  %4496 = vmatprep.subr.mxu0 0.0
  %4497 = vmatpush1.xpose.msra.mxu0 0.0
  %4498 = vmatprep.subr.mxu0 0.0
  %4499 = vmatpush1.xpose.msra.mxu0 0.0
  %4500 = vmatprep.subr.mxu0 0.0
  %4501 = vmatpush1.xpose.msra.mxu0 0.0
  %4502 = vmatprep.mubr.f32.mxu0 0.0
  %v4503 = vand.u32 %v4279, 4294901760
  %v4504 = vsub.f32 %v4279, %v4503
  %4505 = vmatmul.mubr.f32.gmra.mrb[0].mxu0 %v4504
  %v4506 = vpop.f32.mrb[0].mxu0
  %v4507 = vadd.f32 %v4433, %v4506
  %v4508 = vpop.f32.mrb[0].mxu0
  %4509 = vdwg.mxu0
  %4510 = vmatprep.subr.mxu0 0.0
  %v4511 = vand.u32 %v4282, 4294901760
  %4512 = vmatpush1.xpose.msra.mxu0 %v4511
  %4513 = vmatprep.subr.mxu0 0.0
  %4514 = vmatpush1.xpose.msra.mxu0 0.0
  %4515 = vmatprep.subr.mxu0 0.0
  %4516 = vmatpush1.xpose.msra.mxu0 0.0
  %4517 = vmatprep.subr.mxu0 0.0
  %4518 = vmatpush1.xpose.msra.mxu0 0.0
  %4519 = vmatprep.subr.mxu0 0.0
  %4520 = vmatpush1.xpose.msra.mxu0 0.0
  %4521 = vmatprep.subr.mxu0 0.0
  %4522 = vmatpush1.xpose.msra.mxu0 0.0
  %4523 = vmatprep.subr.mxu0 0.0
  %4524 = vmatpush1.xpose.msra.mxu0 0.0
  %4525 = vmatprep.subr.mxu0 0.0
  %4526 = vmatpush1.xpose.msra.mxu0 0.0
  %4527 = vmatprep.subr.mxu0 0.0
  %4528 = vmatpush1.xpose.msra.mxu0 0.0
  %4529 = vmatprep.subr.mxu0 0.0
  %4530 = vmatpush1.xpose.msra.mxu0 0.0
  %4531 = vmatprep.subr.mxu0 0.0
  %4532 = vmatpush1.xpose.msra.mxu0 0.0
  %4533 = vmatprep.subr.mxu0 0.0
  %4534 = vmatpush1.xpose.msra.mxu0 0.0
  %4535 = vmatprep.subr.mxu0 0.0
  %4536 = vmatpush1.xpose.msra.mxu0 0.0
  %4537 = vmatprep.subr.mxu0 0.0
  %4538 = vmatpush1.xpose.msra.mxu0 0.0
  %4539 = vmatprep.subr.mxu0 0.0
  %4540 = vmatpush1.xpose.msra.mxu0 0.0
  %4541 = vmatprep.subr.mxu0 0.0
  %4542 = vmatpush1.xpose.msra.mxu0 0.0
  %4543 = vmatprep.subr.mxu0 0.0
  %4544 = vmatpush1.xpose.msra.mxu0 0.0
  %4545 = vmatprep.subr.mxu0 0.0
  %4546 = vmatpush1.xpose.msra.mxu0 0.0
  %4547 = vmatprep.subr.mxu0 0.0
  %4548 = vmatpush1.xpose.msra.mxu0 0.0
  %4549 = vmatprep.subr.mxu0 0.0
  %4550 = vmatpush1.xpose.msra.mxu0 0.0
  %4551 = vmatprep.subr.mxu0 0.0
  %4552 = vmatpush1.xpose.msra.mxu0 0.0
  %4553 = vmatprep.subr.mxu0 0.0
  %4554 = vmatpush1.xpose.msra.mxu0 0.0
  %4555 = vmatprep.subr.mxu0 0.0
  %4556 = vmatpush1.xpose.msra.mxu0 0.0
  %4557 = vmatprep.subr.mxu0 0.0
  %4558 = vmatpush1.xpose.msra.mxu0 0.0
  %4559 = vmatprep.subr.mxu0 0.0
  %4560 = vmatpush1.xpose.msra.mxu0 0.0
  %4561 = vmatprep.subr.mxu0 0.0
  %4562 = vmatpush1.xpose.msra.mxu0 0.0
  %4563 = vmatprep.subr.mxu0 0.0
  %4564 = vmatpush1.xpose.msra.mxu0 0.0
  %4565 = vmatprep.subr.mxu0 0.0
  %4566 = vmatpush1.xpose.msra.mxu0 0.0
  %4567 = vmatprep.subr.mxu0 0.0
  %4568 = vmatpush1.xpose.msra.mxu0 0.0
  %4569 = vmatprep.subr.mxu0 0.0
  %4570 = vmatpush1.xpose.msra.mxu0 0.0
  %4571 = vmatprep.subr.mxu0 0.0
  %4572 = vmatpush1.xpose.msra.mxu0 0.0
  %4573 = vmatprep.subr.mxu0 0.0
  %4574 = vmatpush1.xpose.msra.mxu0 0.0
  %4575 = vmatprep.mubr.f32.mxu0 0.0
  %v4576 = vand.u32 %v4279, 4294901760
  %v4577 = vsub.f32 %v4279, %v4576
  %v4578 = vand.u32 %v4577, 4294901760
  %4579 = vmatmul.mubr.f32.gmra.mrb[0].mxu0 %v4578
  %v4580 = vpop.f32.mrb[0].mxu0
  %v4581 = vadd.f32 %v4507, %v4580
  %v4582 = vpop.f32.mrb[0].mxu0
  %4583 = vdwg.mxu0
  %4584 = vmatprep.subr.mxu0 0.0
  %v4585 = vand.u32 %v4282, 4294901760
  %v4586 = vsub.f32 %v4282, %v4585
  %v4587 = vand.u32 %v4586, 4294901760
  %4588 = vmatpush1.xpose.msra.mxu0 %v4587
  %4589 = vmatprep.subr.mxu0 0.0
  %4590 = vmatpush1.xpose.msra.mxu0 0.0
  %4591 = vmatprep.subr.mxu0 0.0
  %4592 = vmatpush1.xpose.msra.mxu0 0.0
  %4593 = vmatprep.subr.mxu0 0.0
  %4594 = vmatpush1.xpose.msra.mxu0 0.0
  %4595 = vmatprep.subr.mxu0 0.0
  %4596 = vmatpush1.xpose.msra.mxu0 0.0
  %4597 = vmatprep.subr.mxu0 0.0
  %4598 = vmatpush1.xpose.msra.mxu0 0.0
  %4599 = vmatprep.subr.mxu0 0.0
  %4600 = vmatpush1.xpose.msra.mxu0 0.0
  %4601 = vmatprep.subr.mxu0 0.0
  %4602 = vmatpush1.xpose.msra.mxu0 0.0
  %4603 = vmatprep.subr.mxu0 0.0
  %4604 = vmatpush1.xpose.msra.mxu0 0.0
  %4605 = vmatprep.subr.mxu0 0.0
  %4606 = vmatpush1.xpose.msra.mxu0 0.0
  %4607 = vmatprep.subr.mxu0 0.0
  %4608 = vmatpush1.xpose.msra.mxu0 0.0
  %4609 = vmatprep.subr.mxu0 0.0
  %4610 = vmatpush1.xpose.msra.mxu0 0.0
  %4611 = vmatprep.subr.mxu0 0.0
  %4612 = vmatpush1.xpose.msra.mxu0 0.0
  %4613 = vmatprep.subr.mxu0 0.0
  %4614 = vmatpush1.xpose.msra.mxu0 0.0
  %4615 = vmatprep.subr.mxu0 0.0
  %4616 = vmatpush1.xpose.msra.mxu0 0.0
  %4617 = vmatprep.subr.mxu0 0.0
  %4618 = vmatpush1.xpose.msra.mxu0 0.0
  %4619 = vmatprep.subr.mxu0 0.0
  %4620 = vmatpush1.xpose.msra.mxu0 0.0
  %4621 = vmatprep.subr.mxu0 0.0
  %4622 = vmatpush1.xpose.msra.mxu0 0.0
  %4623 = vmatprep.subr.mxu0 0.0
  %4624 = vmatpush1.xpose.msra.mxu0 0.0
  %4625 = vmatprep.subr.mxu0 0.0
  %4626 = vmatpush1.xpose.msra.mxu0 0.0
  %4627 = vmatprep.subr.mxu0 0.0
  %4628 = vmatpush1.xpose.msra.mxu0 0.0
  %4629 = vmatprep.subr.mxu0 0.0
  %4630 = vmatpush1.xpose.msra.mxu0 0.0
  %4631 = vmatprep.subr.mxu0 0.0
  %4632 = vmatpush1.xpose.msra.mxu0 0.0
  %4633 = vmatprep.subr.mxu0 0.0
  %4634 = vmatpush1.xpose.msra.mxu0 0.0
  %4635 = vmatprep.subr.mxu0 0.0
  %4636 = vmatpush1.xpose.msra.mxu0 0.0
  %4637 = vmatprep.subr.mxu0 0.0
  %4638 = vmatpush1.xpose.msra.mxu0 0.0
  %4639 = vmatprep.subr.mxu0 0.0
  %4640 = vmatpush1.xpose.msra.mxu0 0.0
  %4641 = vmatprep.subr.mxu0 0.0
  %4642 = vmatpush1.xpose.msra.mxu0 0.0
  %4643 = vmatprep.subr.mxu0 0.0
  %4644 = vmatpush1.xpose.msra.mxu0 0.0
  %4645 = vmatprep.subr.mxu0 0.0
  %4646 = vmatpush1.xpose.msra.mxu0 0.0
  %4647 = vmatprep.subr.mxu0 0.0
  %4648 = vmatpush1.xpose.msra.mxu0 0.0
  %4649 = vmatprep.subr.mxu0 0.0
  %4650 = vmatpush1.xpose.msra.mxu0 0.0
  %4651 = vmatprep.mubr.f32.mxu0 0.0
  %v4652 = vand.u32 %v4279, 4294901760
  %4653 = vmatmul.mubr.f32.gmra.mrb[0].mxu0 %v4652
  %v4654 = vpop.f32.mrb[0].mxu0
  %v4655 = vadd.f32 %v4581, %v4654
  %v4656 = vpop.f32.mrb[0].mxu0
  %4657 = vdwg.mxu0
  %4658 = vmatprep.subr.mxu0 0.0
  %v4659 = vand.u32 %v4282, 4294901760
  %4660 = vmatpush1.xpose.msra.mxu0 %v4659
  %4661 = vmatprep.subr.mxu0 0.0
  %4662 = vmatpush1.xpose.msra.mxu0 0.0
  %4663 = vmatprep.subr.mxu0 0.0
  %4664 = vmatpush1.xpose.msra.mxu0 0.0
  %4665 = vmatprep.subr.mxu0 0.0
  %4666 = vmatpush1.xpose.msra.mxu0 0.0
  %4667 = vmatprep.subr.mxu0 0.0
  %4668 = vmatpush1.xpose.msra.mxu0 0.0
  %4669 = vmatprep.subr.mxu0 0.0
  %4670 = vmatpush1.xpose.msra.mxu0 0.0
  %4671 = vmatprep.subr.mxu0 0.0
  %4672 = vmatpush1.xpose.msra.mxu0 0.0
  %4673 = vmatprep.subr.mxu0 0.0
  %4674 = vmatpush1.xpose.msra.mxu0 0.0
  %4675 = vmatprep.subr.mxu0 0.0
  %4676 = vmatpush1.xpose.msra.mxu0 0.0
  %4677 = vmatprep.subr.mxu0 0.0
  %4678 = vmatpush1.xpose.msra.mxu0 0.0
  %4679 = vmatprep.subr.mxu0 0.0
  %4680 = vmatpush1.xpose.msra.mxu0 0.0
  %4681 = vmatprep.subr.mxu0 0.0
  %4682 = vmatpush1.xpose.msra.mxu0 0.0
  %4683 = vmatprep.subr.mxu0 0.0
  %4684 = vmatpush1.xpose.msra.mxu0 0.0
  %4685 = vmatprep.subr.mxu0 0.0
  %4686 = vmatpush1.xpose.msra.mxu0 0.0
  %4687 = vmatprep.subr.mxu0 0.0
  %4688 = vmatpush1.xpose.msra.mxu0 0.0
  %4689 = vmatprep.subr.mxu0 0.0
  %4690 = vmatpush1.xpose.msra.mxu0 0.0
  %4691 = vmatprep.subr.mxu0 0.0
  %4692 = vmatpush1.xpose.msra.mxu0 0.0
  %4693 = vmatprep.subr.mxu0 0.0
  %4694 = vmatpush1.xpose.msra.mxu0 0.0
  %4695 = vmatprep.subr.mxu0 0.0
  %4696 = vmatpush1.xpose.msra.mxu0 0.0
  %4697 = vmatprep.subr.mxu0 0.0
  %4698 = vmatpush1.xpose.msra.mxu0 0.0
  %4699 = vmatprep.subr.mxu0 0.0
  %4700 = vmatpush1.xpose.msra.mxu0 0.0
  %4701 = vmatprep.subr.mxu0 0.0
  %4702 = vmatpush1.xpose.msra.mxu0 0.0
  %4703 = vmatprep.subr.mxu0 0.0
  %4704 = vmatpush1.xpose.msra.mxu0 0.0
  %4705 = vmatprep.subr.mxu0 0.0
  %4706 = vmatpush1.xpose.msra.mxu0 0.0
  %4707 = vmatprep.subr.mxu0 0.0
  %4708 = vmatpush1.xpose.msra.mxu0 0.0
  %4709 = vmatprep.subr.mxu0 0.0
  %4710 = vmatpush1.xpose.msra.mxu0 0.0
  %4711 = vmatprep.subr.mxu0 0.0
  %4712 = vmatpush1.xpose.msra.mxu0 0.0
  %4713 = vmatprep.subr.mxu0 0.0
  %4714 = vmatpush1.xpose.msra.mxu0 0.0
  %4715 = vmatprep.subr.mxu0 0.0
  %4716 = vmatpush1.xpose.msra.mxu0 0.0
  %4717 = vmatprep.subr.mxu0 0.0
  %4718 = vmatpush1.xpose.msra.mxu0 0.0
  %4719 = vmatprep.subr.mxu0 0.0
  %4720 = vmatpush1.xpose.msra.mxu0 0.0
  %4721 = vmatprep.subr.mxu0 0.0
  %4722 = vmatpush1.xpose.msra.mxu0 0.0
  %4723 = vmatprep.mubr.f32.mxu0 0.0
  %v4724 = vand.u32 %v4279, 4294901760
  %4725 = vmatmul.mubr.f32.gmra.mrb[0].mxu0 %v4724
  %v4726 = vpop.f32.mrb[0].mxu0
  %v4727 = vadd.f32 %v4655, %v4726
  %v4728 = vpop.f32.mrb[0].mxu0
  %4729 = vdwg.mxu0
  %v4731 = vsel %vm2017, %v1413, 0
  %v4734 = vsel %vm2017, %v1723, 0
  %4736 = vmatprep.subr.mxu0 0.0
  %v4737 = vand.u32 %v4734, 4294901760
  %4738 = vmatpush1.xpose.msra.mxu0 %v4737
  %4739 = vmatprep.subr.mxu0 0.0
  %4740 = vmatpush1.xpose.msra.mxu0 0.0
  %4741 = vmatprep.subr.mxu0 0.0
  %4742 = vmatpush1.xpose.msra.mxu0 0.0
  %4743 = vmatprep.subr.mxu0 0.0
  %4744 = vmatpush1.xpose.msra.mxu0 0.0
  %4745 = vmatprep.subr.mxu0 0.0
  %4746 = vmatpush1.xpose.msra.mxu0 0.0
  %4747 = vmatprep.subr.mxu0 0.0
  %4748 = vmatpush1.xpose.msra.mxu0 0.0
  %4749 = vmatprep.subr.mxu0 0.0
  %4750 = vmatpush1.xpose.msra.mxu0 0.0
  %4751 = vmatprep.subr.mxu0 0.0
  %4752 = vmatpush1.xpose.msra.mxu0 0.0
  %4753 = vmatprep.subr.mxu0 0.0
  %4754 = vmatpush1.xpose.msra.mxu0 0.0
  %4755 = vmatprep.subr.mxu0 0.0
  %4756 = vmatpush1.xpose.msra.mxu0 0.0
  %4757 = vmatprep.subr.mxu0 0.0
  %4758 = vmatpush1.xpose.msra.mxu0 0.0
  %4759 = vmatprep.subr.mxu0 0.0
  %4760 = vmatpush1.xpose.msra.mxu0 0.0
  %4761 = vmatprep.subr.mxu0 0.0
  %4762 = vmatpush1.xpose.msra.mxu0 0.0
  %4763 = vmatprep.subr.mxu0 0.0
  %4764 = vmatpush1.xpose.msra.mxu0 0.0
  %4765 = vmatprep.subr.mxu0 0.0
  %4766 = vmatpush1.xpose.msra.mxu0 0.0
  %4767 = vmatprep.subr.mxu0 0.0
  %4768 = vmatpush1.xpose.msra.mxu0 0.0
  %4769 = vmatprep.subr.mxu0 0.0
  %4770 = vmatpush1.xpose.msra.mxu0 0.0
  %4771 = vmatprep.subr.mxu0 0.0
  %4772 = vmatpush1.xpose.msra.mxu0 0.0
  %4773 = vmatprep.subr.mxu0 0.0
  %4774 = vmatpush1.xpose.msra.mxu0 0.0
  %4775 = vmatprep.subr.mxu0 0.0
  %4776 = vmatpush1.xpose.msra.mxu0 0.0
  %4777 = vmatprep.subr.mxu0 0.0
  %4778 = vmatpush1.xpose.msra.mxu0 0.0
  %4779 = vmatprep.subr.mxu0 0.0
  %4780 = vmatpush1.xpose.msra.mxu0 0.0
  %4781 = vmatprep.subr.mxu0 0.0
  %4782 = vmatpush1.xpose.msra.mxu0 0.0
  %4783 = vmatprep.subr.mxu0 0.0
  %4784 = vmatpush1.xpose.msra.mxu0 0.0
  %4785 = vmatprep.subr.mxu0 0.0
  %4786 = vmatpush1.xpose.msra.mxu0 0.0
  %4787 = vmatprep.subr.mxu0 0.0
  %4788 = vmatpush1.xpose.msra.mxu0 0.0
  %4789 = vmatprep.subr.mxu0 0.0
  %4790 = vmatpush1.xpose.msra.mxu0 0.0
  %4791 = vmatprep.subr.mxu0 0.0
  %4792 = vmatpush1.xpose.msra.mxu0 0.0
  %4793 = vmatprep.subr.mxu0 0.0
  %4794 = vmatpush1.xpose.msra.mxu0 0.0
  %4795 = vmatprep.subr.mxu0 0.0
  %4796 = vmatpush1.xpose.msra.mxu0 0.0
  %4797 = vmatprep.subr.mxu0 0.0
  %4798 = vmatpush1.xpose.msra.mxu0 0.0
  %4799 = vmatprep.subr.mxu0 0.0
  %4800 = vmatpush1.xpose.msra.mxu0 0.0
  %4801 = vmatprep.mubr.f32.mxu0 0.0
  %v4802 = vand.u32 %v4731, 4294901760
  %v4803 = vsub.f32 %v4731, %v4802
  %v4804 = vand.u32 %v4803, 4294901760
  %v4805 = vsub.f32 %v4803, %v4804
  %v4806 = vand.u32 %v4805, 4294901760
  %4807 = vmatmul.mubr.f32.gmra.mrb[0].mxu0 %v4806
  %v4808 = vpop.f32.mrb[0].mxu0
  %v4809 = vadd.f32 0.0, %v4808
  %v4810 = vpop.f32.mrb[0].mxu0
  %4811 = vdwg.mxu0
  %4812 = vmatprep.subr.mxu0 0.0
  %v4813 = vand.u32 %v4734, 4294901760
  %v4814 = vsub.f32 %v4734, %v4813
  %v4815 = vand.u32 %v4814, 4294901760
  %v4816 = vsub.f32 %v4814, %v4815
  %v4817 = vand.u32 %v4816, 4294901760
  %4818 = vmatpush1.xpose.msra.mxu0 %v4817
  %4819 = vmatprep.subr.mxu0 0.0
  %4820 = vmatpush1.xpose.msra.mxu0 0.0
  %4821 = vmatprep.subr.mxu0 0.0
  %4822 = vmatpush1.xpose.msra.mxu0 0.0
  %4823 = vmatprep.subr.mxu0 0.0
  %4824 = vmatpush1.xpose.msra.mxu0 0.0
  %4825 = vmatprep.subr.mxu0 0.0
  %4826 = vmatpush1.xpose.msra.mxu0 0.0
  %4827 = vmatprep.subr.mxu0 0.0
  %4828 = vmatpush1.xpose.msra.mxu0 0.0
  %4829 = vmatprep.subr.mxu0 0.0
  %4830 = vmatpush1.xpose.msra.mxu0 0.0
  %4831 = vmatprep.subr.mxu0 0.0
  %4832 = vmatpush1.xpose.msra.mxu0 0.0
  %4833 = vmatprep.subr.mxu0 0.0
  %4834 = vmatpush1.xpose.msra.mxu0 0.0
  %4835 = vmatprep.subr.mxu0 0.0
  %4836 = vmatpush1.xpose.msra.mxu0 0.0
  %4837 = vmatprep.subr.mxu0 0.0
  %4838 = vmatpush1.xpose.msra.mxu0 0.0
  %4839 = vmatprep.subr.mxu0 0.0
  %4840 = vmatpush1.xpose.msra.mxu0 0.0
  %4841 = vmatprep.subr.mxu0 0.0
  %4842 = vmatpush1.xpose.msra.mxu0 0.0
  %4843 = vmatprep.subr.mxu0 0.0
  %4844 = vmatpush1.xpose.msra.mxu0 0.0
  %4845 = vmatprep.subr.mxu0 0.0
  %4846 = vmatpush1.xpose.msra.mxu0 0.0
  %4847 = vmatprep.subr.mxu0 0.0
  %4848 = vmatpush1.xpose.msra.mxu0 0.0
  %4849 = vmatprep.subr.mxu0 0.0
  %4850 = vmatpush1.xpose.msra.mxu0 0.0
  %4851 = vmatprep.subr.mxu0 0.0
  %4852 = vmatpush1.xpose.msra.mxu0 0.0
  %4853 = vmatprep.subr.mxu0 0.0
  %4854 = vmatpush1.xpose.msra.mxu0 0.0
  %4855 = vmatprep.subr.mxu0 0.0
  %4856 = vmatpush1.xpose.msra.mxu0 0.0
  %4857 = vmatprep.subr.mxu0 0.0
  %4858 = vmatpush1.xpose.msra.mxu0 0.0
  %4859 = vmatprep.subr.mxu0 0.0
  %4860 = vmatpush1.xpose.msra.mxu0 0.0
  %4861 = vmatprep.subr.mxu0 0.0
  %4862 = vmatpush1.xpose.msra.mxu0 0.0
  %4863 = vmatprep.subr.mxu0 0.0
  %4864 = vmatpush1.xpose.msra.mxu0 0.0
  %4865 = vmatprep.subr.mxu0 0.0
  %4866 = vmatpush1.xpose.msra.mxu0 0.0
  %4867 = vmatprep.subr.mxu0 0.0
  %4868 = vmatpush1.xpose.msra.mxu0 0.0
  %4869 = vmatprep.subr.mxu0 0.0
  %4870 = vmatpush1.xpose.msra.mxu0 0.0
  %4871 = vmatprep.subr.mxu0 0.0
  %4872 = vmatpush1.xpose.msra.mxu0 0.0
  %4873 = vmatprep.subr.mxu0 0.0
  %4874 = vmatpush1.xpose.msra.mxu0 0.0
  %4875 = vmatprep.subr.mxu0 0.0
  %4876 = vmatpush1.xpose.msra.mxu0 0.0
  %4877 = vmatprep.subr.mxu0 0.0
  %4878 = vmatpush1.xpose.msra.mxu0 0.0
  %4879 = vmatprep.subr.mxu0 0.0
  %4880 = vmatpush1.xpose.msra.mxu0 0.0
  %4881 = vmatprep.mubr.f32.mxu0 0.0
  %v4882 = vand.u32 %v4731, 4294901760
  %4883 = vmatmul.mubr.f32.gmra.mrb[0].mxu0 %v4882
  %v4884 = vpop.f32.mrb[0].mxu0
  %v4885 = vadd.f32 %v4809, %v4884
  %v4886 = vpop.f32.mrb[0].mxu0
  %4887 = vdwg.mxu0
  %4888 = vmatprep.subr.mxu0 0.0
  %v4889 = vand.u32 %v4734, 4294901760
  %v4890 = vsub.f32 %v4734, %v4889
  %4891 = vmatpush1.xpose.msra.mxu0 %v4890
  %4892 = vmatprep.subr.mxu0 0.0
  %4893 = vmatpush1.xpose.msra.mxu0 0.0
  %4894 = vmatprep.subr.mxu0 0.0
  %4895 = vmatpush1.xpose.msra.mxu0 0.0
  %4896 = vmatprep.subr.mxu0 0.0
  %4897 = vmatpush1.xpose.msra.mxu0 0.0
  %4898 = vmatprep.subr.mxu0 0.0
  %4899 = vmatpush1.xpose.msra.mxu0 0.0
  %4900 = vmatprep.subr.mxu0 0.0
  %4901 = vmatpush1.xpose.msra.mxu0 0.0
  %4902 = vmatprep.subr.mxu0 0.0
  %4903 = vmatpush1.xpose.msra.mxu0 0.0
  %4904 = vmatprep.subr.mxu0 0.0
  %4905 = vmatpush1.xpose.msra.mxu0 0.0
  %4906 = vmatprep.subr.mxu0 0.0
  %4907 = vmatpush1.xpose.msra.mxu0 0.0
  %4908 = vmatprep.subr.mxu0 0.0
  %4909 = vmatpush1.xpose.msra.mxu0 0.0
  %4910 = vmatprep.subr.mxu0 0.0
  %4911 = vmatpush1.xpose.msra.mxu0 0.0
  %4912 = vmatprep.subr.mxu0 0.0
  %4913 = vmatpush1.xpose.msra.mxu0 0.0
  %4914 = vmatprep.subr.mxu0 0.0
  %4915 = vmatpush1.xpose.msra.mxu0 0.0
  %4916 = vmatprep.subr.mxu0 0.0
  %4917 = vmatpush1.xpose.msra.mxu0 0.0
  %4918 = vmatprep.subr.mxu0 0.0
  %4919 = vmatpush1.xpose.msra.mxu0 0.0
  %4920 = vmatprep.subr.mxu0 0.0
  %4921 = vmatpush1.xpose.msra.mxu0 0.0
  %4922 = vmatprep.subr.mxu0 0.0
  %4923 = vmatpush1.xpose.msra.mxu0 0.0
  %4924 = vmatprep.subr.mxu0 0.0
  %4925 = vmatpush1.xpose.msra.mxu0 0.0
  %4926 = vmatprep.subr.mxu0 0.0
  %4927 = vmatpush1.xpose.msra.mxu0 0.0
  %4928 = vmatprep.subr.mxu0 0.0
  %4929 = vmatpush1.xpose.msra.mxu0 0.0
  %4930 = vmatprep.subr.mxu0 0.0
  %4931 = vmatpush1.xpose.msra.mxu0 0.0
  %4932 = vmatprep.subr.mxu0 0.0
  %4933 = vmatpush1.xpose.msra.mxu0 0.0
  %4934 = vmatprep.subr.mxu0 0.0
  %4935 = vmatpush1.xpose.msra.mxu0 0.0
  %4936 = vmatprep.subr.mxu0 0.0
  %4937 = vmatpush1.xpose.msra.mxu0 0.0
  %4938 = vmatprep.subr.mxu0 0.0
  %4939 = vmatpush1.xpose.msra.mxu0 0.0
  %4940 = vmatprep.subr.mxu0 0.0
  %4941 = vmatpush1.xpose.msra.mxu0 0.0
  %4942 = vmatprep.subr.mxu0 0.0
  %4943 = vmatpush1.xpose.msra.mxu0 0.0
  %4944 = vmatprep.subr.mxu0 0.0
  %4945 = vmatpush1.xpose.msra.mxu0 0.0
  %4946 = vmatprep.subr.mxu0 0.0
  %4947 = vmatpush1.xpose.msra.mxu0 0.0
  %4948 = vmatprep.subr.mxu0 0.0
  %4949 = vmatpush1.xpose.msra.mxu0 0.0
  %4950 = vmatprep.subr.mxu0 0.0
  %4951 = vmatpush1.xpose.msra.mxu0 0.0
  %4952 = vmatprep.subr.mxu0 0.0
  %4953 = vmatpush1.xpose.msra.mxu0 0.0
  %4954 = vmatprep.mubr.f32.mxu0 0.0
  %v4955 = vand.u32 %v4731, 4294901760
  %v4956 = vsub.f32 %v4731, %v4955
  %4957 = vmatmul.mubr.f32.gmra.mrb[0].mxu0 %v4956
  %v4958 = vpop.f32.mrb[0].mxu0
  %v4959 = vadd.f32 %v4885, %v4958
  %v4960 = vpop.f32.mrb[0].mxu0
  %4961 = vdwg.mxu0
  %4962 = vmatprep.subr.mxu0 0.0
  %v4963 = vand.u32 %v4734, 4294901760
  %4964 = vmatpush1.xpose.msra.mxu0 %v4963
  %4965 = vmatprep.subr.mxu0 0.0
  %4966 = vmatpush1.xpose.msra.mxu0 0.0
  %4967 = vmatprep.subr.mxu0 0.0
  %4968 = vmatpush1.xpose.msra.mxu0 0.0
  %4969 = vmatprep.subr.mxu0 0.0
  %4970 = vmatpush1.xpose.msra.mxu0 0.0
  %4971 = vmatprep.subr.mxu0 0.0
  %4972 = vmatpush1.xpose.msra.mxu0 0.0
  %4973 = vmatprep.subr.mxu0 0.0
  %4974 = vmatpush1.xpose.msra.mxu0 0.0
  %4975 = vmatprep.subr.mxu0 0.0
  %4976 = vmatpush1.xpose.msra.mxu0 0.0
  %4977 = vmatprep.subr.mxu0 0.0
  %4978 = vmatpush1.xpose.msra.mxu0 0.0
  %4979 = vmatprep.subr.mxu0 0.0
  %4980 = vmatpush1.xpose.msra.mxu0 0.0
  %4981 = vmatprep.subr.mxu0 0.0
  %4982 = vmatpush1.xpose.msra.mxu0 0.0
  %4983 = vmatprep.subr.mxu0 0.0
  %4984 = vmatpush1.xpose.msra.mxu0 0.0
  %4985 = vmatprep.subr.mxu0 0.0
  %4986 = vmatpush1.xpose.msra.mxu0 0.0
  %4987 = vmatprep.subr.mxu0 0.0
  %4988 = vmatpush1.xpose.msra.mxu0 0.0
  %4989 = vmatprep.subr.mxu0 0.0
  %4990 = vmatpush1.xpose.msra.mxu0 0.0
  %4991 = vmatprep.subr.mxu0 0.0
  %4992 = vmatpush1.xpose.msra.mxu0 0.0
  %4993 = vmatprep.subr.mxu0 0.0
  %4994 = vmatpush1.xpose.msra.mxu0 0.0
  %4995 = vmatprep.subr.mxu0 0.0
  %4996 = vmatpush1.xpose.msra.mxu0 0.0
  %4997 = vmatprep.subr.mxu0 0.0
  %4998 = vmatpush1.xpose.msra.mxu0 0.0
  %4999 = vmatprep.subr.mxu0 0.0
  %5000 = vmatpush1.xpose.msra.mxu0 0.0
  %5001 = vmatprep.subr.mxu0 0.0
  %5002 = vmatpush1.xpose.msra.mxu0 0.0
  %5003 = vmatprep.subr.mxu0 0.0
  %5004 = vmatpush1.xpose.msra.mxu0 0.0
  %5005 = vmatprep.subr.mxu0 0.0
  %5006 = vmatpush1.xpose.msra.mxu0 0.0
  %5007 = vmatprep.subr.mxu0 0.0
  %5008 = vmatpush1.xpose.msra.mxu0 0.0
  %5009 = vmatprep.subr.mxu0 0.0
  %5010 = vmatpush1.xpose.msra.mxu0 0.0
  %5011 = vmatprep.subr.mxu0 0.0
  %5012 = vmatpush1.xpose.msra.mxu0 0.0
  %5013 = vmatprep.subr.mxu0 0.0
  %5014 = vmatpush1.xpose.msra.mxu0 0.0
  %5015 = vmatprep.subr.mxu0 0.0
  %5016 = vmatpush1.xpose.msra.mxu0 0.0
  %5017 = vmatprep.subr.mxu0 0.0
  %5018 = vmatpush1.xpose.msra.mxu0 0.0
  %5019 = vmatprep.subr.mxu0 0.0
  %5020 = vmatpush1.xpose.msra.mxu0 0.0
  %5021 = vmatprep.subr.mxu0 0.0
  %5022 = vmatpush1.xpose.msra.mxu0 0.0
  %5023 = vmatprep.subr.mxu0 0.0
  %5024 = vmatpush1.xpose.msra.mxu0 0.0
  %5025 = vmatprep.subr.mxu0 0.0
  %5026 = vmatpush1.xpose.msra.mxu0 0.0
  %5027 = vmatprep.mubr.f32.mxu0 0.0
  %v5028 = vand.u32 %v4731, 4294901760
  %v5029 = vsub.f32 %v4731, %v5028
  %v5030 = vand.u32 %v5029, 4294901760
  %5031 = vmatmul.mubr.f32.gmra.mrb[0].mxu0 %v5030
  %v5032 = vpop.f32.mrb[0].mxu0
  %v5033 = vadd.f32 %v4959, %v5032
  %v5034 = vpop.f32.mrb[0].mxu0
  %5035 = vdwg.mxu0
  %5036 = vmatprep.subr.mxu0 0.0
  %v5037 = vand.u32 %v4734, 4294901760
  %v5038 = vsub.f32 %v4734, %v5037
  %v5039 = vand.u32 %v5038, 4294901760
  %5040 = vmatpush1.xpose.msra.mxu0 %v5039
  %5041 = vmatprep.subr.mxu0 0.0
  %5042 = vmatpush1.xpose.msra.mxu0 0.0
  %5043 = vmatprep.subr.mxu0 0.0
  %5044 = vmatpush1.xpose.msra.mxu0 0.0
  %5045 = vmatprep.subr.mxu0 0.0
  %5046 = vmatpush1.xpose.msra.mxu0 0.0
  %5047 = vmatprep.subr.mxu0 0.0
  %5048 = vmatpush1.xpose.msra.mxu0 0.0
  %5049 = vmatprep.subr.mxu0 0.0
  %5050 = vmatpush1.xpose.msra.mxu0 0.0
  %5051 = vmatprep.subr.mxu0 0.0
  %5052 = vmatpush1.xpose.msra.mxu0 0.0
  %5053 = vmatprep.subr.mxu0 0.0
  %5054 = vmatpush1.xpose.msra.mxu0 0.0
  %5055 = vmatprep.subr.mxu0 0.0
  %5056 = vmatpush1.xpose.msra.mxu0 0.0
  %5057 = vmatprep.subr.mxu0 0.0
  %5058 = vmatpush1.xpose.msra.mxu0 0.0
  %5059 = vmatprep.subr.mxu0 0.0
  %5060 = vmatpush1.xpose.msra.mxu0 0.0
  %5061 = vmatprep.subr.mxu0 0.0
  %5062 = vmatpush1.xpose.msra.mxu0 0.0
  %5063 = vmatprep.subr.mxu0 0.0
  %5064 = vmatpush1.xpose.msra.mxu0 0.0
  %5065 = vmatprep.subr.mxu0 0.0
  %5066 = vmatpush1.xpose.msra.mxu0 0.0
  %5067 = vmatprep.subr.mxu0 0.0
  %5068 = vmatpush1.xpose.msra.mxu0 0.0
  %5069 = vmatprep.subr.mxu0 0.0
  %5070 = vmatpush1.xpose.msra.mxu0 0.0
  %5071 = vmatprep.subr.mxu0 0.0
  %5072 = vmatpush1.xpose.msra.mxu0 0.0
  %5073 = vmatprep.subr.mxu0 0.0
  %5074 = vmatpush1.xpose.msra.mxu0 0.0
  %5075 = vmatprep.subr.mxu0 0.0
  %5076 = vmatpush1.xpose.msra.mxu0 0.0
  %5077 = vmatprep.subr.mxu0 0.0
  %5078 = vmatpush1.xpose.msra.mxu0 0.0
  %5079 = vmatprep.subr.mxu0 0.0
  %5080 = vmatpush1.xpose.msra.mxu0 0.0
  %5081 = vmatprep.subr.mxu0 0.0
  %5082 = vmatpush1.xpose.msra.mxu0 0.0
  %5083 = vmatprep.subr.mxu0 0.0
  %5084 = vmatpush1.xpose.msra.mxu0 0.0
  %5085 = vmatprep.subr.mxu0 0.0
  %5086 = vmatpush1.xpose.msra.mxu0 0.0
  %5087 = vmatprep.subr.mxu0 0.0
  %5088 = vmatpush1.xpose.msra.mxu0 0.0
  %5089 = vmatprep.subr.mxu0 0.0
  %5090 = vmatpush1.xpose.msra.mxu0 0.0
  %5091 = vmatprep.subr.mxu0 0.0
  %5092 = vmatpush1.xpose.msra.mxu0 0.0
  %5093 = vmatprep.subr.mxu0 0.0
  %5094 = vmatpush1.xpose.msra.mxu0 0.0
  %5095 = vmatprep.subr.mxu0 0.0
  %5096 = vmatpush1.xpose.msra.mxu0 0.0
  %5097 = vmatprep.subr.mxu0 0.0
  %5098 = vmatpush1.xpose.msra.mxu0 0.0
  %5099 = vmatprep.subr.mxu0 0.0
  %5100 = vmatpush1.xpose.msra.mxu0 0.0
  %5101 = vmatprep.subr.mxu0 0.0
  %5102 = vmatpush1.xpose.msra.mxu0 0.0
  %5103 = vmatprep.mubr.f32.mxu0 0.0
  %v5104 = vand.u32 %v4731, 4294901760
  %5105 = vmatmul.mubr.f32.gmra.mrb[0].mxu0 %v5104
  %v5106 = vpop.f32.mrb[0].mxu0
  %v5107 = vadd.f32 %v5033, %v5106
  %v5108 = vpop.f32.mrb[0].mxu0
  %5109 = vdwg.mxu0
  %5110 = vmatprep.subr.mxu0 0.0
  %v5111 = vand.u32 %v4734, 4294901760
  %5112 = vmatpush1.xpose.msra.mxu0 %v5111
  %5113 = vmatprep.subr.mxu0 0.0
  %5114 = vmatpush1.xpose.msra.mxu0 0.0
  %5115 = vmatprep.subr.mxu0 0.0
  %5116 = vmatpush1.xpose.msra.mxu0 0.0
  %5117 = vmatprep.subr.mxu0 0.0
  %5118 = vmatpush1.xpose.msra.mxu0 0.0
  %5119 = vmatprep.subr.mxu0 0.0
  %5120 = vmatpush1.xpose.msra.mxu0 0.0
  %5121 = vmatprep.subr.mxu0 0.0
  %5122 = vmatpush1.xpose.msra.mxu0 0.0
  %5123 = vmatprep.subr.mxu0 0.0
  %5124 = vmatpush1.xpose.msra.mxu0 0.0
  %5125 = vmatprep.subr.mxu0 0.0
  %5126 = vmatpush1.xpose.msra.mxu0 0.0
  %5127 = vmatprep.subr.mxu0 0.0
  %5128 = vmatpush1.xpose.msra.mxu0 0.0
  %5129 = vmatprep.subr.mxu0 0.0
  %5130 = vmatpush1.xpose.msra.mxu0 0.0
  %5131 = vmatprep.subr.mxu0 0.0
  %5132 = vmatpush1.xpose.msra.mxu0 0.0
  %5133 = vmatprep.subr.mxu0 0.0
  %5134 = vmatpush1.xpose.msra.mxu0 0.0
  %5135 = vmatprep.subr.mxu0 0.0
  %5136 = vmatpush1.xpose.msra.mxu0 0.0
  %5137 = vmatprep.subr.mxu0 0.0
  %5138 = vmatpush1.xpose.msra.mxu0 0.0
  %5139 = vmatprep.subr.mxu0 0.0
  %5140 = vmatpush1.xpose.msra.mxu0 0.0
  %5141 = vmatprep.subr.mxu0 0.0
  %5142 = vmatpush1.xpose.msra.mxu0 0.0
  %5143 = vmatprep.subr.mxu0 0.0
  %5144 = vmatpush1.xpose.msra.mxu0 0.0
  %5145 = vmatprep.subr.mxu0 0.0
  %5146 = vmatpush1.xpose.msra.mxu0 0.0
  %5147 = vmatprep.subr.mxu0 0.0
  %5148 = vmatpush1.xpose.msra.mxu0 0.0
  %5149 = vmatprep.subr.mxu0 0.0
  %5150 = vmatpush1.xpose.msra.mxu0 0.0
  %5151 = vmatprep.subr.mxu0 0.0
  %5152 = vmatpush1.xpose.msra.mxu0 0.0
  %5153 = vmatprep.subr.mxu0 0.0
  %5154 = vmatpush1.xpose.msra.mxu0 0.0
  %5155 = vmatprep.subr.mxu0 0.0
  %5156 = vmatpush1.xpose.msra.mxu0 0.0
  %5157 = vmatprep.subr.mxu0 0.0
  %5158 = vmatpush1.xpose.msra.mxu0 0.0
  %5159 = vmatprep.subr.mxu0 0.0
  %5160 = vmatpush1.xpose.msra.mxu0 0.0
  %5161 = vmatprep.subr.mxu0 0.0
  %5162 = vmatpush1.xpose.msra.mxu0 0.0
  %5163 = vmatprep.subr.mxu0 0.0
  %5164 = vmatpush1.xpose.msra.mxu0 0.0
  %5165 = vmatprep.subr.mxu0 0.0
  %5166 = vmatpush1.xpose.msra.mxu0 0.0
  %5167 = vmatprep.subr.mxu0 0.0
  %5168 = vmatpush1.xpose.msra.mxu0 0.0
  %5169 = vmatprep.subr.mxu0 0.0
  %5170 = vmatpush1.xpose.msra.mxu0 0.0
  %5171 = vmatprep.subr.mxu0 0.0
  %5172 = vmatpush1.xpose.msra.mxu0 0.0
  %5173 = vmatprep.subr.mxu0 0.0
  %5174 = vmatpush1.xpose.msra.mxu0 0.0
  %5175 = vmatprep.mubr.f32.mxu0 0.0
  %v5176 = vand.u32 %v4731, 4294901760
  %5177 = vmatmul.mubr.f32.gmra.mrb[0].mxu0 %v5176
  %v5178 = vpop.f32.mrb[0].mxu0
  %v5179 = vadd.f32 %v5107, %v5178
  %v5180 = vpop.f32.mrb[0].mxu0
  %5181 = vdwg.mxu0
  %v5183 = vsel %vm2017, %v1414, 0
  %v5186 = vsel %vm2017, %v1724, 0
  %5188 = vmatprep.subr.mxu0 0.0
  %v5189 = vand.u32 %v5186, 4294901760
  %5190 = vmatpush1.xpose.msra.mxu0 %v5189
  %5191 = vmatprep.subr.mxu0 0.0
  %5192 = vmatpush1.xpose.msra.mxu0 0.0
  %5193 = vmatprep.subr.mxu0 0.0
  %5194 = vmatpush1.xpose.msra.mxu0 0.0
  %5195 = vmatprep.subr.mxu0 0.0
  %5196 = vmatpush1.xpose.msra.mxu0 0.0
  %5197 = vmatprep.subr.mxu0 0.0
  %5198 = vmatpush1.xpose.msra.mxu0 0.0
  %5199 = vmatprep.subr.mxu0 0.0
  %5200 = vmatpush1.xpose.msra.mxu0 0.0
  %5201 = vmatprep.subr.mxu0 0.0
  %5202 = vmatpush1.xpose.msra.mxu0 0.0
  %5203 = vmatprep.subr.mxu0 0.0
  %5204 = vmatpush1.xpose.msra.mxu0 0.0
  %5205 = vmatprep.subr.mxu0 0.0
  %5206 = vmatpush1.xpose.msra.mxu0 0.0
  %5207 = vmatprep.subr.mxu0 0.0
  %5208 = vmatpush1.xpose.msra.mxu0 0.0
  %5209 = vmatprep.subr.mxu0 0.0
  %5210 = vmatpush1.xpose.msra.mxu0 0.0
  %5211 = vmatprep.subr.mxu0 0.0
  %5212 = vmatpush1.xpose.msra.mxu0 0.0
  %5213 = vmatprep.subr.mxu0 0.0
  %5214 = vmatpush1.xpose.msra.mxu0 0.0
  %5215 = vmatprep.subr.mxu0 0.0
  %5216 = vmatpush1.xpose.msra.mxu0 0.0
  %5217 = vmatprep.subr.mxu0 0.0
  %5218 = vmatpush1.xpose.msra.mxu0 0.0
  %5219 = vmatprep.subr.mxu0 0.0
  %5220 = vmatpush1.xpose.msra.mxu0 0.0
  %5221 = vmatprep.subr.mxu0 0.0
  %5222 = vmatpush1.xpose.msra.mxu0 0.0
  %5223 = vmatprep.subr.mxu0 0.0
  %5224 = vmatpush1.xpose.msra.mxu0 0.0
  %5225 = vmatprep.subr.mxu0 0.0
  %5226 = vmatpush1.xpose.msra.mxu0 0.0
  %5227 = vmatprep.subr.mxu0 0.0
  %5228 = vmatpush1.xpose.msra.mxu0 0.0
  %5229 = vmatprep.subr.mxu0 0.0
  %5230 = vmatpush1.xpose.msra.mxu0 0.0
  %5231 = vmatprep.subr.mxu0 0.0
  %5232 = vmatpush1.xpose.msra.mxu0 0.0
  %5233 = vmatprep.subr.mxu0 0.0
  %5234 = vmatpush1.xpose.msra.mxu0 0.0
  %5235 = vmatprep.subr.mxu0 0.0
  %5236 = vmatpush1.xpose.msra.mxu0 0.0
  %5237 = vmatprep.subr.mxu0 0.0
  %5238 = vmatpush1.xpose.msra.mxu0 0.0
  %5239 = vmatprep.subr.mxu0 0.0
  %5240 = vmatpush1.xpose.msra.mxu0 0.0
  %5241 = vmatprep.subr.mxu0 0.0
  %5242 = vmatpush1.xpose.msra.mxu0 0.0
  %5243 = vmatprep.subr.mxu0 0.0
  %5244 = vmatpush1.xpose.msra.mxu0 0.0
  %5245 = vmatprep.subr.mxu0 0.0
  %5246 = vmatpush1.xpose.msra.mxu0 0.0
  %5247 = vmatprep.subr.mxu0 0.0
  %5248 = vmatpush1.xpose.msra.mxu0 0.0
  %5249 = vmatprep.subr.mxu0 0.0
  %5250 = vmatpush1.xpose.msra.mxu0 0.0
  %5251 = vmatprep.subr.mxu0 0.0
  %5252 = vmatpush1.xpose.msra.mxu0 0.0
  %5253 = vmatprep.mubr.f32.mxu0 0.0
  %v5254 = vand.u32 %v5183, 4294901760
  %v5255 = vsub.f32 %v5183, %v5254
  %v5256 = vand.u32 %v5255, 4294901760
  %v5257 = vsub.f32 %v5255, %v5256
  %v5258 = vand.u32 %v5257, 4294901760
  %5259 = vmatmul.mubr.f32.gmra.mrb[0].mxu0 %v5258
  %v5260 = vpop.f32.mrb[0].mxu0
  %v5261 = vadd.f32 0.0, %v5260
  %v5262 = vpop.f32.mrb[0].mxu0
  %5263 = vdwg.mxu0
  %5264 = vmatprep.subr.mxu0 0.0
  %v5265 = vand.u32 %v5186, 4294901760
  %v5266 = vsub.f32 %v5186, %v5265
  %v5267 = vand.u32 %v5266, 4294901760
  %v5268 = vsub.f32 %v5266, %v5267
  %v5269 = vand.u32 %v5268, 4294901760
  %5270 = vmatpush1.xpose.msra.mxu0 %v5269
  %5271 = vmatprep.subr.mxu0 0.0
  %5272 = vmatpush1.xpose.msra.mxu0 0.0
  %5273 = vmatprep.subr.mxu0 0.0
  %5274 = vmatpush1.xpose.msra.mxu0 0.0
  %5275 = vmatprep.subr.mxu0 0.0
  %5276 = vmatpush1.xpose.msra.mxu0 0.0
  %5277 = vmatprep.subr.mxu0 0.0
  %5278 = vmatpush1.xpose.msra.mxu0 0.0
  %5279 = vmatprep.subr.mxu0 0.0
  %5280 = vmatpush1.xpose.msra.mxu0 0.0
  %5281 = vmatprep.subr.mxu0 0.0
  %5282 = vmatpush1.xpose.msra.mxu0 0.0
  %5283 = vmatprep.subr.mxu0 0.0
  %5284 = vmatpush1.xpose.msra.mxu0 0.0
  %5285 = vmatprep.subr.mxu0 0.0
  %5286 = vmatpush1.xpose.msra.mxu0 0.0
  %5287 = vmatprep.subr.mxu0 0.0
  %5288 = vmatpush1.xpose.msra.mxu0 0.0
  %5289 = vmatprep.subr.mxu0 0.0
  %5290 = vmatpush1.xpose.msra.mxu0 0.0
  %5291 = vmatprep.subr.mxu0 0.0
  %5292 = vmatpush1.xpose.msra.mxu0 0.0
  %5293 = vmatprep.subr.mxu0 0.0
  %5294 = vmatpush1.xpose.msra.mxu0 0.0
  %5295 = vmatprep.subr.mxu0 0.0
  %5296 = vmatpush1.xpose.msra.mxu0 0.0
  %5297 = vmatprep.subr.mxu0 0.0
  %5298 = vmatpush1.xpose.msra.mxu0 0.0
  %5299 = vmatprep.subr.mxu0 0.0
  %5300 = vmatpush1.xpose.msra.mxu0 0.0
  %5301 = vmatprep.subr.mxu0 0.0
  %5302 = vmatpush1.xpose.msra.mxu0 0.0
  %5303 = vmatprep.subr.mxu0 0.0
  %5304 = vmatpush1.xpose.msra.mxu0 0.0
  %5305 = vmatprep.subr.mxu0 0.0
  %5306 = vmatpush1.xpose.msra.mxu0 0.0
  %5307 = vmatprep.subr.mxu0 0.0
  %5308 = vmatpush1.xpose.msra.mxu0 0.0
  %5309 = vmatprep.subr.mxu0 0.0
  %5310 = vmatpush1.xpose.msra.mxu0 0.0
  %5311 = vmatprep.subr.mxu0 0.0
  %5312 = vmatpush1.xpose.msra.mxu0 0.0
  %5313 = vmatprep.subr.mxu0 0.0
  %5314 = vmatpush1.xpose.msra.mxu0 0.0
  %5315 = vmatprep.subr.mxu0 0.0
  %5316 = vmatpush1.xpose.msra.mxu0 0.0
  %5317 = vmatprep.subr.mxu0 0.0
  %5318 = vmatpush1.xpose.msra.mxu0 0.0
  %5319 = vmatprep.subr.mxu0 0.0
  %5320 = vmatpush1.xpose.msra.mxu0 0.0
  %5321 = vmatprep.subr.mxu0 0.0
  %5322 = vmatpush1.xpose.msra.mxu0 0.0
  %5323 = vmatprep.subr.mxu0 0.0
  %5324 = vmatpush1.xpose.msra.mxu0 0.0
  %5325 = vmatprep.subr.mxu0 0.0
  %5326 = vmatpush1.xpose.msra.mxu0 0.0
  %5327 = vmatprep.subr.mxu0 0.0
  %5328 = vmatpush1.xpose.msra.mxu0 0.0
  %5329 = vmatprep.subr.mxu0 0.0
  %5330 = vmatpush1.xpose.msra.mxu0 0.0
  %5331 = vmatprep.subr.mxu0 0.0
  %5332 = vmatpush1.xpose.msra.mxu0 0.0
  %5333 = vmatprep.mubr.f32.mxu0 0.0
  %v5334 = vand.u32 %v5183, 4294901760
  %5335 = vmatmul.mubr.f32.gmra.mrb[0].mxu0 %v5334
  %v5336 = vpop.f32.mrb[0].mxu0
  %v5337 = vadd.f32 %v5261, %v5336
  %v5338 = vpop.f32.mrb[0].mxu0
  %5339 = vdwg.mxu0
  %5340 = vmatprep.subr.mxu0 0.0
  %v5341 = vand.u32 %v5186, 4294901760
  %v5342 = vsub.f32 %v5186, %v5341
  %5343 = vmatpush1.xpose.msra.mxu0 %v5342
  %5344 = vmatprep.subr.mxu0 0.0
  %5345 = vmatpush1.xpose.msra.mxu0 0.0
  %5346 = vmatprep.subr.mxu0 0.0
  %5347 = vmatpush1.xpose.msra.mxu0 0.0
  %5348 = vmatprep.subr.mxu0 0.0
  %5349 = vmatpush1.xpose.msra.mxu0 0.0
  %5350 = vmatprep.subr.mxu0 0.0
  %5351 = vmatpush1.xpose.msra.mxu0 0.0
  %5352 = vmatprep.subr.mxu0 0.0
  %5353 = vmatpush1.xpose.msra.mxu0 0.0
  %5354 = vmatprep.subr.mxu0 0.0
  %5355 = vmatpush1.xpose.msra.mxu0 0.0
  %5356 = vmatprep.subr.mxu0 0.0
  %5357 = vmatpush1.xpose.msra.mxu0 0.0
  %5358 = vmatprep.subr.mxu0 0.0
  %5359 = vmatpush1.xpose.msra.mxu0 0.0
  %5360 = vmatprep.subr.mxu0 0.0
  %5361 = vmatpush1.xpose.msra.mxu0 0.0
  %5362 = vmatprep.subr.mxu0 0.0
  %5363 = vmatpush1.xpose.msra.mxu0 0.0
  %5364 = vmatprep.subr.mxu0 0.0
  %5365 = vmatpush1.xpose.msra.mxu0 0.0
  %5366 = vmatprep.subr.mxu0 0.0
  %5367 = vmatpush1.xpose.msra.mxu0 0.0
  %5368 = vmatprep.subr.mxu0 0.0
  %5369 = vmatpush1.xpose.msra.mxu0 0.0
  %5370 = vmatprep.subr.mxu0 0.0
  %5371 = vmatpush1.xpose.msra.mxu0 0.0
  %5372 = vmatprep.subr.mxu0 0.0
  %5373 = vmatpush1.xpose.msra.mxu0 0.0
  %5374 = vmatprep.subr.mxu0 0.0
  %5375 = vmatpush1.xpose.msra.mxu0 0.0
  %5376 = vmatprep.subr.mxu0 0.0
  %5377 = vmatpush1.xpose.msra.mxu0 0.0
  %5378 = vmatprep.subr.mxu0 0.0
  %5379 = vmatpush1.xpose.msra.mxu0 0.0
  %5380 = vmatprep.subr.mxu0 0.0
  %5381 = vmatpush1.xpose.msra.mxu0 0.0
  %5382 = vmatprep.subr.mxu0 0.0
  %5383 = vmatpush1.xpose.msra.mxu0 0.0
  %5384 = vmatprep.subr.mxu0 0.0
  %5385 = vmatpush1.xpose.msra.mxu0 0.0
  %5386 = vmatprep.subr.mxu0 0.0
  %5387 = vmatpush1.xpose.msra.mxu0 0.0
  %5388 = vmatprep.subr.mxu0 0.0
  %5389 = vmatpush1.xpose.msra.mxu0 0.0
  %5390 = vmatprep.subr.mxu0 0.0
  %5391 = vmatpush1.xpose.msra.mxu0 0.0
  %5392 = vmatprep.subr.mxu0 0.0
  %5393 = vmatpush1.xpose.msra.mxu0 0.0
  %5394 = vmatprep.subr.mxu0 0.0
  %5395 = vmatpush1.xpose.msra.mxu0 0.0
  %5396 = vmatprep.subr.mxu0 0.0
  %5397 = vmatpush1.xpose.msra.mxu0 0.0
  %5398 = vmatprep.subr.mxu0 0.0
  %5399 = vmatpush1.xpose.msra.mxu0 0.0
  %5400 = vmatprep.subr.mxu0 0.0
  %5401 = vmatpush1.xpose.msra.mxu0 0.0
  %5402 = vmatprep.subr.mxu0 0.0
  %5403 = vmatpush1.xpose.msra.mxu0 0.0
  %5404 = vmatprep.subr.mxu0 0.0
  %5405 = vmatpush1.xpose.msra.mxu0 0.0
  %5406 = vmatprep.mubr.f32.mxu0 0.0
  %v5407 = vand.u32 %v5183, 4294901760
  %v5408 = vsub.f32 %v5183, %v5407
  %5409 = vmatmul.mubr.f32.gmra.mrb[0].mxu0 %v5408
  %v5410 = vpop.f32.mrb[0].mxu0
  %v5411 = vadd.f32 %v5337, %v5410
  %v5412 = vpop.f32.mrb[0].mxu0
  %5413 = vdwg.mxu0
  %5414 = vmatprep.subr.mxu0 0.0
  %v5415 = vand.u32 %v5186, 4294901760
  %5416 = vmatpush1.xpose.msra.mxu0 %v5415
  %5417 = vmatprep.subr.mxu0 0.0
  %5418 = vmatpush1.xpose.msra.mxu0 0.0
  %5419 = vmatprep.subr.mxu0 0.0
  %5420 = vmatpush1.xpose.msra.mxu0 0.0
  %5421 = vmatprep.subr.mxu0 0.0
  %5422 = vmatpush1.xpose.msra.mxu0 0.0
  %5423 = vmatprep.subr.mxu0 0.0
  %5424 = vmatpush1.xpose.msra.mxu0 0.0
  %5425 = vmatprep.subr.mxu0 0.0
  %5426 = vmatpush1.xpose.msra.mxu0 0.0
  %5427 = vmatprep.subr.mxu0 0.0
  %5428 = vmatpush1.xpose.msra.mxu0 0.0
  %5429 = vmatprep.subr.mxu0 0.0
  %5430 = vmatpush1.xpose.msra.mxu0 0.0
  %5431 = vmatprep.subr.mxu0 0.0
  %5432 = vmatpush1.xpose.msra.mxu0 0.0
  %5433 = vmatprep.subr.mxu0 0.0
  %5434 = vmatpush1.xpose.msra.mxu0 0.0
  %5435 = vmatprep.subr.mxu0 0.0
  %5436 = vmatpush1.xpose.msra.mxu0 0.0
  %5437 = vmatprep.subr.mxu0 0.0
  %5438 = vmatpush1.xpose.msra.mxu0 0.0
  %5439 = vmatprep.subr.mxu0 0.0
  %5440 = vmatpush1.xpose.msra.mxu0 0.0
  %5441 = vmatprep.subr.mxu0 0.0
  %5442 = vmatpush1.xpose.msra.mxu0 0.0
  %5443 = vmatprep.subr.mxu0 0.0
  %5444 = vmatpush1.xpose.msra.mxu0 0.0
  %5445 = vmatprep.subr.mxu0 0.0
  %5446 = vmatpush1.xpose.msra.mxu0 0.0
  %5447 = vmatprep.subr.mxu0 0.0
  %5448 = vmatpush1.xpose.msra.mxu0 0.0
  %5449 = vmatprep.subr.mxu0 0.0
  %5450 = vmatpush1.xpose.msra.mxu0 0.0
  %5451 = vmatprep.subr.mxu0 0.0
  %5452 = vmatpush1.xpose.msra.mxu0 0.0
  %5453 = vmatprep.subr.mxu0 0.0
  %5454 = vmatpush1.xpose.msra.mxu0 0.0
  %5455 = vmatprep.subr.mxu0 0.0
  %5456 = vmatpush1.xpose.msra.mxu0 0.0
  %5457 = vmatprep.subr.mxu0 0.0
  %5458 = vmatpush1.xpose.msra.mxu0 0.0
  %5459 = vmatprep.subr.mxu0 0.0
  %5460 = vmatpush1.xpose.msra.mxu0 0.0
  %5461 = vmatprep.subr.mxu0 0.0
  %5462 = vmatpush1.xpose.msra.mxu0 0.0
  %5463 = vmatprep.subr.mxu0 0.0
  %5464 = vmatpush1.xpose.msra.mxu0 0.0
  %5465 = vmatprep.subr.mxu0 0.0
  %5466 = vmatpush1.xpose.msra.mxu0 0.0
  %5467 = vmatprep.subr.mxu0 0.0
  %5468 = vmatpush1.xpose.msra.mxu0 0.0
  %5469 = vmatprep.subr.mxu0 0.0
  %5470 = vmatpush1.xpose.msra.mxu0 0.0
  %5471 = vmatprep.subr.mxu0 0.0
  %5472 = vmatpush1.xpose.msra.mxu0 0.0
  %5473 = vmatprep.subr.mxu0 0.0
  %5474 = vmatpush1.xpose.msra.mxu0 0.0
  %5475 = vmatprep.subr.mxu0 0.0
  %5476 = vmatpush1.xpose.msra.mxu0 0.0
  %5477 = vmatprep.subr.mxu0 0.0
  %5478 = vmatpush1.xpose.msra.mxu0 0.0
  %5479 = vmatprep.mubr.f32.mxu0 0.0
  %v5480 = vand.u32 %v5183, 4294901760
  %v5481 = vsub.f32 %v5183, %v5480
  %v5482 = vand.u32 %v5481, 4294901760
  %5483 = vmatmul.mubr.f32.gmra.mrb[0].mxu0 %v5482
  %v5484 = vpop.f32.mrb[0].mxu0
  %v5485 = vadd.f32 %v5411, %v5484
  %v5486 = vpop.f32.mrb[0].mxu0
  %5487 = vdwg.mxu0
  %5488 = vmatprep.subr.mxu0 0.0
  %v5489 = vand.u32 %v5186, 4294901760
  %v5490 = vsub.f32 %v5186, %v5489
  %v5491 = vand.u32 %v5490, 4294901760
  %5492 = vmatpush1.xpose.msra.mxu0 %v5491
  %5493 = vmatprep.subr.mxu0 0.0
  %5494 = vmatpush1.xpose.msra.mxu0 0.0
  %5495 = vmatprep.subr.mxu0 0.0
  %5496 = vmatpush1.xpose.msra.mxu0 0.0
  %5497 = vmatprep.subr.mxu0 0.0
  %5498 = vmatpush1.xpose.msra.mxu0 0.0
  %5499 = vmatprep.subr.mxu0 0.0
  %5500 = vmatpush1.xpose.msra.mxu0 0.0
  %5501 = vmatprep.subr.mxu0 0.0
  %5502 = vmatpush1.xpose.msra.mxu0 0.0
  %5503 = vmatprep.subr.mxu0 0.0
  %5504 = vmatpush1.xpose.msra.mxu0 0.0
  %5505 = vmatprep.subr.mxu0 0.0
  %5506 = vmatpush1.xpose.msra.mxu0 0.0
  %5507 = vmatprep.subr.mxu0 0.0
  %5508 = vmatpush1.xpose.msra.mxu0 0.0
  %5509 = vmatprep.subr.mxu0 0.0
  %5510 = vmatpush1.xpose.msra.mxu0 0.0
  %5511 = vmatprep.subr.mxu0 0.0
  %5512 = vmatpush1.xpose.msra.mxu0 0.0
  %5513 = vmatprep.subr.mxu0 0.0
  %5514 = vmatpush1.xpose.msra.mxu0 0.0
  %5515 = vmatprep.subr.mxu0 0.0
  %5516 = vmatpush1.xpose.msra.mxu0 0.0
  %5517 = vmatprep.subr.mxu0 0.0
  %5518 = vmatpush1.xpose.msra.mxu0 0.0
  %5519 = vmatprep.subr.mxu0 0.0
  %5520 = vmatpush1.xpose.msra.mxu0 0.0
  %5521 = vmatprep.subr.mxu0 0.0
  %5522 = vmatpush1.xpose.msra.mxu0 0.0
  %5523 = vmatprep.subr.mxu0 0.0
  %5524 = vmatpush1.xpose.msra.mxu0 0.0
  %5525 = vmatprep.subr.mxu0 0.0
  %5526 = vmatpush1.xpose.msra.mxu0 0.0
  %5527 = vmatprep.subr.mxu0 0.0
  %5528 = vmatpush1.xpose.msra.mxu0 0.0
  %5529 = vmatprep.subr.mxu0 0.0
  %5530 = vmatpush1.xpose.msra.mxu0 0.0
  %5531 = vmatprep.subr.mxu0 0.0
  %5532 = vmatpush1.xpose.msra.mxu0 0.0
  %5533 = vmatprep.subr.mxu0 0.0
  %5534 = vmatpush1.xpose.msra.mxu0 0.0
  %5535 = vmatprep.subr.mxu0 0.0
  %5536 = vmatpush1.xpose.msra.mxu0 0.0
  %5537 = vmatprep.subr.mxu0 0.0
  %5538 = vmatpush1.xpose.msra.mxu0 0.0
  %5539 = vmatprep.subr.mxu0 0.0
  %5540 = vmatpush1.xpose.msra.mxu0 0.0
  %5541 = vmatprep.subr.mxu0 0.0
  %5542 = vmatpush1.xpose.msra.mxu0 0.0
  %5543 = vmatprep.subr.mxu0 0.0
  %5544 = vmatpush1.xpose.msra.mxu0 0.0
  %5545 = vmatprep.subr.mxu0 0.0
  %5546 = vmatpush1.xpose.msra.mxu0 0.0
  %5547 = vmatprep.subr.mxu0 0.0
  %5548 = vmatpush1.xpose.msra.mxu0 0.0
  %5549 = vmatprep.subr.mxu0 0.0
  %5550 = vmatpush1.xpose.msra.mxu0 0.0
  %5551 = vmatprep.subr.mxu0 0.0
  %5552 = vmatpush1.xpose.msra.mxu0 0.0
  %5553 = vmatprep.subr.mxu0 0.0
  %5554 = vmatpush1.xpose.msra.mxu0 0.0
  %5555 = vmatprep.mubr.f32.mxu0 0.0
  %v5556 = vand.u32 %v5183, 4294901760
  %5557 = vmatmul.mubr.f32.gmra.mrb[0].mxu0 %v5556
  %v5558 = vpop.f32.mrb[0].mxu0
  %v5559 = vadd.f32 %v5485, %v5558
  %v5560 = vpop.f32.mrb[0].mxu0
  %5561 = vdwg.mxu0
  %5562 = vmatprep.subr.mxu0 0.0
  %v5563 = vand.u32 %v5186, 4294901760
  %5564 = vmatpush1.xpose.msra.mxu0 %v5563
  %5565 = vmatprep.subr.mxu0 0.0
  %5566 = vmatpush1.xpose.msra.mxu0 0.0
  %5567 = vmatprep.subr.mxu0 0.0
  %5568 = vmatpush1.xpose.msra.mxu0 0.0
  %5569 = vmatprep.subr.mxu0 0.0
  %5570 = vmatpush1.xpose.msra.mxu0 0.0
  %5571 = vmatprep.subr.mxu0 0.0
  %5572 = vmatpush1.xpose.msra.mxu0 0.0
  %5573 = vmatprep.subr.mxu0 0.0
  %5574 = vmatpush1.xpose.msra.mxu0 0.0
  %5575 = vmatprep.subr.mxu0 0.0
  %5576 = vmatpush1.xpose.msra.mxu0 0.0
  %5577 = vmatprep.subr.mxu0 0.0
  %5578 = vmatpush1.xpose.msra.mxu0 0.0
  %5579 = vmatprep.subr.mxu0 0.0
  %5580 = vmatpush1.xpose.msra.mxu0 0.0
  %5581 = vmatprep.subr.mxu0 0.0
  %5582 = vmatpush1.xpose.msra.mxu0 0.0
  %5583 = vmatprep.subr.mxu0 0.0
  %5584 = vmatpush1.xpose.msra.mxu0 0.0
  %5585 = vmatprep.subr.mxu0 0.0
  %5586 = vmatpush1.xpose.msra.mxu0 0.0
  %5587 = vmatprep.subr.mxu0 0.0
  %5588 = vmatpush1.xpose.msra.mxu0 0.0
  %5589 = vmatprep.subr.mxu0 0.0
  %5590 = vmatpush1.xpose.msra.mxu0 0.0
  %5591 = vmatprep.subr.mxu0 0.0
  %5592 = vmatpush1.xpose.msra.mxu0 0.0
  %5593 = vmatprep.subr.mxu0 0.0
  %5594 = vmatpush1.xpose.msra.mxu0 0.0
  %5595 = vmatprep.subr.mxu0 0.0
  %5596 = vmatpush1.xpose.msra.mxu0 0.0
  %5597 = vmatprep.subr.mxu0 0.0
  %5598 = vmatpush1.xpose.msra.mxu0 0.0
  %5599 = vmatprep.subr.mxu0 0.0
  %5600 = vmatpush1.xpose.msra.mxu0 0.0
  %5601 = vmatprep.subr.mxu0 0.0
  %5602 = vmatpush1.xpose.msra.mxu0 0.0
  %5603 = vmatprep.subr.mxu0 0.0
  %5604 = vmatpush1.xpose.msra.mxu0 0.0
  %5605 = vmatprep.subr.mxu0 0.0
  %5606 = vmatpush1.xpose.msra.mxu0 0.0
  %5607 = vmatprep.subr.mxu0 0.0
  %5608 = vmatpush1.xpose.msra.mxu0 0.0
  %5609 = vmatprep.subr.mxu0 0.0
  %5610 = vmatpush1.xpose.msra.mxu0 0.0
  %5611 = vmatprep.subr.mxu0 0.0
  %5612 = vmatpush1.xpose.msra.mxu0 0.0
  %5613 = vmatprep.subr.mxu0 0.0
  %5614 = vmatpush1.xpose.msra.mxu0 0.0
  %5615 = vmatprep.subr.mxu0 0.0
  %5616 = vmatpush1.xpose.msra.mxu0 0.0
  %5617 = vmatprep.subr.mxu0 0.0
  %5618 = vmatpush1.xpose.msra.mxu0 0.0
  %5619 = vmatprep.subr.mxu0 0.0
  %5620 = vmatpush1.xpose.msra.mxu0 0.0
  %5621 = vmatprep.subr.mxu0 0.0
  %5622 = vmatpush1.xpose.msra.mxu0 0.0
  %5623 = vmatprep.subr.mxu0 0.0
  %5624 = vmatpush1.xpose.msra.mxu0 0.0
  %5625 = vmatprep.subr.mxu0 0.0
  %5626 = vmatpush1.xpose.msra.mxu0 0.0
  %5627 = vmatprep.mubr.f32.mxu0 0.0
  %v5628 = vand.u32 %v5183, 4294901760
  %5629 = vmatmul.mubr.f32.gmra.mrb[0].mxu0 %v5628
  %v5630 = vpop.f32.mrb[0].mxu0
  %v5631 = vadd.f32 %v5559, %v5630
  %v5632 = vpop.f32.mrb[0].mxu0
  %5633 = vdwg.mxu0
  %v5634 = vsel %vm2017, %v2467, -inf
  %5635 = vmax.xlane.f32.xlu0 %v5634
  %v5636 = vpop.xlane.xlu0 %5635
  %v5637 = vsel %vm2017, %v2919, -inf
  %5638 = vmax.xlane.f32.xlu0 %v5637
  %v5639 = vpop.xlane.xlu0 %5638
  %v5640 = vsel %vm2017, %v3371, -inf
  %5641 = vmax.xlane.f32.xlu0 %v5640
  %v5642 = vpop.xlane.xlu0 %5641
  %v5643 = vsel %vm2017, %v3823, -inf
  %5644 = vmax.xlane.f32.xlu0 %v5643
  %v5645 = vpop.xlane.xlu0 %5644
  %v5646 = vsel %vm2017, %v4275, -inf
  %5647 = vmax.xlane.f32.xlu0 %v5646
  %v5648 = vpop.xlane.xlu0 %5647
  %v5649 = vsel %vm2017, %v4727, -inf
  %5650 = vmax.xlane.f32.xlu0 %v5649
  %v5651 = vpop.xlane.xlu0 %5650
  %v5652 = vsel %vm2017, %v5179, -inf
  %5653 = vmax.xlane.f32.xlu0 %v5652
  %v5654 = vpop.xlane.xlu0 %5653
  %v5655 = vsel %vm2017, %v5631, -inf
  %5656 = vmax.xlane.f32.xlu0 %v5655
  %v5657 = vpop.xlane.xlu0 %5656
  %v5658 = vsub.f32 %v2467, %v5636
  %v5659 = vsub.f32 %v2919, %v5639
  %v5660 = vsub.f32 %v3371, %v5642
  %v5661 = vsub.f32 %v3823, %v5645
  %v5662 = vsub.f32 %v4275, %v5648
  %v5663 = vsub.f32 %v4727, %v5651
  %v5664 = vsub.f32 %v5179, %v5654
  %v5665 = vsub.f32 %v5631, %v5657
  %v5666 = vmul.f32 %v5658, 1.442695
  %v5667 = vpow.pop %v5666
  %v5668 = vmul.f32 %v5659, 1.442695
  %v5669 = vpow.pop %v5668
  %v5670 = vmul.f32 %v5660, 1.442695
  %v5671 = vpow.pop %v5670
  %v5672 = vmul.f32 %v5661, 1.442695
  %v5673 = vpow.pop %v5672
  %v5674 = vmul.f32 %v5662, 1.442695
  %v5675 = vpow.pop %v5674
  %v5676 = vmul.f32 %v5663, 1.442695
  %v5677 = vpow.pop %v5676
  %v5678 = vmul.f32 %v5664, 1.442695
  %v5679 = vpow.pop %v5678
  %v5680 = vmul.f32 %v5665, 1.442695
  %v5681 = vpow.pop %v5680
  %v5682 = vsel %vm2017, %v5667, 0.0
  %5683 = vadd.xlane.f32.xlu0 %v5682
  %v5684 = vpop.xlane.xlu0 %5683
  %v5685 = vsel %vm2017, %v5669, 0.0
  %5686 = vadd.xlane.f32.xlu0 %v5685
  %v5687 = vpop.xlane.xlu0 %5686
  %v5688 = vsel %vm2017, %v5671, 0.0
  %5689 = vadd.xlane.f32.xlu0 %v5688
  %v5690 = vpop.xlane.xlu0 %5689
  %v5691 = vsel %vm2017, %v5673, 0.0
  %5692 = vadd.xlane.f32.xlu0 %v5691
  %v5693 = vpop.xlane.xlu0 %5692
  %v5694 = vsel %vm2017, %v5675, 0.0
  %5695 = vadd.xlane.f32.xlu0 %v5694
  %v5696 = vpop.xlane.xlu0 %5695
  %v5697 = vsel %vm2017, %v5677, 0.0
  %5698 = vadd.xlane.f32.xlu0 %v5697
  %v5699 = vpop.xlane.xlu0 %5698
  %v5700 = vsel %vm2017, %v5679, 0.0
  %5701 = vadd.xlane.f32.xlu0 %v5700
  %v5702 = vpop.xlane.xlu0 %5701
  %v5703 = vsel %vm2017, %v5681, 0.0
  %5704 = vadd.xlane.f32.xlu0 %v5703
  %v5705 = vpop.xlane.xlu0 %5704
  %v5706 = vrcp.pop %v5684
  %v5707 = vrcp.pop %v5687
  %v5708 = vrcp.pop %v5690
  %v5709 = vrcp.pop %v5693
  %v5710 = vrcp.pop %v5696
  %v5711 = vrcp.pop %v5699
  %v5712 = vrcp.pop %v5702
  %v5713 = vrcp.pop %v5705
  %v5714 = vmul.f32 %v5667, %v5706
  %v5715 = vmul.f32 %v5669, %v5707
  %v5716 = vmul.f32 %v5671, %v5708
  %v5717 = vmul.f32 %v5673, %v5709
  %v5718 = vmul.f32 %v5675, %v5710
  %v5719 = vmul.f32 %v5677, %v5711
  %v5720 = vmul.f32 %v5679, %v5712
  %v5721 = vmul.f32 %v5681, %v5713
  %v5723 = vsel %vm2017, %v5714, 0
  %5725 = vmatprep.subr.mxu0 0.0
  %v5726 = vand.u32 %v1945, 4294901760
  %5727 = vmatpush1.msra.mxu0 %v5726
  %5728 = vmatprep.subr.mxu0 0.0
  %5729 = vmatpush1.msra.mxu0 0.0
  %5730 = vmatprep.subr.mxu0 0.0
  %5731 = vmatpush1.msra.mxu0 0.0
  %5732 = vmatprep.subr.mxu0 0.0
  %5733 = vmatpush1.msra.mxu0 0.0
  %5734 = vmatprep.subr.mxu0 0.0
  %5735 = vmatpush1.msra.mxu0 0.0
  %5736 = vmatprep.subr.mxu0 0.0
  %5737 = vmatpush1.msra.mxu0 0.0
  %5738 = vmatprep.subr.mxu0 0.0
  %5739 = vmatpush1.msra.mxu0 0.0
  %5740 = vmatprep.subr.mxu0 0.0
  %5741 = vmatpush1.msra.mxu0 0.0
  %5742 = vmatprep.subr.mxu0 0.0
  %5743 = vmatpush1.msra.mxu0 0.0
  %5744 = vmatprep.subr.mxu0 0.0
  %5745 = vmatpush1.msra.mxu0 0.0
  %5746 = vmatprep.subr.mxu0 0.0
  %5747 = vmatpush1.msra.mxu0 0.0
  %5748 = vmatprep.subr.mxu0 0.0
  %5749 = vmatpush1.msra.mxu0 0.0
  %5750 = vmatprep.subr.mxu0 0.0
  %5751 = vmatpush1.msra.mxu0 0.0
  %5752 = vmatprep.subr.mxu0 0.0
  %5753 = vmatpush1.msra.mxu0 0.0
  %5754 = vmatprep.subr.mxu0 0.0
  %5755 = vmatpush1.msra.mxu0 0.0
  %5756 = vmatprep.subr.mxu0 0.0
  %5757 = vmatpush1.msra.mxu0 0.0
  %5758 = vmatprep.subr.mxu0 0.0
  %5759 = vmatpush1.msra.mxu0 0.0
  %5760 = vmatprep.subr.mxu0 0.0
  %5761 = vmatpush1.msra.mxu0 0.0
  %5762 = vmatprep.subr.mxu0 0.0
  %5763 = vmatpush1.msra.mxu0 0.0
  %5764 = vmatprep.subr.mxu0 0.0
  %5765 = vmatpush1.msra.mxu0 0.0
  %5766 = vmatprep.subr.mxu0 0.0
  %5767 = vmatpush1.msra.mxu0 0.0
  %5768 = vmatprep.subr.mxu0 0.0
  %5769 = vmatpush1.msra.mxu0 0.0
  %5770 = vmatprep.subr.mxu0 0.0
  %5771 = vmatpush1.msra.mxu0 0.0
  %5772 = vmatprep.subr.mxu0 0.0
  %5773 = vmatpush1.msra.mxu0 0.0
  %5774 = vmatprep.subr.mxu0 0.0
  %5775 = vmatpush1.msra.mxu0 0.0
  %5776 = vmatprep.subr.mxu0 0.0
  %5777 = vmatpush1.msra.mxu0 0.0
  %5778 = vmatprep.subr.mxu0 0.0
  %5779 = vmatpush1.msra.mxu0 0.0
  %5780 = vmatprep.subr.mxu0 0.0
  %5781 = vmatpush1.msra.mxu0 0.0
  %5782 = vmatprep.subr.mxu0 0.0
  %5783 = vmatpush1.msra.mxu0 0.0
  %5784 = vmatprep.subr.mxu0 0.0
  %5785 = vmatpush1.msra.mxu0 0.0
  %5786 = vmatprep.subr.mxu0 0.0
  %5787 = vmatpush1.msra.mxu0 0.0
  %5788 = vmatprep.subr.mxu0 0.0
  %5789 = vmatpush1.msra.mxu0 0.0
  %5790 = vmatprep.mubr.f32.mxu0 0.0
  %v5791 = vand.u32 %v5723, 4294901760
  %v5792 = vsub.f32 %v5723, %v5791
  %v5793 = vand.u32 %v5792, 4294901760
  %v5794 = vsub.f32 %v5792, %v5793
  %v5795 = vand.u32 %v5794, 4294901760
  %5796 = vmatmul.mubr.f32.gmra.mrb[0].mxu0 %v5795
  %v5797 = vpop.f32.mrb[0].mxu0
  %v5798 = vadd.f32 0.0, %v5797
  %v5799 = vpop.f32.mrb[0].mxu0
  %5800 = vdwg.mxu0
  %5801 = vmatprep.subr.mxu0 0.0
  %v5802 = vand.u32 %v1945, 4294901760
  %v5803 = vsub.f32 %v1945, %v5802
  %v5804 = vand.u32 %v5803, 4294901760
  %v5805 = vsub.f32 %v5803, %v5804
  %v5806 = vand.u32 %v5805, 4294901760
  %5807 = vmatpush1.msra.mxu0 %v5806
  %5808 = vmatprep.subr.mxu0 0.0
  %5809 = vmatpush1.msra.mxu0 0.0
  %5810 = vmatprep.subr.mxu0 0.0
  %5811 = vmatpush1.msra.mxu0 0.0
  %5812 = vmatprep.subr.mxu0 0.0
  %5813 = vmatpush1.msra.mxu0 0.0
  %5814 = vmatprep.subr.mxu0 0.0
  %5815 = vmatpush1.msra.mxu0 0.0
  %5816 = vmatprep.subr.mxu0 0.0
  %5817 = vmatpush1.msra.mxu0 0.0
  %5818 = vmatprep.subr.mxu0 0.0
  %5819 = vmatpush1.msra.mxu0 0.0
  %5820 = vmatprep.subr.mxu0 0.0
  %5821 = vmatpush1.msra.mxu0 0.0
  %5822 = vmatprep.subr.mxu0 0.0
  %5823 = vmatpush1.msra.mxu0 0.0
  %5824 = vmatprep.subr.mxu0 0.0
  %5825 = vmatpush1.msra.mxu0 0.0
  %5826 = vmatprep.subr.mxu0 0.0
  %5827 = vmatpush1.msra.mxu0 0.0
  %5828 = vmatprep.subr.mxu0 0.0
  %5829 = vmatpush1.msra.mxu0 0.0
  %5830 = vmatprep.subr.mxu0 0.0
  %5831 = vmatpush1.msra.mxu0 0.0
  %5832 = vmatprep.subr.mxu0 0.0
  %5833 = vmatpush1.msra.mxu0 0.0
  %5834 = vmatprep.subr.mxu0 0.0
  %5835 = vmatpush1.msra.mxu0 0.0
  %5836 = vmatprep.subr.mxu0 0.0
  %5837 = vmatpush1.msra.mxu0 0.0
  %5838 = vmatprep.subr.mxu0 0.0
  %5839 = vmatpush1.msra.mxu0 0.0
  %5840 = vmatprep.subr.mxu0 0.0
  %5841 = vmatpush1.msra.mxu0 0.0
  %5842 = vmatprep.subr.mxu0 0.0
  %5843 = vmatpush1.msra.mxu0 0.0
  %5844 = vmatprep.subr.mxu0 0.0
  %5845 = vmatpush1.msra.mxu0 0.0
  %5846 = vmatprep.subr.mxu0 0.0
  %5847 = vmatpush1.msra.mxu0 0.0
  %5848 = vmatprep.subr.mxu0 0.0
  %5849 = vmatpush1.msra.mxu0 0.0
  %5850 = vmatprep.subr.mxu0 0.0
  %5851 = vmatpush1.msra.mxu0 0.0
  %5852 = vmatprep.subr.mxu0 0.0
  %5853 = vmatpush1.msra.mxu0 0.0
  %5854 = vmatprep.subr.mxu0 0.0
  %5855 = vmatpush1.msra.mxu0 0.0
  %5856 = vmatprep.subr.mxu0 0.0
  %5857 = vmatpush1.msra.mxu0 0.0
  %5858 = vmatprep.subr.mxu0 0.0
  %5859 = vmatpush1.msra.mxu0 0.0
  %5860 = vmatprep.subr.mxu0 0.0
  %5861 = vmatpush1.msra.mxu0 0.0
  %5862 = vmatprep.subr.mxu0 0.0
  %5863 = vmatpush1.msra.mxu0 0.0
  %5864 = vmatprep.subr.mxu0 0.0
  %5865 = vmatpush1.msra.mxu0 0.0
  %5866 = vmatprep.subr.mxu0 0.0
  %5867 = vmatpush1.msra.mxu0 0.0
  %5868 = vmatprep.subr.mxu0 0.0
  %5869 = vmatpush1.msra.mxu0 0.0
  %5870 = vmatprep.mubr.f32.mxu0 0.0
  %v5871 = vand.u32 %v5723, 4294901760
  %5872 = vmatmul.mubr.f32.gmra.mrb[0].mxu0 %v5871
  %v5873 = vpop.f32.mrb[0].mxu0
  %v5874 = vadd.f32 %v5798, %v5873
  %v5875 = vpop.f32.mrb[0].mxu0
  %5876 = vdwg.mxu0
  %5877 = vmatprep.subr.mxu0 0.0
  %v5878 = vand.u32 %v1945, 4294901760
  %v5879 = vsub.f32 %v1945, %v5878
  %5880 = vmatpush1.msra.mxu0 %v5879
  %5881 = vmatprep.subr.mxu0 0.0
  %5882 = vmatpush1.msra.mxu0 0.0
  %5883 = vmatprep.subr.mxu0 0.0
  %5884 = vmatpush1.msra.mxu0 0.0
  %5885 = vmatprep.subr.mxu0 0.0
  %5886 = vmatpush1.msra.mxu0 0.0
  %5887 = vmatprep.subr.mxu0 0.0
  %5888 = vmatpush1.msra.mxu0 0.0
  %5889 = vmatprep.subr.mxu0 0.0
  %5890 = vmatpush1.msra.mxu0 0.0
  %5891 = vmatprep.subr.mxu0 0.0
  %5892 = vmatpush1.msra.mxu0 0.0
  %5893 = vmatprep.subr.mxu0 0.0
  %5894 = vmatpush1.msra.mxu0 0.0
  %5895 = vmatprep.subr.mxu0 0.0
  %5896 = vmatpush1.msra.mxu0 0.0
  %5897 = vmatprep.subr.mxu0 0.0
  %5898 = vmatpush1.msra.mxu0 0.0
  %5899 = vmatprep.subr.mxu0 0.0
  %5900 = vmatpush1.msra.mxu0 0.0
  %5901 = vmatprep.subr.mxu0 0.0
  %5902 = vmatpush1.msra.mxu0 0.0
  %5903 = vmatprep.subr.mxu0 0.0
  %5904 = vmatpush1.msra.mxu0 0.0
  %5905 = vmatprep.subr.mxu0 0.0
  %5906 = vmatpush1.msra.mxu0 0.0
  %5907 = vmatprep.subr.mxu0 0.0
  %5908 = vmatpush1.msra.mxu0 0.0
  %5909 = vmatprep.subr.mxu0 0.0
  %5910 = vmatpush1.msra.mxu0 0.0
  %5911 = vmatprep.subr.mxu0 0.0
  %5912 = vmatpush1.msra.mxu0 0.0
  %5913 = vmatprep.subr.mxu0 0.0
  %5914 = vmatpush1.msra.mxu0 0.0
  %5915 = vmatprep.subr.mxu0 0.0
  %5916 = vmatpush1.msra.mxu0 0.0
  %5917 = vmatprep.subr.mxu0 0.0
  %5918 = vmatpush1.msra.mxu0 0.0
  %5919 = vmatprep.subr.mxu0 0.0
  %5920 = vmatpush1.msra.mxu0 0.0
  %5921 = vmatprep.subr.mxu0 0.0
  %5922 = vmatpush1.msra.mxu0 0.0
  %5923 = vmatprep.subr.mxu0 0.0
  %5924 = vmatpush1.msra.mxu0 0.0
  %5925 = vmatprep.subr.mxu0 0.0
  %5926 = vmatpush1.msra.mxu0 0.0
  %5927 = vmatprep.subr.mxu0 0.0
  %5928 = vmatpush1.msra.mxu0 0.0
  %5929 = vmatprep.subr.mxu0 0.0
  %5930 = vmatpush1.msra.mxu0 0.0
  %5931 = vmatprep.subr.mxu0 0.0
  %5932 = vmatpush1.msra.mxu0 0.0
  %5933 = vmatprep.subr.mxu0 0.0
  %5934 = vmatpush1.msra.mxu0 0.0
  %5935 = vmatprep.subr.mxu0 0.0
  %5936 = vmatpush1.msra.mxu0 0.0
  %5937 = vmatprep.subr.mxu0 0.0
  %5938 = vmatpush1.msra.mxu0 0.0
  %5939 = vmatprep.subr.mxu0 0.0
  %5940 = vmatpush1.msra.mxu0 0.0
  %5941 = vmatprep.subr.mxu0 0.0
  %5942 = vmatpush1.msra.mxu0 0.0
  %5943 = vmatprep.mubr.f32.mxu0 0.0
  %v5944 = vand.u32 %v5723, 4294901760
  %v5945 = vsub.f32 %v5723, %v5944
  %5946 = vmatmul.mubr.f32.gmra.mrb[0].mxu0 %v5945
  %v5947 = vpop.f32.mrb[0].mxu0
  %v5948 = vadd.f32 %v5874, %v5947
  %v5949 = vpop.f32.mrb[0].mxu0
  %5950 = vdwg.mxu0
  %5951 = vmatprep.subr.mxu0 0.0
  %v5952 = vand.u32 %v1945, 4294901760
  %5953 = vmatpush1.msra.mxu0 %v5952
  %5954 = vmatprep.subr.mxu0 0.0
  %5955 = vmatpush1.msra.mxu0 0.0
  %5956 = vmatprep.subr.mxu0 0.0
  %5957 = vmatpush1.msra.mxu0 0.0
  %5958 = vmatprep.subr.mxu0 0.0
  %5959 = vmatpush1.msra.mxu0 0.0
  %5960 = vmatprep.subr.mxu0 0.0
  %5961 = vmatpush1.msra.mxu0 0.0
  %5962 = vmatprep.subr.mxu0 0.0
  %5963 = vmatpush1.msra.mxu0 0.0
  %5964 = vmatprep.subr.mxu0 0.0
  %5965 = vmatpush1.msra.mxu0 0.0
  %5966 = vmatprep.subr.mxu0 0.0
  %5967 = vmatpush1.msra.mxu0 0.0
  %5968 = vmatprep.subr.mxu0 0.0
  %5969 = vmatpush1.msra.mxu0 0.0
  %5970 = vmatprep.subr.mxu0 0.0
  %5971 = vmatpush1.msra.mxu0 0.0
  %5972 = vmatprep.subr.mxu0 0.0
  %5973 = vmatpush1.msra.mxu0 0.0
  %5974 = vmatprep.subr.mxu0 0.0
  %5975 = vmatpush1.msra.mxu0 0.0
  %5976 = vmatprep.subr.mxu0 0.0
  %5977 = vmatpush1.msra.mxu0 0.0
  %5978 = vmatprep.subr.mxu0 0.0
  %5979 = vmatpush1.msra.mxu0 0.0
  %5980 = vmatprep.subr.mxu0 0.0
  %5981 = vmatpush1.msra.mxu0 0.0
  %5982 = vmatprep.subr.mxu0 0.0
  %5983 = vmatpush1.msra.mxu0 0.0
  %5984 = vmatprep.subr.mxu0 0.0
  %5985 = vmatpush1.msra.mxu0 0.0
  %5986 = vmatprep.subr.mxu0 0.0
  %5987 = vmatpush1.msra.mxu0 0.0
  %5988 = vmatprep.subr.mxu0 0.0
  %5989 = vmatpush1.msra.mxu0 0.0
  %5990 = vmatprep.subr.mxu0 0.0
  %5991 = vmatpush1.msra.mxu0 0.0
  %5992 = vmatprep.subr.mxu0 0.0
  %5993 = vmatpush1.msra.mxu0 0.0
  %5994 = vmatprep.subr.mxu0 0.0
  %5995 = vmatpush1.msra.mxu0 0.0
  %5996 = vmatprep.subr.mxu0 0.0
  %5997 = vmatpush1.msra.mxu0 0.0
  %5998 = vmatprep.subr.mxu0 0.0
  %5999 = vmatpush1.msra.mxu0 0.0
  %6000 = vmatprep.subr.mxu0 0.0
  %6001 = vmatpush1.msra.mxu0 0.0
  %6002 = vmatprep.subr.mxu0 0.0
  %6003 = vmatpush1.msra.mxu0 0.0
  %6004 = vmatprep.subr.mxu0 0.0
  %6005 = vmatpush1.msra.mxu0 0.0
  %6006 = vmatprep.subr.mxu0 0.0
  %6007 = vmatpush1.msra.mxu0 0.0
  %6008 = vmatprep.subr.mxu0 0.0
  %6009 = vmatpush1.msra.mxu0 0.0
  %6010 = vmatprep.subr.mxu0 0.0
  %6011 = vmatpush1.msra.mxu0 0.0
  %6012 = vmatprep.subr.mxu0 0.0
  %6013 = vmatpush1.msra.mxu0 0.0
  %6014 = vmatprep.subr.mxu0 0.0
  %6015 = vmatpush1.msra.mxu0 0.0
  %6016 = vmatprep.mubr.f32.mxu0 0.0
  %v6017 = vand.u32 %v5723, 4294901760
  %v6018 = vsub.f32 %v5723, %v6017
  %v6019 = vand.u32 %v6018, 4294901760
  %6020 = vmatmul.mubr.f32.gmra.mrb[0].mxu0 %v6019
  %v6021 = vpop.f32.mrb[0].mxu0
  %v6022 = vadd.f32 %v5948, %v6021
  %v6023 = vpop.f32.mrb[0].mxu0
  %6024 = vdwg.mxu0
  %6025 = vmatprep.subr.mxu0 0.0
  %v6026 = vand.u32 %v1945, 4294901760
  %v6027 = vsub.f32 %v1945, %v6026
  %v6028 = vand.u32 %v6027, 4294901760
  %6029 = vmatpush1.msra.mxu0 %v6028
  %6030 = vmatprep.subr.mxu0 0.0
  %6031 = vmatpush1.msra.mxu0 0.0
  %6032 = vmatprep.subr.mxu0 0.0
  %6033 = vmatpush1.msra.mxu0 0.0
  %6034 = vmatprep.subr.mxu0 0.0
  %6035 = vmatpush1.msra.mxu0 0.0
  %6036 = vmatprep.subr.mxu0 0.0
  %6037 = vmatpush1.msra.mxu0 0.0
  %6038 = vmatprep.subr.mxu0 0.0
  %6039 = vmatpush1.msra.mxu0 0.0
  %6040 = vmatprep.subr.mxu0 0.0
  %6041 = vmatpush1.msra.mxu0 0.0
  %6042 = vmatprep.subr.mxu0 0.0
  %6043 = vmatpush1.msra.mxu0 0.0
  %6044 = vmatprep.subr.mxu0 0.0
  %6045 = vmatpush1.msra.mxu0 0.0
  %6046 = vmatprep.subr.mxu0 0.0
  %6047 = vmatpush1.msra.mxu0 0.0
  %6048 = vmatprep.subr.mxu0 0.0
  %6049 = vmatpush1.msra.mxu0 0.0
  %6050 = vmatprep.subr.mxu0 0.0
  %6051 = vmatpush1.msra.mxu0 0.0
  %6052 = vmatprep.subr.mxu0 0.0
  %6053 = vmatpush1.msra.mxu0 0.0
  %6054 = vmatprep.subr.mxu0 0.0
  %6055 = vmatpush1.msra.mxu0 0.0
  %6056 = vmatprep.subr.mxu0 0.0
  %6057 = vmatpush1.msra.mxu0 0.0
  %6058 = vmatprep.subr.mxu0 0.0
  %6059 = vmatpush1.msra.mxu0 0.0
  %6060 = vmatprep.subr.mxu0 0.0
  %6061 = vmatpush1.msra.mxu0 0.0
  %6062 = vmatprep.subr.mxu0 0.0
  %6063 = vmatpush1.msra.mxu0 0.0
  %6064 = vmatprep.subr.mxu0 0.0
  %6065 = vmatpush1.msra.mxu0 0.0
  %6066 = vmatprep.subr.mxu0 0.0
  %6067 = vmatpush1.msra.mxu0 0.0
  %6068 = vmatprep.subr.mxu0 0.0
  %6069 = vmatpush1.msra.mxu0 0.0
  %6070 = vmatprep.subr.mxu0 0.0
  %6071 = vmatpush1.msra.mxu0 0.0
  %6072 = vmatprep.subr.mxu0 0.0
  %6073 = vmatpush1.msra.mxu0 0.0
  %6074 = vmatprep.subr.mxu0 0.0
  %6075 = vmatpush1.msra.mxu0 0.0
  %6076 = vmatprep.subr.mxu0 0.0
  %6077 = vmatpush1.msra.mxu0 0.0
  %6078 = vmatprep.subr.mxu0 0.0
  %6079 = vmatpush1.msra.mxu0 0.0
  %6080 = vmatprep.subr.mxu0 0.0
  %6081 = vmatpush1.msra.mxu0 0.0
  %6082 = vmatprep.subr.mxu0 0.0
  %6083 = vmatpush1.msra.mxu0 0.0
  %6084 = vmatprep.subr.mxu0 0.0
  %6085 = vmatpush1.msra.mxu0 0.0
  %6086 = vmatprep.subr.mxu0 0.0
  %6087 = vmatpush1.msra.mxu0 0.0
  %6088 = vmatprep.subr.mxu0 0.0
  %6089 = vmatpush1.msra.mxu0 0.0
  %6090 = vmatprep.subr.mxu0 0.0
  %6091 = vmatpush1.msra.mxu0 0.0
  %6092 = vmatprep.mubr.f32.mxu0 0.0
  %v6093 = vand.u32 %v5723, 4294901760
  %6094 = vmatmul.mubr.f32.gmra.mrb[0].mxu0 %v6093
  %v6095 = vpop.f32.mrb[0].mxu0
  %v6096 = vadd.f32 %v6022, %v6095
  %v6097 = vpop.f32.mrb[0].mxu0
  %6098 = vdwg.mxu0
  %6099 = vmatprep.subr.mxu0 0.0
  %v6100 = vand.u32 %v1945, 4294901760
  %6101 = vmatpush1.msra.mxu0 %v6100
  %6102 = vmatprep.subr.mxu0 0.0
  %6103 = vmatpush1.msra.mxu0 0.0
  %6104 = vmatprep.subr.mxu0 0.0
  %6105 = vmatpush1.msra.mxu0 0.0
  %6106 = vmatprep.subr.mxu0 0.0
  %6107 = vmatpush1.msra.mxu0 0.0
  %6108 = vmatprep.subr.mxu0 0.0
  %6109 = vmatpush1.msra.mxu0 0.0
  %6110 = vmatprep.subr.mxu0 0.0
  %6111 = vmatpush1.msra.mxu0 0.0
  %6112 = vmatprep.subr.mxu0 0.0
  %6113 = vmatpush1.msra.mxu0 0.0
  %6114 = vmatprep.subr.mxu0 0.0
  %6115 = vmatpush1.msra.mxu0 0.0
  %6116 = vmatprep.subr.mxu0 0.0
  %6117 = vmatpush1.msra.mxu0 0.0
  %6118 = vmatprep.subr.mxu0 0.0
  %6119 = vmatpush1.msra.mxu0 0.0
  %6120 = vmatprep.subr.mxu0 0.0
  %6121 = vmatpush1.msra.mxu0 0.0
  %6122 = vmatprep.subr.mxu0 0.0
  %6123 = vmatpush1.msra.mxu0 0.0
  %6124 = vmatprep.subr.mxu0 0.0
  %6125 = vmatpush1.msra.mxu0 0.0
  %6126 = vmatprep.subr.mxu0 0.0
  %6127 = vmatpush1.msra.mxu0 0.0
  %6128 = vmatprep.subr.mxu0 0.0
  %6129 = vmatpush1.msra.mxu0 0.0
  %6130 = vmatprep.subr.mxu0 0.0
  %6131 = vmatpush1.msra.mxu0 0.0
  %6132 = vmatprep.subr.mxu0 0.0
  %6133 = vmatpush1.msra.mxu0 0.0
  %6134 = vmatprep.subr.mxu0 0.0
  %6135 = vmatpush1.msra.mxu0 0.0
  %6136 = vmatprep.subr.mxu0 0.0
  %6137 = vmatpush1.msra.mxu0 0.0
  %6138 = vmatprep.subr.mxu0 0.0
  %6139 = vmatpush1.msra.mxu0 0.0
  %6140 = vmatprep.subr.mxu0 0.0
  %6141 = vmatpush1.msra.mxu0 0.0
  %6142 = vmatprep.subr.mxu0 0.0
  %6143 = vmatpush1.msra.mxu0 0.0
  %6144 = vmatprep.subr.mxu0 0.0
  %6145 = vmatpush1.msra.mxu0 0.0
  %6146 = vmatprep.subr.mxu0 0.0
  %6147 = vmatpush1.msra.mxu0 0.0
  %6148 = vmatprep.subr.mxu0 0.0
  %6149 = vmatpush1.msra.mxu0 0.0
  %6150 = vmatprep.subr.mxu0 0.0
  %6151 = vmatpush1.msra.mxu0 0.0
  %6152 = vmatprep.subr.mxu0 0.0
  %6153 = vmatpush1.msra.mxu0 0.0
  %6154 = vmatprep.subr.mxu0 0.0
  %6155 = vmatpush1.msra.mxu0 0.0
  %6156 = vmatprep.subr.mxu0 0.0
  %6157 = vmatpush1.msra.mxu0 0.0
  %6158 = vmatprep.subr.mxu0 0.0
  %6159 = vmatpush1.msra.mxu0 0.0
  %6160 = vmatprep.subr.mxu0 0.0
  %6161 = vmatpush1.msra.mxu0 0.0
  %6162 = vmatprep.subr.mxu0 0.0
  %6163 = vmatpush1.msra.mxu0 0.0
  %6164 = vmatprep.mubr.f32.mxu0 0.0
  %v6165 = vand.u32 %v5723, 4294901760
  %6166 = vmatmul.mubr.f32.gmra.mrb[0].mxu0 %v6165
  %v6167 = vpop.f32.mrb[0].mxu0
  %v6168 = vadd.f32 %v6096, %v6167
  %v6169 = vpop.f32.mrb[0].mxu0
  %6170 = vdwg.mxu0
  %v6172 = vsel %vm2017, %v5715, 0
  %6174 = vmatprep.subr.mxu0 0.0
  %v6175 = vand.u32 %v1946, 4294901760
  %6176 = vmatpush1.msra.mxu0 %v6175
  %6177 = vmatprep.subr.mxu0 0.0
  %6178 = vmatpush1.msra.mxu0 0.0
  %6179 = vmatprep.subr.mxu0 0.0
  %6180 = vmatpush1.msra.mxu0 0.0
  %6181 = vmatprep.subr.mxu0 0.0
  %6182 = vmatpush1.msra.mxu0 0.0
  %6183 = vmatprep.subr.mxu0 0.0
  %6184 = vmatpush1.msra.mxu0 0.0
  %6185 = vmatprep.subr.mxu0 0.0
  %6186 = vmatpush1.msra.mxu0 0.0
  %6187 = vmatprep.subr.mxu0 0.0
  %6188 = vmatpush1.msra.mxu0 0.0
  %6189 = vmatprep.subr.mxu0 0.0
  %6190 = vmatpush1.msra.mxu0 0.0
  %6191 = vmatprep.subr.mxu0 0.0
  %6192 = vmatpush1.msra.mxu0 0.0
  %6193 = vmatprep.subr.mxu0 0.0
  %6194 = vmatpush1.msra.mxu0 0.0
  %6195 = vmatprep.subr.mxu0 0.0
  %6196 = vmatpush1.msra.mxu0 0.0
  %6197 = vmatprep.subr.mxu0 0.0
  %6198 = vmatpush1.msra.mxu0 0.0
  %6199 = vmatprep.subr.mxu0 0.0
  %6200 = vmatpush1.msra.mxu0 0.0
  %6201 = vmatprep.subr.mxu0 0.0
  %6202 = vmatpush1.msra.mxu0 0.0
  %6203 = vmatprep.subr.mxu0 0.0
  %6204 = vmatpush1.msra.mxu0 0.0
  %6205 = vmatprep.subr.mxu0 0.0
  %6206 = vmatpush1.msra.mxu0 0.0
  %6207 = vmatprep.subr.mxu0 0.0
  %6208 = vmatpush1.msra.mxu0 0.0
  %6209 = vmatprep.subr.mxu0 0.0
  %6210 = vmatpush1.msra.mxu0 0.0
  %6211 = vmatprep.subr.mxu0 0.0
  %6212 = vmatpush1.msra.mxu0 0.0
  %6213 = vmatprep.subr.mxu0 0.0
  %6214 = vmatpush1.msra.mxu0 0.0
  %6215 = vmatprep.subr.mxu0 0.0
  %6216 = vmatpush1.msra.mxu0 0.0
  %6217 = vmatprep.subr.mxu0 0.0
  %6218 = vmatpush1.msra.mxu0 0.0
  %6219 = vmatprep.subr.mxu0 0.0
  %6220 = vmatpush1.msra.mxu0 0.0
  %6221 = vmatprep.subr.mxu0 0.0
  %6222 = vmatpush1.msra.mxu0 0.0
  %6223 = vmatprep.subr.mxu0 0.0
  %6224 = vmatpush1.msra.mxu0 0.0
  %6225 = vmatprep.subr.mxu0 0.0
  %6226 = vmatpush1.msra.mxu0 0.0
  %6227 = vmatprep.subr.mxu0 0.0
  %6228 = vmatpush1.msra.mxu0 0.0
  %6229 = vmatprep.subr.mxu0 0.0
  %6230 = vmatpush1.msra.mxu0 0.0
  %6231 = vmatprep.subr.mxu0 0.0
  %6232 = vmatpush1.msra.mxu0 0.0
  %6233 = vmatprep.subr.mxu0 0.0
  %6234 = vmatpush1.msra.mxu0 0.0
  %6235 = vmatprep.subr.mxu0 0.0
  %6236 = vmatpush1.msra.mxu0 0.0
  %6237 = vmatprep.subr.mxu0 0.0
  %6238 = vmatpush1.msra.mxu0 0.0
  %6239 = vmatprep.mubr.f32.mxu0 0.0
  %v6240 = vand.u32 %v6172, 4294901760
  %v6241 = vsub.f32 %v6172, %v6240
  %v6242 = vand.u32 %v6241, 4294901760
  %v6243 = vsub.f32 %v6241, %v6242
  %v6244 = vand.u32 %v6243, 4294901760
  %6245 = vmatmul.mubr.f32.gmra.mrb[0].mxu0 %v6244
  %v6246 = vpop.f32.mrb[0].mxu0
  %v6247 = vadd.f32 0.0, %v6246
  %v6248 = vpop.f32.mrb[0].mxu0
  %6249 = vdwg.mxu0
  %6250 = vmatprep.subr.mxu0 0.0
  %v6251 = vand.u32 %v1946, 4294901760
  %v6252 = vsub.f32 %v1946, %v6251
  %v6253 = vand.u32 %v6252, 4294901760
  %v6254 = vsub.f32 %v6252, %v6253
  %v6255 = vand.u32 %v6254, 4294901760
  %6256 = vmatpush1.msra.mxu0 %v6255
  %6257 = vmatprep.subr.mxu0 0.0
  %6258 = vmatpush1.msra.mxu0 0.0
  %6259 = vmatprep.subr.mxu0 0.0
  %6260 = vmatpush1.msra.mxu0 0.0
  %6261 = vmatprep.subr.mxu0 0.0
  %6262 = vmatpush1.msra.mxu0 0.0
  %6263 = vmatprep.subr.mxu0 0.0
  %6264 = vmatpush1.msra.mxu0 0.0
  %6265 = vmatprep.subr.mxu0 0.0
  %6266 = vmatpush1.msra.mxu0 0.0
  %6267 = vmatprep.subr.mxu0 0.0
  %6268 = vmatpush1.msra.mxu0 0.0
  %6269 = vmatprep.subr.mxu0 0.0
  %6270 = vmatpush1.msra.mxu0 0.0
  %6271 = vmatprep.subr.mxu0 0.0
  %6272 = vmatpush1.msra.mxu0 0.0
  %6273 = vmatprep.subr.mxu0 0.0
  %6274 = vmatpush1.msra.mxu0 0.0
  %6275 = vmatprep.subr.mxu0 0.0
  %6276 = vmatpush1.msra.mxu0 0.0
  %6277 = vmatprep.subr.mxu0 0.0
  %6278 = vmatpush1.msra.mxu0 0.0
  %6279 = vmatprep.subr.mxu0 0.0
  %6280 = vmatpush1.msra.mxu0 0.0
  %6281 = vmatprep.subr.mxu0 0.0
  %6282 = vmatpush1.msra.mxu0 0.0
  %6283 = vmatprep.subr.mxu0 0.0
  %6284 = vmatpush1.msra.mxu0 0.0
  %6285 = vmatprep.subr.mxu0 0.0
  %6286 = vmatpush1.msra.mxu0 0.0
  %6287 = vmatprep.subr.mxu0 0.0
  %6288 = vmatpush1.msra.mxu0 0.0
  %6289 = vmatprep.subr.mxu0 0.0
  %6290 = vmatpush1.msra.mxu0 0.0
  %6291 = vmatprep.subr.mxu0 0.0
  %6292 = vmatpush1.msra.mxu0 0.0
  %6293 = vmatprep.subr.mxu0 0.0
  %6294 = vmatpush1.msra.mxu0 0.0
  %6295 = vmatprep.subr.mxu0 0.0
  %6296 = vmatpush1.msra.mxu0 0.0
  %6297 = vmatprep.subr.mxu0 0.0
  %6298 = vmatpush1.msra.mxu0 0.0
  %6299 = vmatprep.subr.mxu0 0.0
  %6300 = vmatpush1.msra.mxu0 0.0
  %6301 = vmatprep.subr.mxu0 0.0
  %6302 = vmatpush1.msra.mxu0 0.0
  %6303 = vmatprep.subr.mxu0 0.0
  %6304 = vmatpush1.msra.mxu0 0.0
  %6305 = vmatprep.subr.mxu0 0.0
  %6306 = vmatpush1.msra.mxu0 0.0
  %6307 = vmatprep.subr.mxu0 0.0
  %6308 = vmatpush1.msra.mxu0 0.0
  %6309 = vmatprep.subr.mxu0 0.0
  %6310 = vmatpush1.msra.mxu0 0.0
  %6311 = vmatprep.subr.mxu0 0.0
  %6312 = vmatpush1.msra.mxu0 0.0
  %6313 = vmatprep.subr.mxu0 0.0
  %6314 = vmatpush1.msra.mxu0 0.0
  %6315 = vmatprep.subr.mxu0 0.0
  %6316 = vmatpush1.msra.mxu0 0.0
  %6317 = vmatprep.subr.mxu0 0.0
  %6318 = vmatpush1.msra.mxu0 0.0
  %6319 = vmatprep.mubr.f32.mxu0 0.0
  %v6320 = vand.u32 %v6172, 4294901760
  %6321 = vmatmul.mubr.f32.gmra.mrb[0].mxu0 %v6320
  %v6322 = vpop.f32.mrb[0].mxu0
  %v6323 = vadd.f32 %v6247, %v6322
  %v6324 = vpop.f32.mrb[0].mxu0
  %6325 = vdwg.mxu0
  %6326 = vmatprep.subr.mxu0 0.0
  %v6327 = vand.u32 %v1946, 4294901760
  %v6328 = vsub.f32 %v1946, %v6327
  %6329 = vmatpush1.msra.mxu0 %v6328
  %6330 = vmatprep.subr.mxu0 0.0
  %6331 = vmatpush1.msra.mxu0 0.0
  %6332 = vmatprep.subr.mxu0 0.0
  %6333 = vmatpush1.msra.mxu0 0.0
  %6334 = vmatprep.subr.mxu0 0.0
  %6335 = vmatpush1.msra.mxu0 0.0
  %6336 = vmatprep.subr.mxu0 0.0
  %6337 = vmatpush1.msra.mxu0 0.0
  %6338 = vmatprep.subr.mxu0 0.0
  %6339 = vmatpush1.msra.mxu0 0.0
  %6340 = vmatprep.subr.mxu0 0.0
  %6341 = vmatpush1.msra.mxu0 0.0
  %6342 = vmatprep.subr.mxu0 0.0
  %6343 = vmatpush1.msra.mxu0 0.0
  %6344 = vmatprep.subr.mxu0 0.0
  %6345 = vmatpush1.msra.mxu0 0.0
  %6346 = vmatprep.subr.mxu0 0.0
  %6347 = vmatpush1.msra.mxu0 0.0
  %6348 = vmatprep.subr.mxu0 0.0
  %6349 = vmatpush1.msra.mxu0 0.0
  %6350 = vmatprep.subr.mxu0 0.0
  %6351 = vmatpush1.msra.mxu0 0.0
  %6352 = vmatprep.subr.mxu0 0.0
  %6353 = vmatpush1.msra.mxu0 0.0
  %6354 = vmatprep.subr.mxu0 0.0
  %6355 = vmatpush1.msra.mxu0 0.0
  %6356 = vmatprep.subr.mxu0 0.0
  %6357 = vmatpush1.msra.mxu0 0.0
  %6358 = vmatprep.subr.mxu0 0.0
  %6359 = vmatpush1.msra.mxu0 0.0
  %6360 = vmatprep.subr.mxu0 0.0
  %6361 = vmatpush1.msra.mxu0 0.0
  %6362 = vmatprep.subr.mxu0 0.0
  %6363 = vmatpush1.msra.mxu0 0.0
  %6364 = vmatprep.subr.mxu0 0.0
  %6365 = vmatpush1.msra.mxu0 0.0
  %6366 = vmatprep.subr.mxu0 0.0
  %6367 = vmatpush1.msra.mxu0 0.0
  %6368 = vmatprep.subr.mxu0 0.0
  %6369 = vmatpush1.msra.mxu0 0.0
  %6370 = vmatprep.subr.mxu0 0.0
  %6371 = vmatpush1.msra.mxu0 0.0
  %6372 = vmatprep.subr.mxu0 0.0
  %6373 = vmatpush1.msra.mxu0 0.0
  %6374 = vmatprep.subr.mxu0 0.0
  %6375 = vmatpush1.msra.mxu0 0.0
  %6376 = vmatprep.subr.mxu0 0.0
  %6377 = vmatpush1.msra.mxu0 0.0
  %6378 = vmatprep.subr.mxu0 0.0
  %6379 = vmatpush1.msra.mxu0 0.0
  %6380 = vmatprep.subr.mxu0 0.0
  %6381 = vmatpush1.msra.mxu0 0.0
  %6382 = vmatprep.subr.mxu0 0.0
  %6383 = vmatpush1.msra.mxu0 0.0
  %6384 = vmatprep.subr.mxu0 0.0
  %6385 = vmatpush1.msra.mxu0 0.0
  %6386 = vmatprep.subr.mxu0 0.0
  %6387 = vmatpush1.msra.mxu0 0.0
  %6388 = vmatprep.subr.mxu0 0.0
  %6389 = vmatpush1.msra.mxu0 0.0
  %6390 = vmatprep.subr.mxu0 0.0
  %6391 = vmatpush1.msra.mxu0 0.0
  %6392 = vmatprep.mubr.f32.mxu0 0.0
  %v6393 = vand.u32 %v6172, 4294901760
  %v6394 = vsub.f32 %v6172, %v6393
  %6395 = vmatmul.mubr.f32.gmra.mrb[0].mxu0 %v6394
  %v6396 = vpop.f32.mrb[0].mxu0
  %v6397 = vadd.f32 %v6323, %v6396
  %v6398 = vpop.f32.mrb[0].mxu0
  %6399 = vdwg.mxu0
  %6400 = vmatprep.subr.mxu0 0.0
  %v6401 = vand.u32 %v1946, 4294901760
  %6402 = vmatpush1.msra.mxu0 %v6401
  %6403 = vmatprep.subr.mxu0 0.0
  %6404 = vmatpush1.msra.mxu0 0.0
  %6405 = vmatprep.subr.mxu0 0.0
  %6406 = vmatpush1.msra.mxu0 0.0
  %6407 = vmatprep.subr.mxu0 0.0
  %6408 = vmatpush1.msra.mxu0 0.0
  %6409 = vmatprep.subr.mxu0 0.0
  %6410 = vmatpush1.msra.mxu0 0.0
  %6411 = vmatprep.subr.mxu0 0.0
  %6412 = vmatpush1.msra.mxu0 0.0
  %6413 = vmatprep.subr.mxu0 0.0
  %6414 = vmatpush1.msra.mxu0 0.0
  %6415 = vmatprep.subr.mxu0 0.0
  %6416 = vmatpush1.msra.mxu0 0.0
  %6417 = vmatprep.subr.mxu0 0.0
  %6418 = vmatpush1.msra.mxu0 0.0
  %6419 = vmatprep.subr.mxu0 0.0
  %6420 = vmatpush1.msra.mxu0 0.0
  %6421 = vmatprep.subr.mxu0 0.0
  %6422 = vmatpush1.msra.mxu0 0.0
  %6423 = vmatprep.subr.mxu0 0.0
  %6424 = vmatpush1.msra.mxu0 0.0
  %6425 = vmatprep.subr.mxu0 0.0
  %6426 = vmatpush1.msra.mxu0 0.0
  %6427 = vmatprep.subr.mxu0 0.0
  %6428 = vmatpush1.msra.mxu0 0.0
  %6429 = vmatprep.subr.mxu0 0.0
  %6430 = vmatpush1.msra.mxu0 0.0
  %6431 = vmatprep.subr.mxu0 0.0
  %6432 = vmatpush1.msra.mxu0 0.0
  %6433 = vmatprep.subr.mxu0 0.0
  %6434 = vmatpush1.msra.mxu0 0.0
  %6435 = vmatprep.subr.mxu0 0.0
  %6436 = vmatpush1.msra.mxu0 0.0
  %6437 = vmatprep.subr.mxu0 0.0
  %6438 = vmatpush1.msra.mxu0 0.0
  %6439 = vmatprep.subr.mxu0 0.0
  %6440 = vmatpush1.msra.mxu0 0.0
  %6441 = vmatprep.subr.mxu0 0.0
  %6442 = vmatpush1.msra.mxu0 0.0
  %6443 = vmatprep.subr.mxu0 0.0
  %6444 = vmatpush1.msra.mxu0 0.0
  %6445 = vmatprep.subr.mxu0 0.0
  %6446 = vmatpush1.msra.mxu0 0.0
  %6447 = vmatprep.subr.mxu0 0.0
  %6448 = vmatpush1.msra.mxu0 0.0
  %6449 = vmatprep.subr.mxu0 0.0
  %6450 = vmatpush1.msra.mxu0 0.0
  %6451 = vmatprep.subr.mxu0 0.0
  %6452 = vmatpush1.msra.mxu0 0.0
  %6453 = vmatprep.subr.mxu0 0.0
  %6454 = vmatpush1.msra.mxu0 0.0
  %6455 = vmatprep.subr.mxu0 0.0
  %6456 = vmatpush1.msra.mxu0 0.0
  %6457 = vmatprep.subr.mxu0 0.0
  %6458 = vmatpush1.msra.mxu0 0.0
  %6459 = vmatprep.subr.mxu0 0.0
  %6460 = vmatpush1.msra.mxu0 0.0
  %6461 = vmatprep.subr.mxu0 0.0
  %6462 = vmatpush1.msra.mxu0 0.0
  %6463 = vmatprep.subr.mxu0 0.0
  %6464 = vmatpush1.msra.mxu0 0.0
  %6465 = vmatprep.mubr.f32.mxu0 0.0
  %v6466 = vand.u32 %v6172, 4294901760
  %v6467 = vsub.f32 %v6172, %v6466
  %v6468 = vand.u32 %v6467, 4294901760
  %6469 = vmatmul.mubr.f32.gmra.mrb[0].mxu0 %v6468
  %v6470 = vpop.f32.mrb[0].mxu0
  %v6471 = vadd.f32 %v6397, %v6470
  %v6472 = vpop.f32.mrb[0].mxu0
  %6473 = vdwg.mxu0
  %6474 = vmatprep.subr.mxu0 0.0
  %v6475 = vand.u32 %v1946, 4294901760
  %v6476 = vsub.f32 %v1946, %v6475
  %v6477 = vand.u32 %v6476, 4294901760
  %6478 = vmatpush1.msra.mxu0 %v6477
  %6479 = vmatprep.subr.mxu0 0.0
  %6480 = vmatpush1.msra.mxu0 0.0
  %6481 = vmatprep.subr.mxu0 0.0
  %6482 = vmatpush1.msra.mxu0 0.0
  %6483 = vmatprep.subr.mxu0 0.0
  %6484 = vmatpush1.msra.mxu0 0.0
  %6485 = vmatprep.subr.mxu0 0.0
  %6486 = vmatpush1.msra.mxu0 0.0
  %6487 = vmatprep.subr.mxu0 0.0
  %6488 = vmatpush1.msra.mxu0 0.0
  %6489 = vmatprep.subr.mxu0 0.0
  %6490 = vmatpush1.msra.mxu0 0.0
  %6491 = vmatprep.subr.mxu0 0.0
  %6492 = vmatpush1.msra.mxu0 0.0
  %6493 = vmatprep.subr.mxu0 0.0
  %6494 = vmatpush1.msra.mxu0 0.0
  %6495 = vmatprep.subr.mxu0 0.0
  %6496 = vmatpush1.msra.mxu0 0.0
  %6497 = vmatprep.subr.mxu0 0.0
  %6498 = vmatpush1.msra.mxu0 0.0
  %6499 = vmatprep.subr.mxu0 0.0
  %6500 = vmatpush1.msra.mxu0 0.0
  %6501 = vmatprep.subr.mxu0 0.0
  %6502 = vmatpush1.msra.mxu0 0.0
  %6503 = vmatprep.subr.mxu0 0.0
  %6504 = vmatpush1.msra.mxu0 0.0
  %6505 = vmatprep.subr.mxu0 0.0
  %6506 = vmatpush1.msra.mxu0 0.0
  %6507 = vmatprep.subr.mxu0 0.0
  %6508 = vmatpush1.msra.mxu0 0.0
  %6509 = vmatprep.subr.mxu0 0.0
  %6510 = vmatpush1.msra.mxu0 0.0
  %6511 = vmatprep.subr.mxu0 0.0
  %6512 = vmatpush1.msra.mxu0 0.0
  %6513 = vmatprep.subr.mxu0 0.0
  %6514 = vmatpush1.msra.mxu0 0.0
  %6515 = vmatprep.subr.mxu0 0.0
  %6516 = vmatpush1.msra.mxu0 0.0
  %6517 = vmatprep.subr.mxu0 0.0
  %6518 = vmatpush1.msra.mxu0 0.0
  %6519 = vmatprep.subr.mxu0 0.0
  %6520 = vmatpush1.msra.mxu0 0.0
  %6521 = vmatprep.subr.mxu0 0.0
  %6522 = vmatpush1.msra.mxu0 0.0
  %6523 = vmatprep.subr.mxu0 0.0
  %6524 = vmatpush1.msra.mxu0 0.0
  %6525 = vmatprep.subr.mxu0 0.0
  %6526 = vmatpush1.msra.mxu0 0.0
  %6527 = vmatprep.subr.mxu0 0.0
  %6528 = vmatpush1.msra.mxu0 0.0
  %6529 = vmatprep.subr.mxu0 0.0
  %6530 = vmatpush1.msra.mxu0 0.0
  %6531 = vmatprep.subr.mxu0 0.0
  %6532 = vmatpush1.msra.mxu0 0.0
  %6533 = vmatprep.subr.mxu0 0.0
  %6534 = vmatpush1.msra.mxu0 0.0
  %6535 = vmatprep.subr.mxu0 0.0
  %6536 = vmatpush1.msra.mxu0 0.0
  %6537 = vmatprep.subr.mxu0 0.0
  %6538 = vmatpush1.msra.mxu0 0.0
  %6539 = vmatprep.subr.mxu0 0.0
  %6540 = vmatpush1.msra.mxu0 0.0
  %6541 = vmatprep.mubr.f32.mxu0 0.0
  %v6542 = vand.u32 %v6172, 4294901760
  %6543 = vmatmul.mubr.f32.gmra.mrb[0].mxu0 %v6542
  %v6544 = vpop.f32.mrb[0].mxu0
  %v6545 = vadd.f32 %v6471, %v6544
  %v6546 = vpop.f32.mrb[0].mxu0
  %6547 = vdwg.mxu0
  %6548 = vmatprep.subr.mxu0 0.0
  %v6549 = vand.u32 %v1946, 4294901760
  %6550 = vmatpush1.msra.mxu0 %v6549
  %6551 = vmatprep.subr.mxu0 0.0
  %6552 = vmatpush1.msra.mxu0 0.0
  %6553 = vmatprep.subr.mxu0 0.0
  %6554 = vmatpush1.msra.mxu0 0.0
  %6555 = vmatprep.subr.mxu0 0.0
  %6556 = vmatpush1.msra.mxu0 0.0
  %6557 = vmatprep.subr.mxu0 0.0
  %6558 = vmatpush1.msra.mxu0 0.0
  %6559 = vmatprep.subr.mxu0 0.0
  %6560 = vmatpush1.msra.mxu0 0.0
  %6561 = vmatprep.subr.mxu0 0.0
  %6562 = vmatpush1.msra.mxu0 0.0
  %6563 = vmatprep.subr.mxu0 0.0
  %6564 = vmatpush1.msra.mxu0 0.0
  %6565 = vmatprep.subr.mxu0 0.0
  %6566 = vmatpush1.msra.mxu0 0.0
  %6567 = vmatprep.subr.mxu0 0.0
  %6568 = vmatpush1.msra.mxu0 0.0
  %6569 = vmatprep.subr.mxu0 0.0
  %6570 = vmatpush1.msra.mxu0 0.0
  %6571 = vmatprep.subr.mxu0 0.0
  %6572 = vmatpush1.msra.mxu0 0.0
  %6573 = vmatprep.subr.mxu0 0.0
  %6574 = vmatpush1.msra.mxu0 0.0
  %6575 = vmatprep.subr.mxu0 0.0
  %6576 = vmatpush1.msra.mxu0 0.0
  %6577 = vmatprep.subr.mxu0 0.0
  %6578 = vmatpush1.msra.mxu0 0.0
  %6579 = vmatprep.subr.mxu0 0.0
  %6580 = vmatpush1.msra.mxu0 0.0
  %6581 = vmatprep.subr.mxu0 0.0
  %6582 = vmatpush1.msra.mxu0 0.0
  %6583 = vmatprep.subr.mxu0 0.0
  %6584 = vmatpush1.msra.mxu0 0.0
  %6585 = vmatprep.subr.mxu0 0.0
  %6586 = vmatpush1.msra.mxu0 0.0
  %6587 = vmatprep.subr.mxu0 0.0
  %6588 = vmatpush1.msra.mxu0 0.0
  %6589 = vmatprep.subr.mxu0 0.0
  %6590 = vmatpush1.msra.mxu0 0.0
  %6591 = vmatprep.subr.mxu0 0.0
  %6592 = vmatpush1.msra.mxu0 0.0
  %6593 = vmatprep.subr.mxu0 0.0
  %6594 = vmatpush1.msra.mxu0 0.0
  %6595 = vmatprep.subr.mxu0 0.0
  %6596 = vmatpush1.msra.mxu0 0.0
  %6597 = vmatprep.subr.mxu0 0.0
  %6598 = vmatpush1.msra.mxu0 0.0
  %6599 = vmatprep.subr.mxu0 0.0
  %6600 = vmatpush1.msra.mxu0 0.0
  %6601 = vmatprep.subr.mxu0 0.0
  %6602 = vmatpush1.msra.mxu0 0.0
  %6603 = vmatprep.subr.mxu0 0.0
  %6604 = vmatpush1.msra.mxu0 0.0
  %6605 = vmatprep.subr.mxu0 0.0
  %6606 = vmatpush1.msra.mxu0 0.0
  %6607 = vmatprep.subr.mxu0 0.0
  %6608 = vmatpush1.msra.mxu0 0.0
  %6609 = vmatprep.subr.mxu0 0.0
  %6610 = vmatpush1.msra.mxu0 0.0
  %6611 = vmatprep.subr.mxu0 0.0
  %6612 = vmatpush1.msra.mxu0 0.0
  %6613 = vmatprep.mubr.f32.mxu0 0.0
  %v6614 = vand.u32 %v6172, 4294901760
  %6615 = vmatmul.mubr.f32.gmra.mrb[0].mxu0 %v6614
  %v6616 = vpop.f32.mrb[0].mxu0
  %v6617 = vadd.f32 %v6545, %v6616
  %v6618 = vpop.f32.mrb[0].mxu0
  %6619 = vdwg.mxu0
  %v6621 = vsel %vm2017, %v5716, 0
  %6623 = vmatprep.subr.mxu0 0.0
  %v6624 = vand.u32 %v1947, 4294901760
  %6625 = vmatpush1.msra.mxu0 %v6624
  %6626 = vmatprep.subr.mxu0 0.0
  %6627 = vmatpush1.msra.mxu0 0.0
  %6628 = vmatprep.subr.mxu0 0.0
  %6629 = vmatpush1.msra.mxu0 0.0
  %6630 = vmatprep.subr.mxu0 0.0
  %6631 = vmatpush1.msra.mxu0 0.0
  %6632 = vmatprep.subr.mxu0 0.0
  %6633 = vmatpush1.msra.mxu0 0.0
  %6634 = vmatprep.subr.mxu0 0.0
  %6635 = vmatpush1.msra.mxu0 0.0
  %6636 = vmatprep.subr.mxu0 0.0
  %6637 = vmatpush1.msra.mxu0 0.0
  %6638 = vmatprep.subr.mxu0 0.0
  %6639 = vmatpush1.msra.mxu0 0.0
  %6640 = vmatprep.subr.mxu0 0.0
  %6641 = vmatpush1.msra.mxu0 0.0
  %6642 = vmatprep.subr.mxu0 0.0
  %6643 = vmatpush1.msra.mxu0 0.0
  %6644 = vmatprep.subr.mxu0 0.0
  %6645 = vmatpush1.msra.mxu0 0.0
  %6646 = vmatprep.subr.mxu0 0.0
  %6647 = vmatpush1.msra.mxu0 0.0
  %6648 = vmatprep.subr.mxu0 0.0
  %6649 = vmatpush1.msra.mxu0 0.0
  %6650 = vmatprep.subr.mxu0 0.0
  %6651 = vmatpush1.msra.mxu0 0.0
  %6652 = vmatprep.subr.mxu0 0.0
  %6653 = vmatpush1.msra.mxu0 0.0
  %6654 = vmatprep.subr.mxu0 0.0
  %6655 = vmatpush1.msra.mxu0 0.0
  %6656 = vmatprep.subr.mxu0 0.0
  %6657 = vmatpush1.msra.mxu0 0.0
  %6658 = vmatprep.subr.mxu0 0.0
  %6659 = vmatpush1.msra.mxu0 0.0
  %6660 = vmatprep.subr.mxu0 0.0
  %6661 = vmatpush1.msra.mxu0 0.0
  %6662 = vmatprep.subr.mxu0 0.0
  %6663 = vmatpush1.msra.mxu0 0.0
  %6664 = vmatprep.subr.mxu0 0.0
  %6665 = vmatpush1.msra.mxu0 0.0
  %6666 = vmatprep.subr.mxu0 0.0
  %6667 = vmatpush1.msra.mxu0 0.0
  %6668 = vmatprep.subr.mxu0 0.0
  %6669 = vmatpush1.msra.mxu0 0.0
  %6670 = vmatprep.subr.mxu0 0.0
  %6671 = vmatpush1.msra.mxu0 0.0
  %6672 = vmatprep.subr.mxu0 0.0
  %6673 = vmatpush1.msra.mxu0 0.0
  %6674 = vmatprep.subr.mxu0 0.0
  %6675 = vmatpush1.msra.mxu0 0.0
  %6676 = vmatprep.subr.mxu0 0.0
  %6677 = vmatpush1.msra.mxu0 0.0
  %6678 = vmatprep.subr.mxu0 0.0
  %6679 = vmatpush1.msra.mxu0 0.0
  %6680 = vmatprep.subr.mxu0 0.0
  %6681 = vmatpush1.msra.mxu0 0.0
  %6682 = vmatprep.subr.mxu0 0.0
  %6683 = vmatpush1.msra.mxu0 0.0
  %6684 = vmatprep.subr.mxu0 0.0
  %6685 = vmatpush1.msra.mxu0 0.0
  %6686 = vmatprep.subr.mxu0 0.0
  %6687 = vmatpush1.msra.mxu0 0.0
  %6688 = vmatprep.mubr.f32.mxu0 0.0
  %v6689 = vand.u32 %v6621, 4294901760
  %v6690 = vsub.f32 %v6621, %v6689
  %v6691 = vand.u32 %v6690, 4294901760
  %v6692 = vsub.f32 %v6690, %v6691
  %v6693 = vand.u32 %v6692, 4294901760
  %6694 = vmatmul.mubr.f32.gmra.mrb[0].mxu0 %v6693
  %v6695 = vpop.f32.mrb[0].mxu0
  %v6696 = vadd.f32 0.0, %v6695
  %v6697 = vpop.f32.mrb[0].mxu0
  %6698 = vdwg.mxu0
  %6699 = vmatprep.subr.mxu0 0.0
  %v6700 = vand.u32 %v1947, 4294901760
  %v6701 = vsub.f32 %v1947, %v6700
  %v6702 = vand.u32 %v6701, 4294901760
  %v6703 = vsub.f32 %v6701, %v6702
  %v6704 = vand.u32 %v6703, 4294901760
  %6705 = vmatpush1.msra.mxu0 %v6704
  %6706 = vmatprep.subr.mxu0 0.0
  %6707 = vmatpush1.msra.mxu0 0.0
  %6708 = vmatprep.subr.mxu0 0.0
  %6709 = vmatpush1.msra.mxu0 0.0
  %6710 = vmatprep.subr.mxu0 0.0
  %6711 = vmatpush1.msra.mxu0 0.0
  %6712 = vmatprep.subr.mxu0 0.0
  %6713 = vmatpush1.msra.mxu0 0.0
  %6714 = vmatprep.subr.mxu0 0.0
  %6715 = vmatpush1.msra.mxu0 0.0
  %6716 = vmatprep.subr.mxu0 0.0
  %6717 = vmatpush1.msra.mxu0 0.0
  %6718 = vmatprep.subr.mxu0 0.0
  %6719 = vmatpush1.msra.mxu0 0.0
  %6720 = vmatprep.subr.mxu0 0.0
  %6721 = vmatpush1.msra.mxu0 0.0
  %6722 = vmatprep.subr.mxu0 0.0
  %6723 = vmatpush1.msra.mxu0 0.0
  %6724 = vmatprep.subr.mxu0 0.0
  %6725 = vmatpush1.msra.mxu0 0.0
  %6726 = vmatprep.subr.mxu0 0.0
  %6727 = vmatpush1.msra.mxu0 0.0
  %6728 = vmatprep.subr.mxu0 0.0
  %6729 = vmatpush1.msra.mxu0 0.0
  %6730 = vmatprep.subr.mxu0 0.0
  %6731 = vmatpush1.msra.mxu0 0.0
  %6732 = vmatprep.subr.mxu0 0.0
  %6733 = vmatpush1.msra.mxu0 0.0
  %6734 = vmatprep.subr.mxu0 0.0
  %6735 = vmatpush1.msra.mxu0 0.0
  %6736 = vmatprep.subr.mxu0 0.0
  %6737 = vmatpush1.msra.mxu0 0.0
  %6738 = vmatprep.subr.mxu0 0.0
  %6739 = vmatpush1.msra.mxu0 0.0
  %6740 = vmatprep.subr.mxu0 0.0
  %6741 = vmatpush1.msra.mxu0 0.0
  %6742 = vmatprep.subr.mxu0 0.0
  %6743 = vmatpush1.msra.mxu0 0.0
  %6744 = vmatprep.subr.mxu0 0.0
  %6745 = vmatpush1.msra.mxu0 0.0
  %6746 = vmatprep.subr.mxu0 0.0
  %6747 = vmatpush1.msra.mxu0 0.0
  %6748 = vmatprep.subr.mxu0 0.0
  %6749 = vmatpush1.msra.mxu0 0.0
  %6750 = vmatprep.subr.mxu0 0.0
  %6751 = vmatpush1.msra.mxu0 0.0
  %6752 = vmatprep.subr.mxu0 0.0
  %6753 = vmatpush1.msra.mxu0 0.0
  %6754 = vmatprep.subr.mxu0 0.0
  %6755 = vmatpush1.msra.mxu0 0.0
  %6756 = vmatprep.subr.mxu0 0.0
  %6757 = vmatpush1.msra.mxu0 0.0
  %6758 = vmatprep.subr.mxu0 0.0
  %6759 = vmatpush1.msra.mxu0 0.0
  %6760 = vmatprep.subr.mxu0 0.0
  %6761 = vmatpush1.msra.mxu0 0.0
  %6762 = vmatprep.subr.mxu0 0.0
  %6763 = vmatpush1.msra.mxu0 0.0
  %6764 = vmatprep.subr.mxu0 0.0
  %6765 = vmatpush1.msra.mxu0 0.0
  %6766 = vmatprep.subr.mxu0 0.0
  %6767 = vmatpush1.msra.mxu0 0.0
  %6768 = vmatprep.mubr.f32.mxu0 0.0
  %v6769 = vand.u32 %v6621, 4294901760
  %6770 = vmatmul.mubr.f32.gmra.mrb[0].mxu0 %v6769
  %v6771 = vpop.f32.mrb[0].mxu0
  %v6772 = vadd.f32 %v6696, %v6771
  %v6773 = vpop.f32.mrb[0].mxu0
  %6774 = vdwg.mxu0
  %6775 = vmatprep.subr.mxu0 0.0
  %v6776 = vand.u32 %v1947, 4294901760
  %v6777 = vsub.f32 %v1947, %v6776
  %6778 = vmatpush1.msra.mxu0 %v6777
  %6779 = vmatprep.subr.mxu0 0.0
  %6780 = vmatpush1.msra.mxu0 0.0
  %6781 = vmatprep.subr.mxu0 0.0
  %6782 = vmatpush1.msra.mxu0 0.0
  %6783 = vmatprep.subr.mxu0 0.0
  %6784 = vmatpush1.msra.mxu0 0.0
  %6785 = vmatprep.subr.mxu0 0.0
  %6786 = vmatpush1.msra.mxu0 0.0
  %6787 = vmatprep.subr.mxu0 0.0
  %6788 = vmatpush1.msra.mxu0 0.0
  %6789 = vmatprep.subr.mxu0 0.0
  %6790 = vmatpush1.msra.mxu0 0.0
  %6791 = vmatprep.subr.mxu0 0.0
  %6792 = vmatpush1.msra.mxu0 0.0
  %6793 = vmatprep.subr.mxu0 0.0
  %6794 = vmatpush1.msra.mxu0 0.0
  %6795 = vmatprep.subr.mxu0 0.0
  %6796 = vmatpush1.msra.mxu0 0.0
  %6797 = vmatprep.subr.mxu0 0.0
  %6798 = vmatpush1.msra.mxu0 0.0
  %6799 = vmatprep.subr.mxu0 0.0
  %6800 = vmatpush1.msra.mxu0 0.0
  %6801 = vmatprep.subr.mxu0 0.0
  %6802 = vmatpush1.msra.mxu0 0.0
  %6803 = vmatprep.subr.mxu0 0.0
  %6804 = vmatpush1.msra.mxu0 0.0
  %6805 = vmatprep.subr.mxu0 0.0
  %6806 = vmatpush1.msra.mxu0 0.0
  %6807 = vmatprep.subr.mxu0 0.0
  %6808 = vmatpush1.msra.mxu0 0.0
  %6809 = vmatprep.subr.mxu0 0.0
  %6810 = vmatpush1.msra.mxu0 0.0
  %6811 = vmatprep.subr.mxu0 0.0
  %6812 = vmatpush1.msra.mxu0 0.0
  %6813 = vmatprep.subr.mxu0 0.0
  %6814 = vmatpush1.msra.mxu0 0.0
  %6815 = vmatprep.subr.mxu0 0.0
  %6816 = vmatpush1.msra.mxu0 0.0
  %6817 = vmatprep.subr.mxu0 0.0
  %6818 = vmatpush1.msra.mxu0 0.0
  %6819 = vmatprep.subr.mxu0 0.0
  %6820 = vmatpush1.msra.mxu0 0.0
  %6821 = vmatprep.subr.mxu0 0.0
  %6822 = vmatpush1.msra.mxu0 0.0
  %6823 = vmatprep.subr.mxu0 0.0
  %6824 = vmatpush1.msra.mxu0 0.0
  %6825 = vmatprep.subr.mxu0 0.0
  %6826 = vmatpush1.msra.mxu0 0.0
  %6827 = vmatprep.subr.mxu0 0.0
  %6828 = vmatpush1.msra.mxu0 0.0
  %6829 = vmatprep.subr.mxu0 0.0
  %6830 = vmatpush1.msra.mxu0 0.0
  %6831 = vmatprep.subr.mxu0 0.0
  %6832 = vmatpush1.msra.mxu0 0.0
  %6833 = vmatprep.subr.mxu0 0.0
  %6834 = vmatpush1.msra.mxu0 0.0
  %6835 = vmatprep.subr.mxu0 0.0
  %6836 = vmatpush1.msra.mxu0 0.0
  %6837 = vmatprep.subr.mxu0 0.0
  %6838 = vmatpush1.msra.mxu0 0.0
  %6839 = vmatprep.subr.mxu0 0.0
  %6840 = vmatpush1.msra.mxu0 0.0
  %6841 = vmatprep.mubr.f32.mxu0 0.0
  %v6842 = vand.u32 %v6621, 4294901760
  %v6843 = vsub.f32 %v6621, %v6842
  %6844 = vmatmul.mubr.f32.gmra.mrb[0].mxu0 %v6843
  %v6845 = vpop.f32.mrb[0].mxu0
  %v6846 = vadd.f32 %v6772, %v6845
  %v6847 = vpop.f32.mrb[0].mxu0
  %6848 = vdwg.mxu0
  %6849 = vmatprep.subr.mxu0 0.0
  %v6850 = vand.u32 %v1947, 4294901760
  %6851 = vmatpush1.msra.mxu0 %v6850
  %6852 = vmatprep.subr.mxu0 0.0
  %6853 = vmatpush1.msra.mxu0 0.0
  %6854 = vmatprep.subr.mxu0 0.0
  %6855 = vmatpush1.msra.mxu0 0.0
  %6856 = vmatprep.subr.mxu0 0.0
  %6857 = vmatpush1.msra.mxu0 0.0
  %6858 = vmatprep.subr.mxu0 0.0
  %6859 = vmatpush1.msra.mxu0 0.0
  %6860 = vmatprep.subr.mxu0 0.0
  %6861 = vmatpush1.msra.mxu0 0.0
  %6862 = vmatprep.subr.mxu0 0.0
  %6863 = vmatpush1.msra.mxu0 0.0
  %6864 = vmatprep.subr.mxu0 0.0
  %6865 = vmatpush1.msra.mxu0 0.0
  %6866 = vmatprep.subr.mxu0 0.0
  %6867 = vmatpush1.msra.mxu0 0.0
  %6868 = vmatprep.subr.mxu0 0.0
  %6869 = vmatpush1.msra.mxu0 0.0
  %6870 = vmatprep.subr.mxu0 0.0
  %6871 = vmatpush1.msra.mxu0 0.0
  %6872 = vmatprep.subr.mxu0 0.0
  %6873 = vmatpush1.msra.mxu0 0.0
  %6874 = vmatprep.subr.mxu0 0.0
  %6875 = vmatpush1.msra.mxu0 0.0
  %6876 = vmatprep.subr.mxu0 0.0
  %6877 = vmatpush1.msra.mxu0 0.0
  %6878 = vmatprep.subr.mxu0 0.0
  %6879 = vmatpush1.msra.mxu0 0.0
  %6880 = vmatprep.subr.mxu0 0.0
  %6881 = vmatpush1.msra.mxu0 0.0
  %6882 = vmatprep.subr.mxu0 0.0
  %6883 = vmatpush1.msra.mxu0 0.0
  %6884 = vmatprep.subr.mxu0 0.0
  %6885 = vmatpush1.msra.mxu0 0.0
  %6886 = vmatprep.subr.mxu0 0.0
  %6887 = vmatpush1.msra.mxu0 0.0
  %6888 = vmatprep.subr.mxu0 0.0
  %6889 = vmatpush1.msra.mxu0 0.0
  %6890 = vmatprep.subr.mxu0 0.0
  %6891 = vmatpush1.msra.mxu0 0.0
  %6892 = vmatprep.subr.mxu0 0.0
  %6893 = vmatpush1.msra.mxu0 0.0
  %6894 = vmatprep.subr.mxu0 0.0
  %6895 = vmatpush1.msra.mxu0 0.0
  %6896 = vmatprep.subr.mxu0 0.0
  %6897 = vmatpush1.msra.mxu0 0.0
  %6898 = vmatprep.subr.mxu0 0.0
  %6899 = vmatpush1.msra.mxu0 0.0
  %6900 = vmatprep.subr.mxu0 0.0
  %6901 = vmatpush1.msra.mxu0 0.0
  %6902 = vmatprep.subr.mxu0 0.0
  %6903 = vmatpush1.msra.mxu0 0.0
  %6904 = vmatprep.subr.mxu0 0.0
  %6905 = vmatpush1.msra.mxu0 0.0
  %6906 = vmatprep.subr.mxu0 0.0
  %6907 = vmatpush1.msra.mxu0 0.0
  %6908 = vmatprep.subr.mxu0 0.0
  %6909 = vmatpush1.msra.mxu0 0.0
  %6910 = vmatprep.subr.mxu0 0.0
  %6911 = vmatpush1.msra.mxu0 0.0
  %6912 = vmatprep.subr.mxu0 0.0
  %6913 = vmatpush1.msra.mxu0 0.0
  %6914 = vmatprep.mubr.f32.mxu0 0.0
  %v6915 = vand.u32 %v6621, 4294901760
  %v6916 = vsub.f32 %v6621, %v6915
  %v6917 = vand.u32 %v6916, 4294901760
  %6918 = vmatmul.mubr.f32.gmra.mrb[0].mxu0 %v6917
  %v6919 = vpop.f32.mrb[0].mxu0
  %v6920 = vadd.f32 %v6846, %v6919
  %v6921 = vpop.f32.mrb[0].mxu0
  %6922 = vdwg.mxu0
  %6923 = vmatprep.subr.mxu0 0.0
  %v6924 = vand.u32 %v1947, 4294901760
  %v6925 = vsub.f32 %v1947, %v6924
  %v6926 = vand.u32 %v6925, 4294901760
  %6927 = vmatpush1.msra.mxu0 %v6926
  %6928 = vmatprep.subr.mxu0 0.0
  %6929 = vmatpush1.msra.mxu0 0.0
  %6930 = vmatprep.subr.mxu0 0.0
  %6931 = vmatpush1.msra.mxu0 0.0
  %6932 = vmatprep.subr.mxu0 0.0
  %6933 = vmatpush1.msra.mxu0 0.0
  %6934 = vmatprep.subr.mxu0 0.0
  %6935 = vmatpush1.msra.mxu0 0.0
  %6936 = vmatprep.subr.mxu0 0.0
  %6937 = vmatpush1.msra.mxu0 0.0
  %6938 = vmatprep.subr.mxu0 0.0
  %6939 = vmatpush1.msra.mxu0 0.0
  %6940 = vmatprep.subr.mxu0 0.0
  %6941 = vmatpush1.msra.mxu0 0.0
  %6942 = vmatprep.subr.mxu0 0.0
  %6943 = vmatpush1.msra.mxu0 0.0
  %6944 = vmatprep.subr.mxu0 0.0
  %6945 = vmatpush1.msra.mxu0 0.0
  %6946 = vmatprep.subr.mxu0 0.0
  %6947 = vmatpush1.msra.mxu0 0.0
  %6948 = vmatprep.subr.mxu0 0.0
  %6949 = vmatpush1.msra.mxu0 0.0
  %6950 = vmatprep.subr.mxu0 0.0
  %6951 = vmatpush1.msra.mxu0 0.0
  %6952 = vmatprep.subr.mxu0 0.0
  %6953 = vmatpush1.msra.mxu0 0.0
  %6954 = vmatprep.subr.mxu0 0.0
  %6955 = vmatpush1.msra.mxu0 0.0
  %6956 = vmatprep.subr.mxu0 0.0
  %6957 = vmatpush1.msra.mxu0 0.0
  %6958 = vmatprep.subr.mxu0 0.0
  %6959 = vmatpush1.msra.mxu0 0.0
  %6960 = vmatprep.subr.mxu0 0.0
  %6961 = vmatpush1.msra.mxu0 0.0
  %6962 = vmatprep.subr.mxu0 0.0
  %6963 = vmatpush1.msra.mxu0 0.0
  %6964 = vmatprep.subr.mxu0 0.0
  %6965 = vmatpush1.msra.mxu0 0.0
  %6966 = vmatprep.subr.mxu0 0.0
  %6967 = vmatpush1.msra.mxu0 0.0
  %6968 = vmatprep.subr.mxu0 0.0
  %6969 = vmatpush1.msra.mxu0 0.0
  %6970 = vmatprep.subr.mxu0 0.0
  %6971 = vmatpush1.msra.mxu0 0.0
  %6972 = vmatprep.subr.mxu0 0.0
  %6973 = vmatpush1.msra.mxu0 0.0
  %6974 = vmatprep.subr.mxu0 0.0
  %6975 = vmatpush1.msra.mxu0 0.0
  %6976 = vmatprep.subr.mxu0 0.0
  %6977 = vmatpush1.msra.mxu0 0.0
  %6978 = vmatprep.subr.mxu0 0.0
  %6979 = vmatpush1.msra.mxu0 0.0
  %6980 = vmatprep.subr.mxu0 0.0
  %6981 = vmatpush1.msra.mxu0 0.0
  %6982 = vmatprep.subr.mxu0 0.0
  %6983 = vmatpush1.msra.mxu0 0.0
  %6984 = vmatprep.subr.mxu0 0.0
  %6985 = vmatpush1.msra.mxu0 0.0
  %6986 = vmatprep.subr.mxu0 0.0
  %6987 = vmatpush1.msra.mxu0 0.0
  %6988 = vmatprep.subr.mxu0 0.0
  %6989 = vmatpush1.msra.mxu0 0.0
  %6990 = vmatprep.mubr.f32.mxu0 0.0
  %v6991 = vand.u32 %v6621, 4294901760
  %6992 = vmatmul.mubr.f32.gmra.mrb[0].mxu0 %v6991
  %v6993 = vpop.f32.mrb[0].mxu0
  %v6994 = vadd.f32 %v6920, %v6993
  %v6995 = vpop.f32.mrb[0].mxu0
  %6996 = vdwg.mxu0
  %6997 = vmatprep.subr.mxu0 0.0
  %v6998 = vand.u32 %v1947, 4294901760
  %6999 = vmatpush1.msra.mxu0 %v6998
  %7000 = vmatprep.subr.mxu0 0.0
  %7001 = vmatpush1.msra.mxu0 0.0
  %7002 = vmatprep.subr.mxu0 0.0
  %7003 = vmatpush1.msra.mxu0 0.0
  %7004 = vmatprep.subr.mxu0 0.0
  %7005 = vmatpush1.msra.mxu0 0.0
  %7006 = vmatprep.subr.mxu0 0.0
  %7007 = vmatpush1.msra.mxu0 0.0
  %7008 = vmatprep.subr.mxu0 0.0
  %7009 = vmatpush1.msra.mxu0 0.0
  %7010 = vmatprep.subr.mxu0 0.0
  %7011 = vmatpush1.msra.mxu0 0.0
  %7012 = vmatprep.subr.mxu0 0.0
  %7013 = vmatpush1.msra.mxu0 0.0
  %7014 = vmatprep.subr.mxu0 0.0
  %7015 = vmatpush1.msra.mxu0 0.0
  %7016 = vmatprep.subr.mxu0 0.0
  %7017 = vmatpush1.msra.mxu0 0.0
  %7018 = vmatprep.subr.mxu0 0.0
  %7019 = vmatpush1.msra.mxu0 0.0
  %7020 = vmatprep.subr.mxu0 0.0
  %7021 = vmatpush1.msra.mxu0 0.0
  %7022 = vmatprep.subr.mxu0 0.0
  %7023 = vmatpush1.msra.mxu0 0.0
  %7024 = vmatprep.subr.mxu0 0.0
  %7025 = vmatpush1.msra.mxu0 0.0
  %7026 = vmatprep.subr.mxu0 0.0
  %7027 = vmatpush1.msra.mxu0 0.0
  %7028 = vmatprep.subr.mxu0 0.0
  %7029 = vmatpush1.msra.mxu0 0.0
  %7030 = vmatprep.subr.mxu0 0.0
  %7031 = vmatpush1.msra.mxu0 0.0
  %7032 = vmatprep.subr.mxu0 0.0
  %7033 = vmatpush1.msra.mxu0 0.0
  %7034 = vmatprep.subr.mxu0 0.0
  %7035 = vmatpush1.msra.mxu0 0.0
  %7036 = vmatprep.subr.mxu0 0.0
  %7037 = vmatpush1.msra.mxu0 0.0
  %7038 = vmatprep.subr.mxu0 0.0
  %7039 = vmatpush1.msra.mxu0 0.0
  %7040 = vmatprep.subr.mxu0 0.0
  %7041 = vmatpush1.msra.mxu0 0.0
  %7042 = vmatprep.subr.mxu0 0.0
  %7043 = vmatpush1.msra.mxu0 0.0
  %7044 = vmatprep.subr.mxu0 0.0
  %7045 = vmatpush1.msra.mxu0 0.0
  %7046 = vmatprep.subr.mxu0 0.0
  %7047 = vmatpush1.msra.mxu0 0.0
  %7048 = vmatprep.subr.mxu0 0.0
  %7049 = vmatpush1.msra.mxu0 0.0
  %7050 = vmatprep.subr.mxu0 0.0
  %7051 = vmatpush1.msra.mxu0 0.0
  %7052 = vmatprep.subr.mxu0 0.0
  %7053 = vmatpush1.msra.mxu0 0.0
  %7054 = vmatprep.subr.mxu0 0.0
  %7055 = vmatpush1.msra.mxu0 0.0
  %7056 = vmatprep.subr.mxu0 0.0
  %7057 = vmatpush1.msra.mxu0 0.0
  %7058 = vmatprep.subr.mxu0 0.0
  %7059 = vmatpush1.msra.mxu0 0.0
  %7060 = vmatprep.subr.mxu0 0.0
  %7061 = vmatpush1.msra.mxu0 0.0
  %7062 = vmatprep.mubr.f32.mxu0 0.0
  %v7063 = vand.u32 %v6621, 4294901760
  %7064 = vmatmul.mubr.f32.gmra.mrb[0].mxu0 %v7063
  %v7065 = vpop.f32.mrb[0].mxu0
  %v7066 = vadd.f32 %v6994, %v7065
  %v7067 = vpop.f32.mrb[0].mxu0
  %7068 = vdwg.mxu0
  %v7070 = vsel %vm2017, %v5717, 0
  %7072 = vmatprep.subr.mxu0 0.0
  %v7073 = vand.u32 %v1948, 4294901760
  %7074 = vmatpush1.msra.mxu0 %v7073
  %7075 = vmatprep.subr.mxu0 0.0
  %7076 = vmatpush1.msra.mxu0 0.0
  %7077 = vmatprep.subr.mxu0 0.0
  %7078 = vmatpush1.msra.mxu0 0.0
  %7079 = vmatprep.subr.mxu0 0.0
  %7080 = vmatpush1.msra.mxu0 0.0
  %7081 = vmatprep.subr.mxu0 0.0
  %7082 = vmatpush1.msra.mxu0 0.0
  %7083 = vmatprep.subr.mxu0 0.0
  %7084 = vmatpush1.msra.mxu0 0.0
  %7085 = vmatprep.subr.mxu0 0.0
  %7086 = vmatpush1.msra.mxu0 0.0
  %7087 = vmatprep.subr.mxu0 0.0
  %7088 = vmatpush1.msra.mxu0 0.0
  %7089 = vmatprep.subr.mxu0 0.0
  %7090 = vmatpush1.msra.mxu0 0.0
  %7091 = vmatprep.subr.mxu0 0.0
  %7092 = vmatpush1.msra.mxu0 0.0
  %7093 = vmatprep.subr.mxu0 0.0
  %7094 = vmatpush1.msra.mxu0 0.0
  %7095 = vmatprep.subr.mxu0 0.0
  %7096 = vmatpush1.msra.mxu0 0.0
  %7097 = vmatprep.subr.mxu0 0.0
  %7098 = vmatpush1.msra.mxu0 0.0
  %7099 = vmatprep.subr.mxu0 0.0
  %7100 = vmatpush1.msra.mxu0 0.0
  %7101 = vmatprep.subr.mxu0 0.0
  %7102 = vmatpush1.msra.mxu0 0.0
  %7103 = vmatprep.subr.mxu0 0.0
  %7104 = vmatpush1.msra.mxu0 0.0
  %7105 = vmatprep.subr.mxu0 0.0
  %7106 = vmatpush1.msra.mxu0 0.0
  %7107 = vmatprep.subr.mxu0 0.0
  %7108 = vmatpush1.msra.mxu0 0.0
  %7109 = vmatprep.subr.mxu0 0.0
  %7110 = vmatpush1.msra.mxu0 0.0
  %7111 = vmatprep.subr.mxu0 0.0
  %7112 = vmatpush1.msra.mxu0 0.0
  %7113 = vmatprep.subr.mxu0 0.0
  %7114 = vmatpush1.msra.mxu0 0.0
  %7115 = vmatprep.subr.mxu0 0.0
  %7116 = vmatpush1.msra.mxu0 0.0
  %7117 = vmatprep.subr.mxu0 0.0
  %7118 = vmatpush1.msra.mxu0 0.0
  %7119 = vmatprep.subr.mxu0 0.0
  %7120 = vmatpush1.msra.mxu0 0.0
  %7121 = vmatprep.subr.mxu0 0.0
  %7122 = vmatpush1.msra.mxu0 0.0
  %7123 = vmatprep.subr.mxu0 0.0
  %7124 = vmatpush1.msra.mxu0 0.0
  %7125 = vmatprep.subr.mxu0 0.0
  %7126 = vmatpush1.msra.mxu0 0.0
  %7127 = vmatprep.subr.mxu0 0.0
  %7128 = vmatpush1.msra.mxu0 0.0
  %7129 = vmatprep.subr.mxu0 0.0
  %7130 = vmatpush1.msra.mxu0 0.0
  %7131 = vmatprep.subr.mxu0 0.0
  %7132 = vmatpush1.msra.mxu0 0.0
  %7133 = vmatprep.subr.mxu0 0.0
  %7134 = vmatpush1.msra.mxu0 0.0
  %7135 = vmatprep.subr.mxu0 0.0
  %7136 = vmatpush1.msra.mxu0 0.0
  %7137 = vmatprep.mubr.f32.mxu0 0.0
  %v7138 = vand.u32 %v7070, 4294901760
  %v7139 = vsub.f32 %v7070, %v7138
  %v7140 = vand.u32 %v7139, 4294901760
  %v7141 = vsub.f32 %v7139, %v7140
  %v7142 = vand.u32 %v7141, 4294901760
  %7143 = vmatmul.mubr.f32.gmra.mrb[0].mxu0 %v7142
  %v7144 = vpop.f32.mrb[0].mxu0
  %v7145 = vadd.f32 0.0, %v7144
  %v7146 = vpop.f32.mrb[0].mxu0
  %7147 = vdwg.mxu0
  %7148 = vmatprep.subr.mxu0 0.0
  %v7149 = vand.u32 %v1948, 4294901760
  %v7150 = vsub.f32 %v1948, %v7149
  %v7151 = vand.u32 %v7150, 4294901760
  %v7152 = vsub.f32 %v7150, %v7151
  %v7153 = vand.u32 %v7152, 4294901760
  %7154 = vmatpush1.msra.mxu0 %v7153
  %7155 = vmatprep.subr.mxu0 0.0
  %7156 = vmatpush1.msra.mxu0 0.0
  %7157 = vmatprep.subr.mxu0 0.0
  %7158 = vmatpush1.msra.mxu0 0.0
  %7159 = vmatprep.subr.mxu0 0.0
  %7160 = vmatpush1.msra.mxu0 0.0
  %7161 = vmatprep.subr.mxu0 0.0
  %7162 = vmatpush1.msra.mxu0 0.0
  %7163 = vmatprep.subr.mxu0 0.0
  %7164 = vmatpush1.msra.mxu0 0.0
  %7165 = vmatprep.subr.mxu0 0.0
  %7166 = vmatpush1.msra.mxu0 0.0
  %7167 = vmatprep.subr.mxu0 0.0
  %7168 = vmatpush1.msra.mxu0 0.0
  %7169 = vmatprep.subr.mxu0 0.0
  %7170 = vmatpush1.msra.mxu0 0.0
  %7171 = vmatprep.subr.mxu0 0.0
  %7172 = vmatpush1.msra.mxu0 0.0
  %7173 = vmatprep.subr.mxu0 0.0
  %7174 = vmatpush1.msra.mxu0 0.0
  %7175 = vmatprep.subr.mxu0 0.0
  %7176 = vmatpush1.msra.mxu0 0.0
  %7177 = vmatprep.subr.mxu0 0.0
  %7178 = vmatpush1.msra.mxu0 0.0
  %7179 = vmatprep.subr.mxu0 0.0
  %7180 = vmatpush1.msra.mxu0 0.0
  %7181 = vmatprep.subr.mxu0 0.0
  %7182 = vmatpush1.msra.mxu0 0.0
  %7183 = vmatprep.subr.mxu0 0.0
  %7184 = vmatpush1.msra.mxu0 0.0
  %7185 = vmatprep.subr.mxu0 0.0
  %7186 = vmatpush1.msra.mxu0 0.0
  %7187 = vmatprep.subr.mxu0 0.0
  %7188 = vmatpush1.msra.mxu0 0.0
  %7189 = vmatprep.subr.mxu0 0.0
  %7190 = vmatpush1.msra.mxu0 0.0
  %7191 = vmatprep.subr.mxu0 0.0
  %7192 = vmatpush1.msra.mxu0 0.0
  %7193 = vmatprep.subr.mxu0 0.0
  %7194 = vmatpush1.msra.mxu0 0.0
  %7195 = vmatprep.subr.mxu0 0.0
  %7196 = vmatpush1.msra.mxu0 0.0
  %7197 = vmatprep.subr.mxu0 0.0
  %7198 = vmatpush1.msra.mxu0 0.0
  %7199 = vmatprep.subr.mxu0 0.0
  %7200 = vmatpush1.msra.mxu0 0.0
  %7201 = vmatprep.subr.mxu0 0.0
  %7202 = vmatpush1.msra.mxu0 0.0
  %7203 = vmatprep.subr.mxu0 0.0
  %7204 = vmatpush1.msra.mxu0 0.0
  %7205 = vmatprep.subr.mxu0 0.0
  %7206 = vmatpush1.msra.mxu0 0.0
  %7207 = vmatprep.subr.mxu0 0.0
  %7208 = vmatpush1.msra.mxu0 0.0
  %7209 = vmatprep.subr.mxu0 0.0
  %7210 = vmatpush1.msra.mxu0 0.0
  %7211 = vmatprep.subr.mxu0 0.0
  %7212 = vmatpush1.msra.mxu0 0.0
  %7213 = vmatprep.subr.mxu0 0.0
  %7214 = vmatpush1.msra.mxu0 0.0
  %7215 = vmatprep.subr.mxu0 0.0
  %7216 = vmatpush1.msra.mxu0 0.0
  %7217 = vmatprep.mubr.f32.mxu0 0.0
  %v7218 = vand.u32 %v7070, 4294901760
  %7219 = vmatmul.mubr.f32.gmra.mrb[0].mxu0 %v7218
  %v7220 = vpop.f32.mrb[0].mxu0
  %v7221 = vadd.f32 %v7145, %v7220
  %v7222 = vpop.f32.mrb[0].mxu0
  %7223 = vdwg.mxu0
  %7224 = vmatprep.subr.mxu0 0.0
  %v7225 = vand.u32 %v1948, 4294901760
  %v7226 = vsub.f32 %v1948, %v7225
  %7227 = vmatpush1.msra.mxu0 %v7226
  %7228 = vmatprep.subr.mxu0 0.0
  %7229 = vmatpush1.msra.mxu0 0.0
  %7230 = vmatprep.subr.mxu0 0.0
  %7231 = vmatpush1.msra.mxu0 0.0
  %7232 = vmatprep.subr.mxu0 0.0
  %7233 = vmatpush1.msra.mxu0 0.0
  %7234 = vmatprep.subr.mxu0 0.0
  %7235 = vmatpush1.msra.mxu0 0.0
  %7236 = vmatprep.subr.mxu0 0.0
  %7237 = vmatpush1.msra.mxu0 0.0
  %7238 = vmatprep.subr.mxu0 0.0
  %7239 = vmatpush1.msra.mxu0 0.0
  %7240 = vmatprep.subr.mxu0 0.0
  %7241 = vmatpush1.msra.mxu0 0.0
  %7242 = vmatprep.subr.mxu0 0.0
  %7243 = vmatpush1.msra.mxu0 0.0
  %7244 = vmatprep.subr.mxu0 0.0
  %7245 = vmatpush1.msra.mxu0 0.0
  %7246 = vmatprep.subr.mxu0 0.0
  %7247 = vmatpush1.msra.mxu0 0.0
  %7248 = vmatprep.subr.mxu0 0.0
  %7249 = vmatpush1.msra.mxu0 0.0
  %7250 = vmatprep.subr.mxu0 0.0
  %7251 = vmatpush1.msra.mxu0 0.0
  %7252 = vmatprep.subr.mxu0 0.0
  %7253 = vmatpush1.msra.mxu0 0.0
  %7254 = vmatprep.subr.mxu0 0.0
  %7255 = vmatpush1.msra.mxu0 0.0
  %7256 = vmatprep.subr.mxu0 0.0
  %7257 = vmatpush1.msra.mxu0 0.0
  %7258 = vmatprep.subr.mxu0 0.0
  %7259 = vmatpush1.msra.mxu0 0.0
  %7260 = vmatprep.subr.mxu0 0.0
  %7261 = vmatpush1.msra.mxu0 0.0
  %7262 = vmatprep.subr.mxu0 0.0
  %7263 = vmatpush1.msra.mxu0 0.0
  %7264 = vmatprep.subr.mxu0 0.0
  %7265 = vmatpush1.msra.mxu0 0.0
  %7266 = vmatprep.subr.mxu0 0.0
  %7267 = vmatpush1.msra.mxu0 0.0
  %7268 = vmatprep.subr.mxu0 0.0
  %7269 = vmatpush1.msra.mxu0 0.0
  %7270 = vmatprep.subr.mxu0 0.0
  %7271 = vmatpush1.msra.mxu0 0.0
  %7272 = vmatprep.subr.mxu0 0.0
  %7273 = vmatpush1.msra.mxu0 0.0
  %7274 = vmatprep.subr.mxu0 0.0
  %7275 = vmatpush1.msra.mxu0 0.0
  %7276 = vmatprep.subr.mxu0 0.0
  %7277 = vmatpush1.msra.mxu0 0.0
  %7278 = vmatprep.subr.mxu0 0.0
  %7279 = vmatpush1.msra.mxu0 0.0
  %7280 = vmatprep.subr.mxu0 0.0
  %7281 = vmatpush1.msra.mxu0 0.0
  %7282 = vmatprep.subr.mxu0 0.0
  %7283 = vmatpush1.msra.mxu0 0.0
  %7284 = vmatprep.subr.mxu0 0.0
  %7285 = vmatpush1.msra.mxu0 0.0
  %7286 = vmatprep.subr.mxu0 0.0
  %7287 = vmatpush1.msra.mxu0 0.0
  %7288 = vmatprep.subr.mxu0 0.0
  %7289 = vmatpush1.msra.mxu0 0.0
  %7290 = vmatprep.mubr.f32.mxu0 0.0
  %v7291 = vand.u32 %v7070, 4294901760
  %v7292 = vsub.f32 %v7070, %v7291
  %7293 = vmatmul.mubr.f32.gmra.mrb[0].mxu0 %v7292
  %v7294 = vpop.f32.mrb[0].mxu0
  %v7295 = vadd.f32 %v7221, %v7294
  %v7296 = vpop.f32.mrb[0].mxu0
  %7297 = vdwg.mxu0
  %7298 = vmatprep.subr.mxu0 0.0
  %v7299 = vand.u32 %v1948, 4294901760
  %7300 = vmatpush1.msra.mxu0 %v7299
  %7301 = vmatprep.subr.mxu0 0.0
  %7302 = vmatpush1.msra.mxu0 0.0
  %7303 = vmatprep.subr.mxu0 0.0
  %7304 = vmatpush1.msra.mxu0 0.0
  %7305 = vmatprep.subr.mxu0 0.0
  %7306 = vmatpush1.msra.mxu0 0.0
  %7307 = vmatprep.subr.mxu0 0.0
  %7308 = vmatpush1.msra.mxu0 0.0
  %7309 = vmatprep.subr.mxu0 0.0
  %7310 = vmatpush1.msra.mxu0 0.0
  %7311 = vmatprep.subr.mxu0 0.0
  %7312 = vmatpush1.msra.mxu0 0.0
  %7313 = vmatprep.subr.mxu0 0.0
  %7314 = vmatpush1.msra.mxu0 0.0
  %7315 = vmatprep.subr.mxu0 0.0
  %7316 = vmatpush1.msra.mxu0 0.0
  %7317 = vmatprep.subr.mxu0 0.0
  %7318 = vmatpush1.msra.mxu0 0.0
  %7319 = vmatprep.subr.mxu0 0.0
  %7320 = vmatpush1.msra.mxu0 0.0
  %7321 = vmatprep.subr.mxu0 0.0
  %7322 = vmatpush1.msra.mxu0 0.0
  %7323 = vmatprep.subr.mxu0 0.0
  %7324 = vmatpush1.msra.mxu0 0.0
  %7325 = vmatprep.subr.mxu0 0.0
  %7326 = vmatpush1.msra.mxu0 0.0
  %7327 = vmatprep.subr.mxu0 0.0
  %7328 = vmatpush1.msra.mxu0 0.0
  %7329 = vmatprep.subr.mxu0 0.0
  %7330 = vmatpush1.msra.mxu0 0.0
  %7331 = vmatprep.subr.mxu0 0.0
  %7332 = vmatpush1.msra.mxu0 0.0
  %7333 = vmatprep.subr.mxu0 0.0
  %7334 = vmatpush1.msra.mxu0 0.0
  %7335 = vmatprep.subr.mxu0 0.0
  %7336 = vmatpush1.msra.mxu0 0.0
  %7337 = vmatprep.subr.mxu0 0.0
  %7338 = vmatpush1.msra.mxu0 0.0
  %7339 = vmatprep.subr.mxu0 0.0
  %7340 = vmatpush1.msra.mxu0 0.0
  %7341 = vmatprep.subr.mxu0 0.0
  %7342 = vmatpush1.msra.mxu0 0.0
  %7343 = vmatprep.subr.mxu0 0.0
  %7344 = vmatpush1.msra.mxu0 0.0
  %7345 = vmatprep.subr.mxu0 0.0
  %7346 = vmatpush1.msra.mxu0 0.0
  %7347 = vmatprep.subr.mxu0 0.0
  %7348 = vmatpush1.msra.mxu0 0.0
  %7349 = vmatprep.subr.mxu0 0.0
  %7350 = vmatpush1.msra.mxu0 0.0
  %7351 = vmatprep.subr.mxu0 0.0
  %7352 = vmatpush1.msra.mxu0 0.0
  %7353 = vmatprep.subr.mxu0 0.0
  %7354 = vmatpush1.msra.mxu0 0.0
  %7355 = vmatprep.subr.mxu0 0.0
  %7356 = vmatpush1.msra.mxu0 0.0
  %7357 = vmatprep.subr.mxu0 0.0
  %7358 = vmatpush1.msra.mxu0 0.0
  %7359 = vmatprep.subr.mxu0 0.0
  %7360 = vmatpush1.msra.mxu0 0.0
  %7361 = vmatprep.subr.mxu0 0.0
  %7362 = vmatpush1.msra.mxu0 0.0
  %7363 = vmatprep.mubr.f32.mxu0 0.0
  %v7364 = vand.u32 %v7070, 4294901760
  %v7365 = vsub.f32 %v7070, %v7364
  %v7366 = vand.u32 %v7365, 4294901760
  %7367 = vmatmul.mubr.f32.gmra.mrb[0].mxu0 %v7366
  %v7368 = vpop.f32.mrb[0].mxu0
  %v7369 = vadd.f32 %v7295, %v7368
  %v7370 = vpop.f32.mrb[0].mxu0
  %7371 = vdwg.mxu0
  %7372 = vmatprep.subr.mxu0 0.0
  %v7373 = vand.u32 %v1948, 4294901760
  %v7374 = vsub.f32 %v1948, %v7373
  %v7375 = vand.u32 %v7374, 4294901760
  %7376 = vmatpush1.msra.mxu0 %v7375
  %7377 = vmatprep.subr.mxu0 0.0
  %7378 = vmatpush1.msra.mxu0 0.0
  %7379 = vmatprep.subr.mxu0 0.0
  %7380 = vmatpush1.msra.mxu0 0.0
  %7381 = vmatprep.subr.mxu0 0.0
  %7382 = vmatpush1.msra.mxu0 0.0
  %7383 = vmatprep.subr.mxu0 0.0
  %7384 = vmatpush1.msra.mxu0 0.0
  %7385 = vmatprep.subr.mxu0 0.0
  %7386 = vmatpush1.msra.mxu0 0.0
  %7387 = vmatprep.subr.mxu0 0.0
  %7388 = vmatpush1.msra.mxu0 0.0
  %7389 = vmatprep.subr.mxu0 0.0
  %7390 = vmatpush1.msra.mxu0 0.0
  %7391 = vmatprep.subr.mxu0 0.0
  %7392 = vmatpush1.msra.mxu0 0.0
  %7393 = vmatprep.subr.mxu0 0.0
  %7394 = vmatpush1.msra.mxu0 0.0
  %7395 = vmatprep.subr.mxu0 0.0
  %7396 = vmatpush1.msra.mxu0 0.0
  %7397 = vmatprep.subr.mxu0 0.0
  %7398 = vmatpush1.msra.mxu0 0.0
  %7399 = vmatprep.subr.mxu0 0.0
  %7400 = vmatpush1.msra.mxu0 0.0
  %7401 = vmatprep.subr.mxu0 0.0
  %7402 = vmatpush1.msra.mxu0 0.0
  %7403 = vmatprep.subr.mxu0 0.0
  %7404 = vmatpush1.msra.mxu0 0.0
  %7405 = vmatprep.subr.mxu0 0.0
  %7406 = vmatpush1.msra.mxu0 0.0
  %7407 = vmatprep.subr.mxu0 0.0
  %7408 = vmatpush1.msra.mxu0 0.0
  %7409 = vmatprep.subr.mxu0 0.0
  %7410 = vmatpush1.msra.mxu0 0.0
  %7411 = vmatprep.subr.mxu0 0.0
  %7412 = vmatpush1.msra.mxu0 0.0
  %7413 = vmatprep.subr.mxu0 0.0
  %7414 = vmatpush1.msra.mxu0 0.0
  %7415 = vmatprep.subr.mxu0 0.0
  %7416 = vmatpush1.msra.mxu0 0.0
  %7417 = vmatprep.subr.mxu0 0.0
  %7418 = vmatpush1.msra.mxu0 0.0
  %7419 = vmatprep.subr.mxu0 0.0
  %7420 = vmatpush1.msra.mxu0 0.0
  %7421 = vmatprep.subr.mxu0 0.0
  %7422 = vmatpush1.msra.mxu0 0.0
  %7423 = vmatprep.subr.mxu0 0.0
  %7424 = vmatpush1.msra.mxu0 0.0
  %7425 = vmatprep.subr.mxu0 0.0
  %7426 = vmatpush1.msra.mxu0 0.0
  %7427 = vmatprep.subr.mxu0 0.0
  %7428 = vmatpush1.msra.mxu0 0.0
  %7429 = vmatprep.subr.mxu0 0.0
  %7430 = vmatpush1.msra.mxu0 0.0
  %7431 = vmatprep.subr.mxu0 0.0
  %7432 = vmatpush1.msra.mxu0 0.0
  %7433 = vmatprep.subr.mxu0 0.0
  %7434 = vmatpush1.msra.mxu0 0.0
  %7435 = vmatprep.subr.mxu0 0.0
  %7436 = vmatpush1.msra.mxu0 0.0
  %7437 = vmatprep.subr.mxu0 0.0
  %7438 = vmatpush1.msra.mxu0 0.0
  %7439 = vmatprep.mubr.f32.mxu0 0.0
  %v7440 = vand.u32 %v7070, 4294901760
  %7441 = vmatmul.mubr.f32.gmra.mrb[0].mxu0 %v7440
  %v7442 = vpop.f32.mrb[0].mxu0
  %v7443 = vadd.f32 %v7369, %v7442
  %v7444 = vpop.f32.mrb[0].mxu0
  %7445 = vdwg.mxu0
  %7446 = vmatprep.subr.mxu0 0.0
  %v7447 = vand.u32 %v1948, 4294901760
  %7448 = vmatpush1.msra.mxu0 %v7447
  %7449 = vmatprep.subr.mxu0 0.0
  %7450 = vmatpush1.msra.mxu0 0.0
  %7451 = vmatprep.subr.mxu0 0.0
  %7452 = vmatpush1.msra.mxu0 0.0
  %7453 = vmatprep.subr.mxu0 0.0
  %7454 = vmatpush1.msra.mxu0 0.0
  %7455 = vmatprep.subr.mxu0 0.0
  %7456 = vmatpush1.msra.mxu0 0.0
  %7457 = vmatprep.subr.mxu0 0.0
  %7458 = vmatpush1.msra.mxu0 0.0
  %7459 = vmatprep.subr.mxu0 0.0
  %7460 = vmatpush1.msra.mxu0 0.0
  %7461 = vmatprep.subr.mxu0 0.0
  %7462 = vmatpush1.msra.mxu0 0.0
  %7463 = vmatprep.subr.mxu0 0.0
  %7464 = vmatpush1.msra.mxu0 0.0
  %7465 = vmatprep.subr.mxu0 0.0
  %7466 = vmatpush1.msra.mxu0 0.0
  %7467 = vmatprep.subr.mxu0 0.0
  %7468 = vmatpush1.msra.mxu0 0.0
  %7469 = vmatprep.subr.mxu0 0.0
  %7470 = vmatpush1.msra.mxu0 0.0
  %7471 = vmatprep.subr.mxu0 0.0
  %7472 = vmatpush1.msra.mxu0 0.0
  %7473 = vmatprep.subr.mxu0 0.0
  %7474 = vmatpush1.msra.mxu0 0.0
  %7475 = vmatprep.subr.mxu0 0.0
  %7476 = vmatpush1.msra.mxu0 0.0
  %7477 = vmatprep.subr.mxu0 0.0
  %7478 = vmatpush1.msra.mxu0 0.0
  %7479 = vmatprep.subr.mxu0 0.0
  %7480 = vmatpush1.msra.mxu0 0.0
  %7481 = vmatprep.subr.mxu0 0.0
  %7482 = vmatpush1.msra.mxu0 0.0
  %7483 = vmatprep.subr.mxu0 0.0
  %7484 = vmatpush1.msra.mxu0 0.0
  %7485 = vmatprep.subr.mxu0 0.0
  %7486 = vmatpush1.msra.mxu0 0.0
  %7487 = vmatprep.subr.mxu0 0.0
  %7488 = vmatpush1.msra.mxu0 0.0
  %7489 = vmatprep.subr.mxu0 0.0
  %7490 = vmatpush1.msra.mxu0 0.0
  %7491 = vmatprep.subr.mxu0 0.0
  %7492 = vmatpush1.msra.mxu0 0.0
  %7493 = vmatprep.subr.mxu0 0.0
  %7494 = vmatpush1.msra.mxu0 0.0
  %7495 = vmatprep.subr.mxu0 0.0
  %7496 = vmatpush1.msra.mxu0 0.0
  %7497 = vmatprep.subr.mxu0 0.0
  %7498 = vmatpush1.msra.mxu0 0.0
  %7499 = vmatprep.subr.mxu0 0.0
  %7500 = vmatpush1.msra.mxu0 0.0
  %7501 = vmatprep.subr.mxu0 0.0
  %7502 = vmatpush1.msra.mxu0 0.0
  %7503 = vmatprep.subr.mxu0 0.0
  %7504 = vmatpush1.msra.mxu0 0.0
  %7505 = vmatprep.subr.mxu0 0.0
  %7506 = vmatpush1.msra.mxu0 0.0
  %7507 = vmatprep.subr.mxu0 0.0
  %7508 = vmatpush1.msra.mxu0 0.0
  %7509 = vmatprep.subr.mxu0 0.0
  %7510 = vmatpush1.msra.mxu0 0.0
  %7511 = vmatprep.mubr.f32.mxu0 0.0
  %v7512 = vand.u32 %v7070, 4294901760
  %7513 = vmatmul.mubr.f32.gmra.mrb[0].mxu0 %v7512
  %v7514 = vpop.f32.mrb[0].mxu0
  %v7515 = vadd.f32 %v7443, %v7514
  %v7516 = vpop.f32.mrb[0].mxu0
  %7517 = vdwg.mxu0
  %v7519 = vsel %vm2017, %v5718, 0
  %7521 = vmatprep.subr.mxu0 0.0
  %v7522 = vand.u32 %v2013, 4294901760
  %7523 = vmatpush1.msra.mxu0 %v7522
  %7524 = vmatprep.subr.mxu0 0.0
  %7525 = vmatpush1.msra.mxu0 0.0
  %7526 = vmatprep.subr.mxu0 0.0
  %7527 = vmatpush1.msra.mxu0 0.0
  %7528 = vmatprep.subr.mxu0 0.0
  %7529 = vmatpush1.msra.mxu0 0.0
  %7530 = vmatprep.subr.mxu0 0.0
  %7531 = vmatpush1.msra.mxu0 0.0
  %7532 = vmatprep.subr.mxu0 0.0
  %7533 = vmatpush1.msra.mxu0 0.0
  %7534 = vmatprep.subr.mxu0 0.0
  %7535 = vmatpush1.msra.mxu0 0.0
  %7536 = vmatprep.subr.mxu0 0.0
  %7537 = vmatpush1.msra.mxu0 0.0
  %7538 = vmatprep.subr.mxu0 0.0
  %7539 = vmatpush1.msra.mxu0 0.0
  %7540 = vmatprep.subr.mxu0 0.0
  %7541 = vmatpush1.msra.mxu0 0.0
  %7542 = vmatprep.subr.mxu0 0.0
  %7543 = vmatpush1.msra.mxu0 0.0
  %7544 = vmatprep.subr.mxu0 0.0
  %7545 = vmatpush1.msra.mxu0 0.0
  %7546 = vmatprep.subr.mxu0 0.0
  %7547 = vmatpush1.msra.mxu0 0.0
  %7548 = vmatprep.subr.mxu0 0.0
  %7549 = vmatpush1.msra.mxu0 0.0
  %7550 = vmatprep.subr.mxu0 0.0
  %7551 = vmatpush1.msra.mxu0 0.0
  %7552 = vmatprep.subr.mxu0 0.0
  %7553 = vmatpush1.msra.mxu0 0.0
  %7554 = vmatprep.subr.mxu0 0.0
  %7555 = vmatpush1.msra.mxu0 0.0
  %7556 = vmatprep.subr.mxu0 0.0
  %7557 = vmatpush1.msra.mxu0 0.0
  %7558 = vmatprep.subr.mxu0 0.0
  %7559 = vmatpush1.msra.mxu0 0.0
  %7560 = vmatprep.subr.mxu0 0.0
  %7561 = vmatpush1.msra.mxu0 0.0
  %7562 = vmatprep.subr.mxu0 0.0
  %7563 = vmatpush1.msra.mxu0 0.0
  %7564 = vmatprep.subr.mxu0 0.0
  %7565 = vmatpush1.msra.mxu0 0.0
  %7566 = vmatprep.subr.mxu0 0.0
  %7567 = vmatpush1.msra.mxu0 0.0
  %7568 = vmatprep.subr.mxu0 0.0
  %7569 = vmatpush1.msra.mxu0 0.0
  %7570 = vmatprep.subr.mxu0 0.0
  %7571 = vmatpush1.msra.mxu0 0.0
  %7572 = vmatprep.subr.mxu0 0.0
  %7573 = vmatpush1.msra.mxu0 0.0
  %7574 = vmatprep.subr.mxu0 0.0
  %7575 = vmatpush1.msra.mxu0 0.0
  %7576 = vmatprep.subr.mxu0 0.0
  %7577 = vmatpush1.msra.mxu0 0.0
  %7578 = vmatprep.subr.mxu0 0.0
  %7579 = vmatpush1.msra.mxu0 0.0
  %7580 = vmatprep.subr.mxu0 0.0
  %7581 = vmatpush1.msra.mxu0 0.0
  %7582 = vmatprep.subr.mxu0 0.0
  %7583 = vmatpush1.msra.mxu0 0.0
  %7584 = vmatprep.subr.mxu0 0.0
  %7585 = vmatpush1.msra.mxu0 0.0
  %7586 = vmatprep.mubr.f32.mxu0 0.0
  %v7587 = vand.u32 %v7519, 4294901760
  %v7588 = vsub.f32 %v7519, %v7587
  %v7589 = vand.u32 %v7588, 4294901760
  %v7590 = vsub.f32 %v7588, %v7589
  %v7591 = vand.u32 %v7590, 4294901760
  %7592 = vmatmul.mubr.f32.gmra.mrb[0].mxu0 %v7591
  %v7593 = vpop.f32.mrb[0].mxu0
  %v7594 = vadd.f32 0.0, %v7593
  %v7595 = vpop.f32.mrb[0].mxu0
  %7596 = vdwg.mxu0
  %7597 = vmatprep.subr.mxu0 0.0
  %v7598 = vand.u32 %v2013, 4294901760
  %v7599 = vsub.f32 %v2013, %v7598
  %v7600 = vand.u32 %v7599, 4294901760
  %v7601 = vsub.f32 %v7599, %v7600
  %v7602 = vand.u32 %v7601, 4294901760
  %7603 = vmatpush1.msra.mxu0 %v7602
  %7604 = vmatprep.subr.mxu0 0.0
  %7605 = vmatpush1.msra.mxu0 0.0
  %7606 = vmatprep.subr.mxu0 0.0
  %7607 = vmatpush1.msra.mxu0 0.0
  %7608 = vmatprep.subr.mxu0 0.0
  %7609 = vmatpush1.msra.mxu0 0.0
  %7610 = vmatprep.subr.mxu0 0.0
  %7611 = vmatpush1.msra.mxu0 0.0
  %7612 = vmatprep.subr.mxu0 0.0
  %7613 = vmatpush1.msra.mxu0 0.0
  %7614 = vmatprep.subr.mxu0 0.0
  %7615 = vmatpush1.msra.mxu0 0.0
  %7616 = vmatprep.subr.mxu0 0.0
  %7617 = vmatpush1.msra.mxu0 0.0
  %7618 = vmatprep.subr.mxu0 0.0
  %7619 = vmatpush1.msra.mxu0 0.0
  %7620 = vmatprep.subr.mxu0 0.0
  %7621 = vmatpush1.msra.mxu0 0.0
  %7622 = vmatprep.subr.mxu0 0.0
  %7623 = vmatpush1.msra.mxu0 0.0
  %7624 = vmatprep.subr.mxu0 0.0
  %7625 = vmatpush1.msra.mxu0 0.0
  %7626 = vmatprep.subr.mxu0 0.0
  %7627 = vmatpush1.msra.mxu0 0.0
  %7628 = vmatprep.subr.mxu0 0.0
  %7629 = vmatpush1.msra.mxu0 0.0
  %7630 = vmatprep.subr.mxu0 0.0
  %7631 = vmatpush1.msra.mxu0 0.0
  %7632 = vmatprep.subr.mxu0 0.0
  %7633 = vmatpush1.msra.mxu0 0.0
  %7634 = vmatprep.subr.mxu0 0.0
  %7635 = vmatpush1.msra.mxu0 0.0
  %7636 = vmatprep.subr.mxu0 0.0
  %7637 = vmatpush1.msra.mxu0 0.0
  %7638 = vmatprep.subr.mxu0 0.0
  %7639 = vmatpush1.msra.mxu0 0.0
  %7640 = vmatprep.subr.mxu0 0.0
  %7641 = vmatpush1.msra.mxu0 0.0
  %7642 = vmatprep.subr.mxu0 0.0
  %7643 = vmatpush1.msra.mxu0 0.0
  %7644 = vmatprep.subr.mxu0 0.0
  %7645 = vmatpush1.msra.mxu0 0.0
  %7646 = vmatprep.subr.mxu0 0.0
  %7647 = vmatpush1.msra.mxu0 0.0
  %7648 = vmatprep.subr.mxu0 0.0
  %7649 = vmatpush1.msra.mxu0 0.0
  %7650 = vmatprep.subr.mxu0 0.0
  %7651 = vmatpush1.msra.mxu0 0.0
  %7652 = vmatprep.subr.mxu0 0.0
  %7653 = vmatpush1.msra.mxu0 0.0
  %7654 = vmatprep.subr.mxu0 0.0
  %7655 = vmatpush1.msra.mxu0 0.0
  %7656 = vmatprep.subr.mxu0 0.0
  %7657 = vmatpush1.msra.mxu0 0.0
  %7658 = vmatprep.subr.mxu0 0.0
  %7659 = vmatpush1.msra.mxu0 0.0
  %7660 = vmatprep.subr.mxu0 0.0
  %7661 = vmatpush1.msra.mxu0 0.0
  %7662 = vmatprep.subr.mxu0 0.0
  %7663 = vmatpush1.msra.mxu0 0.0
  %7664 = vmatprep.subr.mxu0 0.0
  %7665 = vmatpush1.msra.mxu0 0.0
  %7666 = vmatprep.mubr.f32.mxu0 0.0
  %v7667 = vand.u32 %v7519, 4294901760
  %7668 = vmatmul.mubr.f32.gmra.mrb[0].mxu0 %v7667
  %v7669 = vpop.f32.mrb[0].mxu0
  %v7670 = vadd.f32 %v7594, %v7669
  %v7671 = vpop.f32.mrb[0].mxu0
  %7672 = vdwg.mxu0
  %7673 = vmatprep.subr.mxu0 0.0
  %v7674 = vand.u32 %v2013, 4294901760
  %v7675 = vsub.f32 %v2013, %v7674
  %7676 = vmatpush1.msra.mxu0 %v7675
  %7677 = vmatprep.subr.mxu0 0.0
  %7678 = vmatpush1.msra.mxu0 0.0
  %7679 = vmatprep.subr.mxu0 0.0
  %7680 = vmatpush1.msra.mxu0 0.0
  %7681 = vmatprep.subr.mxu0 0.0
  %7682 = vmatpush1.msra.mxu0 0.0
  %7683 = vmatprep.subr.mxu0 0.0
  %7684 = vmatpush1.msra.mxu0 0.0
  %7685 = vmatprep.subr.mxu0 0.0
  %7686 = vmatpush1.msra.mxu0 0.0
  %7687 = vmatprep.subr.mxu0 0.0
  %7688 = vmatpush1.msra.mxu0 0.0
  %7689 = vmatprep.subr.mxu0 0.0
  %7690 = vmatpush1.msra.mxu0 0.0
  %7691 = vmatprep.subr.mxu0 0.0
  %7692 = vmatpush1.msra.mxu0 0.0
  %7693 = vmatprep.subr.mxu0 0.0
  %7694 = vmatpush1.msra.mxu0 0.0
  %7695 = vmatprep.subr.mxu0 0.0
  %7696 = vmatpush1.msra.mxu0 0.0
  %7697 = vmatprep.subr.mxu0 0.0
  %7698 = vmatpush1.msra.mxu0 0.0
  %7699 = vmatprep.subr.mxu0 0.0
  %7700 = vmatpush1.msra.mxu0 0.0
  %7701 = vmatprep.subr.mxu0 0.0
  %7702 = vmatpush1.msra.mxu0 0.0
  %7703 = vmatprep.subr.mxu0 0.0
  %7704 = vmatpush1.msra.mxu0 0.0
  %7705 = vmatprep.subr.mxu0 0.0
  %7706 = vmatpush1.msra.mxu0 0.0
  %7707 = vmatprep.subr.mxu0 0.0
  %7708 = vmatpush1.msra.mxu0 0.0
  %7709 = vmatprep.subr.mxu0 0.0
  %7710 = vmatpush1.msra.mxu0 0.0
  %7711 = vmatprep.subr.mxu0 0.0
  %7712 = vmatpush1.msra.mxu0 0.0
  %7713 = vmatprep.subr.mxu0 0.0
  %7714 = vmatpush1.msra.mxu0 0.0
  %7715 = vmatprep.subr.mxu0 0.0
  %7716 = vmatpush1.msra.mxu0 0.0
  %7717 = vmatprep.subr.mxu0 0.0
  %7718 = vmatpush1.msra.mxu0 0.0
  %7719 = vmatprep.subr.mxu0 0.0
  %7720 = vmatpush1.msra.mxu0 0.0
  %7721 = vmatprep.subr.mxu0 0.0
  %7722 = vmatpush1.msra.mxu0 0.0
  %7723 = vmatprep.subr.mxu0 0.0
  %7724 = vmatpush1.msra.mxu0 0.0
  %7725 = vmatprep.subr.mxu0 0.0
  %7726 = vmatpush1.msra.mxu0 0.0
  %7727 = vmatprep.subr.mxu0 0.0
  %7728 = vmatpush1.msra.mxu0 0.0
  %7729 = vmatprep.subr.mxu0 0.0
  %7730 = vmatpush1.msra.mxu0 0.0
  %7731 = vmatprep.subr.mxu0 0.0
  %7732 = vmatpush1.msra.mxu0 0.0
  %7733 = vmatprep.subr.mxu0 0.0
  %7734 = vmatpush1.msra.mxu0 0.0
  %7735 = vmatprep.subr.mxu0 0.0
  %7736 = vmatpush1.msra.mxu0 0.0
  %7737 = vmatprep.subr.mxu0 0.0
  %7738 = vmatpush1.msra.mxu0 0.0
  %7739 = vmatprep.mubr.f32.mxu0 0.0
  %v7740 = vand.u32 %v7519, 4294901760
  %v7741 = vsub.f32 %v7519, %v7740
  %7742 = vmatmul.mubr.f32.gmra.mrb[0].mxu0 %v7741
  %v7743 = vpop.f32.mrb[0].mxu0
  %v7744 = vadd.f32 %v7670, %v7743
  %v7745 = vpop.f32.mrb[0].mxu0
  %7746 = vdwg.mxu0
  %7747 = vmatprep.subr.mxu0 0.0
  %v7748 = vand.u32 %v2013, 4294901760
  %7749 = vmatpush1.msra.mxu0 %v7748
  %7750 = vmatprep.subr.mxu0 0.0
  %7751 = vmatpush1.msra.mxu0 0.0
  %7752 = vmatprep.subr.mxu0 0.0
  %7753 = vmatpush1.msra.mxu0 0.0
  %7754 = vmatprep.subr.mxu0 0.0
  %7755 = vmatpush1.msra.mxu0 0.0
  %7756 = vmatprep.subr.mxu0 0.0
  %7757 = vmatpush1.msra.mxu0 0.0
  %7758 = vmatprep.subr.mxu0 0.0
  %7759 = vmatpush1.msra.mxu0 0.0
  %7760 = vmatprep.subr.mxu0 0.0
  %7761 = vmatpush1.msra.mxu0 0.0
  %7762 = vmatprep.subr.mxu0 0.0
  %7763 = vmatpush1.msra.mxu0 0.0
  %7764 = vmatprep.subr.mxu0 0.0
  %7765 = vmatpush1.msra.mxu0 0.0
  %7766 = vmatprep.subr.mxu0 0.0
  %7767 = vmatpush1.msra.mxu0 0.0
  %7768 = vmatprep.subr.mxu0 0.0
  %7769 = vmatpush1.msra.mxu0 0.0
  %7770 = vmatprep.subr.mxu0 0.0
  %7771 = vmatpush1.msra.mxu0 0.0
  %7772 = vmatprep.subr.mxu0 0.0
  %7773 = vmatpush1.msra.mxu0 0.0
  %7774 = vmatprep.subr.mxu0 0.0
  %7775 = vmatpush1.msra.mxu0 0.0
  %7776 = vmatprep.subr.mxu0 0.0
  %7777 = vmatpush1.msra.mxu0 0.0
  %7778 = vmatprep.subr.mxu0 0.0
  %7779 = vmatpush1.msra.mxu0 0.0
  %7780 = vmatprep.subr.mxu0 0.0
  %7781 = vmatpush1.msra.mxu0 0.0
  %7782 = vmatprep.subr.mxu0 0.0
  %7783 = vmatpush1.msra.mxu0 0.0
  %7784 = vmatprep.subr.mxu0 0.0
  %7785 = vmatpush1.msra.mxu0 0.0
  %7786 = vmatprep.subr.mxu0 0.0
  %7787 = vmatpush1.msra.mxu0 0.0
  %7788 = vmatprep.subr.mxu0 0.0
  %7789 = vmatpush1.msra.mxu0 0.0
  %7790 = vmatprep.subr.mxu0 0.0
  %7791 = vmatpush1.msra.mxu0 0.0
  %7792 = vmatprep.subr.mxu0 0.0
  %7793 = vmatpush1.msra.mxu0 0.0
  %7794 = vmatprep.subr.mxu0 0.0
  %7795 = vmatpush1.msra.mxu0 0.0
  %7796 = vmatprep.subr.mxu0 0.0
  %7797 = vmatpush1.msra.mxu0 0.0
  %7798 = vmatprep.subr.mxu0 0.0
  %7799 = vmatpush1.msra.mxu0 0.0
  %7800 = vmatprep.subr.mxu0 0.0
  %7801 = vmatpush1.msra.mxu0 0.0
  %7802 = vmatprep.subr.mxu0 0.0
  %7803 = vmatpush1.msra.mxu0 0.0
  %7804 = vmatprep.subr.mxu0 0.0
  %7805 = vmatpush1.msra.mxu0 0.0
  %7806 = vmatprep.subr.mxu0 0.0
  %7807 = vmatpush1.msra.mxu0 0.0
  %7808 = vmatprep.subr.mxu0 0.0
  %7809 = vmatpush1.msra.mxu0 0.0
  %7810 = vmatprep.subr.mxu0 0.0
  %7811 = vmatpush1.msra.mxu0 0.0
  %7812 = vmatprep.mubr.f32.mxu0 0.0
  %v7813 = vand.u32 %v7519, 4294901760
  %v7814 = vsub.f32 %v7519, %v7813
  %v7815 = vand.u32 %v7814, 4294901760
  %7816 = vmatmul.mubr.f32.gmra.mrb[0].mxu0 %v7815
  %v7817 = vpop.f32.mrb[0].mxu0
  %v7818 = vadd.f32 %v7744, %v7817
  %v7819 = vpop.f32.mrb[0].mxu0
  %7820 = vdwg.mxu0
  %7821 = vmatprep.subr.mxu0 0.0
  %v7822 = vand.u32 %v2013, 4294901760
  %v7823 = vsub.f32 %v2013, %v7822
  %v7824 = vand.u32 %v7823, 4294901760
  %7825 = vmatpush1.msra.mxu0 %v7824
  %7826 = vmatprep.subr.mxu0 0.0
  %7827 = vmatpush1.msra.mxu0 0.0
  %7828 = vmatprep.subr.mxu0 0.0
  %7829 = vmatpush1.msra.mxu0 0.0
  %7830 = vmatprep.subr.mxu0 0.0
  %7831 = vmatpush1.msra.mxu0 0.0
  %7832 = vmatprep.subr.mxu0 0.0
  %7833 = vmatpush1.msra.mxu0 0.0
  %7834 = vmatprep.subr.mxu0 0.0
  %7835 = vmatpush1.msra.mxu0 0.0
  %7836 = vmatprep.subr.mxu0 0.0
  %7837 = vmatpush1.msra.mxu0 0.0
  %7838 = vmatprep.subr.mxu0 0.0
  %7839 = vmatpush1.msra.mxu0 0.0
  %7840 = vmatprep.subr.mxu0 0.0
  %7841 = vmatpush1.msra.mxu0 0.0
  %7842 = vmatprep.subr.mxu0 0.0
  %7843 = vmatpush1.msra.mxu0 0.0
  %7844 = vmatprep.subr.mxu0 0.0
  %7845 = vmatpush1.msra.mxu0 0.0
  %7846 = vmatprep.subr.mxu0 0.0
  %7847 = vmatpush1.msra.mxu0 0.0
  %7848 = vmatprep.subr.mxu0 0.0
  %7849 = vmatpush1.msra.mxu0 0.0
  %7850 = vmatprep.subr.mxu0 0.0
  %7851 = vmatpush1.msra.mxu0 0.0
  %7852 = vmatprep.subr.mxu0 0.0
  %7853 = vmatpush1.msra.mxu0 0.0
  %7854 = vmatprep.subr.mxu0 0.0
  %7855 = vmatpush1.msra.mxu0 0.0
  %7856 = vmatprep.subr.mxu0 0.0
  %7857 = vmatpush1.msra.mxu0 0.0
  %7858 = vmatprep.subr.mxu0 0.0
  %7859 = vmatpush1.msra.mxu0 0.0
  %7860 = vmatprep.subr.mxu0 0.0
  %7861 = vmatpush1.msra.mxu0 0.0
  %7862 = vmatprep.subr.mxu0 0.0
  %7863 = vmatpush1.msra.mxu0 0.0
  %7864 = vmatprep.subr.mxu0 0.0
  %7865 = vmatpush1.msra.mxu0 0.0
  %7866 = vmatprep.subr.mxu0 0.0
  %7867 = vmatpush1.msra.mxu0 0.0
  %7868 = vmatprep.subr.mxu0 0.0
  %7869 = vmatpush1.msra.mxu0 0.0
  %7870 = vmatprep.subr.mxu0 0.0
  %7871 = vmatpush1.msra.mxu0 0.0
  %7872 = vmatprep.subr.mxu0 0.0
  %7873 = vmatpush1.msra.mxu0 0.0
  %7874 = vmatprep.subr.mxu0 0.0
  %7875 = vmatpush1.msra.mxu0 0.0
  %7876 = vmatprep.subr.mxu0 0.0
  %7877 = vmatpush1.msra.mxu0 0.0
  %7878 = vmatprep.subr.mxu0 0.0
  %7879 = vmatpush1.msra.mxu0 0.0
  %7880 = vmatprep.subr.mxu0 0.0
  %7881 = vmatpush1.msra.mxu0 0.0
  %7882 = vmatprep.subr.mxu0 0.0
  %7883 = vmatpush1.msra.mxu0 0.0
  %7884 = vmatprep.subr.mxu0 0.0
  %7885 = vmatpush1.msra.mxu0 0.0
  %7886 = vmatprep.subr.mxu0 0.0
  %7887 = vmatpush1.msra.mxu0 0.0
  %7888 = vmatprep.mubr.f32.mxu0 0.0
  %v7889 = vand.u32 %v7519, 4294901760
  %7890 = vmatmul.mubr.f32.gmra.mrb[0].mxu0 %v7889
  %v7891 = vpop.f32.mrb[0].mxu0
  %v7892 = vadd.f32 %v7818, %v7891
  %v7893 = vpop.f32.mrb[0].mxu0
  %7894 = vdwg.mxu0
  %7895 = vmatprep.subr.mxu0 0.0
  %v7896 = vand.u32 %v2013, 4294901760
  %7897 = vmatpush1.msra.mxu0 %v7896
  %7898 = vmatprep.subr.mxu0 0.0
  %7899 = vmatpush1.msra.mxu0 0.0
  %7900 = vmatprep.subr.mxu0 0.0
  %7901 = vmatpush1.msra.mxu0 0.0
  %7902 = vmatprep.subr.mxu0 0.0
  %7903 = vmatpush1.msra.mxu0 0.0
  %7904 = vmatprep.subr.mxu0 0.0
  %7905 = vmatpush1.msra.mxu0 0.0
  %7906 = vmatprep.subr.mxu0 0.0
  %7907 = vmatpush1.msra.mxu0 0.0
  %7908 = vmatprep.subr.mxu0 0.0
  %7909 = vmatpush1.msra.mxu0 0.0
  %7910 = vmatprep.subr.mxu0 0.0
  %7911 = vmatpush1.msra.mxu0 0.0
  %7912 = vmatprep.subr.mxu0 0.0
  %7913 = vmatpush1.msra.mxu0 0.0
  %7914 = vmatprep.subr.mxu0 0.0
  %7915 = vmatpush1.msra.mxu0 0.0
  %7916 = vmatprep.subr.mxu0 0.0
  %7917 = vmatpush1.msra.mxu0 0.0
  %7918 = vmatprep.subr.mxu0 0.0
  %7919 = vmatpush1.msra.mxu0 0.0
  %7920 = vmatprep.subr.mxu0 0.0
  %7921 = vmatpush1.msra.mxu0 0.0
  %7922 = vmatprep.subr.mxu0 0.0
  %7923 = vmatpush1.msra.mxu0 0.0
  %7924 = vmatprep.subr.mxu0 0.0
  %7925 = vmatpush1.msra.mxu0 0.0
  %7926 = vmatprep.subr.mxu0 0.0
  %7927 = vmatpush1.msra.mxu0 0.0
  %7928 = vmatprep.subr.mxu0 0.0
  %7929 = vmatpush1.msra.mxu0 0.0
  %7930 = vmatprep.subr.mxu0 0.0
  %7931 = vmatpush1.msra.mxu0 0.0
  %7932 = vmatprep.subr.mxu0 0.0
  %7933 = vmatpush1.msra.mxu0 0.0
  %7934 = vmatprep.subr.mxu0 0.0
  %7935 = vmatpush1.msra.mxu0 0.0
  %7936 = vmatprep.subr.mxu0 0.0
  %7937 = vmatpush1.msra.mxu0 0.0
  %7938 = vmatprep.subr.mxu0 0.0
  %7939 = vmatpush1.msra.mxu0 0.0
  %7940 = vmatprep.subr.mxu0 0.0
  %7941 = vmatpush1.msra.mxu0 0.0
  %7942 = vmatprep.subr.mxu0 0.0
  %7943 = vmatpush1.msra.mxu0 0.0
  %7944 = vmatprep.subr.mxu0 0.0
  %7945 = vmatpush1.msra.mxu0 0.0
  %7946 = vmatprep.subr.mxu0 0.0
  %7947 = vmatpush1.msra.mxu0 0.0
  %7948 = vmatprep.subr.mxu0 0.0
  %7949 = vmatpush1.msra.mxu0 0.0
  %7950 = vmatprep.subr.mxu0 0.0
  %7951 = vmatpush1.msra.mxu0 0.0
  %7952 = vmatprep.subr.mxu0 0.0
  %7953 = vmatpush1.msra.mxu0 0.0
  %7954 = vmatprep.subr.mxu0 0.0
  %7955 = vmatpush1.msra.mxu0 0.0
  %7956 = vmatprep.subr.mxu0 0.0
  %7957 = vmatpush1.msra.mxu0 0.0
  %7958 = vmatprep.subr.mxu0 0.0
  %7959 = vmatpush1.msra.mxu0 0.0
  %7960 = vmatprep.mubr.f32.mxu0 0.0
  %v7961 = vand.u32 %v7519, 4294901760
  %7962 = vmatmul.mubr.f32.gmra.mrb[0].mxu0 %v7961
  %v7963 = vpop.f32.mrb[0].mxu0
  %v7964 = vadd.f32 %v7892, %v7963
  %v7965 = vpop.f32.mrb[0].mxu0
  %7966 = vdwg.mxu0
  %v7968 = vsel %vm2017, %v5719, 0
  %7970 = vmatprep.subr.mxu0 0.0
  %v7971 = vand.u32 %v2014, 4294901760
  %7972 = vmatpush1.msra.mxu0 %v7971
  %7973 = vmatprep.subr.mxu0 0.0
  %7974 = vmatpush1.msra.mxu0 0.0
  %7975 = vmatprep.subr.mxu0 0.0
  %7976 = vmatpush1.msra.mxu0 0.0
  %7977 = vmatprep.subr.mxu0 0.0
  %7978 = vmatpush1.msra.mxu0 0.0
  %7979 = vmatprep.subr.mxu0 0.0
  %7980 = vmatpush1.msra.mxu0 0.0
  %7981 = vmatprep.subr.mxu0 0.0
  %7982 = vmatpush1.msra.mxu0 0.0
  %7983 = vmatprep.subr.mxu0 0.0
  %7984 = vmatpush1.msra.mxu0 0.0
  %7985 = vmatprep.subr.mxu0 0.0
  %7986 = vmatpush1.msra.mxu0 0.0
  %7987 = vmatprep.subr.mxu0 0.0
  %7988 = vmatpush1.msra.mxu0 0.0
  %7989 = vmatprep.subr.mxu0 0.0
  %7990 = vmatpush1.msra.mxu0 0.0
  %7991 = vmatprep.subr.mxu0 0.0
  %7992 = vmatpush1.msra.mxu0 0.0
  %7993 = vmatprep.subr.mxu0 0.0
  %7994 = vmatpush1.msra.mxu0 0.0
  %7995 = vmatprep.subr.mxu0 0.0
  %7996 = vmatpush1.msra.mxu0 0.0
  %7997 = vmatprep.subr.mxu0 0.0
  %7998 = vmatpush1.msra.mxu0 0.0
  %7999 = vmatprep.subr.mxu0 0.0
  %8000 = vmatpush1.msra.mxu0 0.0
  %8001 = vmatprep.subr.mxu0 0.0
  %8002 = vmatpush1.msra.mxu0 0.0
  %8003 = vmatprep.subr.mxu0 0.0
  %8004 = vmatpush1.msra.mxu0 0.0
  %8005 = vmatprep.subr.mxu0 0.0
  %8006 = vmatpush1.msra.mxu0 0.0
  %8007 = vmatprep.subr.mxu0 0.0
  %8008 = vmatpush1.msra.mxu0 0.0
  %8009 = vmatprep.subr.mxu0 0.0
  %8010 = vmatpush1.msra.mxu0 0.0
  %8011 = vmatprep.subr.mxu0 0.0
  %8012 = vmatpush1.msra.mxu0 0.0
  %8013 = vmatprep.subr.mxu0 0.0
  %8014 = vmatpush1.msra.mxu0 0.0
  %8015 = vmatprep.subr.mxu0 0.0
  %8016 = vmatpush1.msra.mxu0 0.0
  %8017 = vmatprep.subr.mxu0 0.0
  %8018 = vmatpush1.msra.mxu0 0.0
  %8019 = vmatprep.subr.mxu0 0.0
  %8020 = vmatpush1.msra.mxu0 0.0
  %8021 = vmatprep.subr.mxu0 0.0
  %8022 = vmatpush1.msra.mxu0 0.0
  %8023 = vmatprep.subr.mxu0 0.0
  %8024 = vmatpush1.msra.mxu0 0.0
  %8025 = vmatprep.subr.mxu0 0.0
  %8026 = vmatpush1.msra.mxu0 0.0
  %8027 = vmatprep.subr.mxu0 0.0
  %8028 = vmatpush1.msra.mxu0 0.0
  %8029 = vmatprep.subr.mxu0 0.0
  %8030 = vmatpush1.msra.mxu0 0.0
  %8031 = vmatprep.subr.mxu0 0.0
  %8032 = vmatpush1.msra.mxu0 0.0
  %8033 = vmatprep.subr.mxu0 0.0
  %8034 = vmatpush1.msra.mxu0 0.0
  %8035 = vmatprep.mubr.f32.mxu0 0.0
  %v8036 = vand.u32 %v7968, 4294901760
  %v8037 = vsub.f32 %v7968, %v8036
  %v8038 = vand.u32 %v8037, 4294901760
  %v8039 = vsub.f32 %v8037, %v8038
  %v8040 = vand.u32 %v8039, 4294901760
  %8041 = vmatmul.mubr.f32.gmra.mrb[0].mxu0 %v8040
  %v8042 = vpop.f32.mrb[0].mxu0
  %v8043 = vadd.f32 0.0, %v8042
  %v8044 = vpop.f32.mrb[0].mxu0
  %8045 = vdwg.mxu0
  %8046 = vmatprep.subr.mxu0 0.0
  %v8047 = vand.u32 %v2014, 4294901760
  %v8048 = vsub.f32 %v2014, %v8047
  %v8049 = vand.u32 %v8048, 4294901760
  %v8050 = vsub.f32 %v8048, %v8049
  %v8051 = vand.u32 %v8050, 4294901760
  %8052 = vmatpush1.msra.mxu0 %v8051
  %8053 = vmatprep.subr.mxu0 0.0
  %8054 = vmatpush1.msra.mxu0 0.0
  %8055 = vmatprep.subr.mxu0 0.0
  %8056 = vmatpush1.msra.mxu0 0.0
  %8057 = vmatprep.subr.mxu0 0.0
  %8058 = vmatpush1.msra.mxu0 0.0
  %8059 = vmatprep.subr.mxu0 0.0
  %8060 = vmatpush1.msra.mxu0 0.0
  %8061 = vmatprep.subr.mxu0 0.0
  %8062 = vmatpush1.msra.mxu0 0.0
  %8063 = vmatprep.subr.mxu0 0.0
  %8064 = vmatpush1.msra.mxu0 0.0
  %8065 = vmatprep.subr.mxu0 0.0
  %8066 = vmatpush1.msra.mxu0 0.0
  %8067 = vmatprep.subr.mxu0 0.0
  %8068 = vmatpush1.msra.mxu0 0.0
  %8069 = vmatprep.subr.mxu0 0.0
  %8070 = vmatpush1.msra.mxu0 0.0
  %8071 = vmatprep.subr.mxu0 0.0
  %8072 = vmatpush1.msra.mxu0 0.0
  %8073 = vmatprep.subr.mxu0 0.0
  %8074 = vmatpush1.msra.mxu0 0.0
  %8075 = vmatprep.subr.mxu0 0.0
  %8076 = vmatpush1.msra.mxu0 0.0
  %8077 = vmatprep.subr.mxu0 0.0
  %8078 = vmatpush1.msra.mxu0 0.0
  %8079 = vmatprep.subr.mxu0 0.0
  %8080 = vmatpush1.msra.mxu0 0.0
  %8081 = vmatprep.subr.mxu0 0.0
  %8082 = vmatpush1.msra.mxu0 0.0
  %8083 = vmatprep.subr.mxu0 0.0
  %8084 = vmatpush1.msra.mxu0 0.0
  %8085 = vmatprep.subr.mxu0 0.0
  %8086 = vmatpush1.msra.mxu0 0.0
  %8087 = vmatprep.subr.mxu0 0.0
  %8088 = vmatpush1.msra.mxu0 0.0
  %8089 = vmatprep.subr.mxu0 0.0
  %8090 = vmatpush1.msra.mxu0 0.0
  %8091 = vmatprep.subr.mxu0 0.0
  %8092 = vmatpush1.msra.mxu0 0.0
  %8093 = vmatprep.subr.mxu0 0.0
  %8094 = vmatpush1.msra.mxu0 0.0
  %8095 = vmatprep.subr.mxu0 0.0
  %8096 = vmatpush1.msra.mxu0 0.0
  %8097 = vmatprep.subr.mxu0 0.0
  %8098 = vmatpush1.msra.mxu0 0.0
  %8099 = vmatprep.subr.mxu0 0.0
  %8100 = vmatpush1.msra.mxu0 0.0
  %8101 = vmatprep.subr.mxu0 0.0
  %8102 = vmatpush1.msra.mxu0 0.0
  %8103 = vmatprep.subr.mxu0 0.0
  %8104 = vmatpush1.msra.mxu0 0.0
  %8105 = vmatprep.subr.mxu0 0.0
  %8106 = vmatpush1.msra.mxu0 0.0
  %8107 = vmatprep.subr.mxu0 0.0
  %8108 = vmatpush1.msra.mxu0 0.0
  %8109 = vmatprep.subr.mxu0 0.0
  %8110 = vmatpush1.msra.mxu0 0.0
  %8111 = vmatprep.subr.mxu0 0.0
  %8112 = vmatpush1.msra.mxu0 0.0
  %8113 = vmatprep.subr.mxu0 0.0
  %8114 = vmatpush1.msra.mxu0 0.0
  %8115 = vmatprep.mubr.f32.mxu0 0.0
  %v8116 = vand.u32 %v7968, 4294901760
  %8117 = vmatmul.mubr.f32.gmra.mrb[0].mxu0 %v8116
  %v8118 = vpop.f32.mrb[0].mxu0
  %v8119 = vadd.f32 %v8043, %v8118
  %v8120 = vpop.f32.mrb[0].mxu0
  %8121 = vdwg.mxu0
  %8122 = vmatprep.subr.mxu0 0.0
  %v8123 = vand.u32 %v2014, 4294901760
  %v8124 = vsub.f32 %v2014, %v8123
  %8125 = vmatpush1.msra.mxu0 %v8124
  %8126 = vmatprep.subr.mxu0 0.0
  %8127 = vmatpush1.msra.mxu0 0.0
  %8128 = vmatprep.subr.mxu0 0.0
  %8129 = vmatpush1.msra.mxu0 0.0
  %8130 = vmatprep.subr.mxu0 0.0
  %8131 = vmatpush1.msra.mxu0 0.0
  %8132 = vmatprep.subr.mxu0 0.0
  %8133 = vmatpush1.msra.mxu0 0.0
  %8134 = vmatprep.subr.mxu0 0.0
  %8135 = vmatpush1.msra.mxu0 0.0
  %8136 = vmatprep.subr.mxu0 0.0
  %8137 = vmatpush1.msra.mxu0 0.0
  %8138 = vmatprep.subr.mxu0 0.0
  %8139 = vmatpush1.msra.mxu0 0.0
  %8140 = vmatprep.subr.mxu0 0.0
  %8141 = vmatpush1.msra.mxu0 0.0
  %8142 = vmatprep.subr.mxu0 0.0
  %8143 = vmatpush1.msra.mxu0 0.0
  %8144 = vmatprep.subr.mxu0 0.0
  %8145 = vmatpush1.msra.mxu0 0.0
  %8146 = vmatprep.subr.mxu0 0.0
  %8147 = vmatpush1.msra.mxu0 0.0
  %8148 = vmatprep.subr.mxu0 0.0
  %8149 = vmatpush1.msra.mxu0 0.0
  %8150 = vmatprep.subr.mxu0 0.0
  %8151 = vmatpush1.msra.mxu0 0.0
  %8152 = vmatprep.subr.mxu0 0.0
  %8153 = vmatpush1.msra.mxu0 0.0
  %8154 = vmatprep.subr.mxu0 0.0
  %8155 = vmatpush1.msra.mxu0 0.0
  %8156 = vmatprep.subr.mxu0 0.0
  %8157 = vmatpush1.msra.mxu0 0.0
  %8158 = vmatprep.subr.mxu0 0.0
  %8159 = vmatpush1.msra.mxu0 0.0
  %8160 = vmatprep.subr.mxu0 0.0
  %8161 = vmatpush1.msra.mxu0 0.0
  %8162 = vmatprep.subr.mxu0 0.0
  %8163 = vmatpush1.msra.mxu0 0.0
  %8164 = vmatprep.subr.mxu0 0.0
  %8165 = vmatpush1.msra.mxu0 0.0
  %8166 = vmatprep.subr.mxu0 0.0
  %8167 = vmatpush1.msra.mxu0 0.0
  %8168 = vmatprep.subr.mxu0 0.0
  %8169 = vmatpush1.msra.mxu0 0.0
  %8170 = vmatprep.subr.mxu0 0.0
  %8171 = vmatpush1.msra.mxu0 0.0
  %8172 = vmatprep.subr.mxu0 0.0
  %8173 = vmatpush1.msra.mxu0 0.0
  %8174 = vmatprep.subr.mxu0 0.0
  %8175 = vmatpush1.msra.mxu0 0.0
  %8176 = vmatprep.subr.mxu0 0.0
  %8177 = vmatpush1.msra.mxu0 0.0
  %8178 = vmatprep.subr.mxu0 0.0
  %8179 = vmatpush1.msra.mxu0 0.0
  %8180 = vmatprep.subr.mxu0 0.0
  %8181 = vmatpush1.msra.mxu0 0.0
  %8182 = vmatprep.subr.mxu0 0.0
  %8183 = vmatpush1.msra.mxu0 0.0
  %8184 = vmatprep.subr.mxu0 0.0
  %8185 = vmatpush1.msra.mxu0 0.0
  %8186 = vmatprep.subr.mxu0 0.0
  %8187 = vmatpush1.msra.mxu0 0.0
  %8188 = vmatprep.mubr.f32.mxu0 0.0
  %v8189 = vand.u32 %v7968, 4294901760
  %v8190 = vsub.f32 %v7968, %v8189
  %8191 = vmatmul.mubr.f32.gmra.mrb[0].mxu0 %v8190
  %v8192 = vpop.f32.mrb[0].mxu0
  %v8193 = vadd.f32 %v8119, %v8192
  %v8194 = vpop.f32.mrb[0].mxu0
  %8195 = vdwg.mxu0
  %8196 = vmatprep.subr.mxu0 0.0
  %v8197 = vand.u32 %v2014, 4294901760
  %8198 = vmatpush1.msra.mxu0 %v8197
  %8199 = vmatprep.subr.mxu0 0.0
  %8200 = vmatpush1.msra.mxu0 0.0
  %8201 = vmatprep.subr.mxu0 0.0
  %8202 = vmatpush1.msra.mxu0 0.0
  %8203 = vmatprep.subr.mxu0 0.0
  %8204 = vmatpush1.msra.mxu0 0.0
  %8205 = vmatprep.subr.mxu0 0.0
  %8206 = vmatpush1.msra.mxu0 0.0
  %8207 = vmatprep.subr.mxu0 0.0
  %8208 = vmatpush1.msra.mxu0 0.0
  %8209 = vmatprep.subr.mxu0 0.0
  %8210 = vmatpush1.msra.mxu0 0.0
  %8211 = vmatprep.subr.mxu0 0.0
  %8212 = vmatpush1.msra.mxu0 0.0
  %8213 = vmatprep.subr.mxu0 0.0
  %8214 = vmatpush1.msra.mxu0 0.0
  %8215 = vmatprep.subr.mxu0 0.0
  %8216 = vmatpush1.msra.mxu0 0.0
  %8217 = vmatprep.subr.mxu0 0.0
  %8218 = vmatpush1.msra.mxu0 0.0
  %8219 = vmatprep.subr.mxu0 0.0
  %8220 = vmatpush1.msra.mxu0 0.0
  %8221 = vmatprep.subr.mxu0 0.0
  %8222 = vmatpush1.msra.mxu0 0.0
  %8223 = vmatprep.subr.mxu0 0.0
  %8224 = vmatpush1.msra.mxu0 0.0
  %8225 = vmatprep.subr.mxu0 0.0
  %8226 = vmatpush1.msra.mxu0 0.0
  %8227 = vmatprep.subr.mxu0 0.0
  %8228 = vmatpush1.msra.mxu0 0.0
  %8229 = vmatprep.subr.mxu0 0.0
  %8230 = vmatpush1.msra.mxu0 0.0
  %8231 = vmatprep.subr.mxu0 0.0
  %8232 = vmatpush1.msra.mxu0 0.0
  %8233 = vmatprep.subr.mxu0 0.0
  %8234 = vmatpush1.msra.mxu0 0.0
  %8235 = vmatprep.subr.mxu0 0.0
  %8236 = vmatpush1.msra.mxu0 0.0
  %8237 = vmatprep.subr.mxu0 0.0
  %8238 = vmatpush1.msra.mxu0 0.0
  %8239 = vmatprep.subr.mxu0 0.0
  %8240 = vmatpush1.msra.mxu0 0.0
  %8241 = vmatprep.subr.mxu0 0.0
  %8242 = vmatpush1.msra.mxu0 0.0
  %8243 = vmatprep.subr.mxu0 0.0
  %8244 = vmatpush1.msra.mxu0 0.0
  %8245 = vmatprep.subr.mxu0 0.0
  %8246 = vmatpush1.msra.mxu0 0.0
  %8247 = vmatprep.subr.mxu0 0.0
  %8248 = vmatpush1.msra.mxu0 0.0
  %8249 = vmatprep.subr.mxu0 0.0
  %8250 = vmatpush1.msra.mxu0 0.0
  %8251 = vmatprep.subr.mxu0 0.0
  %8252 = vmatpush1.msra.mxu0 0.0
  %8253 = vmatprep.subr.mxu0 0.0
  %8254 = vmatpush1.msra.mxu0 0.0
  %8255 = vmatprep.subr.mxu0 0.0
  %8256 = vmatpush1.msra.mxu0 0.0
  %8257 = vmatprep.subr.mxu0 0.0
  %8258 = vmatpush1.msra.mxu0 0.0
  %8259 = vmatprep.subr.mxu0 0.0
  %8260 = vmatpush1.msra.mxu0 0.0
  %8261 = vmatprep.mubr.f32.mxu0 0.0
  %v8262 = vand.u32 %v7968, 4294901760
  %v8263 = vsub.f32 %v7968, %v8262
  %v8264 = vand.u32 %v8263, 4294901760
  %8265 = vmatmul.mubr.f32.gmra.mrb[0].mxu0 %v8264
  %v8266 = vpop.f32.mrb[0].mxu0
  %v8267 = vadd.f32 %v8193, %v8266
  %v8268 = vpop.f32.mrb[0].mxu0
  %8269 = vdwg.mxu0
  %8270 = vmatprep.subr.mxu0 0.0
  %v8271 = vand.u32 %v2014, 4294901760
  %v8272 = vsub.f32 %v2014, %v8271
  %v8273 = vand.u32 %v8272, 4294901760
  %8274 = vmatpush1.msra.mxu0 %v8273
  %8275 = vmatprep.subr.mxu0 0.0
  %8276 = vmatpush1.msra.mxu0 0.0
  %8277 = vmatprep.subr.mxu0 0.0
  %8278 = vmatpush1.msra.mxu0 0.0
  %8279 = vmatprep.subr.mxu0 0.0
  %8280 = vmatpush1.msra.mxu0 0.0
  %8281 = vmatprep.subr.mxu0 0.0
  %8282 = vmatpush1.msra.mxu0 0.0
  %8283 = vmatprep.subr.mxu0 0.0
  %8284 = vmatpush1.msra.mxu0 0.0
  %8285 = vmatprep.subr.mxu0 0.0
  %8286 = vmatpush1.msra.mxu0 0.0
  %8287 = vmatprep.subr.mxu0 0.0
  %8288 = vmatpush1.msra.mxu0 0.0
  %8289 = vmatprep.subr.mxu0 0.0
  %8290 = vmatpush1.msra.mxu0 0.0
  %8291 = vmatprep.subr.mxu0 0.0
  %8292 = vmatpush1.msra.mxu0 0.0
  %8293 = vmatprep.subr.mxu0 0.0
  %8294 = vmatpush1.msra.mxu0 0.0
  %8295 = vmatprep.subr.mxu0 0.0
  %8296 = vmatpush1.msra.mxu0 0.0
  %8297 = vmatprep.subr.mxu0 0.0
  %8298 = vmatpush1.msra.mxu0 0.0
  %8299 = vmatprep.subr.mxu0 0.0
  %8300 = vmatpush1.msra.mxu0 0.0
  %8301 = vmatprep.subr.mxu0 0.0
  %8302 = vmatpush1.msra.mxu0 0.0
  %8303 = vmatprep.subr.mxu0 0.0
  %8304 = vmatpush1.msra.mxu0 0.0
  %8305 = vmatprep.subr.mxu0 0.0
  %8306 = vmatpush1.msra.mxu0 0.0
  %8307 = vmatprep.subr.mxu0 0.0
  %8308 = vmatpush1.msra.mxu0 0.0
  %8309 = vmatprep.subr.mxu0 0.0
  %8310 = vmatpush1.msra.mxu0 0.0
  %8311 = vmatprep.subr.mxu0 0.0
  %8312 = vmatpush1.msra.mxu0 0.0
  %8313 = vmatprep.subr.mxu0 0.0
  %8314 = vmatpush1.msra.mxu0 0.0
  %8315 = vmatprep.subr.mxu0 0.0
  %8316 = vmatpush1.msra.mxu0 0.0
  %8317 = vmatprep.subr.mxu0 0.0
  %8318 = vmatpush1.msra.mxu0 0.0
  %8319 = vmatprep.subr.mxu0 0.0
  %8320 = vmatpush1.msra.mxu0 0.0
  %8321 = vmatprep.subr.mxu0 0.0
  %8322 = vmatpush1.msra.mxu0 0.0
  %8323 = vmatprep.subr.mxu0 0.0
  %8324 = vmatpush1.msra.mxu0 0.0
  %8325 = vmatprep.subr.mxu0 0.0
  %8326 = vmatpush1.msra.mxu0 0.0
  %8327 = vmatprep.subr.mxu0 0.0
  %8328 = vmatpush1.msra.mxu0 0.0
  %8329 = vmatprep.subr.mxu0 0.0
  %8330 = vmatpush1.msra.mxu0 0.0
  %8331 = vmatprep.subr.mxu0 0.0
  %8332 = vmatpush1.msra.mxu0 0.0
  %8333 = vmatprep.subr.mxu0 0.0
  %8334 = vmatpush1.msra.mxu0 0.0
  %8335 = vmatprep.subr.mxu0 0.0
  %8336 = vmatpush1.msra.mxu0 0.0
  %8337 = vmatprep.mubr.f32.mxu0 0.0
  %v8338 = vand.u32 %v7968, 4294901760
  %8339 = vmatmul.mubr.f32.gmra.mrb[0].mxu0 %v8338
  %v8340 = vpop.f32.mrb[0].mxu0
  %v8341 = vadd.f32 %v8267, %v8340
  %v8342 = vpop.f32.mrb[0].mxu0
  %8343 = vdwg.mxu0
  %8344 = vmatprep.subr.mxu0 0.0
  %v8345 = vand.u32 %v2014, 4294901760
  %8346 = vmatpush1.msra.mxu0 %v8345
  %8347 = vmatprep.subr.mxu0 0.0
  %8348 = vmatpush1.msra.mxu0 0.0
  %8349 = vmatprep.subr.mxu0 0.0
  %8350 = vmatpush1.msra.mxu0 0.0
  %8351 = vmatprep.subr.mxu0 0.0
  %8352 = vmatpush1.msra.mxu0 0.0
  %8353 = vmatprep.subr.mxu0 0.0
  %8354 = vmatpush1.msra.mxu0 0.0
  %8355 = vmatprep.subr.mxu0 0.0
  %8356 = vmatpush1.msra.mxu0 0.0
  %8357 = vmatprep.subr.mxu0 0.0
  %8358 = vmatpush1.msra.mxu0 0.0
  %8359 = vmatprep.subr.mxu0 0.0
  %8360 = vmatpush1.msra.mxu0 0.0
  %8361 = vmatprep.subr.mxu0 0.0
  %8362 = vmatpush1.msra.mxu0 0.0
  %8363 = vmatprep.subr.mxu0 0.0
  %8364 = vmatpush1.msra.mxu0 0.0
  %8365 = vmatprep.subr.mxu0 0.0
  %8366 = vmatpush1.msra.mxu0 0.0
  %8367 = vmatprep.subr.mxu0 0.0
  %8368 = vmatpush1.msra.mxu0 0.0
  %8369 = vmatprep.subr.mxu0 0.0
  %8370 = vmatpush1.msra.mxu0 0.0
  %8371 = vmatprep.subr.mxu0 0.0
  %8372 = vmatpush1.msra.mxu0 0.0
  %8373 = vmatprep.subr.mxu0 0.0
  %8374 = vmatpush1.msra.mxu0 0.0
  %8375 = vmatprep.subr.mxu0 0.0
  %8376 = vmatpush1.msra.mxu0 0.0
  %8377 = vmatprep.subr.mxu0 0.0
  %8378 = vmatpush1.msra.mxu0 0.0
  %8379 = vmatprep.subr.mxu0 0.0
  %8380 = vmatpush1.msra.mxu0 0.0
  %8381 = vmatprep.subr.mxu0 0.0
  %8382 = vmatpush1.msra.mxu0 0.0
  %8383 = vmatprep.subr.mxu0 0.0
  %8384 = vmatpush1.msra.mxu0 0.0
  %8385 = vmatprep.subr.mxu0 0.0
  %8386 = vmatpush1.msra.mxu0 0.0
  %8387 = vmatprep.subr.mxu0 0.0
  %8388 = vmatpush1.msra.mxu0 0.0
  %8389 = vmatprep.subr.mxu0 0.0
  %8390 = vmatpush1.msra.mxu0 0.0
  %8391 = vmatprep.subr.mxu0 0.0
  %8392 = vmatpush1.msra.mxu0 0.0
  %8393 = vmatprep.subr.mxu0 0.0
  %8394 = vmatpush1.msra.mxu0 0.0
  %8395 = vmatprep.subr.mxu0 0.0
  %8396 = vmatpush1.msra.mxu0 0.0
  %8397 = vmatprep.subr.mxu0 0.0
  %8398 = vmatpush1.msra.mxu0 0.0
  %8399 = vmatprep.subr.mxu0 0.0
  %8400 = vmatpush1.msra.mxu0 0.0
  %8401 = vmatprep.subr.mxu0 0.0
  %8402 = vmatpush1.msra.mxu0 0.0
  %8403 = vmatprep.subr.mxu0 0.0
  %8404 = vmatpush1.msra.mxu0 0.0
  %8405 = vmatprep.subr.mxu0 0.0
  %8406 = vmatpush1.msra.mxu0 0.0
  %8407 = vmatprep.subr.mxu0 0.0
  %8408 = vmatpush1.msra.mxu0 0.0
  %8409 = vmatprep.mubr.f32.mxu0 0.0
  %v8410 = vand.u32 %v7968, 4294901760
  %8411 = vmatmul.mubr.f32.gmra.mrb[0].mxu0 %v8410
  %v8412 = vpop.f32.mrb[0].mxu0
  %v8413 = vadd.f32 %v8341, %v8412
  %v8414 = vpop.f32.mrb[0].mxu0
  %8415 = vdwg.mxu0
  %v8417 = vsel %vm2017, %v5720, 0
  %8419 = vmatprep.subr.mxu0 0.0
  %v8420 = vand.u32 %v2015, 4294901760
  %8421 = vmatpush1.msra.mxu0 %v8420
  %8422 = vmatprep.subr.mxu0 0.0
  %8423 = vmatpush1.msra.mxu0 0.0
  %8424 = vmatprep.subr.mxu0 0.0
  %8425 = vmatpush1.msra.mxu0 0.0
  %8426 = vmatprep.subr.mxu0 0.0
  %8427 = vmatpush1.msra.mxu0 0.0
  %8428 = vmatprep.subr.mxu0 0.0
  %8429 = vmatpush1.msra.mxu0 0.0
  %8430 = vmatprep.subr.mxu0 0.0
  %8431 = vmatpush1.msra.mxu0 0.0
  %8432 = vmatprep.subr.mxu0 0.0
  %8433 = vmatpush1.msra.mxu0 0.0
  %8434 = vmatprep.subr.mxu0 0.0
  %8435 = vmatpush1.msra.mxu0 0.0
  %8436 = vmatprep.subr.mxu0 0.0
  %8437 = vmatpush1.msra.mxu0 0.0
  %8438 = vmatprep.subr.mxu0 0.0
  %8439 = vmatpush1.msra.mxu0 0.0
  %8440 = vmatprep.subr.mxu0 0.0
  %8441 = vmatpush1.msra.mxu0 0.0
  %8442 = vmatprep.subr.mxu0 0.0
  %8443 = vmatpush1.msra.mxu0 0.0
  %8444 = vmatprep.subr.mxu0 0.0
  %8445 = vmatpush1.msra.mxu0 0.0
  %8446 = vmatprep.subr.mxu0 0.0
  %8447 = vmatpush1.msra.mxu0 0.0
  %8448 = vmatprep.subr.mxu0 0.0
  %8449 = vmatpush1.msra.mxu0 0.0
  %8450 = vmatprep.subr.mxu0 0.0
  %8451 = vmatpush1.msra.mxu0 0.0
  %8452 = vmatprep.subr.mxu0 0.0
  %8453 = vmatpush1.msra.mxu0 0.0
  %8454 = vmatprep.subr.mxu0 0.0
  %8455 = vmatpush1.msra.mxu0 0.0
  %8456 = vmatprep.subr.mxu0 0.0
  %8457 = vmatpush1.msra.mxu0 0.0
  %8458 = vmatprep.subr.mxu0 0.0
  %8459 = vmatpush1.msra.mxu0 0.0
  %8460 = vmatprep.subr.mxu0 0.0
  %8461 = vmatpush1.msra.mxu0 0.0
  %8462 = vmatprep.subr.mxu0 0.0
  %8463 = vmatpush1.msra.mxu0 0.0
  %8464 = vmatprep.subr.mxu0 0.0
  %8465 = vmatpush1.msra.mxu0 0.0
  %8466 = vmatprep.subr.mxu0 0.0
  %8467 = vmatpush1.msra.mxu0 0.0
  %8468 = vmatprep.subr.mxu0 0.0
  %8469 = vmatpush1.msra.mxu0 0.0
  %8470 = vmatprep.subr.mxu0 0.0
  %8471 = vmatpush1.msra.mxu0 0.0
  %8472 = vmatprep.subr.mxu0 0.0
  %8473 = vmatpush1.msra.mxu0 0.0
  %8474 = vmatprep.subr.mxu0 0.0
  %8475 = vmatpush1.msra.mxu0 0.0
  %8476 = vmatprep.subr.mxu0 0.0
  %8477 = vmatpush1.msra.mxu0 0.0
  %8478 = vmatprep.subr.mxu0 0.0
  %8479 = vmatpush1.msra.mxu0 0.0
  %8480 = vmatprep.subr.mxu0 0.0
  %8481 = vmatpush1.msra.mxu0 0.0
  %8482 = vmatprep.subr.mxu0 0.0
  %8483 = vmatpush1.msra.mxu0 0.0
  %8484 = vmatprep.mubr.f32.mxu0 0.0
  %v8485 = vand.u32 %v8417, 4294901760
  %v8486 = vsub.f32 %v8417, %v8485
  %v8487 = vand.u32 %v8486, 4294901760
  %v8488 = vsub.f32 %v8486, %v8487
  %v8489 = vand.u32 %v8488, 4294901760
  %8490 = vmatmul.mubr.f32.gmra.mrb[0].mxu0 %v8489
  %v8491 = vpop.f32.mrb[0].mxu0
  %v8492 = vadd.f32 0.0, %v8491
  %v8493 = vpop.f32.mrb[0].mxu0
  %8494 = vdwg.mxu0
  %8495 = vmatprep.subr.mxu0 0.0
  %v8496 = vand.u32 %v2015, 4294901760
  %v8497 = vsub.f32 %v2015, %v8496
  %v8498 = vand.u32 %v8497, 4294901760
  %v8499 = vsub.f32 %v8497, %v8498
  %v8500 = vand.u32 %v8499, 4294901760
  %8501 = vmatpush1.msra.mxu0 %v8500
  %8502 = vmatprep.subr.mxu0 0.0
  %8503 = vmatpush1.msra.mxu0 0.0
  %8504 = vmatprep.subr.mxu0 0.0
  %8505 = vmatpush1.msra.mxu0 0.0
  %8506 = vmatprep.subr.mxu0 0.0
  %8507 = vmatpush1.msra.mxu0 0.0
  %8508 = vmatprep.subr.mxu0 0.0
  %8509 = vmatpush1.msra.mxu0 0.0
  %8510 = vmatprep.subr.mxu0 0.0
  %8511 = vmatpush1.msra.mxu0 0.0
  %8512 = vmatprep.subr.mxu0 0.0
  %8513 = vmatpush1.msra.mxu0 0.0
  %8514 = vmatprep.subr.mxu0 0.0
  %8515 = vmatpush1.msra.mxu0 0.0
  %8516 = vmatprep.subr.mxu0 0.0
  %8517 = vmatpush1.msra.mxu0 0.0
  %8518 = vmatprep.subr.mxu0 0.0
  %8519 = vmatpush1.msra.mxu0 0.0
  %8520 = vmatprep.subr.mxu0 0.0
  %8521 = vmatpush1.msra.mxu0 0.0
  %8522 = vmatprep.subr.mxu0 0.0
  %8523 = vmatpush1.msra.mxu0 0.0
  %8524 = vmatprep.subr.mxu0 0.0
  %8525 = vmatpush1.msra.mxu0 0.0
  %8526 = vmatprep.subr.mxu0 0.0
  %8527 = vmatpush1.msra.mxu0 0.0
  %8528 = vmatprep.subr.mxu0 0.0
  %8529 = vmatpush1.msra.mxu0 0.0
  %8530 = vmatprep.subr.mxu0 0.0
  %8531 = vmatpush1.msra.mxu0 0.0
  %8532 = vmatprep.subr.mxu0 0.0
  %8533 = vmatpush1.msra.mxu0 0.0
  %8534 = vmatprep.subr.mxu0 0.0
  %8535 = vmatpush1.msra.mxu0 0.0
  %8536 = vmatprep.subr.mxu0 0.0
  %8537 = vmatpush1.msra.mxu0 0.0
  %8538 = vmatprep.subr.mxu0 0.0
  %8539 = vmatpush1.msra.mxu0 0.0
  %8540 = vmatprep.subr.mxu0 0.0
  %8541 = vmatpush1.msra.mxu0 0.0
  %8542 = vmatprep.subr.mxu0 0.0
  %8543 = vmatpush1.msra.mxu0 0.0
  %8544 = vmatprep.subr.mxu0 0.0
  %8545 = vmatpush1.msra.mxu0 0.0
  %8546 = vmatprep.subr.mxu0 0.0
  %8547 = vmatpush1.msra.mxu0 0.0
  %8548 = vmatprep.subr.mxu0 0.0
  %8549 = vmatpush1.msra.mxu0 0.0
  %8550 = vmatprep.subr.mxu0 0.0
  %8551 = vmatpush1.msra.mxu0 0.0
  %8552 = vmatprep.subr.mxu0 0.0
  %8553 = vmatpush1.msra.mxu0 0.0
  %8554 = vmatprep.subr.mxu0 0.0
  %8555 = vmatpush1.msra.mxu0 0.0
  %8556 = vmatprep.subr.mxu0 0.0
  %8557 = vmatpush1.msra.mxu0 0.0
  %8558 = vmatprep.subr.mxu0 0.0
  %8559 = vmatpush1.msra.mxu0 0.0
  %8560 = vmatprep.subr.mxu0 0.0
  %8561 = vmatpush1.msra.mxu0 0.0
  %8562 = vmatprep.subr.mxu0 0.0
  %8563 = vmatpush1.msra.mxu0 0.0
  %8564 = vmatprep.mubr.f32.mxu0 0.0
  %v8565 = vand.u32 %v8417, 4294901760
  %8566 = vmatmul.mubr.f32.gmra.mrb[0].mxu0 %v8565
  %v8567 = vpop.f32.mrb[0].mxu0
  %v8568 = vadd.f32 %v8492, %v8567
  %v8569 = vpop.f32.mrb[0].mxu0
  %8570 = vdwg.mxu0
  %8571 = vmatprep.subr.mxu0 0.0
  %v8572 = vand.u32 %v2015, 4294901760
  %v8573 = vsub.f32 %v2015, %v8572
  %8574 = vmatpush1.msra.mxu0 %v8573
  %8575 = vmatprep.subr.mxu0 0.0
  %8576 = vmatpush1.msra.mxu0 0.0
  %8577 = vmatprep.subr.mxu0 0.0
  %8578 = vmatpush1.msra.mxu0 0.0
  %8579 = vmatprep.subr.mxu0 0.0
  %8580 = vmatpush1.msra.mxu0 0.0
  %8581 = vmatprep.subr.mxu0 0.0
  %8582 = vmatpush1.msra.mxu0 0.0
  %8583 = vmatprep.subr.mxu0 0.0
  %8584 = vmatpush1.msra.mxu0 0.0
  %8585 = vmatprep.subr.mxu0 0.0
  %8586 = vmatpush1.msra.mxu0 0.0
  %8587 = vmatprep.subr.mxu0 0.0
  %8588 = vmatpush1.msra.mxu0 0.0
  %8589 = vmatprep.subr.mxu0 0.0
  %8590 = vmatpush1.msra.mxu0 0.0
  %8591 = vmatprep.subr.mxu0 0.0
  %8592 = vmatpush1.msra.mxu0 0.0
  %8593 = vmatprep.subr.mxu0 0.0
  %8594 = vmatpush1.msra.mxu0 0.0
  %8595 = vmatprep.subr.mxu0 0.0
  %8596 = vmatpush1.msra.mxu0 0.0
  %8597 = vmatprep.subr.mxu0 0.0
  %8598 = vmatpush1.msra.mxu0 0.0
  %8599 = vmatprep.subr.mxu0 0.0
  %8600 = vmatpush1.msra.mxu0 0.0
  %8601 = vmatprep.subr.mxu0 0.0
  %8602 = vmatpush1.msra.mxu0 0.0
  %8603 = vmatprep.subr.mxu0 0.0
  %8604 = vmatpush1.msra.mxu0 0.0
  %8605 = vmatprep.subr.mxu0 0.0
  %8606 = vmatpush1.msra.mxu0 0.0
  %8607 = vmatprep.subr.mxu0 0.0
  %8608 = vmatpush1.msra.mxu0 0.0
  %8609 = vmatprep.subr.mxu0 0.0
  %8610 = vmatpush1.msra.mxu0 0.0
  %8611 = vmatprep.subr.mxu0 0.0
  %8612 = vmatpush1.msra.mxu0 0.0
  %8613 = vmatprep.subr.mxu0 0.0
  %8614 = vmatpush1.msra.mxu0 0.0
  %8615 = vmatprep.subr.mxu0 0.0
  %8616 = vmatpush1.msra.mxu0 0.0
  %8617 = vmatprep.subr.mxu0 0.0
  %8618 = vmatpush1.msra.mxu0 0.0
  %8619 = vmatprep.subr.mxu0 0.0
  %8620 = vmatpush1.msra.mxu0 0.0
  %8621 = vmatprep.subr.mxu0 0.0
  %8622 = vmatpush1.msra.mxu0 0.0
  %8623 = vmatprep.subr.mxu0 0.0
  %8624 = vmatpush1.msra.mxu0 0.0
  %8625 = vmatprep.subr.mxu0 0.0
  %8626 = vmatpush1.msra.mxu0 0.0
  %8627 = vmatprep.subr.mxu0 0.0
  %8628 = vmatpush1.msra.mxu0 0.0
  %8629 = vmatprep.subr.mxu0 0.0
  %8630 = vmatpush1.msra.mxu0 0.0
  %8631 = vmatprep.subr.mxu0 0.0
  %8632 = vmatpush1.msra.mxu0 0.0
  %8633 = vmatprep.subr.mxu0 0.0
  %8634 = vmatpush1.msra.mxu0 0.0
  %8635 = vmatprep.subr.mxu0 0.0
  %8636 = vmatpush1.msra.mxu0 0.0
  %8637 = vmatprep.mubr.f32.mxu0 0.0
  %v8638 = vand.u32 %v8417, 4294901760
  %v8639 = vsub.f32 %v8417, %v8638
  %8640 = vmatmul.mubr.f32.gmra.mrb[0].mxu0 %v8639
  %v8641 = vpop.f32.mrb[0].mxu0
  %v8642 = vadd.f32 %v8568, %v8641
  %v8643 = vpop.f32.mrb[0].mxu0
  %8644 = vdwg.mxu0
  %8645 = vmatprep.subr.mxu0 0.0
  %v8646 = vand.u32 %v2015, 4294901760
  %8647 = vmatpush1.msra.mxu0 %v8646
  %8648 = vmatprep.subr.mxu0 0.0
  %8649 = vmatpush1.msra.mxu0 0.0
  %8650 = vmatprep.subr.mxu0 0.0
  %8651 = vmatpush1.msra.mxu0 0.0
  %8652 = vmatprep.subr.mxu0 0.0
  %8653 = vmatpush1.msra.mxu0 0.0
  %8654 = vmatprep.subr.mxu0 0.0
  %8655 = vmatpush1.msra.mxu0 0.0
  %8656 = vmatprep.subr.mxu0 0.0
  %8657 = vmatpush1.msra.mxu0 0.0
  %8658 = vmatprep.subr.mxu0 0.0
  %8659 = vmatpush1.msra.mxu0 0.0
  %8660 = vmatprep.subr.mxu0 0.0
  %8661 = vmatpush1.msra.mxu0 0.0
  %8662 = vmatprep.subr.mxu0 0.0
  %8663 = vmatpush1.msra.mxu0 0.0
  %8664 = vmatprep.subr.mxu0 0.0
  %8665 = vmatpush1.msra.mxu0 0.0
  %8666 = vmatprep.subr.mxu0 0.0
  %8667 = vmatpush1.msra.mxu0 0.0
  %8668 = vmatprep.subr.mxu0 0.0
  %8669 = vmatpush1.msra.mxu0 0.0
  %8670 = vmatprep.subr.mxu0 0.0
  %8671 = vmatpush1.msra.mxu0 0.0
  %8672 = vmatprep.subr.mxu0 0.0
  %8673 = vmatpush1.msra.mxu0 0.0
  %8674 = vmatprep.subr.mxu0 0.0
  %8675 = vmatpush1.msra.mxu0 0.0
  %8676 = vmatprep.subr.mxu0 0.0
  %8677 = vmatpush1.msra.mxu0 0.0
  %8678 = vmatprep.subr.mxu0 0.0
  %8679 = vmatpush1.msra.mxu0 0.0
  %8680 = vmatprep.subr.mxu0 0.0
  %8681 = vmatpush1.msra.mxu0 0.0
  %8682 = vmatprep.subr.mxu0 0.0
  %8683 = vmatpush1.msra.mxu0 0.0
  %8684 = vmatprep.subr.mxu0 0.0
  %8685 = vmatpush1.msra.mxu0 0.0
  %8686 = vmatprep.subr.mxu0 0.0
  %8687 = vmatpush1.msra.mxu0 0.0
  %8688 = vmatprep.subr.mxu0 0.0
  %8689 = vmatpush1.msra.mxu0 0.0
  %8690 = vmatprep.subr.mxu0 0.0
  %8691 = vmatpush1.msra.mxu0 0.0
  %8692 = vmatprep.subr.mxu0 0.0
  %8693 = vmatpush1.msra.mxu0 0.0
  %8694 = vmatprep.subr.mxu0 0.0
  %8695 = vmatpush1.msra.mxu0 0.0
  %8696 = vmatprep.subr.mxu0 0.0
  %8697 = vmatpush1.msra.mxu0 0.0
  %8698 = vmatprep.subr.mxu0 0.0
  %8699 = vmatpush1.msra.mxu0 0.0
  %8700 = vmatprep.subr.mxu0 0.0
  %8701 = vmatpush1.msra.mxu0 0.0
  %8702 = vmatprep.subr.mxu0 0.0
  %8703 = vmatpush1.msra.mxu0 0.0
  %8704 = vmatprep.subr.mxu0 0.0
  %8705 = vmatpush1.msra.mxu0 0.0
  %8706 = vmatprep.subr.mxu0 0.0
  %8707 = vmatpush1.msra.mxu0 0.0
  %8708 = vmatprep.subr.mxu0 0.0
  %8709 = vmatpush1.msra.mxu0 0.0
  %8710 = vmatprep.mubr.f32.mxu0 0.0
  %v8711 = vand.u32 %v8417, 4294901760
  %v8712 = vsub.f32 %v8417, %v8711
  %v8713 = vand.u32 %v8712, 4294901760
  %8714 = vmatmul.mubr.f32.gmra.mrb[0].mxu0 %v8713
  %v8715 = vpop.f32.mrb[0].mxu0
  %v8716 = vadd.f32 %v8642, %v8715
  %v8717 = vpop.f32.mrb[0].mxu0
  %8718 = vdwg.mxu0
  %8719 = vmatprep.subr.mxu0 0.0
  %v8720 = vand.u32 %v2015, 4294901760
  %v8721 = vsub.f32 %v2015, %v8720
  %v8722 = vand.u32 %v8721, 4294901760
  %8723 = vmatpush1.msra.mxu0 %v8722
  %8724 = vmatprep.subr.mxu0 0.0
  %8725 = vmatpush1.msra.mxu0 0.0
  %8726 = vmatprep.subr.mxu0 0.0
  %8727 = vmatpush1.msra.mxu0 0.0
  %8728 = vmatprep.subr.mxu0 0.0
  %8729 = vmatpush1.msra.mxu0 0.0
  %8730 = vmatprep.subr.mxu0 0.0
  %8731 = vmatpush1.msra.mxu0 0.0
  %8732 = vmatprep.subr.mxu0 0.0
  %8733 = vmatpush1.msra.mxu0 0.0
  %8734 = vmatprep.subr.mxu0 0.0
  %8735 = vmatpush1.msra.mxu0 0.0
  %8736 = vmatprep.subr.mxu0 0.0
  %8737 = vmatpush1.msra.mxu0 0.0
  %8738 = vmatprep.subr.mxu0 0.0
  %8739 = vmatpush1.msra.mxu0 0.0
  %8740 = vmatprep.subr.mxu0 0.0
  %8741 = vmatpush1.msra.mxu0 0.0
  %8742 = vmatprep.subr.mxu0 0.0
  %8743 = vmatpush1.msra.mxu0 0.0
  %8744 = vmatprep.subr.mxu0 0.0
  %8745 = vmatpush1.msra.mxu0 0.0
  %8746 = vmatprep.subr.mxu0 0.0
  %8747 = vmatpush1.msra.mxu0 0.0
  %8748 = vmatprep.subr.mxu0 0.0
  %8749 = vmatpush1.msra.mxu0 0.0
  %8750 = vmatprep.subr.mxu0 0.0
  %8751 = vmatpush1.msra.mxu0 0.0
  %8752 = vmatprep.subr.mxu0 0.0
  %8753 = vmatpush1.msra.mxu0 0.0
  %8754 = vmatprep.subr.mxu0 0.0
  %8755 = vmatpush1.msra.mxu0 0.0
  %8756 = vmatprep.subr.mxu0 0.0
  %8757 = vmatpush1.msra.mxu0 0.0
  %8758 = vmatprep.subr.mxu0 0.0
  %8759 = vmatpush1.msra.mxu0 0.0
  %8760 = vmatprep.subr.mxu0 0.0
  %8761 = vmatpush1.msra.mxu0 0.0
  %8762 = vmatprep.subr.mxu0 0.0
  %8763 = vmatpush1.msra.mxu0 0.0
  %8764 = vmatprep.subr.mxu0 0.0
  %8765 = vmatpush1.msra.mxu0 0.0
  %8766 = vmatprep.subr.mxu0 0.0
  %8767 = vmatpush1.msra.mxu0 0.0
  %8768 = vmatprep.subr.mxu0 0.0
  %8769 = vmatpush1.msra.mxu0 0.0
  %8770 = vmatprep.subr.mxu0 0.0
  %8771 = vmatpush1.msra.mxu0 0.0
  %8772 = vmatprep.subr.mxu0 0.0
  %8773 = vmatpush1.msra.mxu0 0.0
  %8774 = vmatprep.subr.mxu0 0.0
  %8775 = vmatpush1.msra.mxu0 0.0
  %8776 = vmatprep.subr.mxu0 0.0
  %8777 = vmatpush1.msra.mxu0 0.0
  %8778 = vmatprep.subr.mxu0 0.0
  %8779 = vmatpush1.msra.mxu0 0.0
  %8780 = vmatprep.subr.mxu0 0.0
  %8781 = vmatpush1.msra.mxu0 0.0
  %8782 = vmatprep.subr.mxu0 0.0
  %8783 = vmatpush1.msra.mxu0 0.0
  %8784 = vmatprep.subr.mxu0 0.0
  %8785 = vmatpush1.msra.mxu0 0.0
  %8786 = vmatprep.mubr.f32.mxu0 0.0
  %v8787 = vand.u32 %v8417, 4294901760
  %8788 = vmatmul.mubr.f32.gmra.mrb[0].mxu0 %v8787
  %v8789 = vpop.f32.mrb[0].mxu0
  %v8790 = vadd.f32 %v8716, %v8789
  %v8791 = vpop.f32.mrb[0].mxu0
  %8792 = vdwg.mxu0
  %8793 = vmatprep.subr.mxu0 0.0
  %v8794 = vand.u32 %v2015, 4294901760
  %8795 = vmatpush1.msra.mxu0 %v8794
  %8796 = vmatprep.subr.mxu0 0.0
  %8797 = vmatpush1.msra.mxu0 0.0
  %8798 = vmatprep.subr.mxu0 0.0
  %8799 = vmatpush1.msra.mxu0 0.0
  %8800 = vmatprep.subr.mxu0 0.0
  %8801 = vmatpush1.msra.mxu0 0.0
  %8802 = vmatprep.subr.mxu0 0.0
  %8803 = vmatpush1.msra.mxu0 0.0
  %8804 = vmatprep.subr.mxu0 0.0
  %8805 = vmatpush1.msra.mxu0 0.0
  %8806 = vmatprep.subr.mxu0 0.0
  %8807 = vmatpush1.msra.mxu0 0.0
  %8808 = vmatprep.subr.mxu0 0.0
  %8809 = vmatpush1.msra.mxu0 0.0
  %8810 = vmatprep.subr.mxu0 0.0
  %8811 = vmatpush1.msra.mxu0 0.0
  %8812 = vmatprep.subr.mxu0 0.0
  %8813 = vmatpush1.msra.mxu0 0.0
  %8814 = vmatprep.subr.mxu0 0.0
  %8815 = vmatpush1.msra.mxu0 0.0
  %8816 = vmatprep.subr.mxu0 0.0
  %8817 = vmatpush1.msra.mxu0 0.0
  %8818 = vmatprep.subr.mxu0 0.0
  %8819 = vmatpush1.msra.mxu0 0.0
  %8820 = vmatprep.subr.mxu0 0.0
  %8821 = vmatpush1.msra.mxu0 0.0
  %8822 = vmatprep.subr.mxu0 0.0
  %8823 = vmatpush1.msra.mxu0 0.0
  %8824 = vmatprep.subr.mxu0 0.0
  %8825 = vmatpush1.msra.mxu0 0.0
  %8826 = vmatprep.subr.mxu0 0.0
  %8827 = vmatpush1.msra.mxu0 0.0
  %8828 = vmatprep.subr.mxu0 0.0
  %8829 = vmatpush1.msra.mxu0 0.0
  %8830 = vmatprep.subr.mxu0 0.0
  %8831 = vmatpush1.msra.mxu0 0.0
  %8832 = vmatprep.subr.mxu0 0.0
  %8833 = vmatpush1.msra.mxu0 0.0
  %8834 = vmatprep.subr.mxu0 0.0
  %8835 = vmatpush1.msra.mxu0 0.0
  %8836 = vmatprep.subr.mxu0 0.0
  %8837 = vmatpush1.msra.mxu0 0.0
  %8838 = vmatprep.subr.mxu0 0.0
  %8839 = vmatpush1.msra.mxu0 0.0
  %8840 = vmatprep.subr.mxu0 0.0
  %8841 = vmatpush1.msra.mxu0 0.0
  %8842 = vmatprep.subr.mxu0 0.0
  %8843 = vmatpush1.msra.mxu0 0.0
  %8844 = vmatprep.subr.mxu0 0.0
  %8845 = vmatpush1.msra.mxu0 0.0
  %8846 = vmatprep.subr.mxu0 0.0
  %8847 = vmatpush1.msra.mxu0 0.0
  %8848 = vmatprep.subr.mxu0 0.0
  %8849 = vmatpush1.msra.mxu0 0.0
  %8850 = vmatprep.subr.mxu0 0.0
  %8851 = vmatpush1.msra.mxu0 0.0
  %8852 = vmatprep.subr.mxu0 0.0
  %8853 = vmatpush1.msra.mxu0 0.0
  %8854 = vmatprep.subr.mxu0 0.0
  %8855 = vmatpush1.msra.mxu0 0.0
  %8856 = vmatprep.subr.mxu0 0.0
  %8857 = vmatpush1.msra.mxu0 0.0
  %8858 = vmatprep.mubr.f32.mxu0 0.0
  %v8859 = vand.u32 %v8417, 4294901760
  %8860 = vmatmul.mubr.f32.gmra.mrb[0].mxu0 %v8859
  %v8861 = vpop.f32.mrb[0].mxu0
  %v8862 = vadd.f32 %v8790, %v8861
  %v8863 = vpop.f32.mrb[0].mxu0
  %8864 = vdwg.mxu0
  %v8866 = vsel %vm2017, %v5721, 0
  %8868 = vmatprep.subr.mxu0 0.0
  %v8869 = vand.u32 %v2016, 4294901760
  %8870 = vmatpush1.msra.mxu0 %v8869
  %8871 = vmatprep.subr.mxu0 0.0
  %8872 = vmatpush1.msra.mxu0 0.0
  %8873 = vmatprep.subr.mxu0 0.0
  %8874 = vmatpush1.msra.mxu0 0.0
  %8875 = vmatprep.subr.mxu0 0.0
  %8876 = vmatpush1.msra.mxu0 0.0
  %8877 = vmatprep.subr.mxu0 0.0
  %8878 = vmatpush1.msra.mxu0 0.0
  %8879 = vmatprep.subr.mxu0 0.0
  %8880 = vmatpush1.msra.mxu0 0.0
  %8881 = vmatprep.subr.mxu0 0.0
  %8882 = vmatpush1.msra.mxu0 0.0
  %8883 = vmatprep.subr.mxu0 0.0
  %8884 = vmatpush1.msra.mxu0 0.0
  %8885 = vmatprep.subr.mxu0 0.0
  %8886 = vmatpush1.msra.mxu0 0.0
  %8887 = vmatprep.subr.mxu0 0.0
  %8888 = vmatpush1.msra.mxu0 0.0
  %8889 = vmatprep.subr.mxu0 0.0
  %8890 = vmatpush1.msra.mxu0 0.0
  %8891 = vmatprep.subr.mxu0 0.0
  %8892 = vmatpush1.msra.mxu0 0.0
  %8893 = vmatprep.subr.mxu0 0.0
  %8894 = vmatpush1.msra.mxu0 0.0
  %8895 = vmatprep.subr.mxu0 0.0
  %8896 = vmatpush1.msra.mxu0 0.0
  %8897 = vmatprep.subr.mxu0 0.0
  %8898 = vmatpush1.msra.mxu0 0.0
  %8899 = vmatprep.subr.mxu0 0.0
  %8900 = vmatpush1.msra.mxu0 0.0
  %8901 = vmatprep.subr.mxu0 0.0
  %8902 = vmatpush1.msra.mxu0 0.0
  %8903 = vmatprep.subr.mxu0 0.0
  %8904 = vmatpush1.msra.mxu0 0.0
  %8905 = vmatprep.subr.mxu0 0.0
  %8906 = vmatpush1.msra.mxu0 0.0
  %8907 = vmatprep.subr.mxu0 0.0
  %8908 = vmatpush1.msra.mxu0 0.0
  %8909 = vmatprep.subr.mxu0 0.0
  %8910 = vmatpush1.msra.mxu0 0.0
  %8911 = vmatprep.subr.mxu0 0.0
  %8912 = vmatpush1.msra.mxu0 0.0
  %8913 = vmatprep.subr.mxu0 0.0
  %8914 = vmatpush1.msra.mxu0 0.0
  %8915 = vmatprep.subr.mxu0 0.0
  %8916 = vmatpush1.msra.mxu0 0.0
  %8917 = vmatprep.subr.mxu0 0.0
  %8918 = vmatpush1.msra.mxu0 0.0
  %8919 = vmatprep.subr.mxu0 0.0
  %8920 = vmatpush1.msra.mxu0 0.0
  %8921 = vmatprep.subr.mxu0 0.0
  %8922 = vmatpush1.msra.mxu0 0.0
  %8923 = vmatprep.subr.mxu0 0.0
  %8924 = vmatpush1.msra.mxu0 0.0
  %8925 = vmatprep.subr.mxu0 0.0
  %8926 = vmatpush1.msra.mxu0 0.0
  %8927 = vmatprep.subr.mxu0 0.0
  %8928 = vmatpush1.msra.mxu0 0.0
  %8929 = vmatprep.subr.mxu0 0.0
  %8930 = vmatpush1.msra.mxu0 0.0
  %8931 = vmatprep.subr.mxu0 0.0
  %8932 = vmatpush1.msra.mxu0 0.0
  %8933 = vmatprep.mubr.f32.mxu0 0.0
  %v8934 = vand.u32 %v8866, 4294901760
  %v8935 = vsub.f32 %v8866, %v8934
  %v8936 = vand.u32 %v8935, 4294901760
  %v8937 = vsub.f32 %v8935, %v8936
  %v8938 = vand.u32 %v8937, 4294901760
  %8939 = vmatmul.mubr.f32.gmra.mrb[0].mxu0 %v8938
  %v8940 = vpop.f32.mrb[0].mxu0
  %v8941 = vadd.f32 0.0, %v8940
  %v8942 = vpop.f32.mrb[0].mxu0
  %8943 = vdwg.mxu0
  %8944 = vmatprep.subr.mxu0 0.0
  %v8945 = vand.u32 %v2016, 4294901760
  %v8946 = vsub.f32 %v2016, %v8945
  %v8947 = vand.u32 %v8946, 4294901760
  %v8948 = vsub.f32 %v8946, %v8947
  %v8949 = vand.u32 %v8948, 4294901760
  %8950 = vmatpush1.msra.mxu0 %v8949
  %8951 = vmatprep.subr.mxu0 0.0
  %8952 = vmatpush1.msra.mxu0 0.0
  %8953 = vmatprep.subr.mxu0 0.0
  %8954 = vmatpush1.msra.mxu0 0.0
  %8955 = vmatprep.subr.mxu0 0.0
  %8956 = vmatpush1.msra.mxu0 0.0
  %8957 = vmatprep.subr.mxu0 0.0
  %8958 = vmatpush1.msra.mxu0 0.0
  %8959 = vmatprep.subr.mxu0 0.0
  %8960 = vmatpush1.msra.mxu0 0.0
  %8961 = vmatprep.subr.mxu0 0.0
  %8962 = vmatpush1.msra.mxu0 0.0
  %8963 = vmatprep.subr.mxu0 0.0
  %8964 = vmatpush1.msra.mxu0 0.0
  %8965 = vmatprep.subr.mxu0 0.0
  %8966 = vmatpush1.msra.mxu0 0.0
  %8967 = vmatprep.subr.mxu0 0.0
  %8968 = vmatpush1.msra.mxu0 0.0
  %8969 = vmatprep.subr.mxu0 0.0
  %8970 = vmatpush1.msra.mxu0 0.0
  %8971 = vmatprep.subr.mxu0 0.0
  %8972 = vmatpush1.msra.mxu0 0.0
  %8973 = vmatprep.subr.mxu0 0.0
  %8974 = vmatpush1.msra.mxu0 0.0
  %8975 = vmatprep.subr.mxu0 0.0
  %8976 = vmatpush1.msra.mxu0 0.0
  %8977 = vmatprep.subr.mxu0 0.0
  %8978 = vmatpush1.msra.mxu0 0.0
  %8979 = vmatprep.subr.mxu0 0.0
  %8980 = vmatpush1.msra.mxu0 0.0
  %8981 = vmatprep.subr.mxu0 0.0
  %8982 = vmatpush1.msra.mxu0 0.0
  %8983 = vmatprep.subr.mxu0 0.0
  %8984 = vmatpush1.msra.mxu0 0.0
  %8985 = vmatprep.subr.mxu0 0.0
  %8986 = vmatpush1.msra.mxu0 0.0
  %8987 = vmatprep.subr.mxu0 0.0
  %8988 = vmatpush1.msra.mxu0 0.0
  %8989 = vmatprep.subr.mxu0 0.0
  %8990 = vmatpush1.msra.mxu0 0.0
  %8991 = vmatprep.subr.mxu0 0.0
  %8992 = vmatpush1.msra.mxu0 0.0
  %8993 = vmatprep.subr.mxu0 0.0
  %8994 = vmatpush1.msra.mxu0 0.0
  %8995 = vmatprep.subr.mxu0 0.0
  %8996 = vmatpush1.msra.mxu0 0.0
  %8997 = vmatprep.subr.mxu0 0.0
  %8998 = vmatpush1.msra.mxu0 0.0
  %8999 = vmatprep.subr.mxu0 0.0
  %9000 = vmatpush1.msra.mxu0 0.0
  %9001 = vmatprep.subr.mxu0 0.0
  %9002 = vmatpush1.msra.mxu0 0.0
  %9003 = vmatprep.subr.mxu0 0.0
  %9004 = vmatpush1.msra.mxu0 0.0
  %9005 = vmatprep.subr.mxu0 0.0
  %9006 = vmatpush1.msra.mxu0 0.0
  %9007 = vmatprep.subr.mxu0 0.0
  %9008 = vmatpush1.msra.mxu0 0.0
  %9009 = vmatprep.subr.mxu0 0.0
  %9010 = vmatpush1.msra.mxu0 0.0
  %9011 = vmatprep.subr.mxu0 0.0
  %9012 = vmatpush1.msra.mxu0 0.0
  %9013 = vmatprep.mubr.f32.mxu0 0.0
  %v9014 = vand.u32 %v8866, 4294901760
  %9015 = vmatmul.mubr.f32.gmra.mrb[0].mxu0 %v9014
  %v9016 = vpop.f32.mrb[0].mxu0
  %v9017 = vadd.f32 %v8941, %v9016
  %v9018 = vpop.f32.mrb[0].mxu0
  %9019 = vdwg.mxu0
  %9020 = vmatprep.subr.mxu0 0.0
  %v9021 = vand.u32 %v2016, 4294901760
  %v9022 = vsub.f32 %v2016, %v9021
  %9023 = vmatpush1.msra.mxu0 %v9022
  %9024 = vmatprep.subr.mxu0 0.0
  %9025 = vmatpush1.msra.mxu0 0.0
  %9026 = vmatprep.subr.mxu0 0.0
  %9027 = vmatpush1.msra.mxu0 0.0
  %9028 = vmatprep.subr.mxu0 0.0
  %9029 = vmatpush1.msra.mxu0 0.0
  %9030 = vmatprep.subr.mxu0 0.0
  %9031 = vmatpush1.msra.mxu0 0.0
  %9032 = vmatprep.subr.mxu0 0.0
  %9033 = vmatpush1.msra.mxu0 0.0
  %9034 = vmatprep.subr.mxu0 0.0
  %9035 = vmatpush1.msra.mxu0 0.0
  %9036 = vmatprep.subr.mxu0 0.0
  %9037 = vmatpush1.msra.mxu0 0.0
  %9038 = vmatprep.subr.mxu0 0.0
  %9039 = vmatpush1.msra.mxu0 0.0
  %9040 = vmatprep.subr.mxu0 0.0
  %9041 = vmatpush1.msra.mxu0 0.0
  %9042 = vmatprep.subr.mxu0 0.0
  %9043 = vmatpush1.msra.mxu0 0.0
  %9044 = vmatprep.subr.mxu0 0.0
  %9045 = vmatpush1.msra.mxu0 0.0
  %9046 = vmatprep.subr.mxu0 0.0
  %9047 = vmatpush1.msra.mxu0 0.0
  %9048 = vmatprep.subr.mxu0 0.0
  %9049 = vmatpush1.msra.mxu0 0.0
  %9050 = vmatprep.subr.mxu0 0.0
  %9051 = vmatpush1.msra.mxu0 0.0
  %9052 = vmatprep.subr.mxu0 0.0
  %9053 = vmatpush1.msra.mxu0 0.0
  %9054 = vmatprep.subr.mxu0 0.0
  %9055 = vmatpush1.msra.mxu0 0.0
  %9056 = vmatprep.subr.mxu0 0.0
  %9057 = vmatpush1.msra.mxu0 0.0
  %9058 = vmatprep.subr.mxu0 0.0
  %9059 = vmatpush1.msra.mxu0 0.0
  %9060 = vmatprep.subr.mxu0 0.0
  %9061 = vmatpush1.msra.mxu0 0.0
  %9062 = vmatprep.subr.mxu0 0.0
  %9063 = vmatpush1.msra.mxu0 0.0
  %9064 = vmatprep.subr.mxu0 0.0
  %9065 = vmatpush1.msra.mxu0 0.0
  %9066 = vmatprep.subr.mxu0 0.0
  %9067 = vmatpush1.msra.mxu0 0.0
  %9068 = vmatprep.subr.mxu0 0.0
  %9069 = vmatpush1.msra.mxu0 0.0
  %9070 = vmatprep.subr.mxu0 0.0
  %9071 = vmatpush1.msra.mxu0 0.0
  %9072 = vmatprep.subr.mxu0 0.0
  %9073 = vmatpush1.msra.mxu0 0.0
  %9074 = vmatprep.subr.mxu0 0.0
  %9075 = vmatpush1.msra.mxu0 0.0
  %9076 = vmatprep.subr.mxu0 0.0
  %9077 = vmatpush1.msra.mxu0 0.0
  %9078 = vmatprep.subr.mxu0 0.0
  %9079 = vmatpush1.msra.mxu0 0.0
  %9080 = vmatprep.subr.mxu0 0.0
  %9081 = vmatpush1.msra.mxu0 0.0
  %9082 = vmatprep.subr.mxu0 0.0
  %9083 = vmatpush1.msra.mxu0 0.0
  %9084 = vmatprep.subr.mxu0 0.0
  %9085 = vmatpush1.msra.mxu0 0.0
  %9086 = vmatprep.mubr.f32.mxu0 0.0
  %v9087 = vand.u32 %v8866, 4294901760
  %v9088 = vsub.f32 %v8866, %v9087
  %9089 = vmatmul.mubr.f32.gmra.mrb[0].mxu0 %v9088
  %v9090 = vpop.f32.mrb[0].mxu0
  %v9091 = vadd.f32 %v9017, %v9090
  %v9092 = vpop.f32.mrb[0].mxu0
  %9093 = vdwg.mxu0
  %9094 = vmatprep.subr.mxu0 0.0
  %v9095 = vand.u32 %v2016, 4294901760
  %9096 = vmatpush1.msra.mxu0 %v9095
  %9097 = vmatprep.subr.mxu0 0.0
  %9098 = vmatpush1.msra.mxu0 0.0
  %9099 = vmatprep.subr.mxu0 0.0
  %9100 = vmatpush1.msra.mxu0 0.0
  %9101 = vmatprep.subr.mxu0 0.0
  %9102 = vmatpush1.msra.mxu0 0.0
  %9103 = vmatprep.subr.mxu0 0.0
  %9104 = vmatpush1.msra.mxu0 0.0
  %9105 = vmatprep.subr.mxu0 0.0
  %9106 = vmatpush1.msra.mxu0 0.0
  %9107 = vmatprep.subr.mxu0 0.0
  %9108 = vmatpush1.msra.mxu0 0.0
  %9109 = vmatprep.subr.mxu0 0.0
  %9110 = vmatpush1.msra.mxu0 0.0
  %9111 = vmatprep.subr.mxu0 0.0
  %9112 = vmatpush1.msra.mxu0 0.0
  %9113 = vmatprep.subr.mxu0 0.0
  %9114 = vmatpush1.msra.mxu0 0.0
  %9115 = vmatprep.subr.mxu0 0.0
  %9116 = vmatpush1.msra.mxu0 0.0
  %9117 = vmatprep.subr.mxu0 0.0
  %9118 = vmatpush1.msra.mxu0 0.0
  %9119 = vmatprep.subr.mxu0 0.0
  %9120 = vmatpush1.msra.mxu0 0.0
  %9121 = vmatprep.subr.mxu0 0.0
  %9122 = vmatpush1.msra.mxu0 0.0
  %9123 = vmatprep.subr.mxu0 0.0
  %9124 = vmatpush1.msra.mxu0 0.0
  %9125 = vmatprep.subr.mxu0 0.0
  %9126 = vmatpush1.msra.mxu0 0.0
  %9127 = vmatprep.subr.mxu0 0.0
  %9128 = vmatpush1.msra.mxu0 0.0
  %9129 = vmatprep.subr.mxu0 0.0
  %9130 = vmatpush1.msra.mxu0 0.0
  %9131 = vmatprep.subr.mxu0 0.0
  %9132 = vmatpush1.msra.mxu0 0.0
  %9133 = vmatprep.subr.mxu0 0.0
  %9134 = vmatpush1.msra.mxu0 0.0
  %9135 = vmatprep.subr.mxu0 0.0
  %9136 = vmatpush1.msra.mxu0 0.0
  %9137 = vmatprep.subr.mxu0 0.0
  %9138 = vmatpush1.msra.mxu0 0.0
  %9139 = vmatprep.subr.mxu0 0.0
  %9140 = vmatpush1.msra.mxu0 0.0
  %9141 = vmatprep.subr.mxu0 0.0
  %9142 = vmatpush1.msra.mxu0 0.0
  %9143 = vmatprep.subr.mxu0 0.0
  %9144 = vmatpush1.msra.mxu0 0.0
  %9145 = vmatprep.subr.mxu0 0.0
  %9146 = vmatpush1.msra.mxu0 0.0
  %9147 = vmatprep.subr.mxu0 0.0
  %9148 = vmatpush1.msra.mxu0 0.0
  %9149 = vmatprep.subr.mxu0 0.0
  %9150 = vmatpush1.msra.mxu0 0.0
  %9151 = vmatprep.subr.mxu0 0.0
  %9152 = vmatpush1.msra.mxu0 0.0
  %9153 = vmatprep.subr.mxu0 0.0
  %9154 = vmatpush1.msra.mxu0 0.0
  %9155 = vmatprep.subr.mxu0 0.0
  %9156 = vmatpush1.msra.mxu0 0.0
  %9157 = vmatprep.subr.mxu0 0.0
  %9158 = vmatpush1.msra.mxu0 0.0
  %9159 = vmatprep.mubr.f32.mxu0 0.0
  %v9160 = vand.u32 %v8866, 4294901760
  %v9161 = vsub.f32 %v8866, %v9160
  %v9162 = vand.u32 %v9161, 4294901760
  %9163 = vmatmul.mubr.f32.gmra.mrb[0].mxu0 %v9162
  %v9164 = vpop.f32.mrb[0].mxu0
  %v9165 = vadd.f32 %v9091, %v9164
  %v9166 = vpop.f32.mrb[0].mxu0
  %9167 = vdwg.mxu0
  %9168 = vmatprep.subr.mxu0 0.0
  %v9169 = vand.u32 %v2016, 4294901760
  %v9170 = vsub.f32 %v2016, %v9169
  %v9171 = vand.u32 %v9170, 4294901760
  %9172 = vmatpush1.msra.mxu0 %v9171
  %9173 = vmatprep.subr.mxu0 0.0
  %9174 = vmatpush1.msra.mxu0 0.0
  %9175 = vmatprep.subr.mxu0 0.0
  %9176 = vmatpush1.msra.mxu0 0.0
  %9177 = vmatprep.subr.mxu0 0.0
  %9178 = vmatpush1.msra.mxu0 0.0
  %9179 = vmatprep.subr.mxu0 0.0
  %9180 = vmatpush1.msra.mxu0 0.0
  %9181 = vmatprep.subr.mxu0 0.0
  %9182 = vmatpush1.msra.mxu0 0.0
  %9183 = vmatprep.subr.mxu0 0.0
  %9184 = vmatpush1.msra.mxu0 0.0
  %9185 = vmatprep.subr.mxu0 0.0
  %9186 = vmatpush1.msra.mxu0 0.0
  %9187 = vmatprep.subr.mxu0 0.0
  %9188 = vmatpush1.msra.mxu0 0.0
  %9189 = vmatprep.subr.mxu0 0.0
  %9190 = vmatpush1.msra.mxu0 0.0
  %9191 = vmatprep.subr.mxu0 0.0
  %9192 = vmatpush1.msra.mxu0 0.0
  %9193 = vmatprep.subr.mxu0 0.0
  %9194 = vmatpush1.msra.mxu0 0.0
  %9195 = vmatprep.subr.mxu0 0.0
  %9196 = vmatpush1.msra.mxu0 0.0
  %9197 = vmatprep.subr.mxu0 0.0
  %9198 = vmatpush1.msra.mxu0 0.0
  %9199 = vmatprep.subr.mxu0 0.0
  %9200 = vmatpush1.msra.mxu0 0.0
  %9201 = vmatprep.subr.mxu0 0.0
  %9202 = vmatpush1.msra.mxu0 0.0
  %9203 = vmatprep.subr.mxu0 0.0
  %9204 = vmatpush1.msra.mxu0 0.0
  %9205 = vmatprep.subr.mxu0 0.0
  %9206 = vmatpush1.msra.mxu0 0.0
  %9207 = vmatprep.subr.mxu0 0.0
  %9208 = vmatpush1.msra.mxu0 0.0
  %9209 = vmatprep.subr.mxu0 0.0
  %9210 = vmatpush1.msra.mxu0 0.0
  %9211 = vmatprep.subr.mxu0 0.0
  %9212 = vmatpush1.msra.mxu0 0.0
  %9213 = vmatprep.subr.mxu0 0.0
  %9214 = vmatpush1.msra.mxu0 0.0
  %9215 = vmatprep.subr.mxu0 0.0
  %9216 = vmatpush1.msra.mxu0 0.0
  %9217 = vmatprep.subr.mxu0 0.0
  %9218 = vmatpush1.msra.mxu0 0.0
  %9219 = vmatprep.subr.mxu0 0.0
  %9220 = vmatpush1.msra.mxu0 0.0
  %9221 = vmatprep.subr.mxu0 0.0
  %9222 = vmatpush1.msra.mxu0 0.0
  %9223 = vmatprep.subr.mxu0 0.0
  %9224 = vmatpush1.msra.mxu0 0.0
  %9225 = vmatprep.subr.mxu0 0.0
  %9226 = vmatpush1.msra.mxu0 0.0
  %9227 = vmatprep.subr.mxu0 0.0
  %9228 = vmatpush1.msra.mxu0 0.0
  %9229 = vmatprep.subr.mxu0 0.0
  %9230 = vmatpush1.msra.mxu0 0.0
  %9231 = vmatprep.subr.mxu0 0.0
  %9232 = vmatpush1.msra.mxu0 0.0
  %9233 = vmatprep.subr.mxu0 0.0
  %9234 = vmatpush1.msra.mxu0 0.0
  %9235 = vmatprep.mubr.f32.mxu0 0.0
  %v9236 = vand.u32 %v8866, 4294901760
  %9237 = vmatmul.mubr.f32.gmra.mrb[0].mxu0 %v9236
  %v9238 = vpop.f32.mrb[0].mxu0
  %v9239 = vadd.f32 %v9165, %v9238
  %v9240 = vpop.f32.mrb[0].mxu0
  %9241 = vdwg.mxu0
  %9242 = vmatprep.subr.mxu0 0.0
  %v9243 = vand.u32 %v2016, 4294901760
  %9244 = vmatpush1.msra.mxu0 %v9243
  %9245 = vmatprep.subr.mxu0 0.0
  %9246 = vmatpush1.msra.mxu0 0.0
  %9247 = vmatprep.subr.mxu0 0.0
  %9248 = vmatpush1.msra.mxu0 0.0
  %9249 = vmatprep.subr.mxu0 0.0
  %9250 = vmatpush1.msra.mxu0 0.0
  %9251 = vmatprep.subr.mxu0 0.0
  %9252 = vmatpush1.msra.mxu0 0.0
  %9253 = vmatprep.subr.mxu0 0.0
  %9254 = vmatpush1.msra.mxu0 0.0
  %9255 = vmatprep.subr.mxu0 0.0
  %9256 = vmatpush1.msra.mxu0 0.0
  %9257 = vmatprep.subr.mxu0 0.0
  %9258 = vmatpush1.msra.mxu0 0.0
  %9259 = vmatprep.subr.mxu0 0.0
  %9260 = vmatpush1.msra.mxu0 0.0
  %9261 = vmatprep.subr.mxu0 0.0
  %9262 = vmatpush1.msra.mxu0 0.0
  %9263 = vmatprep.subr.mxu0 0.0
  %9264 = vmatpush1.msra.mxu0 0.0
  %9265 = vmatprep.subr.mxu0 0.0
  %9266 = vmatpush1.msra.mxu0 0.0
  %9267 = vmatprep.subr.mxu0 0.0
  %9268 = vmatpush1.msra.mxu0 0.0
  %9269 = vmatprep.subr.mxu0 0.0
  %9270 = vmatpush1.msra.mxu0 0.0
  %9271 = vmatprep.subr.mxu0 0.0
  %9272 = vmatpush1.msra.mxu0 0.0
  %9273 = vmatprep.subr.mxu0 0.0
  %9274 = vmatpush1.msra.mxu0 0.0
  %9275 = vmatprep.subr.mxu0 0.0
  %9276 = vmatpush1.msra.mxu0 0.0
  %9277 = vmatprep.subr.mxu0 0.0
  %9278 = vmatpush1.msra.mxu0 0.0
  %9279 = vmatprep.subr.mxu0 0.0
  %9280 = vmatpush1.msra.mxu0 0.0
  %9281 = vmatprep.subr.mxu0 0.0
  %9282 = vmatpush1.msra.mxu0 0.0
  %9283 = vmatprep.subr.mxu0 0.0
  %9284 = vmatpush1.msra.mxu0 0.0
  %9285 = vmatprep.subr.mxu0 0.0
  %9286 = vmatpush1.msra.mxu0 0.0
  %9287 = vmatprep.subr.mxu0 0.0
  %9288 = vmatpush1.msra.mxu0 0.0
  %9289 = vmatprep.subr.mxu0 0.0
  %9290 = vmatpush1.msra.mxu0 0.0
  %9291 = vmatprep.subr.mxu0 0.0
  %9292 = vmatpush1.msra.mxu0 0.0
  %9293 = vmatprep.subr.mxu0 0.0
  %9294 = vmatpush1.msra.mxu0 0.0
  %9295 = vmatprep.subr.mxu0 0.0
  %9296 = vmatpush1.msra.mxu0 0.0
  %9297 = vmatprep.subr.mxu0 0.0
  %9298 = vmatpush1.msra.mxu0 0.0
  %9299 = vmatprep.subr.mxu0 0.0
  %9300 = vmatpush1.msra.mxu0 0.0
  %9301 = vmatprep.subr.mxu0 0.0
  %9302 = vmatpush1.msra.mxu0 0.0
  %9303 = vmatprep.subr.mxu0 0.0
  %9304 = vmatpush1.msra.mxu0 0.0
  %9305 = vmatprep.subr.mxu0 0.0
  %9306 = vmatpush1.msra.mxu0 0.0
  %9307 = vmatprep.mubr.f32.mxu0 0.0
  %v9308 = vand.u32 %v8866, 4294901760
  %9309 = vmatmul.mubr.f32.gmra.mrb[0].mxu0 %v9308
  %v9310 = vpop.f32.mrb[0].mxu0
  %v9311 = vadd.f32 %v9239, %v9310
  %v9312 = vpop.f32.mrb[0].mxu0
  %9313 = vdwg.mxu0
  %v9314 = vcombine.low %v6168, %v7066
  %v9315 = vcombine.high %v6168, %v7066
  %v9317 = vunpack.c.l.s4 1983009808
  %v9318 = vunpack.c.0.s8 %v9317
  %v9319 = vlaneseq
  %v9320 = vshrl.u32 %v9319, 7
  %v9321 = vsub.s32 %v9318, %v9320
  %v9322 = vrot.slane %v9314, %v9321
  %v9324 = vunpack.c.l.s4 1983009808
  %v9325 = vunpack.c.0.s8 %v9324
  %v9326 = vlaneseq
  %v9327 = vshrl.u32 %v9326, 7
  %v9328 = vsub.s32 %v9325, %v9327
  %v9329 = vrot.slane %v9315, %v9328
  %v9330 = vcombine.low %v6617, %v7515
  %v9331 = vcombine.high %v6617, %v7515
  %v9333 = vunpack.c.l.s4 1983009808
  %v9334 = vunpack.c.0.s8 %v9333
  %v9335 = vlaneseq
  %v9336 = vshrl.u32 %v9335, 7
  %v9337 = vsub.s32 %v9334, %v9336
  %v9338 = vrot.slane %v9330, %v9337
  %v9340 = vunpack.c.l.s4 1983009808
  %v9341 = vunpack.c.0.s8 %v9340
  %v9342 = vlaneseq
  %v9343 = vshrl.u32 %v9342, 7
  %v9344 = vsub.s32 %v9341, %v9343
  %v9345 = vrot.slane %v9331, %v9344
  %v9346 = vcombine.low %v9322, %v9338
  %v9347 = vcombine.high %v9322, %v9338
  %v9349 = vunpack.c.l.s4 1934713408
  %v9350 = vunpack.c.0.s8 %v9349
  %v9351 = vlaneseq
  %v9352 = vshrl.u32 %v9351, 7
  %v9353 = vsub.s32 %v9350, %v9352
  %v9354 = vrot.slane %v9346, %v9353
  %v9356 = vunpack.c.l.s4 1934713408
  %v9357 = vunpack.c.0.s8 %v9356
  %v9358 = vlaneseq
  %v9359 = vshrl.u32 %v9358, 7
  %v9360 = vsub.s32 %v9357, %v9359
  %v9361 = vrot.slane %v9347, %v9360
  %v9362 = vcombine.low %v9329, %v9345
  %v9363 = vcombine.high %v9329, %v9345
  %v9365 = vunpack.c.l.s4 1934713408
  %v9366 = vunpack.c.0.s8 %v9365
  %v9367 = vlaneseq
  %v9368 = vshrl.u32 %v9367, 7
  %v9369 = vsub.s32 %v9366, %v9368
  %v9370 = vrot.slane %v9362, %v9369
  %v9372 = vunpack.c.l.s4 1934713408
  %v9373 = vunpack.c.0.s8 %v9372
  %v9374 = vlaneseq
  %v9375 = vshrl.u32 %v9374, 7
  %v9376 = vsub.s32 %v9373, %v9375
  %v9377 = vrot.slane %v9363, %v9376
  %v9378 = vcombine.high %v9354, 0.0
  %v9379 = vcombine.high %v9361, 0.0
  %v9380 = vcombine.high %v9370, 0.0
  %v9381 = vcombine.high %v9377, 0.0
  %v9382 = vcombine.low %v7964, %v8862
  %v9383 = vcombine.high %v7964, %v8862
  %v9385 = vunpack.c.l.s4 1983009808
  %v9386 = vunpack.c.0.s8 %v9385
  %v9387 = vlaneseq
  %v9388 = vshrl.u32 %v9387, 7
  %v9389 = vsub.s32 %v9386, %v9388
  %v9390 = vrot.slane %v9382, %v9389
  %v9392 = vunpack.c.l.s4 1983009808
  %v9393 = vunpack.c.0.s8 %v9392
  %v9394 = vlaneseq
  %v9395 = vshrl.u32 %v9394, 7
  %v9396 = vsub.s32 %v9393, %v9395
  %v9397 = vrot.slane %v9383, %v9396
  %v9398 = vcombine.low %v8413, %v9311
  %v9399 = vcombine.high %v8413, %v9311
  %v9401 = vunpack.c.l.s4 1983009808
  %v9402 = vunpack.c.0.s8 %v9401
  %v9403 = vlaneseq
  %v9404 = vshrl.u32 %v9403, 7
  %v9405 = vsub.s32 %v9402, %v9404
  %v9406 = vrot.slane %v9398, %v9405
  %v9408 = vunpack.c.l.s4 1983009808
  %v9409 = vunpack.c.0.s8 %v9408
  %v9410 = vlaneseq
  %v9411 = vshrl.u32 %v9410, 7
  %v9412 = vsub.s32 %v9409, %v9411
  %v9413 = vrot.slane %v9399, %v9412
  %v9414 = vcombine.low %v9390, %v9406
  %v9415 = vcombine.high %v9390, %v9406
  %v9417 = vunpack.c.l.s4 1934713408
  %v9418 = vunpack.c.0.s8 %v9417
  %v9419 = vlaneseq
  %v9420 = vshrl.u32 %v9419, 7
  %v9421 = vsub.s32 %v9418, %v9420
  %v9422 = vrot.slane %v9414, %v9421
  %v9424 = vunpack.c.l.s4 1934713408
  %v9425 = vunpack.c.0.s8 %v9424
  %v9426 = vlaneseq
  %v9427 = vshrl.u32 %v9426, 7
  %v9428 = vsub.s32 %v9425, %v9427
  %v9429 = vrot.slane %v9415, %v9428
  %v9430 = vcombine.low %v9397, %v9413
  %v9431 = vcombine.high %v9397, %v9413
  %v9433 = vunpack.c.l.s4 1934713408
  %v9434 = vunpack.c.0.s8 %v9433
  %v9435 = vlaneseq
  %v9436 = vshrl.u32 %v9435, 7
  %v9437 = vsub.s32 %v9434, %v9436
  %v9438 = vrot.slane %v9430, %v9437
  %v9440 = vunpack.c.l.s4 1934713408
  %v9441 = vunpack.c.0.s8 %v9440
  %v9442 = vlaneseq
  %v9443 = vshrl.u32 %v9442, 7
  %v9444 = vsub.s32 %v9441, %v9443
  %v9445 = vrot.slane %v9431, %v9444
  %v9446 = vcombine.high %v9422, 0.0
  %v9447 = vcombine.high %v9429, 0.0
  %v9448 = vcombine.high %v9438, 0.0
  %v9449 = vcombine.high %v9445, 0.0
  %v9450 = vcombine.low %v9354, %v9361
  %v9452 = vunpack.c.l.s4 1983009808
  %v9453 = vunpack.c.0.s8 %v9452
  %v9454 = vlaneseq
  %v9455 = vshrl.u32 %v9454, 7
  %v9456 = vsub.s32 %v9453, %v9455
  %v9457 = vrot.slane %v9450, %v9456
  %v9458 = vcombine.low %v9378, %v9379
  %v9460 = vunpack.c.l.s4 1983009808
  %v9461 = vunpack.c.0.s8 %v9460
  %v9462 = vlaneseq
  %v9463 = vshrl.u32 %v9462, 7
  %v9464 = vsub.s32 %v9461, %v9463
  %v9465 = vrot.slane %v9458, %v9464
  %v9466 = vcombine.low %v9370, %v9377
  %v9468 = vunpack.c.l.s4 1983009808
  %v9469 = vunpack.c.0.s8 %v9468
  %v9470 = vlaneseq
  %v9471 = vshrl.u32 %v9470, 7
  %v9472 = vsub.s32 %v9469, %v9471
  %v9473 = vrot.slane %v9466, %v9472
  %v9474 = vcombine.low %v9380, %v9381
  %v9476 = vunpack.c.l.s4 1983009808
  %v9477 = vunpack.c.0.s8 %v9476
  %v9478 = vlaneseq
  %v9479 = vshrl.u32 %v9478, 7
  %v9480 = vsub.s32 %v9477, %v9479
  %v9481 = vrot.slane %v9474, %v9480
  %v9482 = vcombine.low %v9457, %v9465
  %v9483 = vcombine.high %v9457, %v9465
  %v9485 = vunpack.c.l.s4 1934713408
  %v9486 = vunpack.c.0.s8 %v9485
  %v9487 = vlaneseq
  %v9488 = vshrl.u32 %v9487, 7
  %v9489 = vsub.s32 %v9486, %v9488
  %v9490 = vrot.slane %v9482, %v9489
  %v9492 = vunpack.c.l.s4 1934713408
  %v9493 = vunpack.c.0.s8 %v9492
  %v9494 = vlaneseq
  %v9495 = vshrl.u32 %v9494, 7
  %v9496 = vsub.s32 %v9493, %v9495
  %v9497 = vrot.slane %v9483, %v9496
  %v9498 = vcombine.low %v9473, %v9481
  %v9499 = vcombine.high %v9473, %v9481
  %v9501 = vunpack.c.l.s4 1934713408
  %v9502 = vunpack.c.0.s8 %v9501
  %v9503 = vlaneseq
  %v9504 = vshrl.u32 %v9503, 7
  %v9505 = vsub.s32 %v9502, %v9504
  %v9506 = vrot.slane %v9498, %v9505
  %v9508 = vunpack.c.l.s4 1934713408
  %v9509 = vunpack.c.0.s8 %v9508
  %v9510 = vlaneseq
  %v9511 = vshrl.u32 %v9510, 7
  %v9512 = vsub.s32 %v9509, %v9511
  %v9513 = vrot.slane %v9499, %v9512
  %v9514 = vcombine.low %v9490, %v9506
  %v9515 = vcombine.high %v9490, %v9506
  %v9516 = vcombine.low %v9497, %v9513
  %v9517 = vcombine.high %v9497, %v9513
  %v9518 = vcombine.low %v9422, %v9429
  %v9520 = vunpack.c.l.s4 1983009808
  %v9521 = vunpack.c.0.s8 %v9520
  %v9522 = vlaneseq
  %v9523 = vshrl.u32 %v9522, 7
  %v9524 = vsub.s32 %v9521, %v9523
  %v9525 = vrot.slane %v9518, %v9524
  %v9526 = vcombine.low %v9446, %v9447
  %v9528 = vunpack.c.l.s4 1983009808
  %v9529 = vunpack.c.0.s8 %v9528
  %v9530 = vlaneseq
  %v9531 = vshrl.u32 %v9530, 7
  %v9532 = vsub.s32 %v9529, %v9531
  %v9533 = vrot.slane %v9526, %v9532
  %v9534 = vcombine.low %v9438, %v9445
  %v9536 = vunpack.c.l.s4 1983009808
  %v9537 = vunpack.c.0.s8 %v9536
  %v9538 = vlaneseq
  %v9539 = vshrl.u32 %v9538, 7
  %v9540 = vsub.s32 %v9537, %v9539
  %v9541 = vrot.slane %v9534, %v9540
  %v9542 = vcombine.low %v9448, %v9449
  %v9544 = vunpack.c.l.s4 1983009808
  %v9545 = vunpack.c.0.s8 %v9544
  %v9546 = vlaneseq
  %v9547 = vshrl.u32 %v9546, 7
  %v9548 = vsub.s32 %v9545, %v9547
  %v9549 = vrot.slane %v9542, %v9548
  %v9550 = vcombine.low %v9525, %v9533
  %v9551 = vcombine.high %v9525, %v9533
  %v9553 = vunpack.c.l.s4 1934713408
  %v9554 = vunpack.c.0.s8 %v9553
  %v9555 = vlaneseq
  %v9556 = vshrl.u32 %v9555, 7
  %v9557 = vsub.s32 %v9554, %v9556
  %v9558 = vrot.slane %v9550, %v9557
  %v9560 = vunpack.c.l.s4 1934713408
  %v9561 = vunpack.c.0.s8 %v9560
  %v9562 = vlaneseq
  %v9563 = vshrl.u32 %v9562, 7
  %v9564 = vsub.s32 %v9561, %v9563
  %v9565 = vrot.slane %v9551, %v9564
  %v9566 = vcombine.low %v9541, %v9549
  %v9567 = vcombine.high %v9541, %v9549
  %v9569 = vunpack.c.l.s4 1934713408
  %v9570 = vunpack.c.0.s8 %v9569
  %v9571 = vlaneseq
  %v9572 = vshrl.u32 %v9571, 7
  %v9573 = vsub.s32 %v9570, %v9572
  %v9574 = vrot.slane %v9566, %v9573
  %v9576 = vunpack.c.l.s4 1934713408
  %v9577 = vunpack.c.0.s8 %v9576
  %v9578 = vlaneseq
  %v9579 = vshrl.u32 %v9578, 7
  %v9580 = vsub.s32 %v9577, %v9579
  %v9581 = vrot.slane %v9567, %v9580
  %v9582 = vcombine.low %v9558, %v9574
  %v9583 = vcombine.high %v9558, %v9574
  %v9584 = vcombine.low %v9565, %v9581
  %v9585 = vcombine.high %v9565, %v9581
  %9588 = vrot.lane.b32.xlu0 %v9515, 8
  %v9589 = vpop.permute.xlu0 %9588
  %9590 = vrot.lane.b32.xlu0 %v9583, 8
  %v9591 = vpop.permute.xlu0 %9590
  %9596 = vrot.lane.b32.xlu0 %v9516, 16
  %v9597 = vpop.permute.xlu0 %9596
  %9598 = vrot.lane.b32.xlu0 %v9584, 16
  %v9599 = vpop.permute.xlu0 %9598
  %9604 = vrot.lane.b32.xlu0 %v9517, 24
  %v9605 = vpop.permute.xlu0 %9604
  %9606 = vrot.lane.b32.xlu0 %v9585, 24
  %v9607 = vpop.permute.xlu0 %9606
  %v9610 = vsel %vm2017, %v9514, %v9589
  %v9611 = vsel %vm2017, %v9582, %v9591
  %vm9612 = vcmask 130048
  %v9613 = vsel %vm9612, %v9610, %v9597
  %v9614 = vsel %vm9612, %v9611, %v9599
  %vm9615 = vcmask 195584
  %v9616 = vsel %vm9615, %v9613, %v9605
  %v9617 = vsel %vm9615, %v9614, %v9607
  %v9618 = vld [vmem:[%s4] sm:$0xff]
  %v9619 = vld [vmem:[%s4 + $0x8] sm:$0xff]
  %v9620 = vld [vmem:[%s4 + $0x10] sm:$0xff]
  %v9621 = vld [vmem:[%s4 + $0x18] sm:$0xff]
  %9623 = vrot.lane.b32.xlu0 %v586, 96
  %v9624 = vpop.permute.xlu0 %9623
  %v9627 = vsel %vm44, %v9616, 0
  %v9630 = vsel %vm44, %v9617, 0
  %9632 = vmatprep.subr.mxu0 0.0
  %v9633 = vand.u32 %v9618, 4294901760
  %9634 = vmatpush1.msra.mxu0 %v9633
  %9635 = vmatprep.subr.mxu0 0.0
  %v9636 = vand.u32 %v9619, 4294901760
  %9637 = vmatpush1.msra.mxu0 %v9636
  %9638 = vmatprep.subr.mxu0 0.0
  %v9639 = vand.u32 %v9620, 4294901760
  %9640 = vmatpush1.msra.mxu0 %v9639
  %9641 = vmatprep.subr.mxu0 0.0
  %v9642 = vand.u32 %v9621, 4294901760
  %9643 = vmatpush1.msra.mxu0 %v9642
  %9644 = vmatprep.subr.mxu0 0.0
  %9645 = vmatpush1.msra.mxu0 0.0
  %9646 = vmatprep.subr.mxu0 0.0
  %9647 = vmatpush1.msra.mxu0 0.0
  %9648 = vmatprep.subr.mxu0 0.0
  %9649 = vmatpush1.msra.mxu0 0.0
  %9650 = vmatprep.subr.mxu0 0.0
  %9651 = vmatpush1.msra.mxu0 0.0
  %9652 = vmatprep.subr.mxu0 0.0
  %9653 = vmatpush1.msra.mxu0 0.0
  %9654 = vmatprep.subr.mxu0 0.0
  %9655 = vmatpush1.msra.mxu0 0.0
  %9656 = vmatprep.subr.mxu0 0.0
  %9657 = vmatpush1.msra.mxu0 0.0
  %9658 = vmatprep.subr.mxu0 0.0
  %9659 = vmatpush1.msra.mxu0 0.0
  %9660 = vmatprep.subr.mxu0 0.0
  %9661 = vmatpush1.msra.mxu0 0.0
  %9662 = vmatprep.subr.mxu0 0.0
  %9663 = vmatpush1.msra.mxu0 0.0
  %9664 = vmatprep.subr.mxu0 0.0
  %9665 = vmatpush1.msra.mxu0 0.0
  %9666 = vmatprep.subr.mxu0 0.0
  %9667 = vmatpush1.msra.mxu0 0.0
  %9668 = vmatprep.subr.mxu0 0.0
  %9669 = vmatpush1.msra.mxu0 0.0
  %9670 = vmatprep.subr.mxu0 0.0
  %9671 = vmatpush1.msra.mxu0 0.0
  %9672 = vmatprep.subr.mxu0 0.0
  %9673 = vmatpush1.msra.mxu0 0.0
  %9674 = vmatprep.subr.mxu0 0.0
  %9675 = vmatpush1.msra.mxu0 0.0
  %9676 = vmatprep.subr.mxu0 0.0
  %9677 = vmatpush1.msra.mxu0 0.0
  %9678 = vmatprep.subr.mxu0 0.0
  %9679 = vmatpush1.msra.mxu0 0.0
  %9680 = vmatprep.subr.mxu0 0.0
  %9681 = vmatpush1.msra.mxu0 0.0
  %9682 = vmatprep.subr.mxu0 0.0
  %9683 = vmatpush1.msra.mxu0 0.0
  %9684 = vmatprep.subr.mxu0 0.0
  %9685 = vmatpush1.msra.mxu0 0.0
  %9686 = vmatprep.subr.mxu0 0.0
  %9687 = vmatpush1.msra.mxu0 0.0
  %9688 = vmatprep.subr.mxu0 0.0
  %9689 = vmatpush1.msra.mxu0 0.0
  %9690 = vmatprep.subr.mxu0 0.0
  %9691 = vmatpush1.msra.mxu0 0.0
  %9692 = vmatprep.subr.mxu0 0.0
  %9693 = vmatpush1.msra.mxu0 0.0
  %9694 = vmatprep.subr.mxu0 0.0
  %9695 = vmatpush1.msra.mxu0 0.0
  %9696 = vmatprep.subr.mxu0 0.0
  %9697 = vmatpush1.msra.mxu0 0.0
  %9698 = vmatprep.subr.mxu0 0.0
  %9699 = vmatpush1.msra.mxu0 0.0
  %9700 = vmatprep.mubr.f32.mxu0 0.0
  %v9701 = vand.u32 %v9627, 4294901760
  %v9702 = vsub.f32 %v9627, %v9701
  %v9703 = vand.u32 %v9702, 4294901760
  %v9704 = vsub.f32 %v9702, %v9703
  %v9705 = vand.u32 %v9704, 4294901760
  %9706 = vmatmul.mubr.f32.gmra.mrb[0].mxu0 %v9705
  %v9707 = vpop.f32.mrb[0].mxu0
  %v9708 = vadd.f32 %v9624, %v9707
  %v9709 = vpop.f32.mrb[0].mxu0
  %9710 = vmatprep.mubr.f32.mxu0 0.0
  %v9711 = vand.u32 %v9630, 4294901760
  %v9712 = vsub.f32 %v9630, %v9711
  %v9713 = vand.u32 %v9712, 4294901760
  %v9714 = vsub.f32 %v9712, %v9713
  %v9715 = vand.u32 %v9714, 4294901760
  %9716 = vmatmul.mubr.f32.gmra.mrb[0].mxu0 %v9715
  %v9717 = vpop.f32.mrb[0].mxu0
  %v9718 = vadd.f32 %v9624, %v9717
  %v9719 = vpop.f32.mrb[0].mxu0
  %9720 = vdwg.mxu0
  %9721 = vmatprep.subr.mxu0 0.0
  %v9722 = vand.u32 %v9618, 4294901760
  %v9723 = vsub.f32 %v9618, %v9722
  %v9724 = vand.u32 %v9723, 4294901760
  %v9725 = vsub.f32 %v9723, %v9724
  %v9726 = vand.u32 %v9725, 4294901760
  %9727 = vmatpush1.msra.mxu0 %v9726
  %9728 = vmatprep.subr.mxu0 0.0
  %v9729 = vand.u32 %v9619, 4294901760
  %v9730 = vsub.f32 %v9619, %v9729
  %v9731 = vand.u32 %v9730, 4294901760
  %v9732 = vsub.f32 %v9730, %v9731
  %v9733 = vand.u32 %v9732, 4294901760
  %9734 = vmatpush1.msra.mxu0 %v9733
  %9735 = vmatprep.subr.mxu0 0.0
  %v9736 = vand.u32 %v9620, 4294901760
  %v9737 = vsub.f32 %v9620, %v9736
  %v9738 = vand.u32 %v9737, 4294901760
  %v9739 = vsub.f32 %v9737, %v9738
  %v9740 = vand.u32 %v9739, 4294901760
  %9741 = vmatpush1.msra.mxu0 %v9740
  %9742 = vmatprep.subr.mxu0 0.0
  %v9743 = vand.u32 %v9621, 4294901760
  %v9744 = vsub.f32 %v9621, %v9743
  %v9745 = vand.u32 %v9744, 4294901760
  %v9746 = vsub.f32 %v9744, %v9745
  %v9747 = vand.u32 %v9746, 4294901760
  %9748 = vmatpush1.msra.mxu0 %v9747
  %9749 = vmatprep.subr.mxu0 0.0
  %9750 = vmatpush1.msra.mxu0 0.0
  %9751 = vmatprep.subr.mxu0 0.0
  %9752 = vmatpush1.msra.mxu0 0.0
  %9753 = vmatprep.subr.mxu0 0.0
  %9754 = vmatpush1.msra.mxu0 0.0
  %9755 = vmatprep.subr.mxu0 0.0
  %9756 = vmatpush1.msra.mxu0 0.0
  %9757 = vmatprep.subr.mxu0 0.0
  %9758 = vmatpush1.msra.mxu0 0.0
  %9759 = vmatprep.subr.mxu0 0.0
  %9760 = vmatpush1.msra.mxu0 0.0
  %9761 = vmatprep.subr.mxu0 0.0
  %9762 = vmatpush1.msra.mxu0 0.0
  %9763 = vmatprep.subr.mxu0 0.0
  %9764 = vmatpush1.msra.mxu0 0.0
  %9765 = vmatprep.subr.mxu0 0.0
  %9766 = vmatpush1.msra.mxu0 0.0
  %9767 = vmatprep.subr.mxu0 0.0
  %9768 = vmatpush1.msra.mxu0 0.0
  %9769 = vmatprep.subr.mxu0 0.0
  %9770 = vmatpush1.msra.mxu0 0.0
  %9771 = vmatprep.subr.mxu0 0.0
  %9772 = vmatpush1.msra.mxu0 0.0
  %9773 = vmatprep.subr.mxu0 0.0
  %9774 = vmatpush1.msra.mxu0 0.0
  %9775 = vmatprep.subr.mxu0 0.0
  %9776 = vmatpush1.msra.mxu0 0.0
  %9777 = vmatprep.subr.mxu0 0.0
  %9778 = vmatpush1.msra.mxu0 0.0
  %9779 = vmatprep.subr.mxu0 0.0
  %9780 = vmatpush1.msra.mxu0 0.0
  %9781 = vmatprep.subr.mxu0 0.0
  %9782 = vmatpush1.msra.mxu0 0.0
  %9783 = vmatprep.subr.mxu0 0.0
  %9784 = vmatpush1.msra.mxu0 0.0
  %9785 = vmatprep.subr.mxu0 0.0
  %9786 = vmatpush1.msra.mxu0 0.0
  %9787 = vmatprep.subr.mxu0 0.0
  %9788 = vmatpush1.msra.mxu0 0.0
  %9789 = vmatprep.subr.mxu0 0.0
  %9790 = vmatpush1.msra.mxu0 0.0
  %9791 = vmatprep.subr.mxu0 0.0
  %9792 = vmatpush1.msra.mxu0 0.0
  %9793 = vmatprep.subr.mxu0 0.0
  %9794 = vmatpush1.msra.mxu0 0.0
  %9795 = vmatprep.subr.mxu0 0.0
  %9796 = vmatpush1.msra.mxu0 0.0
  %9797 = vmatprep.subr.mxu0 0.0
  %9798 = vmatpush1.msra.mxu0 0.0
  %9799 = vmatprep.subr.mxu0 0.0
  %9800 = vmatpush1.msra.mxu0 0.0
  %9801 = vmatprep.subr.mxu0 0.0
  %9802 = vmatpush1.msra.mxu0 0.0
  %9803 = vmatprep.subr.mxu0 0.0
  %9804 = vmatpush1.msra.mxu0 0.0
  %9805 = vmatprep.mubr.f32.mxu0 0.0
  %v9806 = vand.u32 %v9627, 4294901760
  %9807 = vmatmul.mubr.f32.gmra.mrb[0].mxu0 %v9806
  %v9808 = vpop.f32.mrb[0].mxu0
  %v9809 = vadd.f32 %v9708, %v9808
  %v9810 = vpop.f32.mrb[0].mxu0
  %9811 = vmatprep.mubr.f32.mxu0 0.0
  %v9812 = vand.u32 %v9630, 4294901760
  %9813 = vmatmul.mubr.f32.gmra.mrb[0].mxu0 %v9812
  %v9814 = vpop.f32.mrb[0].mxu0
  %v9815 = vadd.f32 %v9718, %v9814
  %v9816 = vpop.f32.mrb[0].mxu0
  %9817 = vdwg.mxu0
  %9818 = vmatprep.subr.mxu0 0.0
  %v9819 = vand.u32 %v9618, 4294901760
  %v9820 = vsub.f32 %v9618, %v9819
  %9821 = vmatpush1.msra.mxu0 %v9820
  %9822 = vmatprep.subr.mxu0 0.0
  %v9823 = vand.u32 %v9619, 4294901760
  %v9824 = vsub.f32 %v9619, %v9823
  %9825 = vmatpush1.msra.mxu0 %v9824
  %9826 = vmatprep.subr.mxu0 0.0
  %v9827 = vand.u32 %v9620, 4294901760
  %v9828 = vsub.f32 %v9620, %v9827
  %9829 = vmatpush1.msra.mxu0 %v9828
  %9830 = vmatprep.subr.mxu0 0.0
  %v9831 = vand.u32 %v9621, 4294901760
  %v9832 = vsub.f32 %v9621, %v9831
  %9833 = vmatpush1.msra.mxu0 %v9832
  %9834 = vmatprep.subr.mxu0 0.0
  %9835 = vmatpush1.msra.mxu0 0.0
  %9836 = vmatprep.subr.mxu0 0.0
  %9837 = vmatpush1.msra.mxu0 0.0
  %9838 = vmatprep.subr.mxu0 0.0
  %9839 = vmatpush1.msra.mxu0 0.0
  %9840 = vmatprep.subr.mxu0 0.0
  %9841 = vmatpush1.msra.mxu0 0.0
  %9842 = vmatprep.subr.mxu0 0.0
  %9843 = vmatpush1.msra.mxu0 0.0
  %9844 = vmatprep.subr.mxu0 0.0
  %9845 = vmatpush1.msra.mxu0 0.0
  %9846 = vmatprep.subr.mxu0 0.0
  %9847 = vmatpush1.msra.mxu0 0.0
  %9848 = vmatprep.subr.mxu0 0.0
  %9849 = vmatpush1.msra.mxu0 0.0
  %9850 = vmatprep.subr.mxu0 0.0
  %9851 = vmatpush1.msra.mxu0 0.0
  %9852 = vmatprep.subr.mxu0 0.0
  %9853 = vmatpush1.msra.mxu0 0.0
  %9854 = vmatprep.subr.mxu0 0.0
  %9855 = vmatpush1.msra.mxu0 0.0
  %9856 = vmatprep.subr.mxu0 0.0
  %9857 = vmatpush1.msra.mxu0 0.0
  %9858 = vmatprep.subr.mxu0 0.0
  %9859 = vmatpush1.msra.mxu0 0.0
  %9860 = vmatprep.subr.mxu0 0.0
  %9861 = vmatpush1.msra.mxu0 0.0
  %9862 = vmatprep.subr.mxu0 0.0
  %9863 = vmatpush1.msra.mxu0 0.0
  %9864 = vmatprep.subr.mxu0 0.0
  %9865 = vmatpush1.msra.mxu0 0.0
  %9866 = vmatprep.subr.mxu0 0.0
  %9867 = vmatpush1.msra.mxu0 0.0
  %9868 = vmatprep.subr.mxu0 0.0
  %9869 = vmatpush1.msra.mxu0 0.0
  %9870 = vmatprep.subr.mxu0 0.0
  %9871 = vmatpush1.msra.mxu0 0.0
  %9872 = vmatprep.subr.mxu0 0.0
  %9873 = vmatpush1.msra.mxu0 0.0
  %9874 = vmatprep.subr.mxu0 0.0
  %9875 = vmatpush1.msra.mxu0 0.0
  %9876 = vmatprep.subr.mxu0 0.0
  %9877 = vmatpush1.msra.mxu0 0.0
  %9878 = vmatprep.subr.mxu0 0.0
  %9879 = vmatpush1.msra.mxu0 0.0
  %9880 = vmatprep.subr.mxu0 0.0
  %9881 = vmatpush1.msra.mxu0 0.0
  %9882 = vmatprep.subr.mxu0 0.0
  %9883 = vmatpush1.msra.mxu0 0.0
  %9884 = vmatprep.subr.mxu0 0.0
  %9885 = vmatpush1.msra.mxu0 0.0
  %9886 = vmatprep.subr.mxu0 0.0
  %9887 = vmatpush1.msra.mxu0 0.0
  %9888 = vmatprep.subr.mxu0 0.0
  %9889 = vmatpush1.msra.mxu0 0.0
  %9890 = vmatprep.mubr.f32.mxu0 0.0
  %v9891 = vand.u32 %v9627, 4294901760
  %v9892 = vsub.f32 %v9627, %v9891
  %9893 = vmatmul.mubr.f32.gmra.mrb[0].mxu0 %v9892
  %v9894 = vpop.f32.mrb[0].mxu0
  %v9895 = vadd.f32 %v9809, %v9894
  %v9896 = vpop.f32.mrb[0].mxu0
  %9897 = vmatprep.mubr.f32.mxu0 0.0
  %v9898 = vand.u32 %v9630, 4294901760
  %v9899 = vsub.f32 %v9630, %v9898
  %9900 = vmatmul.mubr.f32.gmra.mrb[0].mxu0 %v9899
  %v9901 = vpop.f32.mrb[0].mxu0
  %v9902 = vadd.f32 %v9815, %v9901
  %v9903 = vpop.f32.mrb[0].mxu0
  %9904 = vdwg.mxu0
  %9905 = vmatprep.subr.mxu0 0.0
  %v9906 = vand.u32 %v9618, 4294901760
  %9907 = vmatpush1.msra.mxu0 %v9906
  %9908 = vmatprep.subr.mxu0 0.0
  %v9909 = vand.u32 %v9619, 4294901760
  %9910 = vmatpush1.msra.mxu0 %v9909
  %9911 = vmatprep.subr.mxu0 0.0
  %v9912 = vand.u32 %v9620, 4294901760
  %9913 = vmatpush1.msra.mxu0 %v9912
  %9914 = vmatprep.subr.mxu0 0.0
  %v9915 = vand.u32 %v9621, 4294901760
  %9916 = vmatpush1.msra.mxu0 %v9915
  %9917 = vmatprep.subr.mxu0 0.0
  %9918 = vmatpush1.msra.mxu0 0.0
  %9919 = vmatprep.subr.mxu0 0.0
  %9920 = vmatpush1.msra.mxu0 0.0
  %9921 = vmatprep.subr.mxu0 0.0
  %9922 = vmatpush1.msra.mxu0 0.0
  %9923 = vmatprep.subr.mxu0 0.0
  %9924 = vmatpush1.msra.mxu0 0.0
  %9925 = vmatprep.subr.mxu0 0.0
  %9926 = vmatpush1.msra.mxu0 0.0
  %9927 = vmatprep.subr.mxu0 0.0
  %9928 = vmatpush1.msra.mxu0 0.0
  %9929 = vmatprep.subr.mxu0 0.0
  %9930 = vmatpush1.msra.mxu0 0.0
  %9931 = vmatprep.subr.mxu0 0.0
  %9932 = vmatpush1.msra.mxu0 0.0
  %9933 = vmatprep.subr.mxu0 0.0
  %9934 = vmatpush1.msra.mxu0 0.0
  %9935 = vmatprep.subr.mxu0 0.0
  %9936 = vmatpush1.msra.mxu0 0.0
  %9937 = vmatprep.subr.mxu0 0.0
  %9938 = vmatpush1.msra.mxu0 0.0
  %9939 = vmatprep.subr.mxu0 0.0
  %9940 = vmatpush1.msra.mxu0 0.0
  %9941 = vmatprep.subr.mxu0 0.0
  %9942 = vmatpush1.msra.mxu0 0.0
  %9943 = vmatprep.subr.mxu0 0.0
  %9944 = vmatpush1.msra.mxu0 0.0
  %9945 = vmatprep.subr.mxu0 0.0
  %9946 = vmatpush1.msra.mxu0 0.0
  %9947 = vmatprep.subr.mxu0 0.0
  %9948 = vmatpush1.msra.mxu0 0.0
  %9949 = vmatprep.subr.mxu0 0.0
  %9950 = vmatpush1.msra.mxu0 0.0
  %9951 = vmatprep.subr.mxu0 0.0
  %9952 = vmatpush1.msra.mxu0 0.0
  %9953 = vmatprep.subr.mxu0 0.0
  %9954 = vmatpush1.msra.mxu0 0.0
  %9955 = vmatprep.subr.mxu0 0.0
  %9956 = vmatpush1.msra.mxu0 0.0
  %9957 = vmatprep.subr.mxu0 0.0
  %9958 = vmatpush1.msra.mxu0 0.0
  %9959 = vmatprep.subr.mxu0 0.0
  %9960 = vmatpush1.msra.mxu0 0.0
  %9961 = vmatprep.subr.mxu0 0.0
  %9962 = vmatpush1.msra.mxu0 0.0
  %9963 = vmatprep.subr.mxu0 0.0
  %9964 = vmatpush1.msra.mxu0 0.0
  %9965 = vmatprep.subr.mxu0 0.0
  %9966 = vmatpush1.msra.mxu0 0.0
  %9967 = vmatprep.subr.mxu0 0.0
  %9968 = vmatpush1.msra.mxu0 0.0
  %9969 = vmatprep.subr.mxu0 0.0
  %9970 = vmatpush1.msra.mxu0 0.0
  %9971 = vmatprep.subr.mxu0 0.0
  %9972 = vmatpush1.msra.mxu0 0.0
  %9973 = vmatprep.mubr.f32.mxu0 0.0
  %v9974 = vand.u32 %v9627, 4294901760
  %v9975 = vsub.f32 %v9627, %v9974
  %v9976 = vand.u32 %v9975, 4294901760
  %9977 = vmatmul.mubr.f32.gmra.mrb[0].mxu0 %v9976
  %v9978 = vpop.f32.mrb[0].mxu0
  %v9979 = vadd.f32 %v9895, %v9978
  %v9980 = vpop.f32.mrb[0].mxu0
  %9981 = vmatprep.mubr.f32.mxu0 0.0
  %v9982 = vand.u32 %v9630, 4294901760
  %v9983 = vsub.f32 %v9630, %v9982
  %v9984 = vand.u32 %v9983, 4294901760
  %9985 = vmatmul.mubr.f32.gmra.mrb[0].mxu0 %v9984
  %v9986 = vpop.f32.mrb[0].mxu0
  %v9987 = vadd.f32 %v9902, %v9986
  %v9988 = vpop.f32.mrb[0].mxu0
  %9989 = vdwg.mxu0
  %9990 = vmatprep.subr.mxu0 0.0
  %v9991 = vand.u32 %v9618, 4294901760
  %v9992 = vsub.f32 %v9618, %v9991
  %v9993 = vand.u32 %v9992, 4294901760
  %9994 = vmatpush1.msra.mxu0 %v9993
  %9995 = vmatprep.subr.mxu0 0.0
  %v9996 = vand.u32 %v9619, 4294901760
  %v9997 = vsub.f32 %v9619, %v9996
  %v9998 = vand.u32 %v9997, 4294901760
  %9999 = vmatpush1.msra.mxu0 %v9998
  %10000 = vmatprep.subr.mxu0 0.0
  %v10001 = vand.u32 %v9620, 4294901760
  %v10002 = vsub.f32 %v9620, %v10001
  %v10003 = vand.u32 %v10002, 4294901760
  %10004 = vmatpush1.msra.mxu0 %v10003
  %10005 = vmatprep.subr.mxu0 0.0
  %v10006 = vand.u32 %v9621, 4294901760
  %v10007 = vsub.f32 %v9621, %v10006
  %v10008 = vand.u32 %v10007, 4294901760
  %10009 = vmatpush1.msra.mxu0 %v10008
  %10010 = vmatprep.subr.mxu0 0.0
  %10011 = vmatpush1.msra.mxu0 0.0
  %10012 = vmatprep.subr.mxu0 0.0
  %10013 = vmatpush1.msra.mxu0 0.0
  %10014 = vmatprep.subr.mxu0 0.0
  %10015 = vmatpush1.msra.mxu0 0.0
  %10016 = vmatprep.subr.mxu0 0.0
  %10017 = vmatpush1.msra.mxu0 0.0
  %10018 = vmatprep.subr.mxu0 0.0
  %10019 = vmatpush1.msra.mxu0 0.0
  %10020 = vmatprep.subr.mxu0 0.0
  %10021 = vmatpush1.msra.mxu0 0.0
  %10022 = vmatprep.subr.mxu0 0.0
  %10023 = vmatpush1.msra.mxu0 0.0
  %10024 = vmatprep.subr.mxu0 0.0
  %10025 = vmatpush1.msra.mxu0 0.0
  %10026 = vmatprep.subr.mxu0 0.0
  %10027 = vmatpush1.msra.mxu0 0.0
  %10028 = vmatprep.subr.mxu0 0.0
  %10029 = vmatpush1.msra.mxu0 0.0
  %10030 = vmatprep.subr.mxu0 0.0
  %10031 = vmatpush1.msra.mxu0 0.0
  %10032 = vmatprep.subr.mxu0 0.0
  %10033 = vmatpush1.msra.mxu0 0.0
  %10034 = vmatprep.subr.mxu0 0.0
  %10035 = vmatpush1.msra.mxu0 0.0
  %10036 = vmatprep.subr.mxu0 0.0
  %10037 = vmatpush1.msra.mxu0 0.0
  %10038 = vmatprep.subr.mxu0 0.0
  %10039 = vmatpush1.msra.mxu0 0.0
  %10040 = vmatprep.subr.mxu0 0.0
  %10041 = vmatpush1.msra.mxu0 0.0
  %10042 = vmatprep.subr.mxu0 0.0
  %10043 = vmatpush1.msra.mxu0 0.0
  %10044 = vmatprep.subr.mxu0 0.0
  %10045 = vmatpush1.msra.mxu0 0.0
  %10046 = vmatprep.subr.mxu0 0.0
  %10047 = vmatpush1.msra.mxu0 0.0
  %10048 = vmatprep.subr.mxu0 0.0
  %10049 = vmatpush1.msra.mxu0 0.0
  %10050 = vmatprep.subr.mxu0 0.0
  %10051 = vmatpush1.msra.mxu0 0.0
  %10052 = vmatprep.subr.mxu0 0.0
  %10053 = vmatpush1.msra.mxu0 0.0
  %10054 = vmatprep.subr.mxu0 0.0
  %10055 = vmatpush1.msra.mxu0 0.0
  %10056 = vmatprep.subr.mxu0 0.0
  %10057 = vmatpush1.msra.mxu0 0.0
  %10058 = vmatprep.subr.mxu0 0.0
  %10059 = vmatpush1.msra.mxu0 0.0
  %10060 = vmatprep.subr.mxu0 0.0
  %10061 = vmatpush1.msra.mxu0 0.0
  %10062 = vmatprep.subr.mxu0 0.0
  %10063 = vmatpush1.msra.mxu0 0.0
  %10064 = vmatprep.subr.mxu0 0.0
  %10065 = vmatpush1.msra.mxu0 0.0
  %10066 = vmatprep.mubr.f32.mxu0 0.0
  %v10067 = vand.u32 %v9627, 4294901760
  %10068 = vmatmul.mubr.f32.gmra.mrb[0].mxu0 %v10067
  %v10069 = vpop.f32.mrb[0].mxu0
  %v10070 = vadd.f32 %v9979, %v10069
  %v10071 = vpop.f32.mrb[0].mxu0
  %10072 = vmatprep.mubr.f32.mxu0 0.0
  %v10073 = vand.u32 %v9630, 4294901760
  %10074 = vmatmul.mubr.f32.gmra.mrb[0].mxu0 %v10073
  %v10075 = vpop.f32.mrb[0].mxu0
  %v10076 = vadd.f32 %v9987, %v10075
  %v10077 = vpop.f32.mrb[0].mxu0
  %10078 = vdwg.mxu0
  %10079 = vmatprep.subr.mxu0 0.0
  %v10080 = vand.u32 %v9618, 4294901760
  %10081 = vmatpush1.msra.mxu0 %v10080
  %10082 = vmatprep.subr.mxu0 0.0
  %v10083 = vand.u32 %v9619, 4294901760
  %10084 = vmatpush1.msra.mxu0 %v10083
  %10085 = vmatprep.subr.mxu0 0.0
  %v10086 = vand.u32 %v9620, 4294901760
  %10087 = vmatpush1.msra.mxu0 %v10086
  %10088 = vmatprep.subr.mxu0 0.0
  %v10089 = vand.u32 %v9621, 4294901760
  %10090 = vmatpush1.msra.mxu0 %v10089
  %10091 = vmatprep.subr.mxu0 0.0
  %10092 = vmatpush1.msra.mxu0 0.0
  %10093 = vmatprep.subr.mxu0 0.0
  %10094 = vmatpush1.msra.mxu0 0.0
  %10095 = vmatprep.subr.mxu0 0.0
  %10096 = vmatpush1.msra.mxu0 0.0
  %10097 = vmatprep.subr.mxu0 0.0
  %10098 = vmatpush1.msra.mxu0 0.0
  %10099 = vmatprep.subr.mxu0 0.0
  %10100 = vmatpush1.msra.mxu0 0.0
  %10101 = vmatprep.subr.mxu0 0.0
  %10102 = vmatpush1.msra.mxu0 0.0
  %10103 = vmatprep.subr.mxu0 0.0
  %10104 = vmatpush1.msra.mxu0 0.0
  %10105 = vmatprep.subr.mxu0 0.0
  %10106 = vmatpush1.msra.mxu0 0.0
  %10107 = vmatprep.subr.mxu0 0.0
  %10108 = vmatpush1.msra.mxu0 0.0
  %10109 = vmatprep.subr.mxu0 0.0
  %10110 = vmatpush1.msra.mxu0 0.0
  %10111 = vmatprep.subr.mxu0 0.0
  %10112 = vmatpush1.msra.mxu0 0.0
  %10113 = vmatprep.subr.mxu0 0.0
  %10114 = vmatpush1.msra.mxu0 0.0
  %10115 = vmatprep.subr.mxu0 0.0
  %10116 = vmatpush1.msra.mxu0 0.0
  %10117 = vmatprep.subr.mxu0 0.0
  %10118 = vmatpush1.msra.mxu0 0.0
  %10119 = vmatprep.subr.mxu0 0.0
  %10120 = vmatpush1.msra.mxu0 0.0
  %10121 = vmatprep.subr.mxu0 0.0
  %10122 = vmatpush1.msra.mxu0 0.0
  %10123 = vmatprep.subr.mxu0 0.0
  %10124 = vmatpush1.msra.mxu0 0.0
  %10125 = vmatprep.subr.mxu0 0.0
  %10126 = vmatpush1.msra.mxu0 0.0
  %10127 = vmatprep.subr.mxu0 0.0
  %10128 = vmatpush1.msra.mxu0 0.0
  %10129 = vmatprep.subr.mxu0 0.0
  %10130 = vmatpush1.msra.mxu0 0.0
  %10131 = vmatprep.subr.mxu0 0.0
  %10132 = vmatpush1.msra.mxu0 0.0
  %10133 = vmatprep.subr.mxu0 0.0
  %10134 = vmatpush1.msra.mxu0 0.0
  %10135 = vmatprep.subr.mxu0 0.0
  %10136 = vmatpush1.msra.mxu0 0.0
  %10137 = vmatprep.subr.mxu0 0.0
  %10138 = vmatpush1.msra.mxu0 0.0
  %10139 = vmatprep.subr.mxu0 0.0
  %10140 = vmatpush1.msra.mxu0 0.0
  %10141 = vmatprep.subr.mxu0 0.0
  %10142 = vmatpush1.msra.mxu0 0.0
  %10143 = vmatprep.subr.mxu0 0.0
  %10144 = vmatpush1.msra.mxu0 0.0
  %10145 = vmatprep.subr.mxu0 0.0
  %10146 = vmatpush1.msra.mxu0 0.0
  %10147 = vmatprep.mubr.f32.mxu0 0.0
  %v10148 = vand.u32 %v9627, 4294901760
  %10149 = vmatmul.mubr.f32.gmra.mrb[0].mxu0 %v10148
  %v10150 = vpop.f32.mrb[0].mxu0
  %v10151 = vadd.f32 %v10070, %v10150
  %v10152 = vpop.f32.mrb[0].mxu0
  %10153 = vmatprep.mubr.f32.mxu0 0.0
  %v10154 = vand.u32 %v9630, 4294901760
  %10155 = vmatmul.mubr.f32.gmra.mrb[0].mxu0 %v10154
  %v10156 = vpop.f32.mrb[0].mxu0
  %v10157 = vadd.f32 %v10076, %v10156
  %v10158 = vpop.f32.mrb[0].mxu0
  %10159 = vdwg.mxu0
  %v10160 = vadd.f32 %v29, %v10151
  %v10161 = vadd.f32 %v30, %v10157
  %v10162 = vsel %vm44, %v10160, 0.0
  %10163 = vadd.xlane.f32.xlu0 %v10162
  %v10164 = vpop.xlane.xlu0 %10163
  %v10165 = vsel %vm44, %v10161, 0.0
  %10166 = vadd.xlane.f32.xlu0 %v10165
  %v10167 = vpop.xlane.xlu0 %10166
  %v10168 = vrcp.pop 32.0
  %v10169 = vmul.f32 %v10164, %v10168
  %v10170 = vmul.f32 %v10167, %v10168
  %v10171 = vsub.f32 %v10160, %v10169
  %v10172 = vsub.f32 %v10161, %v10170
  %v10173 = vmul.f32 %v10171, %v10171
  %v10174 = vmul.f32 %v10172, %v10172
  %v10175 = vsel %vm44, %v10173, 0.0
  %10176 = vadd.xlane.f32.xlu0 %v10175
  %v10177 = vpop.xlane.xlu0 %10176
  %v10178 = vsel %vm44, %v10174, 0.0
  %10179 = vadd.xlane.f32.xlu0 %v10178
  %v10180 = vpop.xlane.xlu0 %10179
  %v10181 = vmul.f32 %v10177, %v10168
  %v10182 = vmul.f32 %v10180, %v10168
  %v10183 = vadd.f32 %v10181, 1e-05
  %v10184 = vadd.f32 %v10182, 1e-05
  %v10185 = vrsqrt.pop %v10183
  %v10186 = vrsqrt.pop %v10184
  %v10187 = vmul.f32 %v10171, %v10185
  %v10188 = vmul.f32 %v10172, %v10186
  %v10189 = vlaneseq
  %v10190 = vshrl.u32 %v10189, 7
  %v10191 = vsub.s32 3, %v10190
  %v10192 = vrot.slane %v35, %v10191
  %10194 = vrot.lane.b32.xlu0 %v10192, 96
  %v10195 = vpop.permute.xlu0 %10194
  %v10197 = vmul.f32 %v10187, %v10195
  %v10198 = vmul.f32 %v10188, %v10195
  %v10199 = vlaneseq
  %v10200 = vshrl.u32 %v10199, 7
  %v10201 = vsub.s32 4, %v10200
  %v10202 = vrot.slane %v35, %v10201
  %v10203 = vadd.f32 %v10197, %v10202
  %v10204 = vadd.f32 %v10198, %v10202
  %v10205 = vld [vmem:[%s5] sm:$0xff]
  %v10206 = vld [vmem:[%s5 + $0x8] sm:$0xff]
  %v10207 = vld [vmem:[%s5 + $0x10] sm:$0xff]
  %v10208 = vld [vmem:[%s5 + $0x18] sm:$0xff]
  %v10209 = vlaneseq
  %v10210 = vshrl.u32 %v10209, 7
  %v10211 = vsub.s32 1, %v10210
  %v10212 = vrot.slane %v35, %v10211
  %v10214 = vsel %vm44, %v10203, 0
  %v10217 = vsel %vm44, %v10204, 0
  %10219 = vmatprep.subr.mxu0 0.0
  %v10220 = vand.u32 %v10205, 4294901760
  %10221 = vmatpush1.msra.mxu0 %v10220
  %10222 = vmatprep.subr.mxu0 0.0
  %v10223 = vand.u32 %v10206, 4294901760
  %10224 = vmatpush1.msra.mxu0 %v10223
  %10225 = vmatprep.subr.mxu0 0.0
  %v10226 = vand.u32 %v10207, 4294901760
  %10227 = vmatpush1.msra.mxu0 %v10226
  %10228 = vmatprep.subr.mxu0 0.0
  %v10229 = vand.u32 %v10208, 4294901760
  %10230 = vmatpush1.msra.mxu0 %v10229
  %10231 = vmatprep.subr.mxu0 0.0
  %10232 = vmatpush1.msra.mxu0 0.0
  %10233 = vmatprep.subr.mxu0 0.0
  %10234 = vmatpush1.msra.mxu0 0.0
  %10235 = vmatprep.subr.mxu0 0.0
  %10236 = vmatpush1.msra.mxu0 0.0
  %10237 = vmatprep.subr.mxu0 0.0
  %10238 = vmatpush1.msra.mxu0 0.0
  %10239 = vmatprep.subr.mxu0 0.0
  %10240 = vmatpush1.msra.mxu0 0.0
  %10241 = vmatprep.subr.mxu0 0.0
  %10242 = vmatpush1.msra.mxu0 0.0
  %10243 = vmatprep.subr.mxu0 0.0
  %10244 = vmatpush1.msra.mxu0 0.0
  %10245 = vmatprep.subr.mxu0 0.0
  %10246 = vmatpush1.msra.mxu0 0.0
  %10247 = vmatprep.subr.mxu0 0.0
  %10248 = vmatpush1.msra.mxu0 0.0
  %10249 = vmatprep.subr.mxu0 0.0
  %10250 = vmatpush1.msra.mxu0 0.0
  %10251 = vmatprep.subr.mxu0 0.0
  %10252 = vmatpush1.msra.mxu0 0.0
  %10253 = vmatprep.subr.mxu0 0.0
  %10254 = vmatpush1.msra.mxu0 0.0
  %10255 = vmatprep.subr.mxu0 0.0
  %10256 = vmatpush1.msra.mxu0 0.0
  %10257 = vmatprep.subr.mxu0 0.0
  %10258 = vmatpush1.msra.mxu0 0.0
  %10259 = vmatprep.subr.mxu0 0.0
  %10260 = vmatpush1.msra.mxu0 0.0
  %10261 = vmatprep.subr.mxu0 0.0
  %10262 = vmatpush1.msra.mxu0 0.0
  %10263 = vmatprep.subr.mxu0 0.0
  %10264 = vmatpush1.msra.mxu0 0.0
  %10265 = vmatprep.subr.mxu0 0.0
  %10266 = vmatpush1.msra.mxu0 0.0
  %10267 = vmatprep.subr.mxu0 0.0
  %10268 = vmatpush1.msra.mxu0 0.0
  %10269 = vmatprep.subr.mxu0 0.0
  %10270 = vmatpush1.msra.mxu0 0.0
  %10271 = vmatprep.subr.mxu0 0.0
  %10272 = vmatpush1.msra.mxu0 0.0
  %10273 = vmatprep.subr.mxu0 0.0
  %10274 = vmatpush1.msra.mxu0 0.0
  %10275 = vmatprep.subr.mxu0 0.0
  %10276 = vmatpush1.msra.mxu0 0.0
  %10277 = vmatprep.subr.mxu0 0.0
  %10278 = vmatpush1.msra.mxu0 0.0
  %10279 = vmatprep.subr.mxu0 0.0
  %10280 = vmatpush1.msra.mxu0 0.0
  %10281 = vmatprep.subr.mxu0 0.0
  %10282 = vmatpush1.msra.mxu0 0.0
  %10283 = vmatprep.subr.mxu0 0.0
  %10284 = vmatpush1.msra.mxu0 0.0
  %10285 = vmatprep.subr.mxu0 0.0
  %10286 = vmatpush1.msra.mxu0 0.0
  %10287 = vmatprep.mubr.f32.mxu0 0.0
  %v10288 = vand.u32 %v10214, 4294901760
  %v10289 = vsub.f32 %v10214, %v10288
  %v10290 = vand.u32 %v10289, 4294901760
  %v10291 = vsub.f32 %v10289, %v10290
  %v10292 = vand.u32 %v10291, 4294901760
  %10293 = vmatmul.mubr.f32.gmra.mrb[0].mxu0 %v10292
  %v10294 = vpop.f32.mrb[0].mxu0
  %v10295 = vadd.f32 %v10212, %v10294
  %v10296 = vpop.f32.mrb[0].mxu0
  %10297 = vmatprep.mubr.f32.mxu0 0.0
  %v10298 = vand.u32 %v10217, 4294901760
  %v10299 = vsub.f32 %v10217, %v10298
  %v10300 = vand.u32 %v10299, 4294901760
  %v10301 = vsub.f32 %v10299, %v10300
  %v10302 = vand.u32 %v10301, 4294901760
  %10303 = vmatmul.mubr.f32.gmra.mrb[0].mxu0 %v10302
  %v10304 = vpop.f32.mrb[0].mxu0
  %v10305 = vadd.f32 %v10212, %v10304
  %v10306 = vpop.f32.mrb[0].mxu0
  %10307 = vdwg.mxu0
  %10308 = vmatprep.subr.mxu0 0.0
  %v10309 = vand.u32 %v10205, 4294901760
  %v10310 = vsub.f32 %v10205, %v10309
  %v10311 = vand.u32 %v10310, 4294901760
  %v10312 = vsub.f32 %v10310, %v10311
  %v10313 = vand.u32 %v10312, 4294901760
  %10314 = vmatpush1.msra.mxu0 %v10313
  %10315 = vmatprep.subr.mxu0 0.0
  %v10316 = vand.u32 %v10206, 4294901760
  %v10317 = vsub.f32 %v10206, %v10316
  %v10318 = vand.u32 %v10317, 4294901760
  %v10319 = vsub.f32 %v10317, %v10318
  %v10320 = vand.u32 %v10319, 4294901760
  %10321 = vmatpush1.msra.mxu0 %v10320
  %10322 = vmatprep.subr.mxu0 0.0
  %v10323 = vand.u32 %v10207, 4294901760
  %v10324 = vsub.f32 %v10207, %v10323
  %v10325 = vand.u32 %v10324, 4294901760
  %v10326 = vsub.f32 %v10324, %v10325
  %v10327 = vand.u32 %v10326, 4294901760
  %10328 = vmatpush1.msra.mxu0 %v10327
  %10329 = vmatprep.subr.mxu0 0.0
  %v10330 = vand.u32 %v10208, 4294901760
  %v10331 = vsub.f32 %v10208, %v10330
  %v10332 = vand.u32 %v10331, 4294901760
  %v10333 = vsub.f32 %v10331, %v10332
  %v10334 = vand.u32 %v10333, 4294901760
  %10335 = vmatpush1.msra.mxu0 %v10334
  %10336 = vmatprep.subr.mxu0 0.0
  %10337 = vmatpush1.msra.mxu0 0.0
  %10338 = vmatprep.subr.mxu0 0.0
  %10339 = vmatpush1.msra.mxu0 0.0
  %10340 = vmatprep.subr.mxu0 0.0
  %10341 = vmatpush1.msra.mxu0 0.0
  %10342 = vmatprep.subr.mxu0 0.0
  %10343 = vmatpush1.msra.mxu0 0.0
  %10344 = vmatprep.subr.mxu0 0.0
  %10345 = vmatpush1.msra.mxu0 0.0
  %10346 = vmatprep.subr.mxu0 0.0
  %10347 = vmatpush1.msra.mxu0 0.0
  %10348 = vmatprep.subr.mxu0 0.0
  %10349 = vmatpush1.msra.mxu0 0.0
  %10350 = vmatprep.subr.mxu0 0.0
  %10351 = vmatpush1.msra.mxu0 0.0
  %10352 = vmatprep.subr.mxu0 0.0
  %10353 = vmatpush1.msra.mxu0 0.0
  %10354 = vmatprep.subr.mxu0 0.0
  %10355 = vmatpush1.msra.mxu0 0.0
  %10356 = vmatprep.subr.mxu0 0.0
  %10357 = vmatpush1.msra.mxu0 0.0
  %10358 = vmatprep.subr.mxu0 0.0
  %10359 = vmatpush1.msra.mxu0 0.0
  %10360 = vmatprep.subr.mxu0 0.0
  %10361 = vmatpush1.msra.mxu0 0.0
  %10362 = vmatprep.subr.mxu0 0.0
  %10363 = vmatpush1.msra.mxu0 0.0
  %10364 = vmatprep.subr.mxu0 0.0
  %10365 = vmatpush1.msra.mxu0 0.0
  %10366 = vmatprep.subr.mxu0 0.0
  %10367 = vmatpush1.msra.mxu0 0.0
  %10368 = vmatprep.subr.mxu0 0.0
  %10369 = vmatpush1.msra.mxu0 0.0
  %10370 = vmatprep.subr.mxu0 0.0
  %10371 = vmatpush1.msra.mxu0 0.0
  %10372 = vmatprep.subr.mxu0 0.0
  %10373 = vmatpush1.msra.mxu0 0.0
  %10374 = vmatprep.subr.mxu0 0.0
  %10375 = vmatpush1.msra.mxu0 0.0
  %10376 = vmatprep.subr.mxu0 0.0
  %10377 = vmatpush1.msra.mxu0 0.0
  %10378 = vmatprep.subr.mxu0 0.0
  %10379 = vmatpush1.msra.mxu0 0.0
  %10380 = vmatprep.subr.mxu0 0.0
  %10381 = vmatpush1.msra.mxu0 0.0
  %10382 = vmatprep.subr.mxu0 0.0
  %10383 = vmatpush1.msra.mxu0 0.0
  %10384 = vmatprep.subr.mxu0 0.0
  %10385 = vmatpush1.msra.mxu0 0.0
  %10386 = vmatprep.subr.mxu0 0.0
  %10387 = vmatpush1.msra.mxu0 0.0
  %10388 = vmatprep.subr.mxu0 0.0
  %10389 = vmatpush1.msra.mxu0 0.0
  %10390 = vmatprep.subr.mxu0 0.0
  %10391 = vmatpush1.msra.mxu0 0.0
  %10392 = vmatprep.mubr.f32.mxu0 0.0
  %v10393 = vand.u32 %v10214, 4294901760
  %10394 = vmatmul.mubr.f32.gmra.mrb[0].mxu0 %v10393
  %v10395 = vpop.f32.mrb[0].mxu0
  %v10396 = vadd.f32 %v10295, %v10395
  %v10397 = vpop.f32.mrb[0].mxu0
  %10398 = vmatprep.mubr.f32.mxu0 0.0
  %v10399 = vand.u32 %v10217, 4294901760
  %10400 = vmatmul.mubr.f32.gmra.mrb[0].mxu0 %v10399
  %v10401 = vpop.f32.mrb[0].mxu0
  %v10402 = vadd.f32 %v10305, %v10401
  %v10403 = vpop.f32.mrb[0].mxu0
  %10404 = vdwg.mxu0
  %10405 = vmatprep.subr.mxu0 0.0
  %v10406 = vand.u32 %v10205, 4294901760
  %v10407 = vsub.f32 %v10205, %v10406
  %10408 = vmatpush1.msra.mxu0 %v10407
  %10409 = vmatprep.subr.mxu0 0.0
  %v10410 = vand.u32 %v10206, 4294901760
  %v10411 = vsub.f32 %v10206, %v10410
  %10412 = vmatpush1.msra.mxu0 %v10411
  %10413 = vmatprep.subr.mxu0 0.0
  %v10414 = vand.u32 %v10207, 4294901760
  %v10415 = vsub.f32 %v10207, %v10414
  %10416 = vmatpush1.msra.mxu0 %v10415
  %10417 = vmatprep.subr.mxu0 0.0
  %v10418 = vand.u32 %v10208, 4294901760
  %v10419 = vsub.f32 %v10208, %v10418
  %10420 = vmatpush1.msra.mxu0 %v10419
  %10421 = vmatprep.subr.mxu0 0.0
  %10422 = vmatpush1.msra.mxu0 0.0
  %10423 = vmatprep.subr.mxu0 0.0
  %10424 = vmatpush1.msra.mxu0 0.0
  %10425 = vmatprep.subr.mxu0 0.0
  %10426 = vmatpush1.msra.mxu0 0.0
  %10427 = vmatprep.subr.mxu0 0.0
  %10428 = vmatpush1.msra.mxu0 0.0
  %10429 = vmatprep.subr.mxu0 0.0
  %10430 = vmatpush1.msra.mxu0 0.0
  %10431 = vmatprep.subr.mxu0 0.0
  %10432 = vmatpush1.msra.mxu0 0.0
  %10433 = vmatprep.subr.mxu0 0.0
  %10434 = vmatpush1.msra.mxu0 0.0
  %10435 = vmatprep.subr.mxu0 0.0
  %10436 = vmatpush1.msra.mxu0 0.0
  %10437 = vmatprep.subr.mxu0 0.0
  %10438 = vmatpush1.msra.mxu0 0.0
  %10439 = vmatprep.subr.mxu0 0.0
  %10440 = vmatpush1.msra.mxu0 0.0
  %10441 = vmatprep.subr.mxu0 0.0
  %10442 = vmatpush1.msra.mxu0 0.0
  %10443 = vmatprep.subr.mxu0 0.0
  %10444 = vmatpush1.msra.mxu0 0.0
  %10445 = vmatprep.subr.mxu0 0.0
  %10446 = vmatpush1.msra.mxu0 0.0
  %10447 = vmatprep.subr.mxu0 0.0
  %10448 = vmatpush1.msra.mxu0 0.0
  %10449 = vmatprep.subr.mxu0 0.0
  %10450 = vmatpush1.msra.mxu0 0.0
  %10451 = vmatprep.subr.mxu0 0.0
  %10452 = vmatpush1.msra.mxu0 0.0
  %10453 = vmatprep.subr.mxu0 0.0
  %10454 = vmatpush1.msra.mxu0 0.0
  %10455 = vmatprep.subr.mxu0 0.0
  %10456 = vmatpush1.msra.mxu0 0.0
  %10457 = vmatprep.subr.mxu0 0.0
  %10458 = vmatpush1.msra.mxu0 0.0
  %10459 = vmatprep.subr.mxu0 0.0
  %10460 = vmatpush1.msra.mxu0 0.0
  %10461 = vmatprep.subr.mxu0 0.0
  %10462 = vmatpush1.msra.mxu0 0.0
  %10463 = vmatprep.subr.mxu0 0.0
  %10464 = vmatpush1.msra.mxu0 0.0
  %10465 = vmatprep.subr.mxu0 0.0
  %10466 = vmatpush1.msra.mxu0 0.0
  %10467 = vmatprep.subr.mxu0 0.0
  %10468 = vmatpush1.msra.mxu0 0.0
  %10469 = vmatprep.subr.mxu0 0.0
  %10470 = vmatpush1.msra.mxu0 0.0
  %10471 = vmatprep.subr.mxu0 0.0
  %10472 = vmatpush1.msra.mxu0 0.0
  %10473 = vmatprep.subr.mxu0 0.0
  %10474 = vmatpush1.msra.mxu0 0.0
  %10475 = vmatprep.subr.mxu0 0.0
  %10476 = vmatpush1.msra.mxu0 0.0
  %10477 = vmatprep.mubr.f32.mxu0 0.0
  %v10478 = vand.u32 %v10214, 4294901760
  %v10479 = vsub.f32 %v10214, %v10478
  %10480 = vmatmul.mubr.f32.gmra.mrb[0].mxu0 %v10479
  %v10481 = vpop.f32.mrb[0].mxu0
  %v10482 = vadd.f32 %v10396, %v10481
  %v10483 = vpop.f32.mrb[0].mxu0
  %10484 = vmatprep.mubr.f32.mxu0 0.0
  %v10485 = vand.u32 %v10217, 4294901760
  %v10486 = vsub.f32 %v10217, %v10485
  %10487 = vmatmul.mubr.f32.gmra.mrb[0].mxu0 %v10486
  %v10488 = vpop.f32.mrb[0].mxu0
  %v10489 = vadd.f32 %v10402, %v10488
  %v10490 = vpop.f32.mrb[0].mxu0
  %10491 = vdwg.mxu0
  %10492 = vmatprep.subr.mxu0 0.0
  %v10493 = vand.u32 %v10205, 4294901760
  %10494 = vmatpush1.msra.mxu0 %v10493
  %10495 = vmatprep.subr.mxu0 0.0
  %v10496 = vand.u32 %v10206, 4294901760
  %10497 = vmatpush1.msra.mxu0 %v10496
  %10498 = vmatprep.subr.mxu0 0.0
  %v10499 = vand.u32 %v10207, 4294901760
  %10500 = vmatpush1.msra.mxu0 %v10499
  %10501 = vmatprep.subr.mxu0 0.0
  %v10502 = vand.u32 %v10208, 4294901760
  %10503 = vmatpush1.msra.mxu0 %v10502
  %10504 = vmatprep.subr.mxu0 0.0
  %10505 = vmatpush1.msra.mxu0 0.0
  %10506 = vmatprep.subr.mxu0 0.0
  %10507 = vmatpush1.msra.mxu0 0.0
  %10508 = vmatprep.subr.mxu0 0.0
  %10509 = vmatpush1.msra.mxu0 0.0
  %10510 = vmatprep.subr.mxu0 0.0
  %10511 = vmatpush1.msra.mxu0 0.0
  %10512 = vmatprep.subr.mxu0 0.0
  %10513 = vmatpush1.msra.mxu0 0.0
  %10514 = vmatprep.subr.mxu0 0.0
  %10515 = vmatpush1.msra.mxu0 0.0
  %10516 = vmatprep.subr.mxu0 0.0
  %10517 = vmatpush1.msra.mxu0 0.0
  %10518 = vmatprep.subr.mxu0 0.0
  %10519 = vmatpush1.msra.mxu0 0.0
  %10520 = vmatprep.subr.mxu0 0.0
  %10521 = vmatpush1.msra.mxu0 0.0
  %10522 = vmatprep.subr.mxu0 0.0
  %10523 = vmatpush1.msra.mxu0 0.0
  %10524 = vmatprep.subr.mxu0 0.0
  %10525 = vmatpush1.msra.mxu0 0.0
  %10526 = vmatprep.subr.mxu0 0.0
  %10527 = vmatpush1.msra.mxu0 0.0
  %10528 = vmatprep.subr.mxu0 0.0
  %10529 = vmatpush1.msra.mxu0 0.0
  %10530 = vmatprep.subr.mxu0 0.0
  %10531 = vmatpush1.msra.mxu0 0.0
  %10532 = vmatprep.subr.mxu0 0.0
  %10533 = vmatpush1.msra.mxu0 0.0
  %10534 = vmatprep.subr.mxu0 0.0
  %10535 = vmatpush1.msra.mxu0 0.0
  %10536 = vmatprep.subr.mxu0 0.0
  %10537 = vmatpush1.msra.mxu0 0.0
  %10538 = vmatprep.subr.mxu0 0.0
  %10539 = vmatpush1.msra.mxu0 0.0
  %10540 = vmatprep.subr.mxu0 0.0
  %10541 = vmatpush1.msra.mxu0 0.0
  %10542 = vmatprep.subr.mxu0 0.0
  %10543 = vmatpush1.msra.mxu0 0.0
  %10544 = vmatprep.subr.mxu0 0.0
  %10545 = vmatpush1.msra.mxu0 0.0
  %10546 = vmatprep.subr.mxu0 0.0
  %10547 = vmatpush1.msra.mxu0 0.0
  %10548 = vmatprep.subr.mxu0 0.0
  %10549 = vmatpush1.msra.mxu0 0.0
  %10550 = vmatprep.subr.mxu0 0.0
  %10551 = vmatpush1.msra.mxu0 0.0
  %10552 = vmatprep.subr.mxu0 0.0
  %10553 = vmatpush1.msra.mxu0 0.0
  %10554 = vmatprep.subr.mxu0 0.0
  %10555 = vmatpush1.msra.mxu0 0.0
  %10556 = vmatprep.subr.mxu0 0.0
  %10557 = vmatpush1.msra.mxu0 0.0
  %10558 = vmatprep.subr.mxu0 0.0
  %10559 = vmatpush1.msra.mxu0 0.0
  %10560 = vmatprep.mubr.f32.mxu0 0.0
  %v10561 = vand.u32 %v10214, 4294901760
  %v10562 = vsub.f32 %v10214, %v10561
  %v10563 = vand.u32 %v10562, 4294901760
  %10564 = vmatmul.mubr.f32.gmra.mrb[0].mxu0 %v10563
  %v10565 = vpop.f32.mrb[0].mxu0
  %v10566 = vadd.f32 %v10482, %v10565
  %v10567 = vpop.f32.mrb[0].mxu0
  %10568 = vmatprep.mubr.f32.mxu0 0.0
  %v10569 = vand.u32 %v10217, 4294901760
  %v10570 = vsub.f32 %v10217, %v10569
  %v10571 = vand.u32 %v10570, 4294901760
  %10572 = vmatmul.mubr.f32.gmra.mrb[0].mxu0 %v10571
  %v10573 = vpop.f32.mrb[0].mxu0
  %v10574 = vadd.f32 %v10489, %v10573
  %v10575 = vpop.f32.mrb[0].mxu0
  %10576 = vdwg.mxu0
  %10577 = vmatprep.subr.mxu0 0.0
  %v10578 = vand.u32 %v10205, 4294901760
  %v10579 = vsub.f32 %v10205, %v10578
  %v10580 = vand.u32 %v10579, 4294901760
  %10581 = vmatpush1.msra.mxu0 %v10580
  %10582 = vmatprep.subr.mxu0 0.0
  %v10583 = vand.u32 %v10206, 4294901760
  %v10584 = vsub.f32 %v10206, %v10583
  %v10585 = vand.u32 %v10584, 4294901760
  %10586 = vmatpush1.msra.mxu0 %v10585
  %10587 = vmatprep.subr.mxu0 0.0
  %v10588 = vand.u32 %v10207, 4294901760
  %v10589 = vsub.f32 %v10207, %v10588
  %v10590 = vand.u32 %v10589, 4294901760
  %10591 = vmatpush1.msra.mxu0 %v10590
  %10592 = vmatprep.subr.mxu0 0.0
  %v10593 = vand.u32 %v10208, 4294901760
  %v10594 = vsub.f32 %v10208, %v10593
  %v10595 = vand.u32 %v10594, 4294901760
  %10596 = vmatpush1.msra.mxu0 %v10595
  %10597 = vmatprep.subr.mxu0 0.0
  %10598 = vmatpush1.msra.mxu0 0.0
  %10599 = vmatprep.subr.mxu0 0.0
  %10600 = vmatpush1.msra.mxu0 0.0
  %10601 = vmatprep.subr.mxu0 0.0
  %10602 = vmatpush1.msra.mxu0 0.0
  %10603 = vmatprep.subr.mxu0 0.0
  %10604 = vmatpush1.msra.mxu0 0.0
  %10605 = vmatprep.subr.mxu0 0.0
  %10606 = vmatpush1.msra.mxu0 0.0
  %10607 = vmatprep.subr.mxu0 0.0
  %10608 = vmatpush1.msra.mxu0 0.0
  %10609 = vmatprep.subr.mxu0 0.0
  %10610 = vmatpush1.msra.mxu0 0.0
  %10611 = vmatprep.subr.mxu0 0.0
  %10612 = vmatpush1.msra.mxu0 0.0
  %10613 = vmatprep.subr.mxu0 0.0
  %10614 = vmatpush1.msra.mxu0 0.0
  %10615 = vmatprep.subr.mxu0 0.0
  %10616 = vmatpush1.msra.mxu0 0.0
  %10617 = vmatprep.subr.mxu0 0.0
  %10618 = vmatpush1.msra.mxu0 0.0
  %10619 = vmatprep.subr.mxu0 0.0
  %10620 = vmatpush1.msra.mxu0 0.0
  %10621 = vmatprep.subr.mxu0 0.0
  %10622 = vmatpush1.msra.mxu0 0.0
  %10623 = vmatprep.subr.mxu0 0.0
  %10624 = vmatpush1.msra.mxu0 0.0
  %10625 = vmatprep.subr.mxu0 0.0
  %10626 = vmatpush1.msra.mxu0 0.0
  %10627 = vmatprep.subr.mxu0 0.0
  %10628 = vmatpush1.msra.mxu0 0.0
  %10629 = vmatprep.subr.mxu0 0.0
  %10630 = vmatpush1.msra.mxu0 0.0
  %10631 = vmatprep.subr.mxu0 0.0
  %10632 = vmatpush1.msra.mxu0 0.0
  %10633 = vmatprep.subr.mxu0 0.0
  %10634 = vmatpush1.msra.mxu0 0.0
  %10635 = vmatprep.subr.mxu0 0.0
  %10636 = vmatpush1.msra.mxu0 0.0
  %10637 = vmatprep.subr.mxu0 0.0
  %10638 = vmatpush1.msra.mxu0 0.0
  %10639 = vmatprep.subr.mxu0 0.0
  %10640 = vmatpush1.msra.mxu0 0.0
  %10641 = vmatprep.subr.mxu0 0.0
  %10642 = vmatpush1.msra.mxu0 0.0
  %10643 = vmatprep.subr.mxu0 0.0
  %10644 = vmatpush1.msra.mxu0 0.0
  %10645 = vmatprep.subr.mxu0 0.0
  %10646 = vmatpush1.msra.mxu0 0.0
  %10647 = vmatprep.subr.mxu0 0.0
  %10648 = vmatpush1.msra.mxu0 0.0
  %10649 = vmatprep.subr.mxu0 0.0
  %10650 = vmatpush1.msra.mxu0 0.0
  %10651 = vmatprep.subr.mxu0 0.0
  %10652 = vmatpush1.msra.mxu0 0.0
  %10653 = vmatprep.mubr.f32.mxu0 0.0
  %v10654 = vand.u32 %v10214, 4294901760
  %10655 = vmatmul.mubr.f32.gmra.mrb[0].mxu0 %v10654
  %v10656 = vpop.f32.mrb[0].mxu0
  %v10657 = vadd.f32 %v10566, %v10656
  %v10658 = vpop.f32.mrb[0].mxu0
  %10659 = vmatprep.mubr.f32.mxu0 0.0
  %v10660 = vand.u32 %v10217, 4294901760
  %10661 = vmatmul.mubr.f32.gmra.mrb[0].mxu0 %v10660
  %v10662 = vpop.f32.mrb[0].mxu0
  %v10663 = vadd.f32 %v10574, %v10662
  %v10664 = vpop.f32.mrb[0].mxu0
  %10665 = vdwg.mxu0
  %10666 = vmatprep.subr.mxu0 0.0
  %v10667 = vand.u32 %v10205, 4294901760
  %10668 = vmatpush1.msra.mxu0 %v10667
  %10669 = vmatprep.subr.mxu0 0.0
  %v10670 = vand.u32 %v10206, 4294901760
  %10671 = vmatpush1.msra.mxu0 %v10670
  %10672 = vmatprep.subr.mxu0 0.0
  %v10673 = vand.u32 %v10207, 4294901760
  %10674 = vmatpush1.msra.mxu0 %v10673
  %10675 = vmatprep.subr.mxu0 0.0
  %v10676 = vand.u32 %v10208, 4294901760
  %10677 = vmatpush1.msra.mxu0 %v10676
  %10678 = vmatprep.subr.mxu0 0.0
  %10679 = vmatpush1.msra.mxu0 0.0
  %10680 = vmatprep.subr.mxu0 0.0
  %10681 = vmatpush1.msra.mxu0 0.0
  %10682 = vmatprep.subr.mxu0 0.0
  %10683 = vmatpush1.msra.mxu0 0.0
  %10684 = vmatprep.subr.mxu0 0.0
  %10685 = vmatpush1.msra.mxu0 0.0
  %10686 = vmatprep.subr.mxu0 0.0
  %10687 = vmatpush1.msra.mxu0 0.0
  %10688 = vmatprep.subr.mxu0 0.0
  %10689 = vmatpush1.msra.mxu0 0.0
  %10690 = vmatprep.subr.mxu0 0.0
  %10691 = vmatpush1.msra.mxu0 0.0
  %10692 = vmatprep.subr.mxu0 0.0
  %10693 = vmatpush1.msra.mxu0 0.0
  %10694 = vmatprep.subr.mxu0 0.0
  %10695 = vmatpush1.msra.mxu0 0.0
  %10696 = vmatprep.subr.mxu0 0.0
  %10697 = vmatpush1.msra.mxu0 0.0
  %10698 = vmatprep.subr.mxu0 0.0
  %10699 = vmatpush1.msra.mxu0 0.0
  %10700 = vmatprep.subr.mxu0 0.0
  %10701 = vmatpush1.msra.mxu0 0.0
  %10702 = vmatprep.subr.mxu0 0.0
  %10703 = vmatpush1.msra.mxu0 0.0
  %10704 = vmatprep.subr.mxu0 0.0
  %10705 = vmatpush1.msra.mxu0 0.0
  %10706 = vmatprep.subr.mxu0 0.0
  %10707 = vmatpush1.msra.mxu0 0.0
  %10708 = vmatprep.subr.mxu0 0.0
  %10709 = vmatpush1.msra.mxu0 0.0
  %10710 = vmatprep.subr.mxu0 0.0
  %10711 = vmatpush1.msra.mxu0 0.0
  %10712 = vmatprep.subr.mxu0 0.0
  %10713 = vmatpush1.msra.mxu0 0.0
  %10714 = vmatprep.subr.mxu0 0.0
  %10715 = vmatpush1.msra.mxu0 0.0
  %10716 = vmatprep.subr.mxu0 0.0
  %10717 = vmatpush1.msra.mxu0 0.0
  %10718 = vmatprep.subr.mxu0 0.0
  %10719 = vmatpush1.msra.mxu0 0.0
  %10720 = vmatprep.subr.mxu0 0.0
  %10721 = vmatpush1.msra.mxu0 0.0
  %10722 = vmatprep.subr.mxu0 0.0
  %10723 = vmatpush1.msra.mxu0 0.0
  %10724 = vmatprep.subr.mxu0 0.0
  %10725 = vmatpush1.msra.mxu0 0.0
  %10726 = vmatprep.subr.mxu0 0.0
  %10727 = vmatpush1.msra.mxu0 0.0
  %10728 = vmatprep.subr.mxu0 0.0
  %10729 = vmatpush1.msra.mxu0 0.0
  %10730 = vmatprep.subr.mxu0 0.0
  %10731 = vmatpush1.msra.mxu0 0.0
  %10732 = vmatprep.subr.mxu0 0.0
  %10733 = vmatpush1.msra.mxu0 0.0
  %10734 = vmatprep.mubr.f32.mxu0 0.0
  %v10735 = vand.u32 %v10214, 4294901760
  %10736 = vmatmul.mubr.f32.gmra.mrb[0].mxu0 %v10735
  %v10737 = vpop.f32.mrb[0].mxu0
  %v10738 = vadd.f32 %v10657, %v10737
  %v10739 = vpop.f32.mrb[0].mxu0
  %10740 = vmatprep.mubr.f32.mxu0 0.0
  %v10741 = vand.u32 %v10217, 4294901760
  %10742 = vmatmul.mubr.f32.gmra.mrb[0].mxu0 %v10741
  %v10743 = vpop.f32.mrb[0].mxu0
  %v10744 = vadd.f32 %v10663, %v10743
  %v10745 = vpop.f32.mrb[0].mxu0
  %10746 = vdwg.mxu0
  %v10747 = vmax.f32 %v10738, 0.0
  %v10748 = vmax.f32 %v10744, 0.0
  %v10749 = vld [vmem:[%s6] sm:$0xff]
  %v10750 = vld [vmem:[%s6 + $0x8] sm:$0xff]
  %v10751 = vld [vmem:[%s6 + $0x10] sm:$0xff]
  %v10752 = vld [vmem:[%s6 + $0x18] sm:$0xff]
  %v10753 = vld [vmem:[%s6 + $0x20] sm:$0xff]
  %v10754 = vld [vmem:[%s6 + $0x28] sm:$0xff]
  %v10755 = vld [vmem:[%s6 + $0x30] sm:$0xff]
  %v10756 = vld [vmem:[%s6 + $0x38] sm:$0xff]
  %vm10757 = vcmask 523264
  %v10759 = vsel %vm10757, %v10747, 0
  %v10762 = vsel %vm10757, %v10748, 0
  %10764 = vmatprep.subr.mxu0 0.0
  %v10765 = vand.u32 %v10749, 4294901760
  %10766 = vmatpush1.msra.mxu0 %v10765
  %10767 = vmatprep.subr.mxu0 0.0
  %v10768 = vand.u32 %v10750, 4294901760
  %10769 = vmatpush1.msra.mxu0 %v10768
  %10770 = vmatprep.subr.mxu0 0.0
  %v10771 = vand.u32 %v10751, 4294901760
  %10772 = vmatpush1.msra.mxu0 %v10771
  %10773 = vmatprep.subr.mxu0 0.0
  %v10774 = vand.u32 %v10752, 4294901760
  %10775 = vmatpush1.msra.mxu0 %v10774
  %10776 = vmatprep.subr.mxu0 0.0
  %v10777 = vand.u32 %v10753, 4294901760
  %10778 = vmatpush1.msra.mxu0 %v10777
  %10779 = vmatprep.subr.mxu0 0.0
  %v10780 = vand.u32 %v10754, 4294901760
  %10781 = vmatpush1.msra.mxu0 %v10780
  %10782 = vmatprep.subr.mxu0 0.0
  %v10783 = vand.u32 %v10755, 4294901760
  %10784 = vmatpush1.msra.mxu0 %v10783
  %10785 = vmatprep.subr.mxu0 0.0
  %v10786 = vand.u32 %v10756, 4294901760
  %10787 = vmatpush1.msra.mxu0 %v10786
  %10788 = vmatprep.subr.mxu0 0.0
  %10789 = vmatpush1.msra.mxu0 0.0
  %10790 = vmatprep.subr.mxu0 0.0
  %10791 = vmatpush1.msra.mxu0 0.0
  %10792 = vmatprep.subr.mxu0 0.0
  %10793 = vmatpush1.msra.mxu0 0.0
  %10794 = vmatprep.subr.mxu0 0.0
  %10795 = vmatpush1.msra.mxu0 0.0
  %10796 = vmatprep.subr.mxu0 0.0
  %10797 = vmatpush1.msra.mxu0 0.0
  %10798 = vmatprep.subr.mxu0 0.0
  %10799 = vmatpush1.msra.mxu0 0.0
  %10800 = vmatprep.subr.mxu0 0.0
  %10801 = vmatpush1.msra.mxu0 0.0
  %10802 = vmatprep.subr.mxu0 0.0
  %10803 = vmatpush1.msra.mxu0 0.0
  %10804 = vmatprep.subr.mxu0 0.0
  %10805 = vmatpush1.msra.mxu0 0.0
  %10806 = vmatprep.subr.mxu0 0.0
  %10807 = vmatpush1.msra.mxu0 0.0
  %10808 = vmatprep.subr.mxu0 0.0
  %10809 = vmatpush1.msra.mxu0 0.0
  %10810 = vmatprep.subr.mxu0 0.0
  %10811 = vmatpush1.msra.mxu0 0.0
  %10812 = vmatprep.subr.mxu0 0.0
  %10813 = vmatpush1.msra.mxu0 0.0
  %10814 = vmatprep.subr.mxu0 0.0
  %10815 = vmatpush1.msra.mxu0 0.0
  %10816 = vmatprep.subr.mxu0 0.0
  %10817 = vmatpush1.msra.mxu0 0.0
  %10818 = vmatprep.subr.mxu0 0.0
  %10819 = vmatpush1.msra.mxu0 0.0
  %10820 = vmatprep.subr.mxu0 0.0
  %10821 = vmatpush1.msra.mxu0 0.0
  %10822 = vmatprep.subr.mxu0 0.0
  %10823 = vmatpush1.msra.mxu0 0.0
  %10824 = vmatprep.subr.mxu0 0.0
  %10825 = vmatpush1.msra.mxu0 0.0
  %10826 = vmatprep.subr.mxu0 0.0
  %10827 = vmatpush1.msra.mxu0 0.0
  %10828 = vmatprep.subr.mxu0 0.0
  %10829 = vmatpush1.msra.mxu0 0.0
  %10830 = vmatprep.subr.mxu0 0.0
  %10831 = vmatpush1.msra.mxu0 0.0
  %10832 = vmatprep.subr.mxu0 0.0
  %10833 = vmatpush1.msra.mxu0 0.0
  %10834 = vmatprep.subr.mxu0 0.0
  %10835 = vmatpush1.msra.mxu0 0.0
  %10836 = vmatprep.mubr.f32.mxu0 0.0
  %v10837 = vand.u32 %v10759, 4294901760
  %v10838 = vsub.f32 %v10759, %v10837
  %v10839 = vand.u32 %v10838, 4294901760
  %v10840 = vsub.f32 %v10838, %v10839
  %v10841 = vand.u32 %v10840, 4294901760
  %10842 = vmatmul.mubr.f32.gmra.mrb[0].mxu0 %v10841
  %v10843 = vpop.f32.mrb[0].mxu0
  %v10844 = vadd.f32 %v10192, %v10843
  %v10845 = vpop.f32.mrb[0].mxu0
  %10846 = vmatprep.mubr.f32.mxu0 0.0
  %v10847 = vand.u32 %v10762, 4294901760
  %v10848 = vsub.f32 %v10762, %v10847
  %v10849 = vand.u32 %v10848, 4294901760
  %v10850 = vsub.f32 %v10848, %v10849
  %v10851 = vand.u32 %v10850, 4294901760
  %10852 = vmatmul.mubr.f32.gmra.mrb[0].mxu0 %v10851
  %v10853 = vpop.f32.mrb[0].mxu0
  %v10854 = vadd.f32 %v10192, %v10853
  %v10855 = vpop.f32.mrb[0].mxu0
  %10856 = vdwg.mxu0
  %10857 = vmatprep.subr.mxu0 0.0
  %v10858 = vand.u32 %v10749, 4294901760
  %v10859 = vsub.f32 %v10749, %v10858
  %v10860 = vand.u32 %v10859, 4294901760
  %v10861 = vsub.f32 %v10859, %v10860
  %v10862 = vand.u32 %v10861, 4294901760
  %10863 = vmatpush1.msra.mxu0 %v10862
  %10864 = vmatprep.subr.mxu0 0.0
  %v10865 = vand.u32 %v10750, 4294901760
  %v10866 = vsub.f32 %v10750, %v10865
  %v10867 = vand.u32 %v10866, 4294901760
  %v10868 = vsub.f32 %v10866, %v10867
  %v10869 = vand.u32 %v10868, 4294901760
  %10870 = vmatpush1.msra.mxu0 %v10869
  %10871 = vmatprep.subr.mxu0 0.0
  %v10872 = vand.u32 %v10751, 4294901760
  %v10873 = vsub.f32 %v10751, %v10872
  %v10874 = vand.u32 %v10873, 4294901760
  %v10875 = vsub.f32 %v10873, %v10874
  %v10876 = vand.u32 %v10875, 4294901760
  %10877 = vmatpush1.msra.mxu0 %v10876
  %10878 = vmatprep.subr.mxu0 0.0
  %v10879 = vand.u32 %v10752, 4294901760
  %v10880 = vsub.f32 %v10752, %v10879
  %v10881 = vand.u32 %v10880, 4294901760
  %v10882 = vsub.f32 %v10880, %v10881
  %v10883 = vand.u32 %v10882, 4294901760
  %10884 = vmatpush1.msra.mxu0 %v10883
  %10885 = vmatprep.subr.mxu0 0.0
  %v10886 = vand.u32 %v10753, 4294901760
  %v10887 = vsub.f32 %v10753, %v10886
  %v10888 = vand.u32 %v10887, 4294901760
  %v10889 = vsub.f32 %v10887, %v10888
  %v10890 = vand.u32 %v10889, 4294901760
  %10891 = vmatpush1.msra.mxu0 %v10890
  %10892 = vmatprep.subr.mxu0 0.0
  %v10893 = vand.u32 %v10754, 4294901760
  %v10894 = vsub.f32 %v10754, %v10893
  %v10895 = vand.u32 %v10894, 4294901760
  %v10896 = vsub.f32 %v10894, %v10895
  %v10897 = vand.u32 %v10896, 4294901760
  %10898 = vmatpush1.msra.mxu0 %v10897
  %10899 = vmatprep.subr.mxu0 0.0
  %v10900 = vand.u32 %v10755, 4294901760
  %v10901 = vsub.f32 %v10755, %v10900
  %v10902 = vand.u32 %v10901, 4294901760
  %v10903 = vsub.f32 %v10901, %v10902
  %v10904 = vand.u32 %v10903, 4294901760
  %10905 = vmatpush1.msra.mxu0 %v10904
  %10906 = vmatprep.subr.mxu0 0.0
  %v10907 = vand.u32 %v10756, 4294901760
  %v10908 = vsub.f32 %v10756, %v10907
  %v10909 = vand.u32 %v10908, 4294901760
  %v10910 = vsub.f32 %v10908, %v10909
  %v10911 = vand.u32 %v10910, 4294901760
  %10912 = vmatpush1.msra.mxu0 %v10911
  %10913 = vmatprep.subr.mxu0 0.0
  %10914 = vmatpush1.msra.mxu0 0.0
  %10915 = vmatprep.subr.mxu0 0.0
  %10916 = vmatpush1.msra.mxu0 0.0
  %10917 = vmatprep.subr.mxu0 0.0
  %10918 = vmatpush1.msra.mxu0 0.0
  %10919 = vmatprep.subr.mxu0 0.0
  %10920 = vmatpush1.msra.mxu0 0.0
  %10921 = vmatprep.subr.mxu0 0.0
  %10922 = vmatpush1.msra.mxu0 0.0
  %10923 = vmatprep.subr.mxu0 0.0
  %10924 = vmatpush1.msra.mxu0 0.0
  %10925 = vmatprep.subr.mxu0 0.0
  %10926 = vmatpush1.msra.mxu0 0.0
  %10927 = vmatprep.subr.mxu0 0.0
  %10928 = vmatpush1.msra.mxu0 0.0
  %10929 = vmatprep.subr.mxu0 0.0
  %10930 = vmatpush1.msra.mxu0 0.0
  %10931 = vmatprep.subr.mxu0 0.0
  %10932 = vmatpush1.msra.mxu0 0.0
  %10933 = vmatprep.subr.mxu0 0.0
  %10934 = vmatpush1.msra.mxu0 0.0
  %10935 = vmatprep.subr.mxu0 0.0
  %10936 = vmatpush1.msra.mxu0 0.0
  %10937 = vmatprep.subr.mxu0 0.0
  %10938 = vmatpush1.msra.mxu0 0.0
  %10939 = vmatprep.subr.mxu0 0.0
  %10940 = vmatpush1.msra.mxu0 0.0
  %10941 = vmatprep.subr.mxu0 0.0
  %10942 = vmatpush1.msra.mxu0 0.0
  %10943 = vmatprep.subr.mxu0 0.0
  %10944 = vmatpush1.msra.mxu0 0.0
  %10945 = vmatprep.subr.mxu0 0.0
  %10946 = vmatpush1.msra.mxu0 0.0
  %10947 = vmatprep.subr.mxu0 0.0
  %10948 = vmatpush1.msra.mxu0 0.0
  %10949 = vmatprep.subr.mxu0 0.0
  %10950 = vmatpush1.msra.mxu0 0.0
  %10951 = vmatprep.subr.mxu0 0.0
  %10952 = vmatpush1.msra.mxu0 0.0
  %10953 = vmatprep.subr.mxu0 0.0
  %10954 = vmatpush1.msra.mxu0 0.0
  %10955 = vmatprep.subr.mxu0 0.0
  %10956 = vmatpush1.msra.mxu0 0.0
  %10957 = vmatprep.subr.mxu0 0.0
  %10958 = vmatpush1.msra.mxu0 0.0
  %10959 = vmatprep.subr.mxu0 0.0
  %10960 = vmatpush1.msra.mxu0 0.0
  %10961 = vmatprep.mubr.f32.mxu0 0.0
  %v10962 = vand.u32 %v10759, 4294901760
  %10963 = vmatmul.mubr.f32.gmra.mrb[0].mxu0 %v10962
  %v10964 = vpop.f32.mrb[0].mxu0
  %v10965 = vadd.f32 %v10844, %v10964
  %v10966 = vpop.f32.mrb[0].mxu0
  %10967 = vmatprep.mubr.f32.mxu0 0.0
  %v10968 = vand.u32 %v10762, 4294901760
  %10969 = vmatmul.mubr.f32.gmra.mrb[0].mxu0 %v10968
  %v10970 = vpop.f32.mrb[0].mxu0
  %v10971 = vadd.f32 %v10854, %v10970
  %v10972 = vpop.f32.mrb[0].mxu0
  %10973 = vdwg.mxu0
  %10974 = vmatprep.subr.mxu0 0.0
  %v10975 = vand.u32 %v10749, 4294901760
  %v10976 = vsub.f32 %v10749, %v10975
  %10977 = vmatpush1.msra.mxu0 %v10976
  %10978 = vmatprep.subr.mxu0 0.0
  %v10979 = vand.u32 %v10750, 4294901760
  %v10980 = vsub.f32 %v10750, %v10979
  %10981 = vmatpush1.msra.mxu0 %v10980
  %10982 = vmatprep.subr.mxu0 0.0
  %v10983 = vand.u32 %v10751, 4294901760
  %v10984 = vsub.f32 %v10751, %v10983
  %10985 = vmatpush1.msra.mxu0 %v10984
  %10986 = vmatprep.subr.mxu0 0.0
  %v10987 = vand.u32 %v10752, 4294901760
  %v10988 = vsub.f32 %v10752, %v10987
  %10989 = vmatpush1.msra.mxu0 %v10988
  %10990 = vmatprep.subr.mxu0 0.0
  %v10991 = vand.u32 %v10753, 4294901760
  %v10992 = vsub.f32 %v10753, %v10991
  %10993 = vmatpush1.msra.mxu0 %v10992
  %10994 = vmatprep.subr.mxu0 0.0
  %v10995 = vand.u32 %v10754, 4294901760
  %v10996 = vsub.f32 %v10754, %v10995
  %10997 = vmatpush1.msra.mxu0 %v10996
  %10998 = vmatprep.subr.mxu0 0.0
  %v10999 = vand.u32 %v10755, 4294901760
  %v11000 = vsub.f32 %v10755, %v10999
  %11001 = vmatpush1.msra.mxu0 %v11000
  %11002 = vmatprep.subr.mxu0 0.0
  %v11003 = vand.u32 %v10756, 4294901760
  %v11004 = vsub.f32 %v10756, %v11003
  %11005 = vmatpush1.msra.mxu0 %v11004
  %11006 = vmatprep.subr.mxu0 0.0
  %11007 = vmatpush1.msra.mxu0 0.0
  %11008 = vmatprep.subr.mxu0 0.0
  %11009 = vmatpush1.msra.mxu0 0.0
  %11010 = vmatprep.subr.mxu0 0.0
  %11011 = vmatpush1.msra.mxu0 0.0
  %11012 = vmatprep.subr.mxu0 0.0
  %11013 = vmatpush1.msra.mxu0 0.0
  %11014 = vmatprep.subr.mxu0 0.0
  %11015 = vmatpush1.msra.mxu0 0.0
  %11016 = vmatprep.subr.mxu0 0.0
  %11017 = vmatpush1.msra.mxu0 0.0
  %11018 = vmatprep.subr.mxu0 0.0
  %11019 = vmatpush1.msra.mxu0 0.0
  %11020 = vmatprep.subr.mxu0 0.0
  %11021 = vmatpush1.msra.mxu0 0.0
  %11022 = vmatprep.subr.mxu0 0.0
  %11023 = vmatpush1.msra.mxu0 0.0
  %11024 = vmatprep.subr.mxu0 0.0
  %11025 = vmatpush1.msra.mxu0 0.0
  %11026 = vmatprep.subr.mxu0 0.0
  %11027 = vmatpush1.msra.mxu0 0.0
  %11028 = vmatprep.subr.mxu0 0.0
  %11029 = vmatpush1.msra.mxu0 0.0
  %11030 = vmatprep.subr.mxu0 0.0
  %11031 = vmatpush1.msra.mxu0 0.0
  %11032 = vmatprep.subr.mxu0 0.0
  %11033 = vmatpush1.msra.mxu0 0.0
  %11034 = vmatprep.subr.mxu0 0.0
  %11035 = vmatpush1.msra.mxu0 0.0
  %11036 = vmatprep.subr.mxu0 0.0
  %11037 = vmatpush1.msra.mxu0 0.0
  %11038 = vmatprep.subr.mxu0 0.0
  %11039 = vmatpush1.msra.mxu0 0.0
  %11040 = vmatprep.subr.mxu0 0.0
  %11041 = vmatpush1.msra.mxu0 0.0
  %11042 = vmatprep.subr.mxu0 0.0
  %11043 = vmatpush1.msra.mxu0 0.0
  %11044 = vmatprep.subr.mxu0 0.0
  %11045 = vmatpush1.msra.mxu0 0.0
  %11046 = vmatprep.subr.mxu0 0.0
  %11047 = vmatpush1.msra.mxu0 0.0
  %11048 = vmatprep.subr.mxu0 0.0
  %11049 = vmatpush1.msra.mxu0 0.0
  %11050 = vmatprep.subr.mxu0 0.0
  %11051 = vmatpush1.msra.mxu0 0.0
  %11052 = vmatprep.subr.mxu0 0.0
  %11053 = vmatpush1.msra.mxu0 0.0
  %11054 = vmatprep.mubr.f32.mxu0 0.0
  %v11055 = vand.u32 %v10759, 4294901760
  %v11056 = vsub.f32 %v10759, %v11055
  %11057 = vmatmul.mubr.f32.gmra.mrb[0].mxu0 %v11056
  %v11058 = vpop.f32.mrb[0].mxu0
  %v11059 = vadd.f32 %v10965, %v11058
  %v11060 = vpop.f32.mrb[0].mxu0
  %11061 = vmatprep.mubr.f32.mxu0 0.0
  %v11062 = vand.u32 %v10762, 4294901760
  %v11063 = vsub.f32 %v10762, %v11062
  %11064 = vmatmul.mubr.f32.gmra.mrb[0].mxu0 %v11063
  %v11065 = vpop.f32.mrb[0].mxu0
  %v11066 = vadd.f32 %v10971, %v11065
  %v11067 = vpop.f32.mrb[0].mxu0
  %11068 = vdwg.mxu0
  %11069 = vmatprep.subr.mxu0 0.0
  %v11070 = vand.u32 %v10749, 4294901760
  %11071 = vmatpush1.msra.mxu0 %v11070
  %11072 = vmatprep.subr.mxu0 0.0
  %v11073 = vand.u32 %v10750, 4294901760
  %11074 = vmatpush1.msra.mxu0 %v11073
  %11075 = vmatprep.subr.mxu0 0.0
  %v11076 = vand.u32 %v10751, 4294901760
  %11077 = vmatpush1.msra.mxu0 %v11076
  %11078 = vmatprep.subr.mxu0 0.0
  %v11079 = vand.u32 %v10752, 4294901760
  %11080 = vmatpush1.msra.mxu0 %v11079
  %11081 = vmatprep.subr.mxu0 0.0
  %v11082 = vand.u32 %v10753, 4294901760
  %11083 = vmatpush1.msra.mxu0 %v11082
  %11084 = vmatprep.subr.mxu0 0.0
  %v11085 = vand.u32 %v10754, 4294901760
  %11086 = vmatpush1.msra.mxu0 %v11085
  %11087 = vmatprep.subr.mxu0 0.0
  %v11088 = vand.u32 %v10755, 4294901760
  %11089 = vmatpush1.msra.mxu0 %v11088
  %11090 = vmatprep.subr.mxu0 0.0
  %v11091 = vand.u32 %v10756, 4294901760
  %11092 = vmatpush1.msra.mxu0 %v11091
  %11093 = vmatprep.subr.mxu0 0.0
  %11094 = vmatpush1.msra.mxu0 0.0
  %11095 = vmatprep.subr.mxu0 0.0
  %11096 = vmatpush1.msra.mxu0 0.0
  %11097 = vmatprep.subr.mxu0 0.0
  %11098 = vmatpush1.msra.mxu0 0.0
  %11099 = vmatprep.subr.mxu0 0.0
  %11100 = vmatpush1.msra.mxu0 0.0
  %11101 = vmatprep.subr.mxu0 0.0
  %11102 = vmatpush1.msra.mxu0 0.0
  %11103 = vmatprep.subr.mxu0 0.0
  %11104 = vmatpush1.msra.mxu0 0.0
  %11105 = vmatprep.subr.mxu0 0.0
  %11106 = vmatpush1.msra.mxu0 0.0
  %11107 = vmatprep.subr.mxu0 0.0
  %11108 = vmatpush1.msra.mxu0 0.0
  %11109 = vmatprep.subr.mxu0 0.0
  %11110 = vmatpush1.msra.mxu0 0.0
  %11111 = vmatprep.subr.mxu0 0.0
  %11112 = vmatpush1.msra.mxu0 0.0
  %11113 = vmatprep.subr.mxu0 0.0
  %11114 = vmatpush1.msra.mxu0 0.0
  %11115 = vmatprep.subr.mxu0 0.0
  %11116 = vmatpush1.msra.mxu0 0.0
  %11117 = vmatprep.subr.mxu0 0.0
  %11118 = vmatpush1.msra.mxu0 0.0
  %11119 = vmatprep.subr.mxu0 0.0
  %11120 = vmatpush1.msra.mxu0 0.0
  %11121 = vmatprep.subr.mxu0 0.0
  %11122 = vmatpush1.msra.mxu0 0.0
  %11123 = vmatprep.subr.mxu0 0.0
  %11124 = vmatpush1.msra.mxu0 0.0
  %11125 = vmatprep.subr.mxu0 0.0
  %11126 = vmatpush1.msra.mxu0 0.0
  %11127 = vmatprep.subr.mxu0 0.0
  %11128 = vmatpush1.msra.mxu0 0.0
  %11129 = vmatprep.subr.mxu0 0.0
  %11130 = vmatpush1.msra.mxu0 0.0
  %11131 = vmatprep.subr.mxu0 0.0
  %11132 = vmatpush1.msra.mxu0 0.0
  %11133 = vmatprep.subr.mxu0 0.0
  %11134 = vmatpush1.msra.mxu0 0.0
  %11135 = vmatprep.subr.mxu0 0.0
  %11136 = vmatpush1.msra.mxu0 0.0
  %11137 = vmatprep.subr.mxu0 0.0
  %11138 = vmatpush1.msra.mxu0 0.0
  %11139 = vmatprep.subr.mxu0 0.0
  %11140 = vmatpush1.msra.mxu0 0.0
  %11141 = vmatprep.mubr.f32.mxu0 0.0
  %v11142 = vand.u32 %v10759, 4294901760
  %v11143 = vsub.f32 %v10759, %v11142
  %v11144 = vand.u32 %v11143, 4294901760
  %11145 = vmatmul.mubr.f32.gmra.mrb[0].mxu0 %v11144
  %v11146 = vpop.f32.mrb[0].mxu0
  %v11147 = vadd.f32 %v11059, %v11146
  %v11148 = vpop.f32.mrb[0].mxu0
  %11149 = vmatprep.mubr.f32.mxu0 0.0
  %v11150 = vand.u32 %v10762, 4294901760
  %v11151 = vsub.f32 %v10762, %v11150
  %v11152 = vand.u32 %v11151, 4294901760
  %11153 = vmatmul.mubr.f32.gmra.mrb[0].mxu0 %v11152
  %v11154 = vpop.f32.mrb[0].mxu0
  %v11155 = vadd.f32 %v11066, %v11154
  %v11156 = vpop.f32.mrb[0].mxu0
  %11157 = vdwg.mxu0
  %11158 = vmatprep.subr.mxu0 0.0
  %v11159 = vand.u32 %v10749, 4294901760
  %v11160 = vsub.f32 %v10749, %v11159
  %v11161 = vand.u32 %v11160, 4294901760
  %11162 = vmatpush1.msra.mxu0 %v11161
  %11163 = vmatprep.subr.mxu0 0.0
  %v11164 = vand.u32 %v10750, 4294901760
  %v11165 = vsub.f32 %v10750, %v11164
  %v11166 = vand.u32 %v11165, 4294901760
  %11167 = vmatpush1.msra.mxu0 %v11166
  %11168 = vmatprep.subr.mxu0 0.0
  %v11169 = vand.u32 %v10751, 4294901760
  %v11170 = vsub.f32 %v10751, %v11169
  %v11171 = vand.u32 %v11170, 4294901760
  %11172 = vmatpush1.msra.mxu0 %v11171
  %11173 = vmatprep.subr.mxu0 0.0
  %v11174 = vand.u32 %v10752, 4294901760
  %v11175 = vsub.f32 %v10752, %v11174
  %v11176 = vand.u32 %v11175, 4294901760
  %11177 = vmatpush1.msra.mxu0 %v11176
  %11178 = vmatprep.subr.mxu0 0.0
  %v11179 = vand.u32 %v10753, 4294901760
  %v11180 = vsub.f32 %v10753, %v11179
  %v11181 = vand.u32 %v11180, 4294901760
  %11182 = vmatpush1.msra.mxu0 %v11181
  %11183 = vmatprep.subr.mxu0 0.0
  %v11184 = vand.u32 %v10754, 4294901760
  %v11185 = vsub.f32 %v10754, %v11184
  %v11186 = vand.u32 %v11185, 4294901760
  %11187 = vmatpush1.msra.mxu0 %v11186
  %11188 = vmatprep.subr.mxu0 0.0
  %v11189 = vand.u32 %v10755, 4294901760
  %v11190 = vsub.f32 %v10755, %v11189
  %v11191 = vand.u32 %v11190, 4294901760
  %11192 = vmatpush1.msra.mxu0 %v11191
  %11193 = vmatprep.subr.mxu0 0.0
  %v11194 = vand.u32 %v10756, 4294901760
  %v11195 = vsub.f32 %v10756, %v11194
  %v11196 = vand.u32 %v11195, 4294901760
  %11197 = vmatpush1.msra.mxu0 %v11196
  %11198 = vmatprep.subr.mxu0 0.0
  %11199 = vmatpush1.msra.mxu0 0.0
  %11200 = vmatprep.subr.mxu0 0.0
  %11201 = vmatpush1.msra.mxu0 0.0
  %11202 = vmatprep.subr.mxu0 0.0
  %11203 = vmatpush1.msra.mxu0 0.0
  %11204 = vmatprep.subr.mxu0 0.0
  %11205 = vmatpush1.msra.mxu0 0.0
  %11206 = vmatprep.subr.mxu0 0.0
  %11207 = vmatpush1.msra.mxu0 0.0
  %11208 = vmatprep.subr.mxu0 0.0
  %11209 = vmatpush1.msra.mxu0 0.0
  %11210 = vmatprep.subr.mxu0 0.0
  %11211 = vmatpush1.msra.mxu0 0.0
  %11212 = vmatprep.subr.mxu0 0.0
  %11213 = vmatpush1.msra.mxu0 0.0
  %11214 = vmatprep.subr.mxu0 0.0
  %11215 = vmatpush1.msra.mxu0 0.0
  %11216 = vmatprep.subr.mxu0 0.0
  %11217 = vmatpush1.msra.mxu0 0.0
  %11218 = vmatprep.subr.mxu0 0.0
  %11219 = vmatpush1.msra.mxu0 0.0
  %11220 = vmatprep.subr.mxu0 0.0
  %11221 = vmatpush1.msra.mxu0 0.0
  %11222 = vmatprep.subr.mxu0 0.0
  %11223 = vmatpush1.msra.mxu0 0.0
  %11224 = vmatprep.subr.mxu0 0.0
  %11225 = vmatpush1.msra.mxu0 0.0
  %11226 = vmatprep.subr.mxu0 0.0
  %11227 = vmatpush1.msra.mxu0 0.0
  %11228 = vmatprep.subr.mxu0 0.0
  %11229 = vmatpush1.msra.mxu0 0.0
  %11230 = vmatprep.subr.mxu0 0.0
  %11231 = vmatpush1.msra.mxu0 0.0
  %11232 = vmatprep.subr.mxu0 0.0
  %11233 = vmatpush1.msra.mxu0 0.0
  %11234 = vmatprep.subr.mxu0 0.0
  %11235 = vmatpush1.msra.mxu0 0.0
  %11236 = vmatprep.subr.mxu0 0.0
  %11237 = vmatpush1.msra.mxu0 0.0
  %11238 = vmatprep.subr.mxu0 0.0
  %11239 = vmatpush1.msra.mxu0 0.0
  %11240 = vmatprep.subr.mxu0 0.0
  %11241 = vmatpush1.msra.mxu0 0.0
  %11242 = vmatprep.subr.mxu0 0.0
  %11243 = vmatpush1.msra.mxu0 0.0
  %11244 = vmatprep.subr.mxu0 0.0
  %11245 = vmatpush1.msra.mxu0 0.0
  %11246 = vmatprep.mubr.f32.mxu0 0.0
  %v11247 = vand.u32 %v10759, 4294901760
  %11248 = vmatmul.mubr.f32.gmra.mrb[0].mxu0 %v11247
  %v11249 = vpop.f32.mrb[0].mxu0
  %v11250 = vadd.f32 %v11147, %v11249
  %v11251 = vpop.f32.mrb[0].mxu0
  %11252 = vmatprep.mubr.f32.mxu0 0.0
  %v11253 = vand.u32 %v10762, 4294901760
  %11254 = vmatmul.mubr.f32.gmra.mrb[0].mxu0 %v11253
  %v11255 = vpop.f32.mrb[0].mxu0
  %v11256 = vadd.f32 %v11155, %v11255
  %v11257 = vpop.f32.mrb[0].mxu0
  %11258 = vdwg.mxu0
  %11259 = vmatprep.subr.mxu0 0.0
  %v11260 = vand.u32 %v10749, 4294901760
  %11261 = vmatpush1.msra.mxu0 %v11260
  %11262 = vmatprep.subr.mxu0 0.0
  %v11263 = vand.u32 %v10750, 4294901760
  %11264 = vmatpush1.msra.mxu0 %v11263
  %11265 = vmatprep.subr.mxu0 0.0
  %v11266 = vand.u32 %v10751, 4294901760
  %11267 = vmatpush1.msra.mxu0 %v11266
  %11268 = vmatprep.subr.mxu0 0.0
  %v11269 = vand.u32 %v10752, 4294901760
  %11270 = vmatpush1.msra.mxu0 %v11269
  %11271 = vmatprep.subr.mxu0 0.0
  %v11272 = vand.u32 %v10753, 4294901760
  %11273 = vmatpush1.msra.mxu0 %v11272
  %11274 = vmatprep.subr.mxu0 0.0
  %v11275 = vand.u32 %v10754, 4294901760
  %11276 = vmatpush1.msra.mxu0 %v11275
  %11277 = vmatprep.subr.mxu0 0.0
  %v11278 = vand.u32 %v10755, 4294901760
  %11279 = vmatpush1.msra.mxu0 %v11278
  %11280 = vmatprep.subr.mxu0 0.0
  %v11281 = vand.u32 %v10756, 4294901760
  %11282 = vmatpush1.msra.mxu0 %v11281
  %11283 = vmatprep.subr.mxu0 0.0
  %11284 = vmatpush1.msra.mxu0 0.0
  %11285 = vmatprep.subr.mxu0 0.0
  %11286 = vmatpush1.msra.mxu0 0.0
  %11287 = vmatprep.subr.mxu0 0.0
  %11288 = vmatpush1.msra.mxu0 0.0
  %11289 = vmatprep.subr.mxu0 0.0
  %11290 = vmatpush1.msra.mxu0 0.0
  %11291 = vmatprep.subr.mxu0 0.0
  %11292 = vmatpush1.msra.mxu0 0.0
  %11293 = vmatprep.subr.mxu0 0.0
  %11294 = vmatpush1.msra.mxu0 0.0
  %11295 = vmatprep.subr.mxu0 0.0
  %11296 = vmatpush1.msra.mxu0 0.0
  %11297 = vmatprep.subr.mxu0 0.0
  %11298 = vmatpush1.msra.mxu0 0.0
  %11299 = vmatprep.subr.mxu0 0.0
  %11300 = vmatpush1.msra.mxu0 0.0
  %11301 = vmatprep.subr.mxu0 0.0
  %11302 = vmatpush1.msra.mxu0 0.0
  %11303 = vmatprep.subr.mxu0 0.0
  %11304 = vmatpush1.msra.mxu0 0.0
  %11305 = vmatprep.subr.mxu0 0.0
  %11306 = vmatpush1.msra.mxu0 0.0
  %11307 = vmatprep.subr.mxu0 0.0
  %11308 = vmatpush1.msra.mxu0 0.0
  %11309 = vmatprep.subr.mxu0 0.0
  %11310 = vmatpush1.msra.mxu0 0.0
  %11311 = vmatprep.subr.mxu0 0.0
  %11312 = vmatpush1.msra.mxu0 0.0
  %11313 = vmatprep.subr.mxu0 0.0
  %11314 = vmatpush1.msra.mxu0 0.0
  %11315 = vmatprep.subr.mxu0 0.0
  %11316 = vmatpush1.msra.mxu0 0.0
  %11317 = vmatprep.subr.mxu0 0.0
  %11318 = vmatpush1.msra.mxu0 0.0
  %11319 = vmatprep.subr.mxu0 0.0
  %11320 = vmatpush1.msra.mxu0 0.0
  %11321 = vmatprep.subr.mxu0 0.0
  %11322 = vmatpush1.msra.mxu0 0.0
  %11323 = vmatprep.subr.mxu0 0.0
  %11324 = vmatpush1.msra.mxu0 0.0
  %11325 = vmatprep.subr.mxu0 0.0
  %11326 = vmatpush1.msra.mxu0 0.0
  %11327 = vmatprep.subr.mxu0 0.0
  %11328 = vmatpush1.msra.mxu0 0.0
  %11329 = vmatprep.subr.mxu0 0.0
  %11330 = vmatpush1.msra.mxu0 0.0
  %11331 = vmatprep.mubr.f32.mxu0 0.0
  %v11332 = vand.u32 %v10759, 4294901760
  %11333 = vmatmul.mubr.f32.gmra.mrb[0].mxu0 %v11332
  %v11334 = vpop.f32.mrb[0].mxu0
  %v11335 = vadd.f32 %v11250, %v11334
  %v11336 = vpop.f32.mrb[0].mxu0
  %11337 = vmatprep.mubr.f32.mxu0 0.0
  %v11338 = vand.u32 %v10762, 4294901760
  %11339 = vmatmul.mubr.f32.gmra.mrb[0].mxu0 %v11338
  %v11340 = vpop.f32.mrb[0].mxu0
  %v11341 = vadd.f32 %v11256, %v11340
  %v11342 = vpop.f32.mrb[0].mxu0
  %11343 = vdwg.mxu0
  %v11344 = vadd.f32 %v10203, %v11335
  %v11345 = vadd.f32 %v10204, %v11341
  %v11346 = vsel %vm44, %v11344, 0.0
  %11347 = vadd.xlane.f32.xlu0 %v11346
  %v11348 = vpop.xlane.xlu0 %11347
  %v11349 = vsel %vm44, %v11345, 0.0
  %11350 = vadd.xlane.f32.xlu0 %v11349
  %v11351 = vpop.xlane.xlu0 %11350
  %v11352 = vmul.f32 %v11348, %v10168
  %v11353 = vmul.f32 %v11351, %v10168
  %v11354 = vsub.f32 %v11344, %v11352
  %v11355 = vsub.f32 %v11345, %v11353
  %v11356 = vmul.f32 %v11354, %v11354
  %v11357 = vmul.f32 %v11355, %v11355
  %v11358 = vsel %vm44, %v11356, 0.0
  %11359 = vadd.xlane.f32.xlu0 %v11358
  %v11360 = vpop.xlane.xlu0 %11359
  %v11361 = vsel %vm44, %v11357, 0.0
  %11362 = vadd.xlane.f32.xlu0 %v11361
  %v11363 = vpop.xlane.xlu0 %11362
  %v11364 = vmul.f32 %v11360, %v10168
  %v11365 = vmul.f32 %v11363, %v10168
  %v11366 = vadd.f32 %v11364, 1e-05
  %v11367 = vadd.f32 %v11365, 1e-05
  %v11368 = vrsqrt.pop %v11366
  %v11369 = vrsqrt.pop %v11367
  %v11370 = vmul.f32 %v11354, %v11368
  %v11371 = vmul.f32 %v11355, %v11369
  %11373 = vrot.lane.b32.xlu0 %v10202, 96
  %v11374 = vpop.permute.xlu0 %11373
  %v11376 = vmul.f32 %v11370, %v11374
  %v11377 = vmul.f32 %v11371, %v11374
  %v11378 = vlaneseq
  %v11379 = vshrl.u32 %v11378, 7
  %v11380 = vsub.s32 5, %v11379
  %v11381 = vrot.slane %v35, %v11380
  %v11382 = vadd.f32 %v11376, %v11381
  %v11383 = vadd.f32 %v11377, %v11381
  %11384 = vst.msk [vmem:[%s8] sm:$0xff] %vm44, %v11382
  %11385 = vst.msk [vmem:[%s8 + $0x8] sm:$0xff] %vm44, %v11383
  // Predicated region
  $region34: #{transformer_encoder_layer.1} parent=0 // pred_check
    _
  $region35: #{transformer_encoder_layer.1} parent=0 // pred_check_branch
    %11387 = sbr.rel (0) target = $region37
  $region36: #{transformer_encoder_layer.1} parent=0 // pred_region
    _
  $region37: #{transformer_encoder_layer.1} parent=0 // pred_fallthru
    _
  // Predicated region
  $region38: #{transformer_encoder_layer.1} parent=0 // pred_check
    _
  $region39: #{transformer_encoder_layer.1} parent=0 // pred_check_branch
    %11389 = sbr.rel (0) target = $region41
  $region40: #{transformer_encoder_layer.1} parent=0 // pred_region
    _
  $region41: #{transformer_encoder_layer.1} parent=0 // pred_fallthru
    _

</llo_original>
